<compile_context>
chip_gen: v7x
topology: tpu7x:2x2x1
jax: 0.10.0
libtpu: 0.0.40
codegen_flags: <defaults>
</compile_context>

<pallas_src>
import math
from functools import partial

import numpy as np
import jax
import jax.numpy as jnp
from jax import lax
from jax.experimental import pallas as pl
from jax.experimental.pallas import tpu as pltpu

D_MODEL = 300
N_HEAD = 15
HEAD_DIM = D_MODEL // N_HEAD   # 20
D_FF = 2048                    # nn.TransformerEncoderLayer default dim_feedforward
VOCAB = 100                    # text.__init__ default when vocabulary is None
# TODO(synk): module reads vocabulary.index['<padding>']; with vocabulary=None that
# attribute does not exist, so the pad id is assumed to be 99 (outside example range 0..19).
PAD_IDX = 99
EPS = 1e-5                     # LayerNorm default eps
NEG_INF = -1e30                # additive mask value (exp underflows to 0, matches -inf)


# ------------------------------------------------------------------ kernel ---

def _layernorm(x, g, b):
    mu = jnp.mean(x, axis=-1, keepdims=True)
    xc = x - mu
    var = jnp.mean(xc * xc, axis=-1, keepdims=True)
    return xc * lax.rsqrt(var + EPS) * g + b


def _fused_text_kernel(ids_col_ref, ids_row_ref, emb_ref,
                       sel_ref, selt_ref, hmask_ref, bias_ref,
                       wq_ref, wk_ref, wv_ref, bq_ref, bk_ref, bv_ref,
                       wo_ref, bo_ref, g1_ref, be1_ref,
                       w1_ref, b1_ref, w2_ref, b2_ref, g2_ref, be2_ref,
                       out_ref, *, n_tok):
    f32 = jnp.float32
    bf16 = jnp.bfloat16

    # ---- embedding lookup as an exact one-hot matmul (MXU, no dyn. indexing) ----
    tok_col = ids_col_ref[...]                                        # (N, 1) int32
    onehot = (tok_col == lax.broadcasted_iota(jnp.int32, (n_tok, VOCAB), 1)).astype(f32)
    src = jnp.dot(onehot, emb_ref[...], preferred_element_type=f32)   # (N, D) f32

    # ---- additive attention bias: static causal/batch-block part + key padding ----
    pad_row = jnp.where(ids_row_ref[...] == PAD_IDX, NEG_INF, 0.0).astype(f32)  # (1, N)
    bias = bias_ref[...] + pad_row                                    # (HN, N)

    # ---- QKV projections (bf16 weights, f32 accum; 1/sqrt(hd) folded in wq/bq) ----
    src16 = src.astype(bf16)
    q = jnp.dot(src16, wq_ref[...], preferred_element_type=f32) + bq_ref[...]
    k = jnp.dot(src16, wk_ref[...], preferred_element_type=f32) + bk_ref[...]
    v = jnp.dot(src16, wv_ref[...], preferred_element_type=f32) + bv_ref[...]

    # ---- all 15 heads with TWO attention matmuls ----------------------------------
    # Qstack[h*N+i, :] = q[i, :] * head_mask[h, :]
    qstack = jnp.dot(sel_ref[...], q, preferred_element_type=f32) * hmask_ref[...]  # (HN, D)
    s = lax.dot_general(qstack, k, (((1,), (1,)), ((), ())),
                        preferred_element_type=f32) + bias            # (HN, N)
    s_max = jnp.max(s, axis=-1, keepdims=True)                        # exact per-(head,query)
    p = jnp.exp(s - s_max)
    p = p * pl.reciprocal(jnp.sum(p, axis=-1, keepdims=True), approx=True)
    ctx_stack = jnp.dot(p, v, preferred_element_type=f32) * hmask_ref[...]           # (HN, D)
    ctx = jnp.dot(selt_ref[...], ctx_stack, preferred_element_type=f32)              # (N, D)

    attn = jnp.dot(ctx.astype(bf16), wo_ref[...], preferred_element_type=f32) + bo_ref[...]

    # residual + norm1   (dropout = identity in eval mode)
    h1 = _layernorm(src + attn, g1_ref[...], be1_ref[...])

    # ---- feed-forward: bf16 weights, f32 accumulation ------------------------------
    f = jnp.dot(h1.astype(bf16), w1_ref[...], preferred_element_type=f32) + b1_ref[...]
    f = jnp.maximum(f, 0.0)
    f = jnp.dot(f.astype(bf16), w2_ref[...], preferred_element_type=f32) + b2_ref[...]

    out_ref[...] = _layernorm(h1 + f, g2_ref[...], be2_ref[...]).astype(out_ref.dtype)


# ----------------------------------------------------------------- forward ---

def prepare_params(params, L, B):
    """One-time host-side prep: fold scale, pre-add embeddings, bf16 weights,
    and the tiny static selector/mask/bias constants for the stacked-head attention."""
    n = L * B
    hn = N_HEAD * n
    scale = 1.0 / math.sqrt(HEAD_DIM)
    w_in, b_in = params["w_in"], params["b_in"]          # PyTorch (3D, D), (3D,)

    # Sel[h*n + i, i] = 1 : tiles q / combines heads with a single MXU matmul each.
    r = np.arange(hn)
    sel = np.zeros((hn, n), np.float32)
    sel[r, r % n] = 1.0
    selt = np.ascontiguousarray(sel.T)

    # head_mask_full[h*n+i, d] = 1 iff feature d belongs to head h (contiguous 20-wide heads)
    d = np.arange(D_MODEL)
    hmask_full = ((r[:, None] // n) == (d[None, :] // HEAD_DIM)).astype(np.float32)

    # Static additive bias: causal within each batch element, -inf across batches.
    # Seq-major flattening: token t = p*B + b  ->  b = t % B, p = t // B.
    qtok = r % n
    qb, qp = qtok % B, qtok // B
    ktok = np.arange(n)
    kb, kp = ktok % B, ktok // B
    allowed = (qb[:, None] == kb[None, :]) & (kp[None, :] <= qp[:, None])
    bias_static = np.where(allowed, 0.0, NEG_INF).astype(np.float32)

    bf16 = jnp.bfloat16
    return {
        "emb_sum": (params["emb_e"] + params["emb_p"]).astype(jnp.float32),
        "sel": jnp.asarray(sel), "selT": jnp.asarray(selt),
        "head_mask_full": jnp.asarray(hmask_full),
        "bias_static": jnp.asarray(bias_static),
        "wq_t": (w_in[:D_MODEL].T * scale).astype(bf16),
        "wk_t": w_in[D_MODEL:2 * D_MODEL].T.astype(bf16),
        "wv_t": w_in[2 * D_MODEL:].T.astype(bf16),
        "bq": (b_in[:D_MODEL] * scale).reshape(1, D_MODEL),
        "bk": b_in[D_MODEL:2 * D_MODEL].reshape(1, D_MODEL),
        "bv": b_in[2 * D_MODEL:].reshape(1, D_MODEL),
        "wo_t": params["w_out"].T.astype(bf16),
        "bo": params["b_out"].reshape(1, D_MODEL),
        "g1": params["g1"].reshape(1, D_MODEL), "beta1": params["beta1"].reshape(1, D_MODEL),
        "w1_t": params["w1"].T.astype(bf16), "b1": params["b1"].reshape(1, D_FF),
        "w2_t": params["w2"].T.astype(bf16), "b2": params["b2"].reshape(1, D_MODEL),
        "g2": params["g2"].reshape(1, D_MODEL), "beta2": params["beta2"].reshape(1, D_MODEL),
    }


def text_forward(x, pp):
    """x: (L, B) int32 token ids. Returns (L, B, D_MODEL) float32."""
    L, B = x.shape
    n = L * B
    ids = x.reshape(n).astype(jnp.int32)            # seq-major flatten: t = p*B + b
    y = pl.pallas_call(
        partial(_fused_text_kernel, n_tok=n),
        out_shape=jax.ShapeDtypeStruct((n, D_MODEL), jnp.float32),
        compiler_params=pltpu.CompilerParams(vmem_limit_bytes=24 * 1024 * 1024),
    )(ids.reshape(n, 1), ids.reshape(1, n), pp["emb_sum"],
      pp["sel"], pp["selT"], pp["head_mask_full"], pp["bias_static"],
      pp["wq_t"], pp["wk_t"], pp["wv_t"], pp["bq"], pp["bk"], pp["bv"],
      pp["wo_t"], pp["bo"], pp["g1"], pp["beta1"],
      pp["w1_t"], pp["b1"], pp["w2_t"], pp["b2"], pp["g2"], pp["beta2"])
    return y.reshape(L, B, D_MODEL)                 # free reshape, already (L, B, D) order


# ------------------------------------------------------------------ params ---

def init_params(key):
    ks = jax.random.split(key, 8)
    f32 = jnp.float32
    return {
        "emb_e": jax.random.normal(ks[0], (VOCAB, D_MODEL), f32) * 0.02,
        "emb_p": jax.random.normal(ks[1], (VOCAB, D_MODEL), f32) * 0.02,
        # MHA in-projection (PyTorch layout: (3D, D)) and out-projection (D, D)
        "w_in":  jax.random.normal(ks[2], (3 * D_MODEL, D_MODEL), f32) * 0.02,
        "b_in":  jnp.zeros((3 * D_MODEL,), f32),
        "w_out": jax.random.normal(ks[3], (D_MODEL, D_MODEL), f32) * 0.02,
        "b_out": jnp.zeros((D_MODEL,), f32),
        # FFN (PyTorch layout: (out, in))
        "w1": jax.random.normal(ks[4], (D_FF, D_MODEL), f32) * 0.02,
        "b1": jnp.zeros((D_FF,), f32),
        "w2": jax.random.normal(ks[5], (D_MODEL, D_FF), f32) * 0.02,
        "b2": jnp.zeros((D_MODEL,), f32),
        # LayerNorms
        "g1": jnp.ones((D_MODEL,), f32), "beta1": jnp.zeros((D_MODEL,), f32),
        "g2": jnp.ones((D_MODEL,), f32), "beta2": jnp.zeros((D_MODEL,), f32),
    }


# -------------------------------------------------------------------- main ---

if __name__ == "__main__":
    key = jax.random.PRNGKey(0)
    pkey, xkey = jax.random.split(key)
    params = init_params(pkey)

    # Matches text.__init__: self.example = torch.randint(0, 20, (7, 2))
    L, B = 7, 2
    prepped = prepare_params(params, L, B)   # one-time, outside jit
    x = jax.random.randint(xkey, (L, B), 0, 20, dtype=jnp.int32)

    fwd = jax.jit(text_forward)
    y = fwd(x, prepped)
    jax.block_until_ready(y)

    assert y.shape == (L, B, D_MODEL) and y.dtype == jnp.float32
    assert bool(jnp.all(jnp.isfinite(y)))
    print("KERNEL_OK")
</pallas_src>

<mosaic_0001>
module attributes {stable_mosaic.version = 11 : i64} {
  func.func @_fused_text_kernel(%arg0: memref<14x1xi32, #tpu.memory_space<vmem>>, %arg1: memref<1x14xi32, #tpu.memory_space<vmem>>, %arg2: memref<100x300xf32, #tpu.memory_space<vmem>>, %arg3: memref<210x14xf32, #tpu.memory_space<vmem>>, %arg4: memref<14x210xf32, #tpu.memory_space<vmem>>, %arg5: memref<210x300xf32, #tpu.memory_space<vmem>>, %arg6: memref<210x14xf32, #tpu.memory_space<vmem>>, %arg7: memref<300x300xbf16, #tpu.memory_space<vmem>>, %arg8: memref<300x300xbf16, #tpu.memory_space<vmem>>, %arg9: memref<300x300xbf16, #tpu.memory_space<vmem>>, %arg10: memref<1x300xf32, #tpu.memory_space<vmem>>, %arg11: memref<1x300xf32, #tpu.memory_space<vmem>>, %arg12: memref<1x300xf32, #tpu.memory_space<vmem>>, %arg13: memref<300x300xbf16, #tpu.memory_space<vmem>>, %arg14: memref<1x300xf32, #tpu.memory_space<vmem>>, %arg15: memref<1x300xf32, #tpu.memory_space<vmem>>, %arg16: memref<1x300xf32, #tpu.memory_space<vmem>>, %arg17: memref<300x2048xbf16, #tpu.memory_space<vmem>>, %arg18: memref<1x2048xf32, #tpu.memory_space<vmem>>, %arg19: memref<2048x300xbf16, #tpu.memory_space<vmem>>, %arg20: memref<1x300xf32, #tpu.memory_space<vmem>>, %arg21: memref<1x300xf32, #tpu.memory_space<vmem>>, %arg22: memref<1x300xf32, #tpu.memory_space<vmem>>, %arg23: memref<14x300xf32, #tpu.memory_space<vmem>>) attributes {dimension_semantics = [], scalar_prefetch = 0 : i64, scratch_operands = 0 : i64, tpu.core_type = #tpu.core_type<tc>} {
    %c0 = arith.constant 0 : index
    %c0_0 = arith.constant 0 : index
    %0 = vector.load %arg0[%c0, %c0_0] : memref<14x1xi32, #tpu.memory_space<vmem>>, vector<14x1xi32>
    %1 = tpu.iota {dimensions = array<i32: 1>} : vector<14x100xi32>
    %2 = vector.broadcast %0 : vector<14x1xi32> to vector<14x100xi32>
    %3 = arith.cmpi eq, %2, %1 : vector<14x100xi32>
    %4 = arith.extui %3 : vector<14x100xi1> to vector<14x100xi32>
    %5 = arith.sitofp %4 : vector<14x100xi32> to vector<14x100xf32>
    %c0_1 = arith.constant 0 : index
    %c0_2 = arith.constant 0 : index
    %6 = vector.load %arg2[%c0_1, %c0_2] : memref<100x300xf32, #tpu.memory_space<vmem>>, vector<100x300xf32>
    %cst = arith.constant dense<0.000000e+00> : vector<14x300xf32>
    %7 = tpu.matmul %5, %6, %cst {dimension_numbers = #tpu.dot_dimension_numbers<[1], [0], [0], [1], [0, 0, 1, 1], [], []>} : vector<14x100xf32>, vector<100x300xf32>, vector<14x300xf32> -> vector<14x300xf32>
    %c0_3 = arith.constant 0 : index
    %c0_4 = arith.constant 0 : index
    %8 = vector.load %arg1[%c0_3, %c0_4] : memref<1x14xi32, #tpu.memory_space<vmem>>, vector<1x14xi32>
    %c99_i32 = arith.constant 99 : i32
    %9 = vector.broadcast %c99_i32 : i32 to vector<1x14xi32>
    %10 = arith.cmpi eq, %8, %9 : vector<1x14xi32>
    %cst_5 = arith.constant -1.000000e+30 : f32
    %cst_6 = arith.constant 0.000000e+00 : f32
    %11 = vector.broadcast %cst_5 : f32 to vector<1x14xf32>
    %12 = vector.broadcast %cst_6 : f32 to vector<1x14xf32>
    %13 = arith.select %10, %11, %12 : vector<1x14xi1>, vector<1x14xf32>
    %c0_7 = arith.constant 0 : index
    %c0_8 = arith.constant 0 : index
    %14 = vector.load %arg6[%c0_7, %c0_8] : memref<210x14xf32, #tpu.memory_space<vmem>>, vector<210x14xf32>
    %15 = vector.broadcast %13 : vector<1x14xf32> to vector<210x14xf32>
    %16 = arith.addf %14, %15 : vector<210x14xf32>
    %17 = arith.truncf %7 : vector<14x300xf32> to vector<14x300xbf16>
    %c0_9 = arith.constant 0 : index
    %c0_10 = arith.constant 0 : index
    %18 = vector.load %arg7[%c0_9, %c0_10] : memref<300x300xbf16, #tpu.memory_space<vmem>>, vector<300x300xbf16>
    %cst_11 = arith.constant dense<0.000000e+00> : vector<14x300xf32>
    %19 = tpu.matmul %17, %18, %cst_11 {dimension_numbers = #tpu.dot_dimension_numbers<[1], [0], [0], [1], [0, 0, 1, 1], [], []>} : vector<14x300xbf16>, vector<300x300xbf16>, vector<14x300xf32> -> vector<14x300xf32>
    %c0_12 = arith.constant 0 : index
    %c0_13 = arith.constant 0 : index
    %20 = vector.load %arg10[%c0_12, %c0_13] : memref<1x300xf32, #tpu.memory_space<vmem>>, vector<1x300xf32>
    %21 = vector.broadcast %20 : vector<1x300xf32> to vector<14x300xf32>
    %22 = arith.addf %19, %21 : vector<14x300xf32>
    %c0_14 = arith.constant 0 : index
    %c0_15 = arith.constant 0 : index
    %23 = vector.load %arg8[%c0_14, %c0_15] : memref<300x300xbf16, #tpu.memory_space<vmem>>, vector<300x300xbf16>
    %cst_16 = arith.constant dense<0.000000e+00> : vector<14x300xf32>
    %24 = tpu.matmul %17, %23, %cst_16 {dimension_numbers = #tpu.dot_dimension_numbers<[1], [0], [0], [1], [0, 0, 1, 1], [], []>} : vector<14x300xbf16>, vector<300x300xbf16>, vector<14x300xf32> -> vector<14x300xf32>
    %c0_17 = arith.constant 0 : index
    %c0_18 = arith.constant 0 : index
    %25 = vector.load %arg11[%c0_17, %c0_18] : memref<1x300xf32, #tpu.memory_space<vmem>>, vector<1x300xf32>
    %26 = vector.broadcast %25 : vector<1x300xf32> to vector<14x300xf32>
    %27 = arith.addf %24, %26 : vector<14x300xf32>
    %c0_19 = arith.constant 0 : index
    %c0_20 = arith.constant 0 : index
    %28 = vector.load %arg9[%c0_19, %c0_20] : memref<300x300xbf16, #tpu.memory_space<vmem>>, vector<300x300xbf16>
    %cst_21 = arith.constant dense<0.000000e+00> : vector<14x300xf32>
    %29 = tpu.matmul %17, %28, %cst_21 {dimension_numbers = #tpu.dot_dimension_numbers<[1], [0], [0], [1], [0, 0, 1, 1], [], []>} : vector<14x300xbf16>, vector<300x300xbf16>, vector<14x300xf32> -> vector<14x300xf32>
    %c0_22 = arith.constant 0 : index
    %c0_23 = arith.constant 0 : index
    %30 = vector.load %arg12[%c0_22, %c0_23] : memref<1x300xf32, #tpu.memory_space<vmem>>, vector<1x300xf32>
    %31 = vector.broadcast %30 : vector<1x300xf32> to vector<14x300xf32>
    %32 = arith.addf %29, %31 : vector<14x300xf32>
    %c0_24 = arith.constant 0 : index
    %c0_25 = arith.constant 0 : index
    %33 = vector.load %arg3[%c0_24, %c0_25] : memref<210x14xf32, #tpu.memory_space<vmem>>, vector<210x14xf32>
    %cst_26 = arith.constant dense<0.000000e+00> : vector<210x300xf32>
    %34 = tpu.matmul %33, %22, %cst_26 {dimension_numbers = #tpu.dot_dimension_numbers<[1], [0], [0], [1], [0, 0, 1, 1], [], []>} : vector<210x14xf32>, vector<14x300xf32>, vector<210x300xf32> -> vector<210x300xf32>
    %c0_27 = arith.constant 0 : index
    %c0_28 = arith.constant 0 : index
    %35 = vector.load %arg5[%c0_27, %c0_28] : memref<210x300xf32, #tpu.memory_space<vmem>>, vector<210x300xf32>
    %36 = arith.mulf %34, %35 : vector<210x300xf32>
    %cst_29 = arith.constant dense<0.000000e+00> : vector<210x14xf32>
    %37 = tpu.matmul %36, %27, %cst_29 {dimension_numbers = #tpu.dot_dimension_numbers<[1], [1], [0], [0], [0, 0, 1, 0], [], []>} : vector<210x300xf32>, vector<14x300xf32>, vector<210x14xf32> -> vector<210x14xf32>
    %38 = arith.addf %37, %16 : vector<210x14xf32>
    %cst_30 = arith.constant dense<0xFF800000> : vector<210xf32>
    %39 = vector.multi_reduction <maximumf>, %38, %cst_30 [1] : vector<210x14xf32> to vector<210xf32>
    %40 = vector.shape_cast %39 : vector<210xf32> to vector<210x1xf32>
    %41 = vector.broadcast %40 : vector<210x1xf32> to vector<210x14xf32>
    %42 = arith.subf %38, %41 : vector<210x14xf32>
    %43 = math.exp %42 : vector<210x14xf32>
    %cst_31 = arith.constant dense<0.000000e+00> : vector<210xf32>
    %44 = vector.multi_reduction <add>, %43, %cst_31 [1] : vector<210x14xf32> to vector<210xf32>
    %45 = vector.shape_cast %44 : vector<210xf32> to vector<210x1xf32>
    %46 = tpu.reciprocal %45 {approx = true} : vector<210x1xf32> -> vector<210x1xf32>
    %47 = vector.broadcast %46 : vector<210x1xf32> to vector<210x14xf32>
    %48 = arith.mulf %43, %47 : vector<210x14xf32>
    %cst_32 = arith.constant dense<0.000000e+00> : vector<210x300xf32>
    %49 = tpu.matmul %48, %32, %cst_32 {dimension_numbers = #tpu.dot_dimension_numbers<[1], [0], [0], [1], [0, 0, 1, 1], [], []>} : vector<210x14xf32>, vector<14x300xf32>, vector<210x300xf32> -> vector<210x300xf32>
    %c0_33 = arith.constant 0 : index
    %c0_34 = arith.constant 0 : index
    %50 = vector.load %arg5[%c0_33, %c0_34] : memref<210x300xf32, #tpu.memory_space<vmem>>, vector<210x300xf32>
    %51 = arith.mulf %49, %50 : vector<210x300xf32>
    %c0_35 = arith.constant 0 : index
    %c0_36 = arith.constant 0 : index
    %52 = vector.load %arg4[%c0_35, %c0_36] : memref<14x210xf32, #tpu.memory_space<vmem>>, vector<14x210xf32>
    %cst_37 = arith.constant dense<0.000000e+00> : vector<14x300xf32>
    %53 = tpu.matmul %52, %51, %cst_37 {dimension_numbers = #tpu.dot_dimension_numbers<[1], [0], [0], [1], [0, 0, 1, 1], [], []>} : vector<14x210xf32>, vector<210x300xf32>, vector<14x300xf32> -> vector<14x300xf32>
    %54 = arith.truncf %53 : vector<14x300xf32> to vector<14x300xbf16>
    %c0_38 = arith.constant 0 : index
    %c0_39 = arith.constant 0 : index
    %55 = vector.load %arg13[%c0_38, %c0_39] : memref<300x300xbf16, #tpu.memory_space<vmem>>, vector<300x300xbf16>
    %cst_40 = arith.constant dense<0.000000e+00> : vector<14x300xf32>
    %56 = tpu.matmul %54, %55, %cst_40 {dimension_numbers = #tpu.dot_dimension_numbers<[1], [0], [0], [1], [0, 0, 1, 1], [], []>} : vector<14x300xbf16>, vector<300x300xbf16>, vector<14x300xf32> -> vector<14x300xf32>
    %c0_41 = arith.constant 0 : index
    %c0_42 = arith.constant 0 : index
    %57 = vector.load %arg14[%c0_41, %c0_42] : memref<1x300xf32, #tpu.memory_space<vmem>>, vector<1x300xf32>
    %58 = vector.broadcast %57 : vector<1x300xf32> to vector<14x300xf32>
    %59 = arith.addf %56, %58 : vector<14x300xf32>
    %60 = arith.addf %7, %59 : vector<14x300xf32>
    %c0_43 = arith.constant 0 : index
    %c0_44 = arith.constant 0 : index
    %61 = vector.load %arg15[%c0_43, %c0_44] : memref<1x300xf32, #tpu.memory_space<vmem>>, vector<1x300xf32>
    %c0_45 = arith.constant 0 : index
    %c0_46 = arith.constant 0 : index
    %62 = vector.load %arg16[%c0_45, %c0_46] : memref<1x300xf32, #tpu.memory_space<vmem>>, vector<1x300xf32>
    %cst_47 = arith.constant dense<0.000000e+00> : vector<14xf32>
    %63 = vector.multi_reduction <add>, %60, %cst_47 [1] : vector<14x300xf32> to vector<14xf32>
    %64 = vector.shape_cast %63 : vector<14xf32> to vector<14x1xf32>
    %cst_48 = arith.constant 3.000000e+02 : f32
    %65 = vector.broadcast %cst_48 : f32 to vector<14x1xf32>
    %66 = arith.divf %64, %65 : vector<14x1xf32>
    %67 = vector.broadcast %66 : vector<14x1xf32> to vector<14x300xf32>
    %68 = arith.subf %60, %67 : vector<14x300xf32>
    %69 = arith.mulf %68, %68 : vector<14x300xf32>
    %cst_49 = arith.constant dense<0.000000e+00> : vector<14xf32>
    %70 = vector.multi_reduction <add>, %69, %cst_49 [1] : vector<14x300xf32> to vector<14xf32>
    %71 = vector.shape_cast %70 : vector<14xf32> to vector<14x1xf32>
    %cst_50 = arith.constant 3.000000e+02 : f32
    %72 = vector.broadcast %cst_50 : f32 to vector<14x1xf32>
    %73 = arith.divf %71, %72 : vector<14x1xf32>
    %cst_51 = arith.constant 9.99999974E-6 : f32
    %74 = vector.broadcast %cst_51 : f32 to vector<14x1xf32>
    %75 = arith.addf %73, %74 : vector<14x1xf32>
    %76 = math.rsqrt %75 : vector<14x1xf32>
    %77 = vector.broadcast %76 : vector<14x1xf32> to vector<14x300xf32>
    %78 = arith.mulf %68, %77 : vector<14x300xf32>
    %79 = vector.broadcast %61 : vector<1x300xf32> to vector<14x300xf32>
    %80 = arith.mulf %78, %79 : vector<14x300xf32>
    %81 = vector.broadcast %62 : vector<1x300xf32> to vector<14x300xf32>
    %82 = arith.addf %80, %81 : vector<14x300xf32>
    %83 = arith.truncf %82 : vector<14x300xf32> to vector<14x300xbf16>
    %c0_52 = arith.constant 0 : index
    %c0_53 = arith.constant 0 : index
    %84 = vector.load %arg17[%c0_52, %c0_53] : memref<300x2048xbf16, #tpu.memory_space<vmem>>, vector<300x2048xbf16>
    %cst_54 = arith.constant dense<0.000000e+00> : vector<14x2048xf32>
    %85 = tpu.matmul %83, %84, %cst_54 {dimension_numbers = #tpu.dot_dimension_numbers<[1], [0], [0], [1], [0, 0, 1, 1], [], []>} : vector<14x300xbf16>, vector<300x2048xbf16>, vector<14x2048xf32> -> vector<14x2048xf32>
    %c0_55 = arith.constant 0 : index
    %c0_56 = arith.constant 0 : index
    %86 = vector.load %arg18[%c0_55, %c0_56] : memref<1x2048xf32, #tpu.memory_space<vmem>>, vector<1x2048xf32>
    %87 = vector.broadcast %86 : vector<1x2048xf32> to vector<14x2048xf32>
    %88 = arith.addf %85, %87 : vector<14x2048xf32>
    %cst_57 = arith.constant 0.000000e+00 : f32
    %89 = vector.broadcast %cst_57 : f32 to vector<14x2048xf32>
    %90 = arith.maximumf %88, %89 : vector<14x2048xf32>
    %91 = arith.truncf %90 : vector<14x2048xf32> to vector<14x2048xbf16>
    %c0_58 = arith.constant 0 : index
    %c0_59 = arith.constant 0 : index
    %92 = vector.load %arg19[%c0_58, %c0_59] : memref<2048x300xbf16, #tpu.memory_space<vmem>>, vector<2048x300xbf16>
    %cst_60 = arith.constant dense<0.000000e+00> : vector<14x300xf32>
    %93 = tpu.matmul %91, %92, %cst_60 {dimension_numbers = #tpu.dot_dimension_numbers<[1], [0], [0], [1], [0, 0, 1, 1], [], []>} : vector<14x2048xbf16>, vector<2048x300xbf16>, vector<14x300xf32> -> vector<14x300xf32>
    %c0_61 = arith.constant 0 : index
    %c0_62 = arith.constant 0 : index
    %94 = vector.load %arg20[%c0_61, %c0_62] : memref<1x300xf32, #tpu.memory_space<vmem>>, vector<1x300xf32>
    %95 = vector.broadcast %94 : vector<1x300xf32> to vector<14x300xf32>
    %96 = arith.addf %93, %95 : vector<14x300xf32>
    %97 = arith.addf %82, %96 : vector<14x300xf32>
    %c0_63 = arith.constant 0 : index
    %c0_64 = arith.constant 0 : index
    %98 = vector.load %arg21[%c0_63, %c0_64] : memref<1x300xf32, #tpu.memory_space<vmem>>, vector<1x300xf32>
    %c0_65 = arith.constant 0 : index
    %c0_66 = arith.constant 0 : index
    %99 = vector.load %arg22[%c0_65, %c0_66] : memref<1x300xf32, #tpu.memory_space<vmem>>, vector<1x300xf32>
    %cst_67 = arith.constant dense<0.000000e+00> : vector<14xf32>
    %100 = vector.multi_reduction <add>, %97, %cst_67 [1] : vector<14x300xf32> to vector<14xf32>
    %101 = vector.shape_cast %100 : vector<14xf32> to vector<14x1xf32>
    %cst_68 = arith.constant 3.000000e+02 : f32
    %102 = vector.broadcast %cst_68 : f32 to vector<14x1xf32>
    %103 = arith.divf %101, %102 : vector<14x1xf32>
    %104 = vector.broadcast %103 : vector<14x1xf32> to vector<14x300xf32>
    %105 = arith.subf %97, %104 : vector<14x300xf32>
    %106 = arith.mulf %105, %105 : vector<14x300xf32>
    %cst_69 = arith.constant dense<0.000000e+00> : vector<14xf32>
    %107 = vector.multi_reduction <add>, %106, %cst_69 [1] : vector<14x300xf32> to vector<14xf32>
    %108 = vector.shape_cast %107 : vector<14xf32> to vector<14x1xf32>
    %cst_70 = arith.constant 3.000000e+02 : f32
    %109 = vector.broadcast %cst_70 : f32 to vector<14x1xf32>
    %110 = arith.divf %108, %109 : vector<14x1xf32>
    %cst_71 = arith.constant 9.99999974E-6 : f32
    %111 = vector.broadcast %cst_71 : f32 to vector<14x1xf32>
    %112 = arith.addf %110, %111 : vector<14x1xf32>
    %113 = math.rsqrt %112 : vector<14x1xf32>
    %114 = vector.broadcast %113 : vector<14x1xf32> to vector<14x300xf32>
    %115 = arith.mulf %105, %114 : vector<14x300xf32>
    %116 = vector.broadcast %98 : vector<1x300xf32> to vector<14x300xf32>
    %117 = arith.mulf %115, %116 : vector<14x300xf32>
    %118 = vector.broadcast %99 : vector<1x300xf32> to vector<14x300xf32>
    %119 = arith.addf %117, %118 : vector<14x300xf32>
    %c0_72 = arith.constant 0 : index
    %c0_73 = arith.constant 0 : index
    %120 = vector.load %arg23[%c0_72, %c0_73] : memref<14x300xf32, #tpu.memory_space<vmem>>, vector<14x300xf32>
    tpu.vector_store %arg23[%c0_72, %c0_73], %119 {strides = array<i32>} : memref<14x300xf32, #tpu.memory_space<vmem>>, vector<14x300xf32>,
    return
  }
}

</mosaic_0001>

<llo_original>
// kernel: text_forward.1
$region0: #{text_forward.1}
  #allocation0 [shape = 'u32[]', space=smem, size = 0x4, offset = 0x4, fixed_abs, tag = 'smem constant byte address 0x4 - core index']
  #allocation1 [shape = 'u32[144,128]{1,0:T(1,128)}', space=vmem, size = 0x12000, scoped, tag = 'internal scratch']
  %s0 = inlined_call_operand.vmem [shape: s32[14,1], index: 0, kind: input, shape index: {}]
  %s1 = inlined_call_operand.vmem [shape: s32[1,14], index: 1, kind: input, shape index: {}]
  %s2 = inlined_call_operand.vmem [shape: f32[100,300], index: 2, kind: input, shape index: {}]
  %s3 = inlined_call_operand.vmem [shape: f32[210,14], index: 3, kind: input, shape index: {}]
  %s4 = inlined_call_operand.vmem [shape: f32[14,210], index: 4, kind: input, shape index: {}]
  %s5 = inlined_call_operand.vmem [shape: f32[210,300], index: 5, kind: input, shape index: {}]
  %s6 = inlined_call_operand.vmem [shape: f32[210,14], index: 6, kind: input, shape index: {}]
  %s7 = inlined_call_operand.vmem [shape: bf16[300,300], index: 7, kind: input, shape index: {}]
  %s8 = inlined_call_operand.vmem [shape: bf16[300,300], index: 8, kind: input, shape index: {}]
  %s9 = inlined_call_operand.vmem [shape: bf16[300,300], index: 9, kind: input, shape index: {}]
  %s10 = inlined_call_operand.vmem [shape: f32[1,300], index: 10, kind: input, shape index: {}]
  %s11 = inlined_call_operand.vmem [shape: f32[1,300], index: 11, kind: input, shape index: {}]
  %s12 = inlined_call_operand.vmem [shape: f32[1,300], index: 12, kind: input, shape index: {}]
  %s13 = inlined_call_operand.vmem [shape: bf16[300,300], index: 13, kind: input, shape index: {}]
  %s14 = inlined_call_operand.vmem [shape: f32[1,300], index: 14, kind: input, shape index: {}]
  %s15 = inlined_call_operand.vmem [shape: f32[1,300], index: 15, kind: input, shape index: {}]
  %s16 = inlined_call_operand.vmem [shape: f32[1,300], index: 16, kind: input, shape index: {}]
  %s17 = inlined_call_operand.vmem [shape: bf16[300,2048], index: 17, kind: input, shape index: {}]
  %s18 = inlined_call_operand.vmem [shape: f32[1,2048], index: 18, kind: input, shape index: {}]
  %s19 = inlined_call_operand.vmem [shape: bf16[2048,300], index: 19, kind: input, shape index: {}]
  %s20 = inlined_call_operand.vmem [shape: f32[1,300], index: 20, kind: input, shape index: {}]
  %s21 = inlined_call_operand.vmem [shape: f32[1,300], index: 21, kind: input, shape index: {}]
  %s22 = inlined_call_operand.vmem [shape: f32[1,300], index: 22, kind: input, shape index: {}]
  %s23 = inlined_call_operand.vmem [shape: f32[14,300], index: 23, kind: output, shape index: {}]
  %s24 = sld [smem:[#allocation0]]
  $region102: #{text_forward.1} parent=0
    _
  %s26 = ssub.s32 1, %s24
  %s27 = scalar_select 0, %s26, %s24
  // Predicated region
  $region2: #{text_forward.1} parent=0 // pred_check
    _
  $region3: #{text_forward.1} parent=0 // pred_check_branch
    %29 = sbr.rel (0) target = $region5
  $region4: #{text_forward.1} parent=0 // pred_region
    _
  $region5: #{text_forward.1} parent=0 // pred_fallthru
    _
  // Predicated region
  $region6: #{text_forward.1} parent=0 // pred_check
    _
  $region7: #{text_forward.1} parent=0 // pred_check_branch
    %31 = sbr.rel (0) target = $region9
  $region8: #{text_forward.1} parent=0 // pred_region
    _
  $region9: #{text_forward.1} parent=0 // pred_fallthru
    _
  // Predicated region
  $region10: #{text_forward.1} parent=0 // pred_check
    _
  $region11: #{text_forward.1} parent=0 // pred_check_branch
    %33 = sbr.rel (0) target = $region13
  $region12: #{text_forward.1} parent=0 // pred_region
    _
  $region13: #{text_forward.1} parent=0 // pred_fallthru
    _
  // Predicated region
  $region14: #{text_forward.1} parent=0 // pred_check
    _
  $region15: #{text_forward.1} parent=0 // pred_check_branch
    %35 = sbr.rel (0) target = $region17
  $region16: #{text_forward.1} parent=0 // pred_region
    _
  $region17: #{text_forward.1} parent=0 // pred_fallthru
    _
  // Predicated region
  $region18: #{text_forward.1} parent=0 // pred_check
    _
  $region19: #{text_forward.1} parent=0 // pred_check_branch
    %37 = sbr.rel (0) target = $region21
  $region20: #{text_forward.1} parent=0 // pred_region
    _
  $region21: #{text_forward.1} parent=0 // pred_fallthru
    _
  // Predicated region
  $region22: #{text_forward.1} parent=0 // pred_check
    _
  $region23: #{text_forward.1} parent=0 // pred_check_branch
    %39 = sbr.rel (0) target = $region25
  $region24: #{text_forward.1} parent=0 // pred_region
    _
  $region25: #{text_forward.1} parent=0 // pred_fallthru
    _
  // Predicated region
  $region26: #{text_forward.1} parent=0 // pred_check
    _
  $region27: #{text_forward.1} parent=0 // pred_check_branch
    %41 = sbr.rel (0) target = $region29
  $region28: #{text_forward.1} parent=0 // pred_region
    _
  $region29: #{text_forward.1} parent=0 // pred_fallthru
    _
  // Predicated region
  $region30: #{text_forward.1} parent=0 // pred_check
    _
  $region31: #{text_forward.1} parent=0 // pred_check_branch
    %43 = sbr.rel (0) target = $region33
  $region32: #{text_forward.1} parent=0 // pred_region
    _
  $region33: #{text_forward.1} parent=0 // pred_fallthru
    _
  // Predicated region
  $region34: #{text_forward.1} parent=0 // pred_check
    _
  $region35: #{text_forward.1} parent=0 // pred_check_branch
    %45 = sbr.rel (0) target = $region37
  $region36: #{text_forward.1} parent=0 // pred_region
    _
  $region37: #{text_forward.1} parent=0 // pred_fallthru
    _
  // Predicated region
  $region38: #{text_forward.1} parent=0 // pred_check
    _
  $region39: #{text_forward.1} parent=0 // pred_check_branch
    %47 = sbr.rel (0) target = $region41
  $region40: #{text_forward.1} parent=0 // pred_region
    _
  $region41: #{text_forward.1} parent=0 // pred_fallthru
    _
  // Predicated region
  $region42: #{text_forward.1} parent=0 // pred_check
    _
  $region43: #{text_forward.1} parent=0 // pred_check_branch
    %49 = sbr.rel (0) target = $region45
  $region44: #{text_forward.1} parent=0 // pred_region
    _
  $region45: #{text_forward.1} parent=0 // pred_fallthru
    _
  // Predicated region
  $region46: #{text_forward.1} parent=0 // pred_check
    _
  $region47: #{text_forward.1} parent=0 // pred_check_branch
    %51 = sbr.rel (0) target = $region49
  $region48: #{text_forward.1} parent=0 // pred_region
    _
  $region49: #{text_forward.1} parent=0 // pred_fallthru
    _
  // Predicated region
  $region50: #{text_forward.1} parent=0 // pred_check
    _
  $region51: #{text_forward.1} parent=0 // pred_check_branch
    %53 = sbr.rel (0) target = $region53
  $region52: #{text_forward.1} parent=0 // pred_region
    _
  $region53: #{text_forward.1} parent=0 // pred_fallthru
    _
  // Predicated region
  $region54: #{text_forward.1} parent=0 // pred_check
    _
  $region55: #{text_forward.1} parent=0 // pred_check_branch
    %55 = sbr.rel (0) target = $region57
  $region56: #{text_forward.1} parent=0 // pred_region
    _
  $region57: #{text_forward.1} parent=0 // pred_fallthru
    _
  // Predicated region
  $region58: #{text_forward.1} parent=0 // pred_check
    _
  $region59: #{text_forward.1} parent=0 // pred_check_branch
    %57 = sbr.rel (0) target = $region61
  $region60: #{text_forward.1} parent=0 // pred_region
    _
  $region61: #{text_forward.1} parent=0 // pred_fallthru
    _
  // Predicated region
  $region62: #{text_forward.1} parent=0 // pred_check
    _
  $region63: #{text_forward.1} parent=0 // pred_check_branch
    %59 = sbr.rel (0) target = $region65
  $region64: #{text_forward.1} parent=0 // pred_region
    _
  $region65: #{text_forward.1} parent=0 // pred_fallthru
    _
  // Predicated region
  $region66: #{text_forward.1} parent=0 // pred_check
    _
  $region67: #{text_forward.1} parent=0 // pred_check_branch
    %61 = sbr.rel (0) target = $region69
  $region68: #{text_forward.1} parent=0 // pred_region
    _
  $region69: #{text_forward.1} parent=0 // pred_fallthru
    _
  // Predicated region
  $region70: #{text_forward.1} parent=0 // pred_check
    _
  $region71: #{text_forward.1} parent=0 // pred_check_branch
    %63 = sbr.rel (0) target = $region73
  $region72: #{text_forward.1} parent=0 // pred_region
    _
  $region73: #{text_forward.1} parent=0 // pred_fallthru
    _
  // Predicated region
  $region74: #{text_forward.1} parent=0 // pred_check
    _
  $region75: #{text_forward.1} parent=0 // pred_check_branch
    %65 = sbr.rel (0) target = $region77
  $region76: #{text_forward.1} parent=0 // pred_region
    _
  $region77: #{text_forward.1} parent=0 // pred_fallthru
    _
  // Predicated region
  $region78: #{text_forward.1} parent=0 // pred_check
    _
  $region79: #{text_forward.1} parent=0 // pred_check_branch
    %67 = sbr.rel (0) target = $region81
  $region80: #{text_forward.1} parent=0 // pred_region
    _
  $region81: #{text_forward.1} parent=0 // pred_fallthru
    _
  // Predicated region
  $region82: #{text_forward.1} parent=0 // pred_check
    _
  $region83: #{text_forward.1} parent=0 // pred_check_branch
    %69 = sbr.rel (0) target = $region85
  $region84: #{text_forward.1} parent=0 // pred_region
    _
  $region85: #{text_forward.1} parent=0 // pred_fallthru
    _
  // Predicated region
  $region86: #{text_forward.1} parent=0 // pred_check
    _
  $region87: #{text_forward.1} parent=0 // pred_check_branch
    %71 = sbr.rel (0) target = $region89
  $region88: #{text_forward.1} parent=0 // pred_region
    _
  $region89: #{text_forward.1} parent=0 // pred_fallthru
    _
  // Predicated region
  $region90: #{text_forward.1} parent=0 // pred_check
    _
  $region91: #{text_forward.1} parent=0 // pred_check_branch
    %73 = sbr.rel (0) target = $region93
  $region92: #{text_forward.1} parent=0 // pred_region
    _
  $region93: #{text_forward.1} parent=0 // pred_fallthru
    _
  %v75 = vld [vmem:[%s0] sm:$0xff]
  %v76 = vld [vmem:[%s0 + $0x8] sm:$0x3f]
  %v77 = vlaneseq
  %v78 = vand.u32 %v77, 127
  %79 = vset.pattern.permute.xlu0 0
  %80 = vperm.xlu0 %79, %v75
  %v81 = vpop.permute.xlu0 %80
  %82 = vset.pattern.permute.xlu0 0
  %83 = vperm.xlu0 %82, %v76
  %v84 = vpop.permute.xlu0 %83
  %vm85 = vcmp.eq.s32.totalorder %v81, %v78
  %vm86 = vcmp.eq.s32.totalorder %v84, %v78
  %v87 = vsel %vm85, 1, 0
  %v88 = vsel %vm86, 1, 0
  %v89 = vcvt.s32.f32 %v87
  %v90 = vcvt.s32.f32 %v88
  %v91 = vld [vmem:[%s2] sm:$0xff]
  %v92 = vld [vmem:[%s2 + $0x8] sm:$0xff]
  %v93 = vld [vmem:[%s2 + $0x10] sm:$0xff]
  %v94 = vld [vmem:[%s2 + $0x18] sm:$0xff]
  %v95 = vld [vmem:[%s2 + $0x20] sm:$0xff]
  %v96 = vld [vmem:[%s2 + $0x28] sm:$0xff]
  %v97 = vld [vmem:[%s2 + $0x30] sm:$0xff]
  %v98 = vld [vmem:[%s2 + $0x38] sm:$0xff]
  %v99 = vld [vmem:[%s2 + $0x40] sm:$0xff]
  %v100 = vld [vmem:[%s2 + $0x48] sm:$0xff]
  %v101 = vld [vmem:[%s2 + $0x50] sm:$0xff]
  %v102 = vld [vmem:[%s2 + $0x58] sm:$0xff]
  %v103 = vld [vmem:[%s2 + $0x60] sm:$0xff]
  %v104 = vld [vmem:[%s2 + $0x68] sm:$0xff]
  %v105 = vld [vmem:[%s2 + $0x70] sm:$0xff]
  %v106 = vld [vmem:[%s2 + $0x78] sm:$0xff]
  %v107 = vld [vmem:[%s2 + $0x80] sm:$0xff]
  %v108 = vld [vmem:[%s2 + $0x88] sm:$0xff]
  %v109 = vld [vmem:[%s2 + $0x90] sm:$0xff]
  %v110 = vld [vmem:[%s2 + $0x98] sm:$0xff]
  %v111 = vld [vmem:[%s2 + $0xa0] sm:$0xff]
  %v112 = vld [vmem:[%s2 + $0xa8] sm:$0xff]
  %v113 = vld [vmem:[%s2 + $0xb0] sm:$0xff]
  %v114 = vld [vmem:[%s2 + $0xb8] sm:$0xff]
  %v115 = vld [vmem:[%s2 + $0xc0] sm:$0xff]
  %v116 = vld [vmem:[%s2 + $0xc8] sm:$0xff]
  %v117 = vld [vmem:[%s2 + $0xd0] sm:$0xff]
  %v118 = vld [vmem:[%s2 + $0xd8] sm:$0xff]
  %v119 = vld [vmem:[%s2 + $0xe0] sm:$0xff]
  %v120 = vld [vmem:[%s2 + $0xe8] sm:$0xff]
  %v121 = vld [vmem:[%s2 + $0xf0] sm:$0xff]
  %v122 = vld [vmem:[%s2 + $0xf8] sm:$0xff]
  %v123 = vld [vmem:[%s2 + $0x100] sm:$0xff]
  %v124 = vld [vmem:[%s2 + $0x108] sm:$0xff]
  %v125 = vld [vmem:[%s2 + $0x110] sm:$0xff]
  %v126 = vld [vmem:[%s2 + $0x118] sm:$0xff]
  %v127 = vld [vmem:[%s2 + $0x120] sm:$0xf]
  %v128 = vld [vmem:[%s2 + $0x128] sm:$0xf]
  %v129 = vld [vmem:[%s2 + $0x130] sm:$0xf]
  %vm130 = vcmask 818176
  %v132 = vsel %vm130, %v89, 0
  %v135 = vsel %vm130, %v90, 0
  %vm137 = vcmask 1043456
  %v139 = vsel %vm137, %v127, 0
  %v142 = vsel %vm137, %v128, 0
  %v145 = vsel %vm137, %v129, 0
  %147 = vmatprep.subr.mxu0 %v92
  %148 = vmatpush1.msra.mxu0 %v91
  %149 = vmatprep.subr.mxu0 %v95
  %150 = vmatpush1.msra.mxu0 %v94
  %151 = vmatprep.subr.mxu0 %v98
  %152 = vmatpush1.msra.mxu0 %v97
  %153 = vmatprep.subr.mxu0 %v101
  %154 = vmatpush1.msra.mxu0 %v100
  %155 = vmatprep.subr.mxu0 %v104
  %156 = vmatpush1.msra.mxu0 %v103
  %157 = vmatprep.subr.mxu0 %v107
  %158 = vmatpush1.msra.mxu0 %v106
  %159 = vmatprep.subr.mxu0 %v110
  %160 = vmatpush1.msra.mxu0 %v109
  %161 = vmatprep.subr.mxu0 %v113
  %162 = vmatpush1.msra.mxu0 %v112
  %163 = vmatprep.subr.mxu0 %v116
  %164 = vmatpush1.msra.mxu0 %v115
  %165 = vmatprep.subr.mxu0 %v119
  %166 = vmatpush1.msra.mxu0 %v118
  %167 = vmatprep.subr.mxu0 %v122
  %168 = vmatpush1.msra.mxu0 %v121
  %169 = vmatprep.subr.mxu0 %v125
  %170 = vmatpush1.msra.mxu0 %v124
  %171 = vmatprep.subr.mxu0 %v142
  %172 = vmatpush1.msra.mxu0 %v139
  %173 = vmatprep.subr.mxu0 0.0
  %174 = vmatpush1.msra.mxu0 0.0
  %175 = vmatprep.subr.mxu0 0.0
  %176 = vmatpush1.msra.mxu0 0.0
  %177 = vmatprep.subr.mxu0 0.0
  %178 = vmatpush1.msra.mxu0 0.0
  %179 = vmatprep.subr.mxu0 0.0
  %180 = vmatpush1.msra.mxu0 0.0
  %181 = vmatprep.subr.mxu0 0.0
  %182 = vmatpush1.msra.mxu0 0.0
  %183 = vmatprep.subr.mxu0 0.0
  %184 = vmatpush1.msra.mxu0 0.0
  %185 = vmatprep.subr.mxu0 0.0
  %186 = vmatpush1.msra.mxu0 0.0
  %187 = vmatprep.subr.mxu0 0.0
  %188 = vmatpush1.msra.mxu0 0.0
  %189 = vmatprep.subr.mxu0 0.0
  %190 = vmatpush1.msra.mxu0 0.0
  %191 = vmatprep.subr.mxu0 0.0
  %192 = vmatpush1.msra.mxu0 0.0
  %193 = vmatprep.subr.mxu0 0.0
  %194 = vmatpush1.msra.mxu0 0.0
  %195 = vmatprep.subr.mxu0 0.0
  %196 = vmatpush1.msra.mxu0 0.0
  %197 = vmatprep.subr.mxu0 0.0
  %198 = vmatpush1.msra.mxu0 0.0
  %199 = vmatprep.subr.mxu0 0.0
  %200 = vmatpush1.msra.mxu0 0.0
  %201 = vmatprep.subr.mxu0 0.0
  %202 = vmatpush1.msra.mxu0 0.0
  %203 = vmatprep.subr.mxu0 0.0
  %204 = vmatpush1.msra.mxu0 0.0
  %205 = vmatprep.subr.mxu0 0.0
  %206 = vmatpush1.msra.mxu0 0.0
  %207 = vmatprep.subr.mxu0 0.0
  %208 = vmatpush1.msra.mxu0 0.0
  %209 = vmatprep.subr.mxu0 0.0
  %210 = vmatpush1.msra.mxu0 0.0
  %211 = vmatprep.mubr.f32.mxu0 0.0
  %212 = vmatmul.mubr.f32.gmra.mrb[0].mxu0 %v132
  %v213 = vpop.f32.mrb[0].mxu0
  %v214 = vadd.f32 0.0, %v213
  %v215 = vpop.f32.mrb[0].mxu0
  %v216 = vadd.f32 0.0, %v215
  %217 = vmatprep.mubr.f32.mxu0 0.0
  %218 = vmatmul.mubr.f32.gmra.mrb[0].mxu0 %v135
  %v219 = vpop.f32.mrb[0].mxu0
  %v220 = vadd.f32 0.0, %v219
  %v221 = vpop.f32.mrb[0].mxu0
  %v222 = vadd.f32 0.0, %v221
  %223 = vdwg.mxu0
  %224 = vmatprep.subr.mxu0 0.0
  %225 = vmatpush1.msra.mxu0 %v93
  %226 = vmatprep.subr.mxu0 0.0
  %227 = vmatpush1.msra.mxu0 %v96
  %228 = vmatprep.subr.mxu0 0.0
  %229 = vmatpush1.msra.mxu0 %v99
  %230 = vmatprep.subr.mxu0 0.0
  %231 = vmatpush1.msra.mxu0 %v102
  %232 = vmatprep.subr.mxu0 0.0
  %233 = vmatpush1.msra.mxu0 %v105
  %234 = vmatprep.subr.mxu0 0.0
  %235 = vmatpush1.msra.mxu0 %v108
  %236 = vmatprep.subr.mxu0 0.0
  %237 = vmatpush1.msra.mxu0 %v111
  %238 = vmatprep.subr.mxu0 0.0
  %239 = vmatpush1.msra.mxu0 %v114
  %240 = vmatprep.subr.mxu0 0.0
  %241 = vmatpush1.msra.mxu0 %v117
  %242 = vmatprep.subr.mxu0 0.0
  %243 = vmatpush1.msra.mxu0 %v120
  %244 = vmatprep.subr.mxu0 0.0
  %245 = vmatpush1.msra.mxu0 %v123
  %246 = vmatprep.subr.mxu0 0.0
  %247 = vmatpush1.msra.mxu0 %v126
  %248 = vmatprep.subr.mxu0 0.0
  %249 = vmatpush1.msra.mxu0 %v145
  %250 = vmatprep.subr.mxu0 0.0
  %251 = vmatpush1.msra.mxu0 0.0
  %252 = vmatprep.subr.mxu0 0.0
  %253 = vmatpush1.msra.mxu0 0.0
  %254 = vmatprep.subr.mxu0 0.0
  %255 = vmatpush1.msra.mxu0 0.0
  %256 = vmatprep.subr.mxu0 0.0
  %257 = vmatpush1.msra.mxu0 0.0
  %258 = vmatprep.subr.mxu0 0.0
  %259 = vmatpush1.msra.mxu0 0.0
  %260 = vmatprep.subr.mxu0 0.0
  %261 = vmatpush1.msra.mxu0 0.0
  %262 = vmatprep.subr.mxu0 0.0
  %263 = vmatpush1.msra.mxu0 0.0
  %264 = vmatprep.subr.mxu0 0.0
  %265 = vmatpush1.msra.mxu0 0.0
  %266 = vmatprep.subr.mxu0 0.0
  %267 = vmatpush1.msra.mxu0 0.0
  %268 = vmatprep.subr.mxu0 0.0
  %269 = vmatpush1.msra.mxu0 0.0
  %270 = vmatprep.subr.mxu0 0.0
  %271 = vmatpush1.msra.mxu0 0.0
  %272 = vmatprep.subr.mxu0 0.0
  %273 = vmatpush1.msra.mxu0 0.0
  %274 = vmatprep.subr.mxu0 0.0
  %275 = vmatpush1.msra.mxu0 0.0
  %276 = vmatprep.subr.mxu0 0.0
  %277 = vmatpush1.msra.mxu0 0.0
  %278 = vmatprep.subr.mxu0 0.0
  %279 = vmatpush1.msra.mxu0 0.0
  %280 = vmatprep.subr.mxu0 0.0
  %281 = vmatpush1.msra.mxu0 0.0
  %282 = vmatprep.subr.mxu0 0.0
  %283 = vmatpush1.msra.mxu0 0.0
  %284 = vmatprep.subr.mxu0 0.0
  %285 = vmatpush1.msra.mxu0 0.0
  %286 = vmatprep.subr.mxu0 0.0
  %287 = vmatpush1.msra.mxu0 0.0
  %288 = vmatprep.mubr.f32.mxu0 0.0
  %289 = vmatmul.mubr.f32.gmra.mrb[0].mxu0 %v132
  %v290 = vpop.f32.mrb[0].mxu0
  %v291 = vadd.f32 0.0, %v290
  %v292 = vpop.f32.mrb[0].mxu0
  %293 = vmatprep.mubr.f32.mxu0 0.0
  %294 = vmatmul.mubr.f32.gmra.mrb[0].mxu0 %v135
  %v295 = vpop.f32.mrb[0].mxu0
  %v296 = vadd.f32 0.0, %v295
  %v297 = vpop.f32.mrb[0].mxu0
  %298 = vdwg.mxu0
  %v299 = vld [vmem:[%s1] sm:$0x1]
  %vm300 = vcmp.eq.s32.totalorder %v299, 99
  %v301 = vsel %vm300, -1e+30, 0.0
  %v302 = vld [vmem:[%s6] sm:$0xff]
  %v303 = vld [vmem:[%s6 + $0x8] sm:$0xff]
  %v304 = vld [vmem:[%s6 + $0x10] sm:$0xff]
  %v305 = vld [vmem:[%s6 + $0x18] sm:$0xff]
  %v306 = vld [vmem:[%s6 + $0x20] sm:$0xff]
  %v307 = vld [vmem:[%s6 + $0x28] sm:$0xff]
  %v308 = vld [vmem:[%s6 + $0x30] sm:$0xff]
  %v309 = vld [vmem:[%s6 + $0x38] sm:$0xff]
  %v310 = vld [vmem:[%s6 + $0x40] sm:$0xff]
  %v311 = vld [vmem:[%s6 + $0x48] sm:$0xff]
  %v312 = vld [vmem:[%s6 + $0x50] sm:$0xff]
  %v313 = vld [vmem:[%s6 + $0x58] sm:$0xff]
  %v314 = vld [vmem:[%s6 + $0x60] sm:$0xff]
  %v315 = vld [vmem:[%s6 + $0x68] sm:$0xff]
  %v316 = vld [vmem:[%s6 + $0x70] sm:$0xff]
  %v317 = vld [vmem:[%s6 + $0x78] sm:$0xff]
  %v318 = vld [vmem:[%s6 + $0x80] sm:$0xff]
  %v319 = vld [vmem:[%s6 + $0x88] sm:$0xff]
  %v320 = vld [vmem:[%s6 + $0x90] sm:$0xff]
  %v321 = vld [vmem:[%s6 + $0x98] sm:$0xff]
  %v322 = vld [vmem:[%s6 + $0xa0] sm:$0xff]
  %v323 = vld [vmem:[%s6 + $0xa8] sm:$0xff]
  %v324 = vld [vmem:[%s6 + $0xb0] sm:$0xff]
  %v325 = vld [vmem:[%s6 + $0xb8] sm:$0xff]
  %v326 = vld [vmem:[%s6 + $0xc0] sm:$0xff]
  %v327 = vld [vmem:[%s6 + $0xc8] sm:$0xff]
  %v328 = vld [vmem:[%s6 + $0xd0] sm:$0x3]
  %v330 = vlaneseq
  %v331 = vshrl.u32 %v330, 7
  %v332 = vsub.s32 0, %v331
  %v333 = vrot.slane %v301, %v332
  %v335 = vadd.f32 %v302, %v333
  %v336 = vadd.f32 %v303, %v333
  %v337 = vadd.f32 %v304, %v333
  %v338 = vadd.f32 %v305, %v333
  %v339 = vadd.f32 %v306, %v333
  %v340 = vadd.f32 %v307, %v333
  %v341 = vadd.f32 %v308, %v333
  %v342 = vadd.f32 %v309, %v333
  %v343 = vadd.f32 %v310, %v333
  %v344 = vadd.f32 %v311, %v333
  %v345 = vadd.f32 %v312, %v333
  %v346 = vadd.f32 %v313, %v333
  %v347 = vadd.f32 %v314, %v333
  %v348 = vadd.f32 %v315, %v333
  %v349 = vadd.f32 %v316, %v333
  %v350 = vadd.f32 %v317, %v333
  %v351 = vadd.f32 %v318, %v333
  %v352 = vadd.f32 %v319, %v333
  %v353 = vadd.f32 %v320, %v333
  %v354 = vadd.f32 %v321, %v333
  %v355 = vadd.f32 %v322, %v333
  %v356 = vadd.f32 %v323, %v333
  %v357 = vadd.f32 %v324, %v333
  %v358 = vadd.f32 %v325, %v333
  %v359 = vadd.f32 %v326, %v333
  %v360 = vadd.f32 %v327, %v333
  %v361 = vadd.f32 %v328, %v333
  %v362 = vpack.c.bf16 %v220, %v214
  %v363 = vpack.c.bf16 %v222, %v216
  %v364 = vpack.c.bf16 %v296, %v291
  %v365 = vld [vmem:[%s7] sm:$0xff]
  %v366 = vld [vmem:[%s7 + $0x8] sm:$0xf]
  %v367 = vld [vmem:[%s7 + $0xc] sm:$0xff]
  %v368 = vld [vmem:[%s7 + $0x14] sm:$0xf]
  %v369 = vld [vmem:[%s7 + $0x18] sm:$0xff]
  %v370 = vld [vmem:[%s7 + $0x20] sm:$0xf]
  %v371 = vld [vmem:[%s7 + $0x24] sm:$0xff]
  %v372 = vld [vmem:[%s7 + $0x2c] sm:$0xf]
  %v373 = vld [vmem:[%s7 + $0x30] sm:$0xff]
  %v374 = vld [vmem:[%s7 + $0x38] sm:$0xf]
  %v375 = vld [vmem:[%s7 + $0x3c] sm:$0xff]
  %v376 = vld [vmem:[%s7 + $0x44] sm:$0xf]
  %v377 = vld [vmem:[%s7 + $0x48] sm:$0xff]
  %v378 = vld [vmem:[%s7 + $0x50] sm:$0xf]
  %v379 = vld [vmem:[%s7 + $0x54] sm:$0xff]
  %v380 = vld [vmem:[%s7 + $0x5c] sm:$0xf]
  %v381 = vld [vmem:[%s7 + $0x60] sm:$0xff]
  %v382 = vld [vmem:[%s7 + $0x68] sm:$0xf]
  %v383 = vld [vmem:[%s7 + $0x6c] sm:$0xff]
  %v384 = vld [vmem:[%s7 + $0x74] sm:$0xf]
  %v385 = vld [vmem:[%s7 + $0x78] sm:$0xff]
  %v386 = vld [vmem:[%s7 + $0x80] sm:$0xf]
  %v387 = vld [vmem:[%s7 + $0x84] sm:$0xff]
  %v388 = vld [vmem:[%s7 + $0x8c] sm:$0xf]
  %v389 = vld [vmem:[%s7 + $0x90] sm:$0xff]
  %v390 = vld [vmem:[%s7 + $0x98] sm:$0xf]
  %v391 = vld [vmem:[%s7 + $0x9c] sm:$0xff]
  %v392 = vld [vmem:[%s7 + $0xa4] sm:$0xf]
  %v393 = vld [vmem:[%s7 + $0xa8] sm:$0xff]
  %v394 = vld [vmem:[%s7 + $0xb0] sm:$0xf]
  %v395 = vld [vmem:[%s7 + $0xb4] sm:$0xff]
  %v396 = vld [vmem:[%s7 + $0xbc] sm:$0xf]
  %v397 = vld [vmem:[%s7 + $0xc0] sm:$0xff]
  %v398 = vld [vmem:[%s7 + $0xc8] sm:$0xf]
  %v399 = vld [vmem:[%s7 + $0xcc] sm:$0xff]
  %v400 = vld [vmem:[%s7 + $0xd4] sm:$0xf]
  %v401 = vld [vmem:[%s7 + $0xd8] sm:$0xff]
  %v402 = vld [vmem:[%s7 + $0xe0] sm:$0xf]
  %v403 = vld [vmem:[%s7 + $0xe4] sm:$0xff]
  %v404 = vld [vmem:[%s7 + $0xec] sm:$0xf]
  %v405 = vld [vmem:[%s7 + $0xf0] sm:$0xff]
  %v406 = vld [vmem:[%s7 + $0xf8] sm:$0xf]
  %v407 = vld [vmem:[%s7 + $0xfc] sm:$0xff]
  %v408 = vld [vmem:[%s7 + $0x104] sm:$0xf]
  %v409 = vld [vmem:[%s7 + $0x108] sm:$0xff]
  %v410 = vld [vmem:[%s7 + $0x110] sm:$0xf]
  %v411 = vld [vmem:[%s7 + $0x114] sm:$0xff]
  %v412 = vld [vmem:[%s7 + $0x11c] sm:$0xf]
  %v413 = vld [vmem:[%s7 + $0x120] sm:$0xff]
  %v414 = vld [vmem:[%s7 + $0x128] sm:$0xf]
  %v415 = vld [vmem:[%s7 + $0x12c] sm:$0xff]
  %v416 = vld [vmem:[%s7 + $0x134] sm:$0xf]
  %v417 = vld [vmem:[%s7 + $0x138] sm:$0xff]
  %v418 = vld [vmem:[%s7 + $0x140] sm:$0xf]
  %v419 = vld [vmem:[%s7 + $0x144] sm:$0xff]
  %v420 = vld [vmem:[%s7 + $0x14c] sm:$0xf]
  %v421 = vld [vmem:[%s7 + $0x150] sm:$0xff]
  %v422 = vld [vmem:[%s7 + $0x158] sm:$0xf]
  %v423 = vld [vmem:[%s7 + $0x15c] sm:$0xff]
  %v424 = vld [vmem:[%s7 + $0x164] sm:$0xf]
  %v425 = vld [vmem:[%s7 + $0x168] sm:$0xff]
  %v426 = vld [vmem:[%s7 + $0x170] sm:$0xf]
  %v427 = vld [vmem:[%s7 + $0x174] sm:$0xff]
  %v428 = vld [vmem:[%s7 + $0x17c] sm:$0xf]
  %v429 = vld [vmem:[%s7 + $0x180] sm:$0xff]
  %v430 = vld [vmem:[%s7 + $0x188] sm:$0xf]
  %v431 = vld [vmem:[%s7 + $0x18c] sm:$0xff]
  %v432 = vld [vmem:[%s7 + $0x194] sm:$0xf]
  %v433 = vld [vmem:[%s7 + $0x198] sm:$0xff]
  %v434 = vld [vmem:[%s7 + $0x1a0] sm:$0xf]
  %v435 = vld [vmem:[%s7 + $0x1a4] sm:$0xff]
  %v436 = vld [vmem:[%s7 + $0x1ac] sm:$0xf]
  %v437 = vld [vmem:[%s7 + $0x1b0] sm:$0xff]
  %v438 = vld [vmem:[%s7 + $0x1b8] sm:$0xf]
  %v439 = vld [vmem:[%s7 + $0x1bc] sm:$0x33]
  %v440 = vld [vmem:[%s7 + $0x1c4] sm:$0x3]
  %v441 = vld [vmem:[%s10] sm:$0x7]
  %v443 = vlaneseq
  %v444 = vshrl.u32 %v443, 7
  %v445 = vsub.s32 0, %v444
  %v446 = vrot.slane %v441, %v445
  %v447 = vlaneseq
  %v448 = vshrl.u32 %v447, 7
  %v449 = vsub.s32 1, %v448
  %v450 = vrot.slane %v441, %v449
  %v451 = vlaneseq
  %v452 = vshrl.u32 %v451, 7
  %v453 = vsub.s32 2, %v452
  %v454 = vrot.slane %v441, %v453
  %v534 = vunpack.c.l.b16 %v365
  %v535 = vunpack.c.h.b16 %v365
  %v536 = vunpack.c.l.b16 %v366
  %v537 = vunpack.c.l.b16 %v367
  %v538 = vunpack.c.h.b16 %v367
  %v539 = vunpack.c.l.b16 %v368
  %v540 = vunpack.c.l.b16 %v369
  %v541 = vunpack.c.h.b16 %v369
  %v542 = vunpack.c.l.b16 %v370
  %v543 = vunpack.c.l.b16 %v371
  %v544 = vunpack.c.h.b16 %v371
  %v545 = vunpack.c.l.b16 %v372
  %v546 = vunpack.c.l.b16 %v373
  %v547 = vunpack.c.h.b16 %v373
  %v548 = vunpack.c.l.b16 %v374
  %v549 = vunpack.c.l.b16 %v375
  %v550 = vunpack.c.h.b16 %v375
  %v551 = vunpack.c.l.b16 %v376
  %v552 = vunpack.c.l.b16 %v377
  %v553 = vunpack.c.h.b16 %v377
  %v554 = vunpack.c.l.b16 %v378
  %v555 = vunpack.c.l.b16 %v379
  %v556 = vunpack.c.h.b16 %v379
  %v557 = vunpack.c.l.b16 %v380
  %v558 = vunpack.c.l.b16 %v381
  %v559 = vunpack.c.h.b16 %v381
  %v560 = vunpack.c.l.b16 %v382
  %v561 = vunpack.c.l.b16 %v383
  %v562 = vunpack.c.h.b16 %v383
  %v563 = vunpack.c.l.b16 %v384
  %v564 = vunpack.c.l.b16 %v385
  %v565 = vunpack.c.h.b16 %v385
  %v566 = vunpack.c.l.b16 %v386
  %v567 = vunpack.c.l.b16 %v387
  %v568 = vunpack.c.h.b16 %v387
  %v569 = vunpack.c.l.b16 %v388
  %v570 = vunpack.c.l.b16 %v389
  %v571 = vunpack.c.h.b16 %v389
  %v572 = vunpack.c.l.b16 %v390
  %v573 = vunpack.c.l.b16 %v391
  %v574 = vunpack.c.h.b16 %v391
  %v575 = vunpack.c.l.b16 %v392
  %v576 = vunpack.c.l.b16 %v393
  %v577 = vunpack.c.h.b16 %v393
  %v578 = vunpack.c.l.b16 %v394
  %v579 = vunpack.c.l.b16 %v395
  %v580 = vunpack.c.h.b16 %v395
  %v581 = vunpack.c.l.b16 %v396
  %v582 = vunpack.c.l.b16 %v397
  %v583 = vunpack.c.h.b16 %v397
  %v584 = vunpack.c.l.b16 %v398
  %v585 = vunpack.c.l.b16 %v399
  %v586 = vunpack.c.h.b16 %v399
  %v587 = vunpack.c.l.b16 %v400
  %v588 = vunpack.c.l.b16 %v401
  %v589 = vunpack.c.h.b16 %v401
  %v590 = vunpack.c.l.b16 %v402
  %v591 = vunpack.c.l.b16 %v403
  %v592 = vunpack.c.h.b16 %v403
  %v593 = vunpack.c.l.b16 %v404
  %v594 = vunpack.c.l.b16 %v405
  %v595 = vunpack.c.h.b16 %v405
  %v596 = vunpack.c.l.b16 %v406
  %v597 = vunpack.c.l.b16 %v407
  %v598 = vunpack.c.h.b16 %v407
  %v599 = vunpack.c.l.b16 %v408
  %v600 = vunpack.c.l.b16 %v409
  %v601 = vunpack.c.h.b16 %v409
  %v602 = vunpack.c.l.b16 %v410
  %v603 = vunpack.c.l.b16 %v411
  %v604 = vunpack.c.h.b16 %v411
  %v605 = vunpack.c.l.b16 %v412
  %v606 = vunpack.c.l.b16 %v413
  %v607 = vunpack.c.h.b16 %v413
  %v608 = vunpack.c.l.b16 %v414
  %v609 = vunpack.c.l.b16 %v415
  %v610 = vunpack.c.h.b16 %v415
  %v611 = vunpack.c.l.b16 %v416
  %v612 = vunpack.c.l.b16 %v417
  %v613 = vunpack.c.h.b16 %v417
  %v614 = vunpack.c.l.b16 %v418
  %v615 = vunpack.c.l.b16 %v419
  %v616 = vunpack.c.h.b16 %v419
  %v617 = vunpack.c.l.b16 %v420
  %v618 = vunpack.c.l.b16 %v421
  %v619 = vunpack.c.h.b16 %v421
  %v620 = vunpack.c.l.b16 %v422
  %v621 = vunpack.c.l.b16 %v423
  %v622 = vunpack.c.h.b16 %v423
  %v623 = vunpack.c.l.b16 %v424
  %v624 = vunpack.c.l.b16 %v425
  %v625 = vunpack.c.h.b16 %v425
  %v626 = vunpack.c.l.b16 %v426
  %v627 = vunpack.c.l.b16 %v427
  %v628 = vunpack.c.h.b16 %v427
  %v629 = vunpack.c.l.b16 %v428
  %v630 = vunpack.c.l.b16 %v429
  %v631 = vunpack.c.h.b16 %v429
  %v632 = vunpack.c.l.b16 %v430
  %v633 = vunpack.c.l.b16 %v431
  %v634 = vunpack.c.h.b16 %v431
  %v635 = vunpack.c.l.b16 %v432
  %v636 = vunpack.c.l.b16 %v433
  %v637 = vunpack.c.h.b16 %v433
  %v638 = vunpack.c.l.b16 %v434
  %v639 = vunpack.c.l.b16 %v435
  %v640 = vunpack.c.h.b16 %v435
  %v641 = vunpack.c.l.b16 %v436
  %v642 = vunpack.c.l.b16 %v437
  %v643 = vunpack.c.h.b16 %v437
  %v644 = vunpack.c.l.b16 %v438
  %v645 = vunpack.c.l.b16 %v439
  %v646 = vunpack.c.h.b16 %v439
  %v647 = vunpack.c.l.b16 %v440
  %v648 = vpack.c.b16 %v537, %v534
  %v649 = vpack.c.b16 %v538, %v535
  %v650 = vpack.c.b16 %v539, %v536
  %v651 = vpack.c.b16 %v543, %v540
  %v652 = vpack.c.b16 %v544, %v541
  %v653 = vpack.c.b16 %v545, %v542
  %v654 = vpack.c.b16 %v549, %v546
  %v655 = vpack.c.b16 %v550, %v547
  %v656 = vpack.c.b16 %v551, %v548
  %v657 = vpack.c.b16 %v555, %v552
  %v658 = vpack.c.b16 %v556, %v553
  %v659 = vpack.c.b16 %v557, %v554
  %v660 = vpack.c.b16 %v561, %v558
  %v661 = vpack.c.b16 %v562, %v559
  %v662 = vpack.c.b16 %v563, %v560
  %v663 = vpack.c.b16 %v567, %v564
  %v664 = vpack.c.b16 %v568, %v565
  %v665 = vpack.c.b16 %v569, %v566
  %v666 = vpack.c.b16 %v573, %v570
  %v667 = vpack.c.b16 %v574, %v571
  %v668 = vpack.c.b16 %v575, %v572
  %v669 = vpack.c.b16 %v579, %v576
  %v670 = vpack.c.b16 %v580, %v577
  %v671 = vpack.c.b16 %v581, %v578
  %v672 = vpack.c.b16 %v585, %v582
  %v673 = vpack.c.b16 %v586, %v583
  %v674 = vpack.c.b16 %v587, %v584
  %v675 = vpack.c.b16 %v591, %v588
  %v676 = vpack.c.b16 %v592, %v589
  %v677 = vpack.c.b16 %v593, %v590
  %v678 = vpack.c.b16 %v597, %v594
  %v679 = vpack.c.b16 %v598, %v595
  %v680 = vpack.c.b16 %v599, %v596
  %v681 = vpack.c.b16 %v603, %v600
  %v682 = vpack.c.b16 %v604, %v601
  %v683 = vpack.c.b16 %v605, %v602
  %v684 = vpack.c.b16 %v609, %v606
  %v685 = vpack.c.b16 %v610, %v607
  %v686 = vpack.c.b16 %v611, %v608
  %v687 = vpack.c.b16 %v615, %v612
  %v688 = vpack.c.b16 %v616, %v613
  %v689 = vpack.c.b16 %v617, %v614
  %v690 = vpack.c.b16 %v621, %v618
  %v691 = vpack.c.b16 %v622, %v619
  %v692 = vpack.c.b16 %v623, %v620
  %v693 = vpack.c.b16 %v627, %v624
  %v694 = vpack.c.b16 %v628, %v625
  %v695 = vpack.c.b16 %v629, %v626
  %v696 = vpack.c.b16 %v633, %v630
  %v697 = vpack.c.b16 %v634, %v631
  %v698 = vpack.c.b16 %v635, %v632
  %v699 = vpack.c.b16 %v639, %v636
  %v700 = vpack.c.b16 %v640, %v637
  %v701 = vpack.c.b16 %v641, %v638
  %v702 = vpack.c.b16 %v645, %v642
  %v703 = vpack.c.b16 %v646, %v643
  %v704 = vpack.c.b16 %v647, %v644
  %vm759 = vcmask 359424
  %v761 = vsel %vm759, %v364, 0
  %vm763 = vcmask 1045504
  %v765 = vsel %vm763, %v702, 0
  %v768 = vsel %vm763, %v703, 0
  %v771 = vsel %vm763, %v704, 0
  %773 = vmatprep.subr.bf16.mxu0 %v649
  %774 = vmatpush1.bf16.msra.mxu0 %v648
  %775 = vmatprep.subr.bf16.mxu0 %v652
  %776 = vmatpush1.bf16.msra.mxu0 %v651
  %777 = vmatprep.subr.bf16.mxu0 %v655
  %778 = vmatpush1.bf16.msra.mxu0 %v654
  %779 = vmatprep.subr.bf16.mxu0 %v658
  %780 = vmatpush1.bf16.msra.mxu0 %v657
  %781 = vmatprep.subr.bf16.mxu0 %v661
  %782 = vmatpush1.bf16.msra.mxu0 %v660
  %783 = vmatprep.subr.bf16.mxu0 %v664
  %784 = vmatpush1.bf16.msra.mxu0 %v663
  %785 = vmatprep.subr.bf16.mxu0 %v667
  %786 = vmatpush1.bf16.msra.mxu0 %v666
  %787 = vmatprep.subr.bf16.mxu0 %v670
  %788 = vmatpush1.bf16.msra.mxu0 %v669
  %789 = vmatprep.subr.bf16.mxu0 %v673
  %790 = vmatpush1.bf16.msra.mxu0 %v672
  %791 = vmatprep.subr.bf16.mxu0 %v676
  %792 = vmatpush1.bf16.msra.mxu0 %v675
  %793 = vmatprep.subr.bf16.mxu0 %v679
  %794 = vmatpush1.bf16.msra.mxu0 %v678
  %795 = vmatprep.subr.bf16.mxu0 %v682
  %796 = vmatpush1.bf16.msra.mxu0 %v681
  %797 = vmatprep.subr.bf16.mxu0 %v685
  %798 = vmatpush1.bf16.msra.mxu0 %v684
  %799 = vmatprep.subr.bf16.mxu0 %v688
  %800 = vmatpush1.bf16.msra.mxu0 %v687
  %801 = vmatprep.subr.bf16.mxu0 %v691
  %802 = vmatpush1.bf16.msra.mxu0 %v690
  %803 = vmatprep.subr.bf16.mxu0 %v694
  %804 = vmatpush1.bf16.msra.mxu0 %v693
  %805 = vmatprep.mubr.bf16.mxu0 %v363
  %806 = vmatmul.mubr.bf16.gmra.mrb[0].mxu0 %v362
  %v807 = vpop.f32.mrb[0].mxu0
  %v808 = vadd.f32 %v446, %v807
  %v809 = vpop.f32.mrb[0].mxu0
  %v810 = vadd.f32 %v450, %v809
  %v811 = vpop.f32.mrb[0].mxu0
  %v812 = vadd.f32 %v446, %v811
  %v813 = vpop.f32.mrb[0].mxu0
  %v814 = vadd.f32 %v450, %v813
  %815 = vdwg.mxu0
  %816 = vmatprep.subr.bf16.mxu0 %v697
  %817 = vmatpush1.bf16.msra.mxu0 %v696
  %818 = vmatprep.subr.bf16.mxu0 %v700
  %819 = vmatpush1.bf16.msra.mxu0 %v699
  %820 = vmatprep.subr.bf16.mxu0 %v768
  %821 = vmatpush1.bf16.msra.mxu0 %v765
  %822 = vmatprep.subr.bf16.mxu0 0
  %823 = vmatpush1.bf16.msra.mxu0 0
  %824 = vmatprep.subr.bf16.mxu0 0
  %825 = vmatpush1.bf16.msra.mxu0 0
  %826 = vmatprep.subr.bf16.mxu0 0
  %827 = vmatpush1.bf16.msra.mxu0 0
  %828 = vmatprep.subr.bf16.mxu0 0
  %829 = vmatpush1.bf16.msra.mxu0 0
  %830 = vmatprep.subr.bf16.mxu0 0
  %831 = vmatpush1.bf16.msra.mxu0 0
  %832 = vmatprep.subr.bf16.mxu0 0
  %833 = vmatpush1.bf16.msra.mxu0 0
  %834 = vmatprep.subr.bf16.mxu0 0
  %835 = vmatpush1.bf16.msra.mxu0 0
  %836 = vmatprep.subr.bf16.mxu0 0
  %837 = vmatpush1.bf16.msra.mxu0 0
  %838 = vmatprep.subr.bf16.mxu0 0
  %839 = vmatpush1.bf16.msra.mxu0 0
  %840 = vmatprep.subr.bf16.mxu0 0
  %841 = vmatpush1.bf16.msra.mxu0 0
  %842 = vmatprep.subr.bf16.mxu0 0
  %843 = vmatpush1.bf16.msra.mxu0 0
  %844 = vmatprep.subr.bf16.mxu0 0
  %845 = vmatpush1.bf16.msra.mxu0 0
  %846 = vmatprep.subr.bf16.mxu0 0
  %847 = vmatpush1.bf16.msra.mxu0 0
  %848 = vmatprep.mubr.bf16.mxu0 0
  %849 = vmatmul.mubr.bf16.gmra.mrb[0].mxu0 %v761
  %v850 = vpop.f32.mrb[0].mxu0
  %v851 = vadd.f32 %v808, %v850
  %v852 = vpop.f32.mrb[0].mxu0
  %v853 = vadd.f32 %v810, %v852
  %v854 = vpop.f32.mrb[0].mxu0
  %v855 = vadd.f32 %v812, %v854
  %v856 = vpop.f32.mrb[0].mxu0
  %v857 = vadd.f32 %v814, %v856
  %858 = vdwg.mxu0
  %859 = vmatprep.subr.bf16.mxu0 0
  %860 = vmatpush1.bf16.msra.mxu0 %v650
  %861 = vmatprep.subr.bf16.mxu0 0
  %862 = vmatpush1.bf16.msra.mxu0 %v653
  %863 = vmatprep.subr.bf16.mxu0 0
  %864 = vmatpush1.bf16.msra.mxu0 %v656
  %865 = vmatprep.subr.bf16.mxu0 0
  %866 = vmatpush1.bf16.msra.mxu0 %v659
  %867 = vmatprep.subr.bf16.mxu0 0
  %868 = vmatpush1.bf16.msra.mxu0 %v662
  %869 = vmatprep.subr.bf16.mxu0 0
  %870 = vmatpush1.bf16.msra.mxu0 %v665
  %871 = vmatprep.subr.bf16.mxu0 0
  %872 = vmatpush1.bf16.msra.mxu0 %v668
  %873 = vmatprep.subr.bf16.mxu0 0
  %874 = vmatpush1.bf16.msra.mxu0 %v671
  %875 = vmatprep.subr.bf16.mxu0 0
  %876 = vmatpush1.bf16.msra.mxu0 %v674
  %877 = vmatprep.subr.bf16.mxu0 0
  %878 = vmatpush1.bf16.msra.mxu0 %v677
  %879 = vmatprep.subr.bf16.mxu0 0
  %880 = vmatpush1.bf16.msra.mxu0 %v680
  %881 = vmatprep.subr.bf16.mxu0 0
  %882 = vmatpush1.bf16.msra.mxu0 %v683
  %883 = vmatprep.subr.bf16.mxu0 0
  %884 = vmatpush1.bf16.msra.mxu0 %v686
  %885 = vmatprep.subr.bf16.mxu0 0
  %886 = vmatpush1.bf16.msra.mxu0 %v689
  %887 = vmatprep.subr.bf16.mxu0 0
  %888 = vmatpush1.bf16.msra.mxu0 %v692
  %889 = vmatprep.subr.bf16.mxu0 0
  %890 = vmatpush1.bf16.msra.mxu0 %v695
  %891 = vmatprep.mubr.bf16.mxu0 %v363
  %892 = vmatmul.mubr.bf16.gmra.mrb[0].mxu0 %v362
  %v893 = vpop.f32.mrb[0].mxu0
  %v894 = vadd.f32 %v454, %v893
  %v895 = vpop.f32.mrb[0].mxu0
  %v896 = vpop.f32.mrb[0].mxu0
  %v897 = vadd.f32 %v454, %v896
  %v898 = vpop.f32.mrb[0].mxu0
  %899 = vdwg.mxu0
  %900 = vmatprep.subr.bf16.mxu0 0
  %901 = vmatpush1.bf16.msra.mxu0 %v698
  %902 = vmatprep.subr.bf16.mxu0 0
  %903 = vmatpush1.bf16.msra.mxu0 %v701
  %904 = vmatprep.subr.bf16.mxu0 0
  %905 = vmatpush1.bf16.msra.mxu0 %v771
  %906 = vmatprep.subr.bf16.mxu0 0
  %907 = vmatpush1.bf16.msra.mxu0 0
  %908 = vmatprep.subr.bf16.mxu0 0
  %909 = vmatpush1.bf16.msra.mxu0 0
  %910 = vmatprep.subr.bf16.mxu0 0
  %911 = vmatpush1.bf16.msra.mxu0 0
  %912 = vmatprep.subr.bf16.mxu0 0
  %913 = vmatpush1.bf16.msra.mxu0 0
  %914 = vmatprep.subr.bf16.mxu0 0
  %915 = vmatpush1.bf16.msra.mxu0 0
  %916 = vmatprep.subr.bf16.mxu0 0
  %917 = vmatpush1.bf16.msra.mxu0 0
  %918 = vmatprep.subr.bf16.mxu0 0
  %919 = vmatpush1.bf16.msra.mxu0 0
  %920 = vmatprep.subr.bf16.mxu0 0
  %921 = vmatpush1.bf16.msra.mxu0 0
  %922 = vmatprep.subr.bf16.mxu0 0
  %923 = vmatpush1.bf16.msra.mxu0 0
  %924 = vmatprep.subr.bf16.mxu0 0
  %925 = vmatpush1.bf16.msra.mxu0 0
  %926 = vmatprep.subr.bf16.mxu0 0
  %927 = vmatpush1.bf16.msra.mxu0 0
  %928 = vmatprep.subr.bf16.mxu0 0
  %929 = vmatpush1.bf16.msra.mxu0 0
  %930 = vmatprep.subr.bf16.mxu0 0
  %931 = vmatpush1.bf16.msra.mxu0 0
  %932 = vmatprep.mubr.bf16.mxu0 0
  %933 = vmatmul.mubr.bf16.gmra.mrb[0].mxu0 %v761
  %v934 = vpop.f32.mrb[0].mxu0
  %v935 = vadd.f32 %v894, %v934
  %v936 = vpop.f32.mrb[0].mxu0
  %v937 = vpop.f32.mrb[0].mxu0
  %v938 = vadd.f32 %v897, %v937
  %v939 = vpop.f32.mrb[0].mxu0
  %940 = vdwg.mxu0
  %v941 = vld [vmem:[%s8] sm:$0xff]
  %v942 = vld [vmem:[%s8 + $0x8] sm:$0xf]
  %v943 = vld [vmem:[%s8 + $0xc] sm:$0xff]
  %v944 = vld [vmem:[%s8 + $0x14] sm:$0xf]
  %v945 = vld [vmem:[%s8 + $0x18] sm:$0xff]
  %v946 = vld [vmem:[%s8 + $0x20] sm:$0xf]
  %v947 = vld [vmem:[%s8 + $0x24] sm:$0xff]
  %v948 = vld [vmem:[%s8 + $0x2c] sm:$0xf]
  %v949 = vld [vmem:[%s8 + $0x30] sm:$0xff]
  %v950 = vld [vmem:[%s8 + $0x38] sm:$0xf]
  %v951 = vld [vmem:[%s8 + $0x3c] sm:$0xff]
  %v952 = vld [vmem:[%s8 + $0x44] sm:$0xf]
  %v953 = vld [vmem:[%s8 + $0x48] sm:$0xff]
  %v954 = vld [vmem:[%s8 + $0x50] sm:$0xf]
  %v955 = vld [vmem:[%s8 + $0x54] sm:$0xff]
  %v956 = vld [vmem:[%s8 + $0x5c] sm:$0xf]
  %v957 = vld [vmem:[%s8 + $0x60] sm:$0xff]
  %v958 = vld [vmem:[%s8 + $0x68] sm:$0xf]
  %v959 = vld [vmem:[%s8 + $0x6c] sm:$0xff]
  %v960 = vld [vmem:[%s8 + $0x74] sm:$0xf]
  %v961 = vld [vmem:[%s8 + $0x78] sm:$0xff]
  %v962 = vld [vmem:[%s8 + $0x80] sm:$0xf]
  %v963 = vld [vmem:[%s8 + $0x84] sm:$0xff]
  %v964 = vld [vmem:[%s8 + $0x8c] sm:$0xf]
  %v965 = vld [vmem:[%s8 + $0x90] sm:$0xff]
  %v966 = vld [vmem:[%s8 + $0x98] sm:$0xf]
  %v967 = vld [vmem:[%s8 + $0x9c] sm:$0xff]
  %v968 = vld [vmem:[%s8 + $0xa4] sm:$0xf]
  %v969 = vld [vmem:[%s8 + $0xa8] sm:$0xff]
  %v970 = vld [vmem:[%s8 + $0xb0] sm:$0xf]
  %v971 = vld [vmem:[%s8 + $0xb4] sm:$0xff]
  %v972 = vld [vmem:[%s8 + $0xbc] sm:$0xf]
  %v973 = vld [vmem:[%s8 + $0xc0] sm:$0xff]
  %v974 = vld [vmem:[%s8 + $0xc8] sm:$0xf]
  %v975 = vld [vmem:[%s8 + $0xcc] sm:$0xff]
  %v976 = vld [vmem:[%s8 + $0xd4] sm:$0xf]
  %v977 = vld [vmem:[%s8 + $0xd8] sm:$0xff]
  %v978 = vld [vmem:[%s8 + $0xe0] sm:$0xf]
  %v979 = vld [vmem:[%s8 + $0xe4] sm:$0xff]
  %v980 = vld [vmem:[%s8 + $0xec] sm:$0xf]
  %v981 = vld [vmem:[%s8 + $0xf0] sm:$0xff]
  %v982 = vld [vmem:[%s8 + $0xf8] sm:$0xf]
  %v983 = vld [vmem:[%s8 + $0xfc] sm:$0xff]
  %v984 = vld [vmem:[%s8 + $0x104] sm:$0xf]
  %v985 = vld [vmem:[%s8 + $0x108] sm:$0xff]
  %v986 = vld [vmem:[%s8 + $0x110] sm:$0xf]
  %v987 = vld [vmem:[%s8 + $0x114] sm:$0xff]
  %v988 = vld [vmem:[%s8 + $0x11c] sm:$0xf]
  %v989 = vld [vmem:[%s8 + $0x120] sm:$0xff]
  %v990 = vld [vmem:[%s8 + $0x128] sm:$0xf]
  %v991 = vld [vmem:[%s8 + $0x12c] sm:$0xff]
  %v992 = vld [vmem:[%s8 + $0x134] sm:$0xf]
  %v993 = vld [vmem:[%s8 + $0x138] sm:$0xff]
  %v994 = vld [vmem:[%s8 + $0x140] sm:$0xf]
  %v995 = vld [vmem:[%s8 + $0x144] sm:$0xff]
  %v996 = vld [vmem:[%s8 + $0x14c] sm:$0xf]
  %v997 = vld [vmem:[%s8 + $0x150] sm:$0xff]
  %v998 = vld [vmem:[%s8 + $0x158] sm:$0xf]
  %v999 = vld [vmem:[%s8 + $0x15c] sm:$0xff]
  %v1000 = vld [vmem:[%s8 + $0x164] sm:$0xf]
  %v1001 = vld [vmem:[%s8 + $0x168] sm:$0xff]
  %v1002 = vld [vmem:[%s8 + $0x170] sm:$0xf]
  %v1003 = vld [vmem:[%s8 + $0x174] sm:$0xff]
  %v1004 = vld [vmem:[%s8 + $0x17c] sm:$0xf]
  %v1005 = vld [vmem:[%s8 + $0x180] sm:$0xff]
  %v1006 = vld [vmem:[%s8 + $0x188] sm:$0xf]
  %v1007 = vld [vmem:[%s8 + $0x18c] sm:$0xff]
  %v1008 = vld [vmem:[%s8 + $0x194] sm:$0xf]
  %v1009 = vld [vmem:[%s8 + $0x198] sm:$0xff]
  %v1010 = vld [vmem:[%s8 + $0x1a0] sm:$0xf]
  %v1011 = vld [vmem:[%s8 + $0x1a4] sm:$0xff]
  %v1012 = vld [vmem:[%s8 + $0x1ac] sm:$0xf]
  %v1013 = vld [vmem:[%s8 + $0x1b0] sm:$0xff]
  %v1014 = vld [vmem:[%s8 + $0x1b8] sm:$0xf]
  %v1015 = vld [vmem:[%s8 + $0x1bc] sm:$0x33]
  %v1016 = vld [vmem:[%s8 + $0x1c4] sm:$0x3]
  %v1017 = vld [vmem:[%s11] sm:$0x7]
  %v1019 = vlaneseq
  %v1020 = vshrl.u32 %v1019, 7
  %v1021 = vsub.s32 0, %v1020
  %v1022 = vrot.slane %v1017, %v1021
  %v1023 = vlaneseq
  %v1024 = vshrl.u32 %v1023, 7
  %v1025 = vsub.s32 1, %v1024
  %v1026 = vrot.slane %v1017, %v1025
  %v1027 = vlaneseq
  %v1028 = vshrl.u32 %v1027, 7
  %v1029 = vsub.s32 2, %v1028
  %v1030 = vrot.slane %v1017, %v1029
  %v1110 = vunpack.c.l.b16 %v941
  %v1111 = vunpack.c.h.b16 %v941
  %v1112 = vunpack.c.l.b16 %v942
  %v1113 = vunpack.c.l.b16 %v943
  %v1114 = vunpack.c.h.b16 %v943
  %v1115 = vunpack.c.l.b16 %v944
  %v1116 = vunpack.c.l.b16 %v945
  %v1117 = vunpack.c.h.b16 %v945
  %v1118 = vunpack.c.l.b16 %v946
  %v1119 = vunpack.c.l.b16 %v947
  %v1120 = vunpack.c.h.b16 %v947
  %v1121 = vunpack.c.l.b16 %v948
  %v1122 = vunpack.c.l.b16 %v949
  %v1123 = vunpack.c.h.b16 %v949
  %v1124 = vunpack.c.l.b16 %v950
  %v1125 = vunpack.c.l.b16 %v951
  %v1126 = vunpack.c.h.b16 %v951
  %v1127 = vunpack.c.l.b16 %v952
  %v1128 = vunpack.c.l.b16 %v953
  %v1129 = vunpack.c.h.b16 %v953
  %v1130 = vunpack.c.l.b16 %v954
  %v1131 = vunpack.c.l.b16 %v955
  %v1132 = vunpack.c.h.b16 %v955
  %v1133 = vunpack.c.l.b16 %v956
  %v1134 = vunpack.c.l.b16 %v957
  %v1135 = vunpack.c.h.b16 %v957
  %v1136 = vunpack.c.l.b16 %v958
  %v1137 = vunpack.c.l.b16 %v959
  %v1138 = vunpack.c.h.b16 %v959
  %v1139 = vunpack.c.l.b16 %v960
  %v1140 = vunpack.c.l.b16 %v961
  %v1141 = vunpack.c.h.b16 %v961
  %v1142 = vunpack.c.l.b16 %v962
  %v1143 = vunpack.c.l.b16 %v963
  %v1144 = vunpack.c.h.b16 %v963
  %v1145 = vunpack.c.l.b16 %v964
  %v1146 = vunpack.c.l.b16 %v965
  %v1147 = vunpack.c.h.b16 %v965
  %v1148 = vunpack.c.l.b16 %v966
  %v1149 = vunpack.c.l.b16 %v967
  %v1150 = vunpack.c.h.b16 %v967
  %v1151 = vunpack.c.l.b16 %v968
  %v1152 = vunpack.c.l.b16 %v969
  %v1153 = vunpack.c.h.b16 %v969
  %v1154 = vunpack.c.l.b16 %v970
  %v1155 = vunpack.c.l.b16 %v971
  %v1156 = vunpack.c.h.b16 %v971
  %v1157 = vunpack.c.l.b16 %v972
  %v1158 = vunpack.c.l.b16 %v973
  %v1159 = vunpack.c.h.b16 %v973
  %v1160 = vunpack.c.l.b16 %v974
  %v1161 = vunpack.c.l.b16 %v975
  %v1162 = vunpack.c.h.b16 %v975
  %v1163 = vunpack.c.l.b16 %v976
  %v1164 = vunpack.c.l.b16 %v977
  %v1165 = vunpack.c.h.b16 %v977
  %v1166 = vunpack.c.l.b16 %v978
  %v1167 = vunpack.c.l.b16 %v979
  %v1168 = vunpack.c.h.b16 %v979
  %v1169 = vunpack.c.l.b16 %v980
  %v1170 = vunpack.c.l.b16 %v981
  %v1171 = vunpack.c.h.b16 %v981
  %v1172 = vunpack.c.l.b16 %v982
  %v1173 = vunpack.c.l.b16 %v983
  %v1174 = vunpack.c.h.b16 %v983
  %v1175 = vunpack.c.l.b16 %v984
  %v1176 = vunpack.c.l.b16 %v985
  %v1177 = vunpack.c.h.b16 %v985
  %v1178 = vunpack.c.l.b16 %v986
  %v1179 = vunpack.c.l.b16 %v987
  %v1180 = vunpack.c.h.b16 %v987
  %v1181 = vunpack.c.l.b16 %v988
  %v1182 = vunpack.c.l.b16 %v989
  %v1183 = vunpack.c.h.b16 %v989
  %v1184 = vunpack.c.l.b16 %v990
  %v1185 = vunpack.c.l.b16 %v991
  %v1186 = vunpack.c.h.b16 %v991
  %v1187 = vunpack.c.l.b16 %v992
  %v1188 = vunpack.c.l.b16 %v993
  %v1189 = vunpack.c.h.b16 %v993
  %v1190 = vunpack.c.l.b16 %v994
  %v1191 = vunpack.c.l.b16 %v995
  %v1192 = vunpack.c.h.b16 %v995
  %v1193 = vunpack.c.l.b16 %v996
  %v1194 = vunpack.c.l.b16 %v997
  %v1195 = vunpack.c.h.b16 %v997
  %v1196 = vunpack.c.l.b16 %v998
  %v1197 = vunpack.c.l.b16 %v999
  %v1198 = vunpack.c.h.b16 %v999
  %v1199 = vunpack.c.l.b16 %v1000
  %v1200 = vunpack.c.l.b16 %v1001
  %v1201 = vunpack.c.h.b16 %v1001
  %v1202 = vunpack.c.l.b16 %v1002
  %v1203 = vunpack.c.l.b16 %v1003
  %v1204 = vunpack.c.h.b16 %v1003
  %v1205 = vunpack.c.l.b16 %v1004
  %v1206 = vunpack.c.l.b16 %v1005
  %v1207 = vunpack.c.h.b16 %v1005
  %v1208 = vunpack.c.l.b16 %v1006
  %v1209 = vunpack.c.l.b16 %v1007
  %v1210 = vunpack.c.h.b16 %v1007
  %v1211 = vunpack.c.l.b16 %v1008
  %v1212 = vunpack.c.l.b16 %v1009
  %v1213 = vunpack.c.h.b16 %v1009
  %v1214 = vunpack.c.l.b16 %v1010
  %v1215 = vunpack.c.l.b16 %v1011
  %v1216 = vunpack.c.h.b16 %v1011
  %v1217 = vunpack.c.l.b16 %v1012
  %v1218 = vunpack.c.l.b16 %v1013
  %v1219 = vunpack.c.h.b16 %v1013
  %v1220 = vunpack.c.l.b16 %v1014
  %v1221 = vunpack.c.l.b16 %v1015
  %v1222 = vunpack.c.h.b16 %v1015
  %v1223 = vunpack.c.l.b16 %v1016
  %v1224 = vpack.c.b16 %v1113, %v1110
  %v1225 = vpack.c.b16 %v1114, %v1111
  %v1226 = vpack.c.b16 %v1115, %v1112
  %v1227 = vpack.c.b16 %v1119, %v1116
  %v1228 = vpack.c.b16 %v1120, %v1117
  %v1229 = vpack.c.b16 %v1121, %v1118
  %v1230 = vpack.c.b16 %v1125, %v1122
  %v1231 = vpack.c.b16 %v1126, %v1123
  %v1232 = vpack.c.b16 %v1127, %v1124
  %v1233 = vpack.c.b16 %v1131, %v1128
  %v1234 = vpack.c.b16 %v1132, %v1129
  %v1235 = vpack.c.b16 %v1133, %v1130
  %v1236 = vpack.c.b16 %v1137, %v1134
  %v1237 = vpack.c.b16 %v1138, %v1135
  %v1238 = vpack.c.b16 %v1139, %v1136
  %v1239 = vpack.c.b16 %v1143, %v1140
  %v1240 = vpack.c.b16 %v1144, %v1141
  %v1241 = vpack.c.b16 %v1145, %v1142
  %v1242 = vpack.c.b16 %v1149, %v1146
  %v1243 = vpack.c.b16 %v1150, %v1147
  %v1244 = vpack.c.b16 %v1151, %v1148
  %v1245 = vpack.c.b16 %v1155, %v1152
  %v1246 = vpack.c.b16 %v1156, %v1153
  %v1247 = vpack.c.b16 %v1157, %v1154
  %v1248 = vpack.c.b16 %v1161, %v1158
  %v1249 = vpack.c.b16 %v1162, %v1159
  %v1250 = vpack.c.b16 %v1163, %v1160
  %v1251 = vpack.c.b16 %v1167, %v1164
  %v1252 = vpack.c.b16 %v1168, %v1165
  %v1253 = vpack.c.b16 %v1169, %v1166
  %v1254 = vpack.c.b16 %v1173, %v1170
  %v1255 = vpack.c.b16 %v1174, %v1171
  %v1256 = vpack.c.b16 %v1175, %v1172
  %v1257 = vpack.c.b16 %v1179, %v1176
  %v1258 = vpack.c.b16 %v1180, %v1177
  %v1259 = vpack.c.b16 %v1181, %v1178
  %v1260 = vpack.c.b16 %v1185, %v1182
  %v1261 = vpack.c.b16 %v1186, %v1183
  %v1262 = vpack.c.b16 %v1187, %v1184
  %v1263 = vpack.c.b16 %v1191, %v1188
  %v1264 = vpack.c.b16 %v1192, %v1189
  %v1265 = vpack.c.b16 %v1193, %v1190
  %v1266 = vpack.c.b16 %v1197, %v1194
  %v1267 = vpack.c.b16 %v1198, %v1195
  %v1268 = vpack.c.b16 %v1199, %v1196
  %v1269 = vpack.c.b16 %v1203, %v1200
  %v1270 = vpack.c.b16 %v1204, %v1201
  %v1271 = vpack.c.b16 %v1205, %v1202
  %v1272 = vpack.c.b16 %v1209, %v1206
  %v1273 = vpack.c.b16 %v1210, %v1207
  %v1274 = vpack.c.b16 %v1211, %v1208
  %v1275 = vpack.c.b16 %v1215, %v1212
  %v1276 = vpack.c.b16 %v1216, %v1213
  %v1277 = vpack.c.b16 %v1217, %v1214
  %v1278 = vpack.c.b16 %v1221, %v1218
  %v1279 = vpack.c.b16 %v1222, %v1219
  %v1280 = vpack.c.b16 %v1223, %v1220
  %v1336 = vsel %vm763, %v1278, 0
  %v1339 = vsel %vm763, %v1279, 0
  %v1342 = vsel %vm763, %v1280, 0
  %1344 = vmatprep.subr.bf16.mxu0 %v1225
  %1345 = vmatpush1.bf16.msra.mxu0 %v1224
  %1346 = vmatprep.subr.bf16.mxu0 %v1228
  %1347 = vmatpush1.bf16.msra.mxu0 %v1227
  %1348 = vmatprep.subr.bf16.mxu0 %v1231
  %1349 = vmatpush1.bf16.msra.mxu0 %v1230
  %1350 = vmatprep.subr.bf16.mxu0 %v1234
  %1351 = vmatpush1.bf16.msra.mxu0 %v1233
  %1352 = vmatprep.subr.bf16.mxu0 %v1237
  %1353 = vmatpush1.bf16.msra.mxu0 %v1236
  %1354 = vmatprep.subr.bf16.mxu0 %v1240
  %1355 = vmatpush1.bf16.msra.mxu0 %v1239
  %1356 = vmatprep.subr.bf16.mxu0 %v1243
  %1357 = vmatpush1.bf16.msra.mxu0 %v1242
  %1358 = vmatprep.subr.bf16.mxu0 %v1246
  %1359 = vmatpush1.bf16.msra.mxu0 %v1245
  %1360 = vmatprep.subr.bf16.mxu0 %v1249
  %1361 = vmatpush1.bf16.msra.mxu0 %v1248
  %1362 = vmatprep.subr.bf16.mxu0 %v1252
  %1363 = vmatpush1.bf16.msra.mxu0 %v1251
  %1364 = vmatprep.subr.bf16.mxu0 %v1255
  %1365 = vmatpush1.bf16.msra.mxu0 %v1254
  %1366 = vmatprep.subr.bf16.mxu0 %v1258
  %1367 = vmatpush1.bf16.msra.mxu0 %v1257
  %1368 = vmatprep.subr.bf16.mxu0 %v1261
  %1369 = vmatpush1.bf16.msra.mxu0 %v1260
  %1370 = vmatprep.subr.bf16.mxu0 %v1264
  %1371 = vmatpush1.bf16.msra.mxu0 %v1263
  %1372 = vmatprep.subr.bf16.mxu0 %v1267
  %1373 = vmatpush1.bf16.msra.mxu0 %v1266
  %1374 = vmatprep.subr.bf16.mxu0 %v1270
  %1375 = vmatpush1.bf16.msra.mxu0 %v1269
  %1376 = vmatprep.mubr.bf16.mxu0 %v363
  %1377 = vmatmul.mubr.bf16.gmra.mrb[0].mxu0 %v362
  %v1378 = vpop.f32.mrb[0].mxu0
  %v1379 = vadd.f32 %v1022, %v1378
  %v1380 = vpop.f32.mrb[0].mxu0
  %v1381 = vadd.f32 %v1026, %v1380
  %v1382 = vpop.f32.mrb[0].mxu0
  %v1383 = vadd.f32 %v1022, %v1382
  %v1384 = vpop.f32.mrb[0].mxu0
  %v1385 = vadd.f32 %v1026, %v1384
  %1386 = vdwg.mxu0
  %1387 = vmatprep.subr.bf16.mxu0 %v1273
  %1388 = vmatpush1.bf16.msra.mxu0 %v1272
  %1389 = vmatprep.subr.bf16.mxu0 %v1276
  %1390 = vmatpush1.bf16.msra.mxu0 %v1275
  %1391 = vmatprep.subr.bf16.mxu0 %v1339
  %1392 = vmatpush1.bf16.msra.mxu0 %v1336
  %1393 = vmatprep.subr.bf16.mxu0 0
  %1394 = vmatpush1.bf16.msra.mxu0 0
  %1395 = vmatprep.subr.bf16.mxu0 0
  %1396 = vmatpush1.bf16.msra.mxu0 0
  %1397 = vmatprep.subr.bf16.mxu0 0
  %1398 = vmatpush1.bf16.msra.mxu0 0
  %1399 = vmatprep.subr.bf16.mxu0 0
  %1400 = vmatpush1.bf16.msra.mxu0 0
  %1401 = vmatprep.subr.bf16.mxu0 0
  %1402 = vmatpush1.bf16.msra.mxu0 0
  %1403 = vmatprep.subr.bf16.mxu0 0
  %1404 = vmatpush1.bf16.msra.mxu0 0
  %1405 = vmatprep.subr.bf16.mxu0 0
  %1406 = vmatpush1.bf16.msra.mxu0 0
  %1407 = vmatprep.subr.bf16.mxu0 0
  %1408 = vmatpush1.bf16.msra.mxu0 0
  %1409 = vmatprep.subr.bf16.mxu0 0
  %1410 = vmatpush1.bf16.msra.mxu0 0
  %1411 = vmatprep.subr.bf16.mxu0 0
  %1412 = vmatpush1.bf16.msra.mxu0 0
  %1413 = vmatprep.subr.bf16.mxu0 0
  %1414 = vmatpush1.bf16.msra.mxu0 0
  %1415 = vmatprep.subr.bf16.mxu0 0
  %1416 = vmatpush1.bf16.msra.mxu0 0
  %1417 = vmatprep.subr.bf16.mxu0 0
  %1418 = vmatpush1.bf16.msra.mxu0 0
  %1419 = vmatprep.mubr.bf16.mxu0 0
  %1420 = vmatmul.mubr.bf16.gmra.mrb[0].mxu0 %v761
  %v1421 = vpop.f32.mrb[0].mxu0
  %v1422 = vadd.f32 %v1379, %v1421
  %v1423 = vpop.f32.mrb[0].mxu0
  %v1424 = vadd.f32 %v1381, %v1423
  %v1425 = vpop.f32.mrb[0].mxu0
  %v1426 = vadd.f32 %v1383, %v1425
  %v1427 = vpop.f32.mrb[0].mxu0
  %v1428 = vadd.f32 %v1385, %v1427
  %1429 = vdwg.mxu0
  %1430 = vmatprep.subr.bf16.mxu0 0
  %1431 = vmatpush1.bf16.msra.mxu0 %v1226
  %1432 = vmatprep.subr.bf16.mxu0 0
  %1433 = vmatpush1.bf16.msra.mxu0 %v1229
  %1434 = vmatprep.subr.bf16.mxu0 0
  %1435 = vmatpush1.bf16.msra.mxu0 %v1232
  %1436 = vmatprep.subr.bf16.mxu0 0
  %1437 = vmatpush1.bf16.msra.mxu0 %v1235
  %1438 = vmatprep.subr.bf16.mxu0 0
  %1439 = vmatpush1.bf16.msra.mxu0 %v1238
  %1440 = vmatprep.subr.bf16.mxu0 0
  %1441 = vmatpush1.bf16.msra.mxu0 %v1241
  %1442 = vmatprep.subr.bf16.mxu0 0
  %1443 = vmatpush1.bf16.msra.mxu0 %v1244
  %1444 = vmatprep.subr.bf16.mxu0 0
  %1445 = vmatpush1.bf16.msra.mxu0 %v1247
  %1446 = vmatprep.subr.bf16.mxu0 0
  %1447 = vmatpush1.bf16.msra.mxu0 %v1250
  %1448 = vmatprep.subr.bf16.mxu0 0
  %1449 = vmatpush1.bf16.msra.mxu0 %v1253
  %1450 = vmatprep.subr.bf16.mxu0 0
  %1451 = vmatpush1.bf16.msra.mxu0 %v1256
  %1452 = vmatprep.subr.bf16.mxu0 0
  %1453 = vmatpush1.bf16.msra.mxu0 %v1259
  %1454 = vmatprep.subr.bf16.mxu0 0
  %1455 = vmatpush1.bf16.msra.mxu0 %v1262
  %1456 = vmatprep.subr.bf16.mxu0 0
  %1457 = vmatpush1.bf16.msra.mxu0 %v1265
  %1458 = vmatprep.subr.bf16.mxu0 0
  %1459 = vmatpush1.bf16.msra.mxu0 %v1268
  %1460 = vmatprep.subr.bf16.mxu0 0
  %1461 = vmatpush1.bf16.msra.mxu0 %v1271
  %1462 = vmatprep.mubr.bf16.mxu0 %v363
  %1463 = vmatmul.mubr.bf16.gmra.mrb[0].mxu0 %v362
  %v1464 = vpop.f32.mrb[0].mxu0
  %v1465 = vadd.f32 %v1030, %v1464
  %v1466 = vpop.f32.mrb[0].mxu0
  %v1467 = vpop.f32.mrb[0].mxu0
  %v1468 = vadd.f32 %v1030, %v1467
  %v1469 = vpop.f32.mrb[0].mxu0
  %1470 = vdwg.mxu0
  %1471 = vmatprep.subr.bf16.mxu0 0
  %1472 = vmatpush1.bf16.msra.mxu0 %v1274
  %1473 = vmatprep.subr.bf16.mxu0 0
  %1474 = vmatpush1.bf16.msra.mxu0 %v1277
  %1475 = vmatprep.subr.bf16.mxu0 0
  %1476 = vmatpush1.bf16.msra.mxu0 %v1342
  %1477 = vmatprep.subr.bf16.mxu0 0
  %1478 = vmatpush1.bf16.msra.mxu0 0
  %1479 = vmatprep.subr.bf16.mxu0 0
  %1480 = vmatpush1.bf16.msra.mxu0 0
  %1481 = vmatprep.subr.bf16.mxu0 0
  %1482 = vmatpush1.bf16.msra.mxu0 0
  %1483 = vmatprep.subr.bf16.mxu0 0
  %1484 = vmatpush1.bf16.msra.mxu0 0
  %1485 = vmatprep.subr.bf16.mxu0 0
  %1486 = vmatpush1.bf16.msra.mxu0 0
  %1487 = vmatprep.subr.bf16.mxu0 0
  %1488 = vmatpush1.bf16.msra.mxu0 0
  %1489 = vmatprep.subr.bf16.mxu0 0
  %1490 = vmatpush1.bf16.msra.mxu0 0
  %1491 = vmatprep.subr.bf16.mxu0 0
  %1492 = vmatpush1.bf16.msra.mxu0 0
  %1493 = vmatprep.subr.bf16.mxu0 0
  %1494 = vmatpush1.bf16.msra.mxu0 0
  %1495 = vmatprep.subr.bf16.mxu0 0
  %1496 = vmatpush1.bf16.msra.mxu0 0
  %1497 = vmatprep.subr.bf16.mxu0 0
  %1498 = vmatpush1.bf16.msra.mxu0 0
  %1499 = vmatprep.subr.bf16.mxu0 0
  %1500 = vmatpush1.bf16.msra.mxu0 0
  %1501 = vmatprep.subr.bf16.mxu0 0
  %1502 = vmatpush1.bf16.msra.mxu0 0
  %1503 = vmatprep.mubr.bf16.mxu0 0
  %1504 = vmatmul.mubr.bf16.gmra.mrb[0].mxu0 %v761
  %v1505 = vpop.f32.mrb[0].mxu0
  %v1506 = vadd.f32 %v1465, %v1505
  %v1507 = vpop.f32.mrb[0].mxu0
  %v1508 = vpop.f32.mrb[0].mxu0
  %v1509 = vadd.f32 %v1468, %v1508
  %v1510 = vpop.f32.mrb[0].mxu0
  %1511 = vdwg.mxu0
  %v1512 = vld [vmem:[%s9] sm:$0xff]
  %v1513 = vld [vmem:[%s9 + $0x8] sm:$0xf]
  %v1514 = vld [vmem:[%s9 + $0xc] sm:$0xff]
  %v1515 = vld [vmem:[%s9 + $0x14] sm:$0xf]
  %v1516 = vld [vmem:[%s9 + $0x18] sm:$0xff]
  %v1517 = vld [vmem:[%s9 + $0x20] sm:$0xf]
  %v1518 = vld [vmem:[%s9 + $0x24] sm:$0xff]
  %v1519 = vld [vmem:[%s9 + $0x2c] sm:$0xf]
  %v1520 = vld [vmem:[%s9 + $0x30] sm:$0xff]
  %v1521 = vld [vmem:[%s9 + $0x38] sm:$0xf]
  %v1522 = vld [vmem:[%s9 + $0x3c] sm:$0xff]
  %v1523 = vld [vmem:[%s9 + $0x44] sm:$0xf]
  %v1524 = vld [vmem:[%s9 + $0x48] sm:$0xff]
  %v1525 = vld [vmem:[%s9 + $0x50] sm:$0xf]
  %v1526 = vld [vmem:[%s9 + $0x54] sm:$0xff]
  %v1527 = vld [vmem:[%s9 + $0x5c] sm:$0xf]
  %v1528 = vld [vmem:[%s9 + $0x60] sm:$0xff]
  %v1529 = vld [vmem:[%s9 + $0x68] sm:$0xf]
  %v1530 = vld [vmem:[%s9 + $0x6c] sm:$0xff]
  %v1531 = vld [vmem:[%s9 + $0x74] sm:$0xf]
  %v1532 = vld [vmem:[%s9 + $0x78] sm:$0xff]
  %v1533 = vld [vmem:[%s9 + $0x80] sm:$0xf]
  %v1534 = vld [vmem:[%s9 + $0x84] sm:$0xff]
  %v1535 = vld [vmem:[%s9 + $0x8c] sm:$0xf]
  %v1536 = vld [vmem:[%s9 + $0x90] sm:$0xff]
  %v1537 = vld [vmem:[%s9 + $0x98] sm:$0xf]
  %v1538 = vld [vmem:[%s9 + $0x9c] sm:$0xff]
  %v1539 = vld [vmem:[%s9 + $0xa4] sm:$0xf]
  %v1540 = vld [vmem:[%s9 + $0xa8] sm:$0xff]
  %v1541 = vld [vmem:[%s9 + $0xb0] sm:$0xf]
  %v1542 = vld [vmem:[%s9 + $0xb4] sm:$0xff]
  %v1543 = vld [vmem:[%s9 + $0xbc] sm:$0xf]
  %v1544 = vld [vmem:[%s9 + $0xc0] sm:$0xff]
  %v1545 = vld [vmem:[%s9 + $0xc8] sm:$0xf]
  %v1546 = vld [vmem:[%s9 + $0xcc] sm:$0xff]
  %v1547 = vld [vmem:[%s9 + $0xd4] sm:$0xf]
  %v1548 = vld [vmem:[%s9 + $0xd8] sm:$0xff]
  %v1549 = vld [vmem:[%s9 + $0xe0] sm:$0xf]
  %v1550 = vld [vmem:[%s9 + $0xe4] sm:$0xff]
  %v1551 = vld [vmem:[%s9 + $0xec] sm:$0xf]
  %v1552 = vld [vmem:[%s9 + $0xf0] sm:$0xff]
  %v1553 = vld [vmem:[%s9 + $0xf8] sm:$0xf]
  %v1554 = vld [vmem:[%s9 + $0xfc] sm:$0xff]
  %v1555 = vld [vmem:[%s9 + $0x104] sm:$0xf]
  %v1556 = vld [vmem:[%s9 + $0x108] sm:$0xff]
  %v1557 = vld [vmem:[%s9 + $0x110] sm:$0xf]
  %v1558 = vld [vmem:[%s9 + $0x114] sm:$0xff]
  %v1559 = vld [vmem:[%s9 + $0x11c] sm:$0xf]
  %v1560 = vld [vmem:[%s9 + $0x120] sm:$0xff]
  %v1561 = vld [vmem:[%s9 + $0x128] sm:$0xf]
  %v1562 = vld [vmem:[%s9 + $0x12c] sm:$0xff]
  %v1563 = vld [vmem:[%s9 + $0x134] sm:$0xf]
  %v1564 = vld [vmem:[%s9 + $0x138] sm:$0xff]
  %v1565 = vld [vmem:[%s9 + $0x140] sm:$0xf]
  %v1566 = vld [vmem:[%s9 + $0x144] sm:$0xff]
  %v1567 = vld [vmem:[%s9 + $0x14c] sm:$0xf]
  %v1568 = vld [vmem:[%s9 + $0x150] sm:$0xff]
  %v1569 = vld [vmem:[%s9 + $0x158] sm:$0xf]
  %v1570 = vld [vmem:[%s9 + $0x15c] sm:$0xff]
  %v1571 = vld [vmem:[%s9 + $0x164] sm:$0xf]
  %v1572 = vld [vmem:[%s9 + $0x168] sm:$0xff]
  %v1573 = vld [vmem:[%s9 + $0x170] sm:$0xf]
  %v1574 = vld [vmem:[%s9 + $0x174] sm:$0xff]
  %v1575 = vld [vmem:[%s9 + $0x17c] sm:$0xf]
  %v1576 = vld [vmem:[%s9 + $0x180] sm:$0xff]
  %v1577 = vld [vmem:[%s9 + $0x188] sm:$0xf]
  %v1578 = vld [vmem:[%s9 + $0x18c] sm:$0xff]
  %v1579 = vld [vmem:[%s9 + $0x194] sm:$0xf]
  %v1580 = vld [vmem:[%s9 + $0x198] sm:$0xff]
  %v1581 = vld [vmem:[%s9 + $0x1a0] sm:$0xf]
  %v1582 = vld [vmem:[%s9 + $0x1a4] sm:$0xff]
  %v1583 = vld [vmem:[%s9 + $0x1ac] sm:$0xf]
  %v1584 = vld [vmem:[%s9 + $0x1b0] sm:$0xff]
  %v1585 = vld [vmem:[%s9 + $0x1b8] sm:$0xf]
  %v1586 = vld [vmem:[%s9 + $0x1bc] sm:$0x33]
  %v1587 = vld [vmem:[%s9 + $0x1c4] sm:$0x3]
  %v1588 = vld [vmem:[%s12] sm:$0x7]
  %v1590 = vlaneseq
  %v1591 = vshrl.u32 %v1590, 7
  %v1592 = vsub.s32 0, %v1591
  %v1593 = vrot.slane %v1588, %v1592
  %v1594 = vlaneseq
  %v1595 = vshrl.u32 %v1594, 7
  %v1596 = vsub.s32 1, %v1595
  %v1597 = vrot.slane %v1588, %v1596
  %v1598 = vlaneseq
  %v1599 = vshrl.u32 %v1598, 7
  %v1600 = vsub.s32 2, %v1599
  %v1601 = vrot.slane %v1588, %v1600
  %v1681 = vunpack.c.l.b16 %v1512
  %v1682 = vunpack.c.h.b16 %v1512
  %v1683 = vunpack.c.l.b16 %v1513
  %v1684 = vunpack.c.l.b16 %v1514
  %v1685 = vunpack.c.h.b16 %v1514
  %v1686 = vunpack.c.l.b16 %v1515
  %v1687 = vunpack.c.l.b16 %v1516
  %v1688 = vunpack.c.h.b16 %v1516
  %v1689 = vunpack.c.l.b16 %v1517
  %v1690 = vunpack.c.l.b16 %v1518
  %v1691 = vunpack.c.h.b16 %v1518
  %v1692 = vunpack.c.l.b16 %v1519
  %v1693 = vunpack.c.l.b16 %v1520
  %v1694 = vunpack.c.h.b16 %v1520
  %v1695 = vunpack.c.l.b16 %v1521
  %v1696 = vunpack.c.l.b16 %v1522
  %v1697 = vunpack.c.h.b16 %v1522
  %v1698 = vunpack.c.l.b16 %v1523
  %v1699 = vunpack.c.l.b16 %v1524
  %v1700 = vunpack.c.h.b16 %v1524
  %v1701 = vunpack.c.l.b16 %v1525
  %v1702 = vunpack.c.l.b16 %v1526
  %v1703 = vunpack.c.h.b16 %v1526
  %v1704 = vunpack.c.l.b16 %v1527
  %v1705 = vunpack.c.l.b16 %v1528
  %v1706 = vunpack.c.h.b16 %v1528
  %v1707 = vunpack.c.l.b16 %v1529
  %v1708 = vunpack.c.l.b16 %v1530
  %v1709 = vunpack.c.h.b16 %v1530
  %v1710 = vunpack.c.l.b16 %v1531
  %v1711 = vunpack.c.l.b16 %v1532
  %v1712 = vunpack.c.h.b16 %v1532
  %v1713 = vunpack.c.l.b16 %v1533
  %v1714 = vunpack.c.l.b16 %v1534
  %v1715 = vunpack.c.h.b16 %v1534
  %v1716 = vunpack.c.l.b16 %v1535
  %v1717 = vunpack.c.l.b16 %v1536
  %v1718 = vunpack.c.h.b16 %v1536
  %v1719 = vunpack.c.l.b16 %v1537
  %v1720 = vunpack.c.l.b16 %v1538
  %v1721 = vunpack.c.h.b16 %v1538
  %v1722 = vunpack.c.l.b16 %v1539
  %v1723 = vunpack.c.l.b16 %v1540
  %v1724 = vunpack.c.h.b16 %v1540
  %v1725 = vunpack.c.l.b16 %v1541
  %v1726 = vunpack.c.l.b16 %v1542
  %v1727 = vunpack.c.h.b16 %v1542
  %v1728 = vunpack.c.l.b16 %v1543
  %v1729 = vunpack.c.l.b16 %v1544
  %v1730 = vunpack.c.h.b16 %v1544
  %v1731 = vunpack.c.l.b16 %v1545
  %v1732 = vunpack.c.l.b16 %v1546
  %v1733 = vunpack.c.h.b16 %v1546
  %v1734 = vunpack.c.l.b16 %v1547
  %v1735 = vunpack.c.l.b16 %v1548
  %v1736 = vunpack.c.h.b16 %v1548
  %v1737 = vunpack.c.l.b16 %v1549
  %v1738 = vunpack.c.l.b16 %v1550
  %v1739 = vunpack.c.h.b16 %v1550
  %v1740 = vunpack.c.l.b16 %v1551
  %v1741 = vunpack.c.l.b16 %v1552
  %v1742 = vunpack.c.h.b16 %v1552
  %v1743 = vunpack.c.l.b16 %v1553
  %v1744 = vunpack.c.l.b16 %v1554
  %v1745 = vunpack.c.h.b16 %v1554
  %v1746 = vunpack.c.l.b16 %v1555
  %v1747 = vunpack.c.l.b16 %v1556
  %v1748 = vunpack.c.h.b16 %v1556
  %v1749 = vunpack.c.l.b16 %v1557
  %v1750 = vunpack.c.l.b16 %v1558
  %v1751 = vunpack.c.h.b16 %v1558
  %v1752 = vunpack.c.l.b16 %v1559
  %v1753 = vunpack.c.l.b16 %v1560
  %v1754 = vunpack.c.h.b16 %v1560
  %v1755 = vunpack.c.l.b16 %v1561
  %v1756 = vunpack.c.l.b16 %v1562
  %v1757 = vunpack.c.h.b16 %v1562
  %v1758 = vunpack.c.l.b16 %v1563
  %v1759 = vunpack.c.l.b16 %v1564
  %v1760 = vunpack.c.h.b16 %v1564
  %v1761 = vunpack.c.l.b16 %v1565
  %v1762 = vunpack.c.l.b16 %v1566
  %v1763 = vunpack.c.h.b16 %v1566
  %v1764 = vunpack.c.l.b16 %v1567
  %v1765 = vunpack.c.l.b16 %v1568
  %v1766 = vunpack.c.h.b16 %v1568
  %v1767 = vunpack.c.l.b16 %v1569
  %v1768 = vunpack.c.l.b16 %v1570
  %v1769 = vunpack.c.h.b16 %v1570
  %v1770 = vunpack.c.l.b16 %v1571
  %v1771 = vunpack.c.l.b16 %v1572
  %v1772 = vunpack.c.h.b16 %v1572
  %v1773 = vunpack.c.l.b16 %v1573
  %v1774 = vunpack.c.l.b16 %v1574
  %v1775 = vunpack.c.h.b16 %v1574
  %v1776 = vunpack.c.l.b16 %v1575
  %v1777 = vunpack.c.l.b16 %v1576
  %v1778 = vunpack.c.h.b16 %v1576
  %v1779 = vunpack.c.l.b16 %v1577
  %v1780 = vunpack.c.l.b16 %v1578
  %v1781 = vunpack.c.h.b16 %v1578
  %v1782 = vunpack.c.l.b16 %v1579
  %v1783 = vunpack.c.l.b16 %v1580
  %v1784 = vunpack.c.h.b16 %v1580
  %v1785 = vunpack.c.l.b16 %v1581
  %v1786 = vunpack.c.l.b16 %v1582
  %v1787 = vunpack.c.h.b16 %v1582
  %v1788 = vunpack.c.l.b16 %v1583
  %v1789 = vunpack.c.l.b16 %v1584
  %v1790 = vunpack.c.h.b16 %v1584
  %v1791 = vunpack.c.l.b16 %v1585
  %v1792 = vunpack.c.l.b16 %v1586
  %v1793 = vunpack.c.h.b16 %v1586
  %v1794 = vunpack.c.l.b16 %v1587
  %v1795 = vpack.c.b16 %v1684, %v1681
  %v1796 = vpack.c.b16 %v1685, %v1682
  %v1797 = vpack.c.b16 %v1686, %v1683
  %v1798 = vpack.c.b16 %v1690, %v1687
  %v1799 = vpack.c.b16 %v1691, %v1688
  %v1800 = vpack.c.b16 %v1692, %v1689
  %v1801 = vpack.c.b16 %v1696, %v1693
  %v1802 = vpack.c.b16 %v1697, %v1694
  %v1803 = vpack.c.b16 %v1698, %v1695
  %v1804 = vpack.c.b16 %v1702, %v1699
  %v1805 = vpack.c.b16 %v1703, %v1700
  %v1806 = vpack.c.b16 %v1704, %v1701
  %v1807 = vpack.c.b16 %v1708, %v1705
  %v1808 = vpack.c.b16 %v1709, %v1706
  %v1809 = vpack.c.b16 %v1710, %v1707
  %v1810 = vpack.c.b16 %v1714, %v1711
  %v1811 = vpack.c.b16 %v1715, %v1712
  %v1812 = vpack.c.b16 %v1716, %v1713
  %v1813 = vpack.c.b16 %v1720, %v1717
  %v1814 = vpack.c.b16 %v1721, %v1718
  %v1815 = vpack.c.b16 %v1722, %v1719
  %v1816 = vpack.c.b16 %v1726, %v1723
  %v1817 = vpack.c.b16 %v1727, %v1724
  %v1818 = vpack.c.b16 %v1728, %v1725
  %v1819 = vpack.c.b16 %v1732, %v1729
  %v1820 = vpack.c.b16 %v1733, %v1730
  %v1821 = vpack.c.b16 %v1734, %v1731
  %v1822 = vpack.c.b16 %v1738, %v1735
  %v1823 = vpack.c.b16 %v1739, %v1736
  %v1824 = vpack.c.b16 %v1740, %v1737
  %v1825 = vpack.c.b16 %v1744, %v1741
  %v1826 = vpack.c.b16 %v1745, %v1742
  %v1827 = vpack.c.b16 %v1746, %v1743
  %v1828 = vpack.c.b16 %v1750, %v1747
  %v1829 = vpack.c.b16 %v1751, %v1748
  %v1830 = vpack.c.b16 %v1752, %v1749
  %v1831 = vpack.c.b16 %v1756, %v1753
  %v1832 = vpack.c.b16 %v1757, %v1754
  %v1833 = vpack.c.b16 %v1758, %v1755
  %v1834 = vpack.c.b16 %v1762, %v1759
  %v1835 = vpack.c.b16 %v1763, %v1760
  %v1836 = vpack.c.b16 %v1764, %v1761
  %v1837 = vpack.c.b16 %v1768, %v1765
  %v1838 = vpack.c.b16 %v1769, %v1766
  %v1839 = vpack.c.b16 %v1770, %v1767
  %v1840 = vpack.c.b16 %v1774, %v1771
  %v1841 = vpack.c.b16 %v1775, %v1772
  %v1842 = vpack.c.b16 %v1776, %v1773
  %v1843 = vpack.c.b16 %v1780, %v1777
  %v1844 = vpack.c.b16 %v1781, %v1778
  %v1845 = vpack.c.b16 %v1782, %v1779
  %v1846 = vpack.c.b16 %v1786, %v1783
  %v1847 = vpack.c.b16 %v1787, %v1784
  %v1848 = vpack.c.b16 %v1788, %v1785
  %v1849 = vpack.c.b16 %v1792, %v1789
  %v1850 = vpack.c.b16 %v1793, %v1790
  %v1851 = vpack.c.b16 %v1794, %v1791
  %v1907 = vsel %vm763, %v1849, 0
  %v1910 = vsel %vm763, %v1850, 0
  %v1913 = vsel %vm763, %v1851, 0
  %1915 = vmatprep.subr.bf16.mxu0 %v1796
  %1916 = vmatpush1.bf16.msra.mxu0 %v1795
  %1917 = vmatprep.subr.bf16.mxu0 %v1799
  %1918 = vmatpush1.bf16.msra.mxu0 %v1798
  %1919 = vmatprep.subr.bf16.mxu0 %v1802
  %1920 = vmatpush1.bf16.msra.mxu0 %v1801
  %1921 = vmatprep.subr.bf16.mxu0 %v1805
  %1922 = vmatpush1.bf16.msra.mxu0 %v1804
  %1923 = vmatprep.subr.bf16.mxu0 %v1808
  %1924 = vmatpush1.bf16.msra.mxu0 %v1807
  %1925 = vmatprep.subr.bf16.mxu0 %v1811
  %1926 = vmatpush1.bf16.msra.mxu0 %v1810
  %1927 = vmatprep.subr.bf16.mxu0 %v1814
  %1928 = vmatpush1.bf16.msra.mxu0 %v1813
  %1929 = vmatprep.subr.bf16.mxu0 %v1817
  %1930 = vmatpush1.bf16.msra.mxu0 %v1816
  %1931 = vmatprep.subr.bf16.mxu0 %v1820
  %1932 = vmatpush1.bf16.msra.mxu0 %v1819
  %1933 = vmatprep.subr.bf16.mxu0 %v1823
  %1934 = vmatpush1.bf16.msra.mxu0 %v1822
  %1935 = vmatprep.subr.bf16.mxu0 %v1826
  %1936 = vmatpush1.bf16.msra.mxu0 %v1825
  %1937 = vmatprep.subr.bf16.mxu0 %v1829
  %1938 = vmatpush1.bf16.msra.mxu0 %v1828
  %1939 = vmatprep.subr.bf16.mxu0 %v1832
  %1940 = vmatpush1.bf16.msra.mxu0 %v1831
  %1941 = vmatprep.subr.bf16.mxu0 %v1835
  %1942 = vmatpush1.bf16.msra.mxu0 %v1834
  %1943 = vmatprep.subr.bf16.mxu0 %v1838
  %1944 = vmatpush1.bf16.msra.mxu0 %v1837
  %1945 = vmatprep.subr.bf16.mxu0 %v1841
  %1946 = vmatpush1.bf16.msra.mxu0 %v1840
  %1947 = vmatprep.mubr.bf16.mxu0 %v363
  %1948 = vmatmul.mubr.bf16.gmra.mrb[0].mxu0 %v362
  %v1949 = vpop.f32.mrb[0].mxu0
  %v1950 = vadd.f32 %v1593, %v1949
  %v1951 = vpop.f32.mrb[0].mxu0
  %v1952 = vadd.f32 %v1597, %v1951
  %v1953 = vpop.f32.mrb[0].mxu0
  %v1954 = vadd.f32 %v1593, %v1953
  %v1955 = vpop.f32.mrb[0].mxu0
  %v1956 = vadd.f32 %v1597, %v1955
  %1957 = vdwg.mxu0
  %1958 = vmatprep.subr.bf16.mxu0 %v1844
  %1959 = vmatpush1.bf16.msra.mxu0 %v1843
  %1960 = vmatprep.subr.bf16.mxu0 %v1847
  %1961 = vmatpush1.bf16.msra.mxu0 %v1846
  %1962 = vmatprep.subr.bf16.mxu0 %v1910
  %1963 = vmatpush1.bf16.msra.mxu0 %v1907
  %1964 = vmatprep.subr.bf16.mxu0 0
  %1965 = vmatpush1.bf16.msra.mxu0 0
  %1966 = vmatprep.subr.bf16.mxu0 0
  %1967 = vmatpush1.bf16.msra.mxu0 0
  %1968 = vmatprep.subr.bf16.mxu0 0
  %1969 = vmatpush1.bf16.msra.mxu0 0
  %1970 = vmatprep.subr.bf16.mxu0 0
  %1971 = vmatpush1.bf16.msra.mxu0 0
  %1972 = vmatprep.subr.bf16.mxu0 0
  %1973 = vmatpush1.bf16.msra.mxu0 0
  %1974 = vmatprep.subr.bf16.mxu0 0
  %1975 = vmatpush1.bf16.msra.mxu0 0
  %1976 = vmatprep.subr.bf16.mxu0 0
  %1977 = vmatpush1.bf16.msra.mxu0 0
  %1978 = vmatprep.subr.bf16.mxu0 0
  %1979 = vmatpush1.bf16.msra.mxu0 0
  %1980 = vmatprep.subr.bf16.mxu0 0
  %1981 = vmatpush1.bf16.msra.mxu0 0
  %1982 = vmatprep.subr.bf16.mxu0 0
  %1983 = vmatpush1.bf16.msra.mxu0 0
  %1984 = vmatprep.subr.bf16.mxu0 0
  %1985 = vmatpush1.bf16.msra.mxu0 0
  %1986 = vmatprep.subr.bf16.mxu0 0
  %1987 = vmatpush1.bf16.msra.mxu0 0
  %1988 = vmatprep.subr.bf16.mxu0 0
  %1989 = vmatpush1.bf16.msra.mxu0 0
  %1990 = vmatprep.mubr.bf16.mxu0 0
  %1991 = vmatmul.mubr.bf16.gmra.mrb[0].mxu0 %v761
  %v1992 = vpop.f32.mrb[0].mxu0
  %v1993 = vadd.f32 %v1950, %v1992
  %v1994 = vpop.f32.mrb[0].mxu0
  %v1995 = vadd.f32 %v1952, %v1994
  %v1996 = vpop.f32.mrb[0].mxu0
  %v1997 = vadd.f32 %v1954, %v1996
  %v1998 = vpop.f32.mrb[0].mxu0
  %v1999 = vadd.f32 %v1956, %v1998
  %2000 = vdwg.mxu0
  %2001 = vmatprep.subr.bf16.mxu0 0
  %2002 = vmatpush1.bf16.msra.mxu0 %v1797
  %2003 = vmatprep.subr.bf16.mxu0 0
  %2004 = vmatpush1.bf16.msra.mxu0 %v1800
  %2005 = vmatprep.subr.bf16.mxu0 0
  %2006 = vmatpush1.bf16.msra.mxu0 %v1803
  %2007 = vmatprep.subr.bf16.mxu0 0
  %2008 = vmatpush1.bf16.msra.mxu0 %v1806
  %2009 = vmatprep.subr.bf16.mxu0 0
  %2010 = vmatpush1.bf16.msra.mxu0 %v1809
  %2011 = vmatprep.subr.bf16.mxu0 0
  %2012 = vmatpush1.bf16.msra.mxu0 %v1812
  %2013 = vmatprep.subr.bf16.mxu0 0
  %2014 = vmatpush1.bf16.msra.mxu0 %v1815
  %2015 = vmatprep.subr.bf16.mxu0 0
  %2016 = vmatpush1.bf16.msra.mxu0 %v1818
  %2017 = vmatprep.subr.bf16.mxu0 0
  %2018 = vmatpush1.bf16.msra.mxu0 %v1821
  %2019 = vmatprep.subr.bf16.mxu0 0
  %2020 = vmatpush1.bf16.msra.mxu0 %v1824
  %2021 = vmatprep.subr.bf16.mxu0 0
  %2022 = vmatpush1.bf16.msra.mxu0 %v1827
  %2023 = vmatprep.subr.bf16.mxu0 0
  %2024 = vmatpush1.bf16.msra.mxu0 %v1830
  %2025 = vmatprep.subr.bf16.mxu0 0
  %2026 = vmatpush1.bf16.msra.mxu0 %v1833
  %2027 = vmatprep.subr.bf16.mxu0 0
  %2028 = vmatpush1.bf16.msra.mxu0 %v1836
  %2029 = vmatprep.subr.bf16.mxu0 0
  %2030 = vmatpush1.bf16.msra.mxu0 %v1839
  %2031 = vmatprep.subr.bf16.mxu0 0
  %2032 = vmatpush1.bf16.msra.mxu0 %v1842
  %2033 = vmatprep.mubr.bf16.mxu0 %v363
  %2034 = vmatmul.mubr.bf16.gmra.mrb[0].mxu0 %v362
  %v2035 = vpop.f32.mrb[0].mxu0
  %v2036 = vadd.f32 %v1601, %v2035
  %v2037 = vpop.f32.mrb[0].mxu0
  %v2038 = vpop.f32.mrb[0].mxu0
  %v2039 = vadd.f32 %v1601, %v2038
  %v2040 = vpop.f32.mrb[0].mxu0
  %2041 = vdwg.mxu0
  %2042 = vmatprep.subr.bf16.mxu0 0
  %2043 = vmatpush1.bf16.msra.mxu0 %v1845
  %2044 = vmatprep.subr.bf16.mxu0 0
  %2045 = vmatpush1.bf16.msra.mxu0 %v1848
  %2046 = vmatprep.subr.bf16.mxu0 0
  %2047 = vmatpush1.bf16.msra.mxu0 %v1913
  %2048 = vmatprep.subr.bf16.mxu0 0
  %2049 = vmatpush1.bf16.msra.mxu0 0
  %2050 = vmatprep.subr.bf16.mxu0 0
  %2051 = vmatpush1.bf16.msra.mxu0 0
  %2052 = vmatprep.subr.bf16.mxu0 0
  %2053 = vmatpush1.bf16.msra.mxu0 0
  %2054 = vmatprep.subr.bf16.mxu0 0
  %2055 = vmatpush1.bf16.msra.mxu0 0
  %2056 = vmatprep.subr.bf16.mxu0 0
  %2057 = vmatpush1.bf16.msra.mxu0 0
  %2058 = vmatprep.subr.bf16.mxu0 0
  %2059 = vmatpush1.bf16.msra.mxu0 0
  %2060 = vmatprep.subr.bf16.mxu0 0
  %2061 = vmatpush1.bf16.msra.mxu0 0
  %2062 = vmatprep.subr.bf16.mxu0 0
  %2063 = vmatpush1.bf16.msra.mxu0 0
  %2064 = vmatprep.subr.bf16.mxu0 0
  %2065 = vmatpush1.bf16.msra.mxu0 0
  %2066 = vmatprep.subr.bf16.mxu0 0
  %2067 = vmatpush1.bf16.msra.mxu0 0
  %2068 = vmatprep.subr.bf16.mxu0 0
  %2069 = vmatpush1.bf16.msra.mxu0 0
  %2070 = vmatprep.subr.bf16.mxu0 0
  %2071 = vmatpush1.bf16.msra.mxu0 0
  %2072 = vmatprep.subr.bf16.mxu0 0
  %2073 = vmatpush1.bf16.msra.mxu0 0
  %2074 = vmatprep.mubr.bf16.mxu0 0
  %2075 = vmatmul.mubr.bf16.gmra.mrb[0].mxu0 %v761
  %v2076 = vpop.f32.mrb[0].mxu0
  %v2077 = vadd.f32 %v2036, %v2076
  %v2078 = vpop.f32.mrb[0].mxu0
  %v2079 = vpop.f32.mrb[0].mxu0
  %v2080 = vadd.f32 %v2039, %v2079
  %v2081 = vpop.f32.mrb[0].mxu0
  %2082 = vdwg.mxu0
  %v2083 = vld [vmem:[%s3] sm:$0xff]
  %v2084 = vld [vmem:[%s3 + $0x8] sm:$0xff]
  %v2085 = vld [vmem:[%s3 + $0x10] sm:$0xff]
  %v2086 = vld [vmem:[%s3 + $0x18] sm:$0xff]
  %v2087 = vld [vmem:[%s3 + $0x20] sm:$0xff]
  %v2088 = vld [vmem:[%s3 + $0x28] sm:$0xff]
  %v2089 = vld [vmem:[%s3 + $0x30] sm:$0xff]
  %v2090 = vld [vmem:[%s3 + $0x38] sm:$0xff]
  %v2091 = vld [vmem:[%s3 + $0x40] sm:$0xff]
  %v2092 = vld [vmem:[%s3 + $0x48] sm:$0xff]
  %v2093 = vld [vmem:[%s3 + $0x50] sm:$0xff]
  %v2094 = vld [vmem:[%s3 + $0x58] sm:$0xff]
  %v2095 = vld [vmem:[%s3 + $0x60] sm:$0xff]
  %v2096 = vld [vmem:[%s3 + $0x68] sm:$0xff]
  %v2097 = vld [vmem:[%s3 + $0x70] sm:$0xff]
  %v2098 = vld [vmem:[%s3 + $0x78] sm:$0xff]
  %v2099 = vld [vmem:[%s3 + $0x80] sm:$0xff]
  %v2100 = vld [vmem:[%s3 + $0x88] sm:$0xff]
  %v2101 = vld [vmem:[%s3 + $0x90] sm:$0xff]
  %v2102 = vld [vmem:[%s3 + $0x98] sm:$0xff]
  %v2103 = vld [vmem:[%s3 + $0xa0] sm:$0xff]
  %v2104 = vld [vmem:[%s3 + $0xa8] sm:$0xff]
  %v2105 = vld [vmem:[%s3 + $0xb0] sm:$0xff]
  %v2106 = vld [vmem:[%s3 + $0xb8] sm:$0xff]
  %v2107 = vld [vmem:[%s3 + $0xc0] sm:$0xff]
  %v2108 = vld [vmem:[%s3 + $0xc8] sm:$0xff]
  %v2109 = vld [vmem:[%s3 + $0xd0] sm:$0x3]
  %vm2110 = vcmask 113664
  %v2112 = vsel %vm2110, %v2083, 0
  %v2115 = vsel %vm2110, %v2084, 0
  %v2118 = vsel %vm2110, %v2085, 0
  %v2121 = vsel %vm2110, %v2086, 0
  %v2124 = vsel %vm2110, %v2087, 0
  %v2127 = vsel %vm2110, %v2088, 0
  %v2130 = vsel %vm2110, %v2089, 0
  %v2133 = vsel %vm2110, %v2090, 0
  %v2136 = vsel %vm2110, %v2091, 0
  %v2139 = vsel %vm2110, %v2092, 0
  %v2142 = vsel %vm2110, %v2093, 0
  %v2145 = vsel %vm2110, %v2094, 0
  %v2148 = vsel %vm2110, %v2095, 0
  %v2151 = vsel %vm2110, %v2096, 0
  %v2154 = vsel %vm2110, %v2097, 0
  %v2157 = vsel %vm2110, %v2098, 0
  %v2160 = vsel %vm2110, %v2099, 0
  %v2163 = vsel %vm2110, %v2100, 0
  %v2166 = vsel %vm2110, %v2101, 0
  %v2169 = vsel %vm2110, %v2102, 0
  %v2172 = vsel %vm2110, %v2103, 0
  %v2175 = vsel %vm2110, %v2104, 0
  %v2178 = vsel %vm2110, %v2105, 0
  %v2181 = vsel %vm2110, %v2106, 0
  %v2184 = vsel %vm2110, %v2107, 0
  %v2187 = vsel %vm2110, %v2108, 0
  %v2190 = vsel %vm2110, %v2109, 0
  %v2193 = vsel %vm763, %v855, 0
  %v2196 = vsel %vm763, %v857, 0
  %v2199 = vsel %vm763, %v938, 0
  %2201 = vmatprep.subr.mxu0 %v853
  %2202 = vmatpush1.msra.mxu0 %v851
  %2203 = vmatprep.subr.mxu0 %v2196
  %2204 = vmatpush1.msra.mxu0 %v2193
  %2205 = vmatprep.subr.mxu0 0.0
  %2206 = vmatpush1.msra.mxu0 0.0
  %2207 = vmatprep.subr.mxu0 0.0
  %2208 = vmatpush1.msra.mxu0 0.0
  %2209 = vmatprep.subr.mxu0 0.0
  %2210 = vmatpush1.msra.mxu0 0.0
  %2211 = vmatprep.subr.mxu0 0.0
  %2212 = vmatpush1.msra.mxu0 0.0
  %2213 = vmatprep.subr.mxu0 0.0
  %2214 = vmatpush1.msra.mxu0 0.0
  %2215 = vmatprep.subr.mxu0 0.0
  %2216 = vmatpush1.msra.mxu0 0.0
  %2217 = vmatprep.subr.mxu0 0.0
  %2218 = vmatpush1.msra.mxu0 0.0
  %2219 = vmatprep.subr.mxu0 0.0
  %2220 = vmatpush1.msra.mxu0 0.0
  %2221 = vmatprep.subr.mxu0 0.0
  %2222 = vmatpush1.msra.mxu0 0.0
  %2223 = vmatprep.subr.mxu0 0.0
  %2224 = vmatpush1.msra.mxu0 0.0
  %2225 = vmatprep.subr.mxu0 0.0
  %2226 = vmatpush1.msra.mxu0 0.0
  %2227 = vmatprep.subr.mxu0 0.0
  %2228 = vmatpush1.msra.mxu0 0.0
  %2229 = vmatprep.subr.mxu0 0.0
  %2230 = vmatpush1.msra.mxu0 0.0
  %2231 = vmatprep.subr.mxu0 0.0
  %2232 = vmatpush1.msra.mxu0 0.0
  %2233 = vmatprep.subr.mxu0 0.0
  %2234 = vmatpush1.msra.mxu0 0.0
  %2235 = vmatprep.subr.mxu0 0.0
  %2236 = vmatpush1.msra.mxu0 0.0
  %2237 = vmatprep.subr.mxu0 0.0
  %2238 = vmatpush1.msra.mxu0 0.0
  %2239 = vmatprep.subr.mxu0 0.0
  %2240 = vmatpush1.msra.mxu0 0.0
  %2241 = vmatprep.subr.mxu0 0.0
  %2242 = vmatpush1.msra.mxu0 0.0
  %2243 = vmatprep.subr.mxu0 0.0
  %2244 = vmatpush1.msra.mxu0 0.0
  %2245 = vmatprep.subr.mxu0 0.0
  %2246 = vmatpush1.msra.mxu0 0.0
  %2247 = vmatprep.subr.mxu0 0.0
  %2248 = vmatpush1.msra.mxu0 0.0
  %2249 = vmatprep.subr.mxu0 0.0
  %2250 = vmatpush1.msra.mxu0 0.0
  %2251 = vmatprep.subr.mxu0 0.0
  %2252 = vmatpush1.msra.mxu0 0.0
  %2253 = vmatprep.subr.mxu0 0.0
  %2254 = vmatpush1.msra.mxu0 0.0
  %2255 = vmatprep.subr.mxu0 0.0
  %2256 = vmatpush1.msra.mxu0 0.0
  %2257 = vmatprep.subr.mxu0 0.0
  %2258 = vmatpush1.msra.mxu0 0.0
  %2259 = vmatprep.subr.mxu0 0.0
  %2260 = vmatpush1.msra.mxu0 0.0
  %2261 = vmatprep.subr.mxu0 0.0
  %2262 = vmatpush1.msra.mxu0 0.0
  %2263 = vmatprep.subr.mxu0 0.0
  %2264 = vmatpush1.msra.mxu0 0.0
  %2265 = vmatprep.mubr.f32.mxu0 0.0
  %2266 = vmatmul.mubr.f32.gmra.mrb[0].mxu0 %v2112
  %v2267 = vpop.f32.mrb[0].mxu0
  %v2268 = vadd.f32 0.0, %v2267
  %v2269 = vpop.f32.mrb[0].mxu0
  %v2270 = vadd.f32 0.0, %v2269
  %2271 = vmatprep.mubr.f32.mxu0 0.0
  %2272 = vmatmul.mubr.f32.gmra.mrb[0].mxu0 %v2115
  %v2273 = vpop.f32.mrb[0].mxu0
  %v2274 = vadd.f32 0.0, %v2273
  %v2275 = vpop.f32.mrb[0].mxu0
  %v2276 = vadd.f32 0.0, %v2275
  %2277 = vmatprep.mubr.f32.mxu0 0.0
  %2278 = vmatmul.mubr.f32.gmra.mrb[0].mxu0 %v2118
  %v2279 = vpop.f32.mrb[0].mxu0
  %v2280 = vadd.f32 0.0, %v2279
  %v2281 = vpop.f32.mrb[0].mxu0
  %v2282 = vadd.f32 0.0, %v2281
  %2283 = vmatprep.mubr.f32.mxu0 0.0
  %2284 = vmatmul.mubr.f32.gmra.mrb[0].mxu0 %v2121
  %v2285 = vpop.f32.mrb[0].mxu0
  %v2286 = vadd.f32 0.0, %v2285
  %v2287 = vpop.f32.mrb[0].mxu0
  %v2288 = vadd.f32 0.0, %v2287
  %2289 = vmatprep.mubr.f32.mxu0 0.0
  %2290 = vmatmul.mubr.f32.gmra.mrb[0].mxu0 %v2124
  %v2291 = vpop.f32.mrb[0].mxu0
  %v2292 = vadd.f32 0.0, %v2291
  %v2293 = vpop.f32.mrb[0].mxu0
  %v2294 = vadd.f32 0.0, %v2293
  %2295 = vmatprep.mubr.f32.mxu0 0.0
  %2296 = vmatmul.mubr.f32.gmra.mrb[0].mxu0 %v2127
  %v2297 = vpop.f32.mrb[0].mxu0
  %v2298 = vadd.f32 0.0, %v2297
  %v2299 = vpop.f32.mrb[0].mxu0
  %v2300 = vadd.f32 0.0, %v2299
  %2301 = vmatprep.mubr.f32.mxu0 0.0
  %2302 = vmatmul.mubr.f32.gmra.mrb[0].mxu0 %v2130
  %v2303 = vpop.f32.mrb[0].mxu0
  %v2304 = vadd.f32 0.0, %v2303
  %v2305 = vpop.f32.mrb[0].mxu0
  %v2306 = vadd.f32 0.0, %v2305
  %2307 = vmatprep.mubr.f32.mxu0 0.0
  %2308 = vmatmul.mubr.f32.gmra.mrb[0].mxu0 %v2133
  %v2309 = vpop.f32.mrb[0].mxu0
  %v2310 = vadd.f32 0.0, %v2309
  %v2311 = vpop.f32.mrb[0].mxu0
  %v2312 = vadd.f32 0.0, %v2311
  %2313 = vmatprep.mubr.f32.mxu0 0.0
  %2314 = vmatmul.mubr.f32.gmra.mrb[0].mxu0 %v2136
  %v2315 = vpop.f32.mrb[0].mxu0
  %v2316 = vadd.f32 0.0, %v2315
  %v2317 = vpop.f32.mrb[0].mxu0
  %v2318 = vadd.f32 0.0, %v2317
  %2319 = vmatprep.mubr.f32.mxu0 0.0
  %2320 = vmatmul.mubr.f32.gmra.mrb[0].mxu0 %v2139
  %v2321 = vpop.f32.mrb[0].mxu0
  %v2322 = vadd.f32 0.0, %v2321
  %v2323 = vpop.f32.mrb[0].mxu0
  %v2324 = vadd.f32 0.0, %v2323
  %2325 = vmatprep.mubr.f32.mxu0 0.0
  %2326 = vmatmul.mubr.f32.gmra.mrb[0].mxu0 %v2142
  %v2327 = vpop.f32.mrb[0].mxu0
  %v2328 = vadd.f32 0.0, %v2327
  %v2329 = vpop.f32.mrb[0].mxu0
  %v2330 = vadd.f32 0.0, %v2329
  %2331 = vmatprep.mubr.f32.mxu0 0.0
  %2332 = vmatmul.mubr.f32.gmra.mrb[0].mxu0 %v2145
  %v2333 = vpop.f32.mrb[0].mxu0
  %v2334 = vadd.f32 0.0, %v2333
  %v2335 = vpop.f32.mrb[0].mxu0
  %v2336 = vadd.f32 0.0, %v2335
  %2337 = vmatprep.mubr.f32.mxu0 0.0
  %2338 = vmatmul.mubr.f32.gmra.mrb[0].mxu0 %v2148
  %v2339 = vpop.f32.mrb[0].mxu0
  %v2340 = vadd.f32 0.0, %v2339
  %v2341 = vpop.f32.mrb[0].mxu0
  %v2342 = vadd.f32 0.0, %v2341
  %2343 = vmatprep.mubr.f32.mxu0 0.0
  %2344 = vmatmul.mubr.f32.gmra.mrb[0].mxu0 %v2151
  %v2345 = vpop.f32.mrb[0].mxu0
  %v2346 = vadd.f32 0.0, %v2345
  %v2347 = vpop.f32.mrb[0].mxu0
  %v2348 = vadd.f32 0.0, %v2347
  %2349 = vmatprep.mubr.f32.mxu0 0.0
  %2350 = vmatmul.mubr.f32.gmra.mrb[0].mxu0 %v2154
  %v2351 = vpop.f32.mrb[0].mxu0
  %v2352 = vadd.f32 0.0, %v2351
  %v2353 = vpop.f32.mrb[0].mxu0
  %v2354 = vadd.f32 0.0, %v2353
  %2355 = vmatprep.mubr.f32.mxu0 0.0
  %2356 = vmatmul.mubr.f32.gmra.mrb[0].mxu0 %v2157
  %v2357 = vpop.f32.mrb[0].mxu0
  %v2358 = vadd.f32 0.0, %v2357
  %v2359 = vpop.f32.mrb[0].mxu0
  %v2360 = vadd.f32 0.0, %v2359
  %2361 = vmatprep.mubr.f32.mxu0 0.0
  %2362 = vmatmul.mubr.f32.gmra.mrb[0].mxu0 %v2160
  %v2363 = vpop.f32.mrb[0].mxu0
  %v2364 = vadd.f32 0.0, %v2363
  %v2365 = vpop.f32.mrb[0].mxu0
  %v2366 = vadd.f32 0.0, %v2365
  %2367 = vmatprep.mubr.f32.mxu0 0.0
  %2368 = vmatmul.mubr.f32.gmra.mrb[0].mxu0 %v2163
  %v2369 = vpop.f32.mrb[0].mxu0
  %v2370 = vadd.f32 0.0, %v2369
  %v2371 = vpop.f32.mrb[0].mxu0
  %v2372 = vadd.f32 0.0, %v2371
  %2373 = vmatprep.mubr.f32.mxu0 0.0
  %2374 = vmatmul.mubr.f32.gmra.mrb[0].mxu0 %v2166
  %v2375 = vpop.f32.mrb[0].mxu0
  %v2376 = vadd.f32 0.0, %v2375
  %v2377 = vpop.f32.mrb[0].mxu0
  %v2378 = vadd.f32 0.0, %v2377
  %2379 = vmatprep.mubr.f32.mxu0 0.0
  %2380 = vmatmul.mubr.f32.gmra.mrb[0].mxu0 %v2169
  %v2381 = vpop.f32.mrb[0].mxu0
  %v2382 = vadd.f32 0.0, %v2381
  %v2383 = vpop.f32.mrb[0].mxu0
  %v2384 = vadd.f32 0.0, %v2383
  %2385 = vmatprep.mubr.f32.mxu0 0.0
  %2386 = vmatmul.mubr.f32.gmra.mrb[0].mxu0 %v2172
  %v2387 = vpop.f32.mrb[0].mxu0
  %v2388 = vadd.f32 0.0, %v2387
  %v2389 = vpop.f32.mrb[0].mxu0
  %v2390 = vadd.f32 0.0, %v2389
  %2391 = vmatprep.mubr.f32.mxu0 0.0
  %2392 = vmatmul.mubr.f32.gmra.mrb[0].mxu0 %v2175
  %v2393 = vpop.f32.mrb[0].mxu0
  %v2394 = vadd.f32 0.0, %v2393
  %v2395 = vpop.f32.mrb[0].mxu0
  %v2396 = vadd.f32 0.0, %v2395
  %2397 = vmatprep.mubr.f32.mxu0 0.0
  %2398 = vmatmul.mubr.f32.gmra.mrb[0].mxu0 %v2178
  %v2399 = vpop.f32.mrb[0].mxu0
  %v2400 = vadd.f32 0.0, %v2399
  %v2401 = vpop.f32.mrb[0].mxu0
  %v2402 = vadd.f32 0.0, %v2401
  %2403 = vmatprep.mubr.f32.mxu0 0.0
  %2404 = vmatmul.mubr.f32.gmra.mrb[0].mxu0 %v2181
  %v2405 = vpop.f32.mrb[0].mxu0
  %v2406 = vadd.f32 0.0, %v2405
  %v2407 = vpop.f32.mrb[0].mxu0
  %v2408 = vadd.f32 0.0, %v2407
  %2409 = vmatprep.mubr.f32.mxu0 0.0
  %2410 = vmatmul.mubr.f32.gmra.mrb[0].mxu0 %v2184
  %v2411 = vpop.f32.mrb[0].mxu0
  %v2412 = vadd.f32 0.0, %v2411
  %v2413 = vpop.f32.mrb[0].mxu0
  %v2414 = vadd.f32 0.0, %v2413
  %2415 = vmatprep.mubr.f32.mxu0 0.0
  %2416 = vmatmul.mubr.f32.gmra.mrb[0].mxu0 %v2187
  %v2417 = vpop.f32.mrb[0].mxu0
  %v2418 = vadd.f32 0.0, %v2417
  %v2419 = vpop.f32.mrb[0].mxu0
  %v2420 = vadd.f32 0.0, %v2419
  %2421 = vmatprep.mubr.f32.mxu0 0.0
  %2422 = vmatmul.mubr.f32.gmra.mrb[0].mxu0 %v2190
  %v2423 = vpop.f32.mrb[0].mxu0
  %v2424 = vadd.f32 0.0, %v2423
  %v2425 = vpop.f32.mrb[0].mxu0
  %v2426 = vadd.f32 0.0, %v2425
  %2427 = vdwg.mxu0
  %2428 = vmatprep.subr.mxu0 0.0
  %2429 = vmatpush1.msra.mxu0 %v935
  %2430 = vmatprep.subr.mxu0 0.0
  %2431 = vmatpush1.msra.mxu0 %v2199
  %2432 = vmatprep.subr.mxu0 0.0
  %2433 = vmatpush1.msra.mxu0 0.0
  %2434 = vmatprep.subr.mxu0 0.0
  %2435 = vmatpush1.msra.mxu0 0.0
  %2436 = vmatprep.subr.mxu0 0.0
  %2437 = vmatpush1.msra.mxu0 0.0
  %2438 = vmatprep.subr.mxu0 0.0
  %2439 = vmatpush1.msra.mxu0 0.0
  %2440 = vmatprep.subr.mxu0 0.0
  %2441 = vmatpush1.msra.mxu0 0.0
  %2442 = vmatprep.subr.mxu0 0.0
  %2443 = vmatpush1.msra.mxu0 0.0
  %2444 = vmatprep.subr.mxu0 0.0
  %2445 = vmatpush1.msra.mxu0 0.0
  %2446 = vmatprep.subr.mxu0 0.0
  %2447 = vmatpush1.msra.mxu0 0.0
  %2448 = vmatprep.subr.mxu0 0.0
  %2449 = vmatpush1.msra.mxu0 0.0
  %2450 = vmatprep.subr.mxu0 0.0
  %2451 = vmatpush1.msra.mxu0 0.0
  %2452 = vmatprep.subr.mxu0 0.0
  %2453 = vmatpush1.msra.mxu0 0.0
  %2454 = vmatprep.subr.mxu0 0.0
  %2455 = vmatpush1.msra.mxu0 0.0
  %2456 = vmatprep.subr.mxu0 0.0
  %2457 = vmatpush1.msra.mxu0 0.0
  %2458 = vmatprep.subr.mxu0 0.0
  %2459 = vmatpush1.msra.mxu0 0.0
  %2460 = vmatprep.subr.mxu0 0.0
  %2461 = vmatpush1.msra.mxu0 0.0
  %2462 = vmatprep.subr.mxu0 0.0
  %2463 = vmatpush1.msra.mxu0 0.0
  %2464 = vmatprep.subr.mxu0 0.0
  %2465 = vmatpush1.msra.mxu0 0.0
  %2466 = vmatprep.subr.mxu0 0.0
  %2467 = vmatpush1.msra.mxu0 0.0
  %2468 = vmatprep.subr.mxu0 0.0
  %2469 = vmatpush1.msra.mxu0 0.0
  %2470 = vmatprep.subr.mxu0 0.0
  %2471 = vmatpush1.msra.mxu0 0.0
  %2472 = vmatprep.subr.mxu0 0.0
  %2473 = vmatpush1.msra.mxu0 0.0
  %2474 = vmatprep.subr.mxu0 0.0
  %2475 = vmatpush1.msra.mxu0 0.0
  %2476 = vmatprep.subr.mxu0 0.0
  %2477 = vmatpush1.msra.mxu0 0.0
  %2478 = vmatprep.subr.mxu0 0.0
  %2479 = vmatpush1.msra.mxu0 0.0
  %2480 = vmatprep.subr.mxu0 0.0
  %2481 = vmatpush1.msra.mxu0 0.0
  %2482 = vmatprep.subr.mxu0 0.0
  %2483 = vmatpush1.msra.mxu0 0.0
  %2484 = vmatprep.subr.mxu0 0.0
  %2485 = vmatpush1.msra.mxu0 0.0
  %2486 = vmatprep.subr.mxu0 0.0
  %2487 = vmatpush1.msra.mxu0 0.0
  %2488 = vmatprep.subr.mxu0 0.0
  %2489 = vmatpush1.msra.mxu0 0.0
  %2490 = vmatprep.subr.mxu0 0.0
  %2491 = vmatpush1.msra.mxu0 0.0
  %2492 = vmatprep.mubr.f32.mxu0 0.0
  %2493 = vmatmul.mubr.f32.gmra.mrb[0].mxu0 %v2112
  %v2494 = vpop.f32.mrb[0].mxu0
  %v2495 = vadd.f32 0.0, %v2494
  %v2496 = vpop.f32.mrb[0].mxu0
  %2497 = vmatprep.mubr.f32.mxu0 0.0
  %2498 = vmatmul.mubr.f32.gmra.mrb[0].mxu0 %v2115
  %v2499 = vpop.f32.mrb[0].mxu0
  %v2500 = vadd.f32 0.0, %v2499
  %v2501 = vpop.f32.mrb[0].mxu0
  %2502 = vmatprep.mubr.f32.mxu0 0.0
  %2503 = vmatmul.mubr.f32.gmra.mrb[0].mxu0 %v2118
  %v2504 = vpop.f32.mrb[0].mxu0
  %v2505 = vadd.f32 0.0, %v2504
  %v2506 = vpop.f32.mrb[0].mxu0
  %2507 = vmatprep.mubr.f32.mxu0 0.0
  %2508 = vmatmul.mubr.f32.gmra.mrb[0].mxu0 %v2121
  %v2509 = vpop.f32.mrb[0].mxu0
  %v2510 = vadd.f32 0.0, %v2509
  %v2511 = vpop.f32.mrb[0].mxu0
  %2512 = vmatprep.mubr.f32.mxu0 0.0
  %2513 = vmatmul.mubr.f32.gmra.mrb[0].mxu0 %v2124
  %v2514 = vpop.f32.mrb[0].mxu0
  %v2515 = vadd.f32 0.0, %v2514
  %v2516 = vpop.f32.mrb[0].mxu0
  %2517 = vmatprep.mubr.f32.mxu0 0.0
  %2518 = vmatmul.mubr.f32.gmra.mrb[0].mxu0 %v2127
  %v2519 = vpop.f32.mrb[0].mxu0
  %v2520 = vadd.f32 0.0, %v2519
  %v2521 = vpop.f32.mrb[0].mxu0
  %2522 = vmatprep.mubr.f32.mxu0 0.0
  %2523 = vmatmul.mubr.f32.gmra.mrb[0].mxu0 %v2130
  %v2524 = vpop.f32.mrb[0].mxu0
  %v2525 = vadd.f32 0.0, %v2524
  %v2526 = vpop.f32.mrb[0].mxu0
  %2527 = vmatprep.mubr.f32.mxu0 0.0
  %2528 = vmatmul.mubr.f32.gmra.mrb[0].mxu0 %v2133
  %v2529 = vpop.f32.mrb[0].mxu0
  %v2530 = vadd.f32 0.0, %v2529
  %v2531 = vpop.f32.mrb[0].mxu0
  %2532 = vmatprep.mubr.f32.mxu0 0.0
  %2533 = vmatmul.mubr.f32.gmra.mrb[0].mxu0 %v2136
  %v2534 = vpop.f32.mrb[0].mxu0
  %v2535 = vadd.f32 0.0, %v2534
  %v2536 = vpop.f32.mrb[0].mxu0
  %2537 = vmatprep.mubr.f32.mxu0 0.0
  %2538 = vmatmul.mubr.f32.gmra.mrb[0].mxu0 %v2139
  %v2539 = vpop.f32.mrb[0].mxu0
  %v2540 = vadd.f32 0.0, %v2539
  %v2541 = vpop.f32.mrb[0].mxu0
  %2542 = vmatprep.mubr.f32.mxu0 0.0
  %2543 = vmatmul.mubr.f32.gmra.mrb[0].mxu0 %v2142
  %v2544 = vpop.f32.mrb[0].mxu0
  %v2545 = vadd.f32 0.0, %v2544
  %v2546 = vpop.f32.mrb[0].mxu0
  %2547 = vmatprep.mubr.f32.mxu0 0.0
  %2548 = vmatmul.mubr.f32.gmra.mrb[0].mxu0 %v2145
  %v2549 = vpop.f32.mrb[0].mxu0
  %v2550 = vadd.f32 0.0, %v2549
  %v2551 = vpop.f32.mrb[0].mxu0
  %2552 = vmatprep.mubr.f32.mxu0 0.0
  %2553 = vmatmul.mubr.f32.gmra.mrb[0].mxu0 %v2148
  %v2554 = vpop.f32.mrb[0].mxu0
  %v2555 = vadd.f32 0.0, %v2554
  %v2556 = vpop.f32.mrb[0].mxu0
  %2557 = vmatprep.mubr.f32.mxu0 0.0
  %2558 = vmatmul.mubr.f32.gmra.mrb[0].mxu0 %v2151
  %v2559 = vpop.f32.mrb[0].mxu0
  %v2560 = vadd.f32 0.0, %v2559
  %v2561 = vpop.f32.mrb[0].mxu0
  %2562 = vmatprep.mubr.f32.mxu0 0.0
  %2563 = vmatmul.mubr.f32.gmra.mrb[0].mxu0 %v2154
  %v2564 = vpop.f32.mrb[0].mxu0
  %v2565 = vadd.f32 0.0, %v2564
  %v2566 = vpop.f32.mrb[0].mxu0
  %2567 = vmatprep.mubr.f32.mxu0 0.0
  %2568 = vmatmul.mubr.f32.gmra.mrb[0].mxu0 %v2157
  %v2569 = vpop.f32.mrb[0].mxu0
  %v2570 = vadd.f32 0.0, %v2569
  %v2571 = vpop.f32.mrb[0].mxu0
  %2572 = vmatprep.mubr.f32.mxu0 0.0
  %2573 = vmatmul.mubr.f32.gmra.mrb[0].mxu0 %v2160
  %v2574 = vpop.f32.mrb[0].mxu0
  %v2575 = vadd.f32 0.0, %v2574
  %v2576 = vpop.f32.mrb[0].mxu0
  %2577 = vmatprep.mubr.f32.mxu0 0.0
  %2578 = vmatmul.mubr.f32.gmra.mrb[0].mxu0 %v2163
  %v2579 = vpop.f32.mrb[0].mxu0
  %v2580 = vadd.f32 0.0, %v2579
  %v2581 = vpop.f32.mrb[0].mxu0
  %2582 = vmatprep.mubr.f32.mxu0 0.0
  %2583 = vmatmul.mubr.f32.gmra.mrb[0].mxu0 %v2166
  %v2584 = vpop.f32.mrb[0].mxu0
  %v2585 = vadd.f32 0.0, %v2584
  %v2586 = vpop.f32.mrb[0].mxu0
  %2587 = vmatprep.mubr.f32.mxu0 0.0
  %2588 = vmatmul.mubr.f32.gmra.mrb[0].mxu0 %v2169
  %v2589 = vpop.f32.mrb[0].mxu0
  %v2590 = vadd.f32 0.0, %v2589
  %v2591 = vpop.f32.mrb[0].mxu0
  %2592 = vmatprep.mubr.f32.mxu0 0.0
  %2593 = vmatmul.mubr.f32.gmra.mrb[0].mxu0 %v2172
  %v2594 = vpop.f32.mrb[0].mxu0
  %v2595 = vadd.f32 0.0, %v2594
  %v2596 = vpop.f32.mrb[0].mxu0
  %2597 = vmatprep.mubr.f32.mxu0 0.0
  %2598 = vmatmul.mubr.f32.gmra.mrb[0].mxu0 %v2175
  %v2599 = vpop.f32.mrb[0].mxu0
  %v2600 = vadd.f32 0.0, %v2599
  %v2601 = vpop.f32.mrb[0].mxu0
  %2602 = vmatprep.mubr.f32.mxu0 0.0
  %2603 = vmatmul.mubr.f32.gmra.mrb[0].mxu0 %v2178
  %v2604 = vpop.f32.mrb[0].mxu0
  %v2605 = vadd.f32 0.0, %v2604
  %v2606 = vpop.f32.mrb[0].mxu0
  %2607 = vmatprep.mubr.f32.mxu0 0.0
  %2608 = vmatmul.mubr.f32.gmra.mrb[0].mxu0 %v2181
  %v2609 = vpop.f32.mrb[0].mxu0
  %v2610 = vadd.f32 0.0, %v2609
  %v2611 = vpop.f32.mrb[0].mxu0
  %2612 = vmatprep.mubr.f32.mxu0 0.0
  %2613 = vmatmul.mubr.f32.gmra.mrb[0].mxu0 %v2184
  %v2614 = vpop.f32.mrb[0].mxu0
  %v2615 = vadd.f32 0.0, %v2614
  %v2616 = vpop.f32.mrb[0].mxu0
  %2617 = vmatprep.mubr.f32.mxu0 0.0
  %2618 = vmatmul.mubr.f32.gmra.mrb[0].mxu0 %v2187
  %v2619 = vpop.f32.mrb[0].mxu0
  %v2620 = vadd.f32 0.0, %v2619
  %v2621 = vpop.f32.mrb[0].mxu0
  %2622 = vmatprep.mubr.f32.mxu0 0.0
  %2623 = vmatmul.mubr.f32.gmra.mrb[0].mxu0 %v2190
  %v2624 = vpop.f32.mrb[0].mxu0
  %v2625 = vadd.f32 0.0, %v2624
  %v2626 = vpop.f32.mrb[0].mxu0
  %2627 = vdwg.mxu0
  %v2628 = vld [vmem:[%s5] sm:$0xff]
  %v2629 = vld [vmem:[%s5 + $0x8] sm:$0xff]
  %v2630 = vld [vmem:[%s5 + $0x10] sm:$0xff]
  %v2631 = vld [vmem:[%s5 + $0x18] sm:$0xff]
  %v2632 = vld [vmem:[%s5 + $0x20] sm:$0xff]
  %v2633 = vld [vmem:[%s5 + $0x28] sm:$0xff]
  %v2634 = vld [vmem:[%s5 + $0x30] sm:$0xff]
  %v2635 = vld [vmem:[%s5 + $0x38] sm:$0xff]
  %v2636 = vld [vmem:[%s5 + $0x40] sm:$0xff]
  %v2637 = vld [vmem:[%s5 + $0x48] sm:$0xff]
  %v2638 = vld [vmem:[%s5 + $0x50] sm:$0xff]
  %v2639 = vld [vmem:[%s5 + $0x58] sm:$0xff]
  %v2640 = vld [vmem:[%s5 + $0x60] sm:$0xff]
  %v2641 = vld [vmem:[%s5 + $0x68] sm:$0xff]
  %v2642 = vld [vmem:[%s5 + $0x70] sm:$0xff]
  %v2643 = vld [vmem:[%s5 + $0x78] sm:$0xff]
  %v2644 = vld [vmem:[%s5 + $0x80] sm:$0xff]
  %v2645 = vld [vmem:[%s5 + $0x88] sm:$0xff]
  %v2646 = vld [vmem:[%s5 + $0x90] sm:$0xff]
  %v2647 = vld [vmem:[%s5 + $0x98] sm:$0xff]
  %v2648 = vld [vmem:[%s5 + $0xa0] sm:$0xff]
  %v2649 = vld [vmem:[%s5 + $0xa8] sm:$0xff]
  %v2650 = vld [vmem:[%s5 + $0xb0] sm:$0xff]
  %v2651 = vld [vmem:[%s5 + $0xb8] sm:$0xff]
  %v2652 = vld [vmem:[%s5 + $0xc0] sm:$0xff]
  %v2653 = vld [vmem:[%s5 + $0xc8] sm:$0xff]
  %v2654 = vld [vmem:[%s5 + $0xd0] sm:$0xff]
  %v2655 = vld [vmem:[%s5 + $0xd8] sm:$0xff]
  %v2656 = vld [vmem:[%s5 + $0xe0] sm:$0xff]
  %v2657 = vld [vmem:[%s5 + $0xe8] sm:$0xff]
  %v2658 = vld [vmem:[%s5 + $0xf0] sm:$0xff]
  %v2659 = vld [vmem:[%s5 + $0xf8] sm:$0xff]
  %v2660 = vld [vmem:[%s5 + $0x100] sm:$0xff]
  %v2661 = vld [vmem:[%s5 + $0x108] sm:$0xff]
  %v2662 = vld [vmem:[%s5 + $0x110] sm:$0xff]
  %v2663 = vld [vmem:[%s5 + $0x118] sm:$0xff]
  %v2664 = vld [vmem:[%s5 + $0x120] sm:$0xff]
  %v2665 = vld [vmem:[%s5 + $0x128] sm:$0xff]
  %v2666 = vld [vmem:[%s5 + $0x130] sm:$0xff]
  %v2667 = vld [vmem:[%s5 + $0x138] sm:$0xff]
  %v2668 = vld [vmem:[%s5 + $0x140] sm:$0xff]
  %v2669 = vld [vmem:[%s5 + $0x148] sm:$0xff]
  %v2670 = vld [vmem:[%s5 + $0x150] sm:$0xff]
  %v2671 = vld [vmem:[%s5 + $0x158] sm:$0xff]
  %v2672 = vld [vmem:[%s5 + $0x160] sm:$0xff]
  %v2673 = vld [vmem:[%s5 + $0x168] sm:$0xff]
  %v2674 = vld [vmem:[%s5 + $0x170] sm:$0xff]
  %v2675 = vld [vmem:[%s5 + $0x178] sm:$0xff]
  %v2676 = vld [vmem:[%s5 + $0x180] sm:$0xff]
  %v2677 = vld [vmem:[%s5 + $0x188] sm:$0xff]
  %v2678 = vld [vmem:[%s5 + $0x190] sm:$0xff]
  %v2679 = vld [vmem:[%s5 + $0x198] sm:$0xff]
  %v2680 = vld [vmem:[%s5 + $0x1a0] sm:$0xff]
  %v2681 = vld [vmem:[%s5 + $0x1a8] sm:$0xff]
  %v2682 = vld [vmem:[%s5 + $0x1b0] sm:$0xff]
  %v2683 = vld [vmem:[%s5 + $0x1b8] sm:$0xff]
  %v2684 = vld [vmem:[%s5 + $0x1c0] sm:$0xff]
  %v2685 = vld [vmem:[%s5 + $0x1c8] sm:$0xff]
  %v2686 = vld [vmem:[%s5 + $0x1d0] sm:$0xff]
  %v2687 = vld [vmem:[%s5 + $0x1d8] sm:$0xff]
  %v2688 = vld [vmem:[%s5 + $0x1e0] sm:$0xff]
  %v2689 = vld [vmem:[%s5 + $0x1e8] sm:$0xff]
  %v2690 = vld [vmem:[%s5 + $0x1f0] sm:$0xff]
  %v2691 = vld [vmem:[%s5 + $0x1f8] sm:$0xff]
  %v2692 = vld [vmem:[%s5 + $0x200] sm:$0xff]
  %v2693 = vld [vmem:[%s5 + $0x208] sm:$0xff]
  %v2694 = vld [vmem:[%s5 + $0x210] sm:$0xff]
  %v2695 = vld [vmem:[%s5 + $0x218] sm:$0xff]
  %v2696 = vld [vmem:[%s5 + $0x220] sm:$0xff]
  %v2697 = vld [vmem:[%s5 + $0x228] sm:$0xff]
  %v2698 = vld [vmem:[%s5 + $0x230] sm:$0xff]
  %v2699 = vld [vmem:[%s5 + $0x238] sm:$0xff]
  %v2700 = vld [vmem:[%s5 + $0x240] sm:$0xff]
  %v2701 = vld [vmem:[%s5 + $0x248] sm:$0xff]
  %v2702 = vld [vmem:[%s5 + $0x250] sm:$0xff]
  %v2703 = vld [vmem:[%s5 + $0x258] sm:$0xff]
  %v2704 = vld [vmem:[%s5 + $0x260] sm:$0xff]
  %v2705 = vld [vmem:[%s5 + $0x268] sm:$0xff]
  %v2706 = vld [vmem:[%s5 + $0x270] sm:$0x3]
  %v2707 = vld [vmem:[%s5 + $0x278] sm:$0x3]
  %v2708 = vld [vmem:[%s5 + $0x280] sm:$0x3]
  %v2709 = vmul.f32 %v2268, %v2628
  %v2710 = vmul.f32 %v2270, %v2629
  %v2711 = vmul.f32 %v2495, %v2630
  %v2712 = vmul.f32 %v2274, %v2631
  %v2713 = vmul.f32 %v2276, %v2632
  %v2714 = vmul.f32 %v2500, %v2633
  %v2715 = vmul.f32 %v2280, %v2634
  %v2716 = vmul.f32 %v2282, %v2635
  %v2717 = vmul.f32 %v2505, %v2636
  %v2718 = vmul.f32 %v2286, %v2637
  %v2719 = vmul.f32 %v2288, %v2638
  %v2720 = vmul.f32 %v2510, %v2639
  %v2721 = vmul.f32 %v2292, %v2640
  %v2722 = vmul.f32 %v2294, %v2641
  %v2723 = vmul.f32 %v2515, %v2642
  %v2724 = vmul.f32 %v2298, %v2643
  %v2725 = vmul.f32 %v2300, %v2644
  %v2726 = vmul.f32 %v2520, %v2645
  %v2727 = vmul.f32 %v2304, %v2646
  %v2728 = vmul.f32 %v2306, %v2647
  %v2729 = vmul.f32 %v2525, %v2648
  %v2730 = vmul.f32 %v2310, %v2649
  %v2731 = vmul.f32 %v2312, %v2650
  %v2732 = vmul.f32 %v2530, %v2651
  %v2733 = vmul.f32 %v2316, %v2652
  %v2734 = vmul.f32 %v2318, %v2653
  %v2735 = vmul.f32 %v2535, %v2654
  %v2736 = vmul.f32 %v2322, %v2655
  %v2737 = vmul.f32 %v2324, %v2656
  %v2738 = vmul.f32 %v2540, %v2657
  %v2739 = vmul.f32 %v2328, %v2658
  %v2740 = vmul.f32 %v2330, %v2659
  %v2741 = vmul.f32 %v2545, %v2660
  %v2742 = vmul.f32 %v2334, %v2661
  %v2743 = vmul.f32 %v2336, %v2662
  %v2744 = vmul.f32 %v2550, %v2663
  %v2745 = vmul.f32 %v2340, %v2664
  %v2746 = vmul.f32 %v2342, %v2665
  %v2747 = vmul.f32 %v2555, %v2666
  %v2748 = vmul.f32 %v2346, %v2667
  %v2749 = vmul.f32 %v2348, %v2668
  %v2750 = vmul.f32 %v2560, %v2669
  %v2751 = vmul.f32 %v2352, %v2670
  %v2752 = vmul.f32 %v2354, %v2671
  %v2753 = vmul.f32 %v2565, %v2672
  %v2754 = vmul.f32 %v2358, %v2673
  %v2755 = vmul.f32 %v2360, %v2674
  %v2756 = vmul.f32 %v2570, %v2675
  %v2757 = vmul.f32 %v2364, %v2676
  %v2758 = vmul.f32 %v2366, %v2677
  %v2759 = vmul.f32 %v2575, %v2678
  %v2760 = vmul.f32 %v2370, %v2679
  %v2761 = vmul.f32 %v2372, %v2680
  %v2762 = vmul.f32 %v2580, %v2681
  %v2763 = vmul.f32 %v2376, %v2682
  %v2764 = vmul.f32 %v2378, %v2683
  %v2765 = vmul.f32 %v2585, %v2684
  %v2766 = vmul.f32 %v2382, %v2685
  %v2767 = vmul.f32 %v2384, %v2686
  %v2768 = vmul.f32 %v2590, %v2687
  %v2769 = vmul.f32 %v2388, %v2688
  %v2770 = vmul.f32 %v2390, %v2689
  %v2771 = vmul.f32 %v2595, %v2690
  %v2772 = vmul.f32 %v2394, %v2691
  %v2773 = vmul.f32 %v2396, %v2692
  %v2774 = vmul.f32 %v2600, %v2693
  %v2775 = vmul.f32 %v2400, %v2694
  %v2776 = vmul.f32 %v2402, %v2695
  %v2777 = vmul.f32 %v2605, %v2696
  %v2778 = vmul.f32 %v2406, %v2697
  %v2779 = vmul.f32 %v2408, %v2698
  %v2780 = vmul.f32 %v2610, %v2699
  %v2781 = vmul.f32 %v2412, %v2700
  %v2782 = vmul.f32 %v2414, %v2701
  %v2783 = vmul.f32 %v2615, %v2702
  %v2784 = vmul.f32 %v2418, %v2703
  %v2785 = vmul.f32 %v2420, %v2704
  %v2786 = vmul.f32 %v2620, %v2705
  %v2787 = vmul.f32 %v2424, %v2706
  %v2788 = vmul.f32 %v2426, %v2707
  %v2789 = vmul.f32 %v2625, %v2708
  %v2791 = vsel %vm759, %v2711, 0
  %v2794 = vsel %vm759, %v2714, 0
  %v2797 = vsel %vm759, %v2717, 0
  %v2800 = vsel %vm759, %v2720, 0
  %v2803 = vsel %vm759, %v2723, 0
  %v2806 = vsel %vm759, %v2726, 0
  %v2809 = vsel %vm759, %v2729, 0
  %v2812 = vsel %vm759, %v2732, 0
  %v2815 = vsel %vm759, %v2735, 0
  %v2818 = vsel %vm759, %v2738, 0
  %v2821 = vsel %vm759, %v2741, 0
  %v2824 = vsel %vm759, %v2744, 0
  %v2827 = vsel %vm759, %v2747, 0
  %v2830 = vsel %vm759, %v2750, 0
  %v2833 = vsel %vm759, %v2753, 0
  %v2836 = vsel %vm759, %v2756, 0
  %v2839 = vsel %vm759, %v2759, 0
  %v2842 = vsel %vm759, %v2762, 0
  %v2845 = vsel %vm759, %v2765, 0
  %v2848 = vsel %vm759, %v2768, 0
  %v2851 = vsel %vm759, %v2771, 0
  %v2854 = vsel %vm759, %v2774, 0
  %v2857 = vsel %vm759, %v2777, 0
  %v2860 = vsel %vm759, %v2780, 0
  %v2863 = vsel %vm759, %v2783, 0
  %v2866 = vsel %vm759, %v2786, 0
  %v2869 = vsel %vm759, %v2789, 0
  %v2872 = vsel %vm759, %v1506, 0
  %v2875 = vsel %vm759, %v1509, 0
  %2877 = vmatprep.subr.mxu0 %v1424
  %2878 = vmatpush1.xpose.msra.mxu0 %v1422
  %2879 = vmatprep.subr.mxu0 %v1428
  %2880 = vmatpush1.xpose.msra.mxu0 %v1426
  %2881 = vmatprep.subr.mxu0 0.0
  %2882 = vmatpush1.xpose.msra.mxu0 0.0
  %2883 = vmatprep.subr.mxu0 0.0
  %2884 = vmatpush1.xpose.msra.mxu0 0.0
  %2885 = vmatprep.subr.mxu0 0.0
  %2886 = vmatpush1.xpose.msra.mxu0 0.0
  %2887 = vmatprep.subr.mxu0 0.0
  %2888 = vmatpush1.xpose.msra.mxu0 0.0
  %2889 = vmatprep.subr.mxu0 0.0
  %2890 = vmatpush1.xpose.msra.mxu0 0.0
  %2891 = vmatprep.subr.mxu0 0.0
  %2892 = vmatpush1.xpose.msra.mxu0 0.0
  %2893 = vmatprep.subr.mxu0 0.0
  %2894 = vmatpush1.xpose.msra.mxu0 0.0
  %2895 = vmatprep.subr.mxu0 0.0
  %2896 = vmatpush1.xpose.msra.mxu0 0.0
  %2897 = vmatprep.subr.mxu0 0.0
  %2898 = vmatpush1.xpose.msra.mxu0 0.0
  %2899 = vmatprep.subr.mxu0 0.0
  %2900 = vmatpush1.xpose.msra.mxu0 0.0
  %2901 = vmatprep.subr.mxu0 0.0
  %2902 = vmatpush1.xpose.msra.mxu0 0.0
  %2903 = vmatprep.subr.mxu0 0.0
  %2904 = vmatpush1.xpose.msra.mxu0 0.0
  %2905 = vmatprep.subr.mxu0 0.0
  %2906 = vmatpush1.xpose.msra.mxu0 0.0
  %2907 = vmatprep.subr.mxu0 0.0
  %2908 = vmatpush1.xpose.msra.mxu0 0.0
  %2909 = vmatprep.subr.mxu0 0.0
  %2910 = vmatpush1.xpose.msra.mxu0 0.0
  %2911 = vmatprep.subr.mxu0 0.0
  %2912 = vmatpush1.xpose.msra.mxu0 0.0
  %2913 = vmatprep.subr.mxu0 0.0
  %2914 = vmatpush1.xpose.msra.mxu0 0.0
  %2915 = vmatprep.subr.mxu0 0.0
  %2916 = vmatpush1.xpose.msra.mxu0 0.0
  %2917 = vmatprep.subr.mxu0 0.0
  %2918 = vmatpush1.xpose.msra.mxu0 0.0
  %2919 = vmatprep.subr.mxu0 0.0
  %2920 = vmatpush1.xpose.msra.mxu0 0.0
  %2921 = vmatprep.subr.mxu0 0.0
  %2922 = vmatpush1.xpose.msra.mxu0 0.0
  %2923 = vmatprep.subr.mxu0 0.0
  %2924 = vmatpush1.xpose.msra.mxu0 0.0
  %2925 = vmatprep.subr.mxu0 0.0
  %2926 = vmatpush1.xpose.msra.mxu0 0.0
  %2927 = vmatprep.subr.mxu0 0.0
  %2928 = vmatpush1.xpose.msra.mxu0 0.0
  %2929 = vmatprep.subr.mxu0 0.0
  %2930 = vmatpush1.xpose.msra.mxu0 0.0
  %2931 = vmatprep.subr.mxu0 0.0
  %2932 = vmatpush1.xpose.msra.mxu0 0.0
  %2933 = vmatprep.subr.mxu0 0.0
  %2934 = vmatpush1.xpose.msra.mxu0 0.0
  %2935 = vmatprep.subr.mxu0 0.0
  %2936 = vmatpush1.xpose.msra.mxu0 0.0
  %2937 = vmatprep.subr.mxu0 0.0
  %2938 = vmatpush1.xpose.msra.mxu0 0.0
  %2939 = vmatprep.subr.mxu0 0.0
  %2940 = vmatpush1.xpose.msra.mxu0 0.0
  %2941 = vmatprep.mubr.f32.mxu0 %v2710
  %2942 = vmatmul.mubr.f32.gmra.mrb[0].mxu0 %v2709
  %v2943 = vpop.f32.mrb[0].mxu0
  %v2944 = vadd.f32 %v335, %v2943
  %v2945 = vpop.f32.mrb[0].mxu0
  %2946 = vmatprep.mubr.f32.mxu0 %v2713
  %2947 = vmatmul.mubr.f32.gmra.mrb[0].mxu0 %v2712
  %v2948 = vpop.f32.mrb[0].mxu0
  %v2949 = vadd.f32 %v336, %v2948
  %v2950 = vpop.f32.mrb[0].mxu0
  %2951 = vmatprep.mubr.f32.mxu0 %v2716
  %2952 = vmatmul.mubr.f32.gmra.mrb[0].mxu0 %v2715
  %v2953 = vpop.f32.mrb[0].mxu0
  %v2954 = vadd.f32 %v337, %v2953
  %v2955 = vpop.f32.mrb[0].mxu0
  %2956 = vmatprep.mubr.f32.mxu0 %v2719
  %2957 = vmatmul.mubr.f32.gmra.mrb[0].mxu0 %v2718
  %v2958 = vpop.f32.mrb[0].mxu0
  %v2959 = vadd.f32 %v338, %v2958
  %v2960 = vpop.f32.mrb[0].mxu0
  %2961 = vmatprep.mubr.f32.mxu0 %v2722
  %2962 = vmatmul.mubr.f32.gmra.mrb[0].mxu0 %v2721
  %v2963 = vpop.f32.mrb[0].mxu0
  %v2964 = vadd.f32 %v339, %v2963
  %v2965 = vpop.f32.mrb[0].mxu0
  %2966 = vmatprep.mubr.f32.mxu0 %v2725
  %2967 = vmatmul.mubr.f32.gmra.mrb[0].mxu0 %v2724
  %v2968 = vpop.f32.mrb[0].mxu0
  %v2969 = vadd.f32 %v340, %v2968
  %v2970 = vpop.f32.mrb[0].mxu0
  %2971 = vmatprep.mubr.f32.mxu0 %v2728
  %2972 = vmatmul.mubr.f32.gmra.mrb[0].mxu0 %v2727
  %v2973 = vpop.f32.mrb[0].mxu0
  %v2974 = vadd.f32 %v341, %v2973
  %v2975 = vpop.f32.mrb[0].mxu0
  %2976 = vmatprep.mubr.f32.mxu0 %v2731
  %2977 = vmatmul.mubr.f32.gmra.mrb[0].mxu0 %v2730
  %v2978 = vpop.f32.mrb[0].mxu0
  %v2979 = vadd.f32 %v342, %v2978
  %v2980 = vpop.f32.mrb[0].mxu0
  %2981 = vmatprep.mubr.f32.mxu0 %v2734
  %2982 = vmatmul.mubr.f32.gmra.mrb[0].mxu0 %v2733
  %v2983 = vpop.f32.mrb[0].mxu0
  %v2984 = vadd.f32 %v343, %v2983
  %v2985 = vpop.f32.mrb[0].mxu0
  %2986 = vmatprep.mubr.f32.mxu0 %v2737
  %2987 = vmatmul.mubr.f32.gmra.mrb[0].mxu0 %v2736
  %v2988 = vpop.f32.mrb[0].mxu0
  %v2989 = vadd.f32 %v344, %v2988
  %v2990 = vpop.f32.mrb[0].mxu0
  %2991 = vmatprep.mubr.f32.mxu0 %v2740
  %2992 = vmatmul.mubr.f32.gmra.mrb[0].mxu0 %v2739
  %v2993 = vpop.f32.mrb[0].mxu0
  %v2994 = vadd.f32 %v345, %v2993
  %v2995 = vpop.f32.mrb[0].mxu0
  %2996 = vmatprep.mubr.f32.mxu0 %v2743
  %2997 = vmatmul.mubr.f32.gmra.mrb[0].mxu0 %v2742
  %v2998 = vpop.f32.mrb[0].mxu0
  %v2999 = vadd.f32 %v346, %v2998
  %v3000 = vpop.f32.mrb[0].mxu0
  %3001 = vmatprep.mubr.f32.mxu0 %v2746
  %3002 = vmatmul.mubr.f32.gmra.mrb[0].mxu0 %v2745
  %v3003 = vpop.f32.mrb[0].mxu0
  %v3004 = vadd.f32 %v347, %v3003
  %v3005 = vpop.f32.mrb[0].mxu0
  %3006 = vmatprep.mubr.f32.mxu0 %v2749
  %3007 = vmatmul.mubr.f32.gmra.mrb[0].mxu0 %v2748
  %v3008 = vpop.f32.mrb[0].mxu0
  %v3009 = vadd.f32 %v348, %v3008
  %v3010 = vpop.f32.mrb[0].mxu0
  %3011 = vmatprep.mubr.f32.mxu0 %v2752
  %3012 = vmatmul.mubr.f32.gmra.mrb[0].mxu0 %v2751
  %v3013 = vpop.f32.mrb[0].mxu0
  %v3014 = vadd.f32 %v349, %v3013
  %v3015 = vpop.f32.mrb[0].mxu0
  %3016 = vmatprep.mubr.f32.mxu0 %v2755
  %3017 = vmatmul.mubr.f32.gmra.mrb[0].mxu0 %v2754
  %v3018 = vpop.f32.mrb[0].mxu0
  %v3019 = vadd.f32 %v350, %v3018
  %v3020 = vpop.f32.mrb[0].mxu0
  %3021 = vmatprep.mubr.f32.mxu0 %v2758
  %3022 = vmatmul.mubr.f32.gmra.mrb[0].mxu0 %v2757
  %v3023 = vpop.f32.mrb[0].mxu0
  %v3024 = vadd.f32 %v351, %v3023
  %v3025 = vpop.f32.mrb[0].mxu0
  %3026 = vmatprep.mubr.f32.mxu0 %v2761
  %3027 = vmatmul.mubr.f32.gmra.mrb[0].mxu0 %v2760
  %v3028 = vpop.f32.mrb[0].mxu0
  %v3029 = vadd.f32 %v352, %v3028
  %v3030 = vpop.f32.mrb[0].mxu0
  %3031 = vmatprep.mubr.f32.mxu0 %v2764
  %3032 = vmatmul.mubr.f32.gmra.mrb[0].mxu0 %v2763
  %v3033 = vpop.f32.mrb[0].mxu0
  %v3034 = vadd.f32 %v353, %v3033
  %v3035 = vpop.f32.mrb[0].mxu0
  %3036 = vmatprep.mubr.f32.mxu0 %v2767
  %3037 = vmatmul.mubr.f32.gmra.mrb[0].mxu0 %v2766
  %v3038 = vpop.f32.mrb[0].mxu0
  %v3039 = vadd.f32 %v354, %v3038
  %v3040 = vpop.f32.mrb[0].mxu0
  %3041 = vmatprep.mubr.f32.mxu0 %v2770
  %3042 = vmatmul.mubr.f32.gmra.mrb[0].mxu0 %v2769
  %v3043 = vpop.f32.mrb[0].mxu0
  %v3044 = vadd.f32 %v355, %v3043
  %v3045 = vpop.f32.mrb[0].mxu0
  %3046 = vmatprep.mubr.f32.mxu0 %v2773
  %3047 = vmatmul.mubr.f32.gmra.mrb[0].mxu0 %v2772
  %v3048 = vpop.f32.mrb[0].mxu0
  %v3049 = vadd.f32 %v356, %v3048
  %v3050 = vpop.f32.mrb[0].mxu0
  %3051 = vmatprep.mubr.f32.mxu0 %v2776
  %3052 = vmatmul.mubr.f32.gmra.mrb[0].mxu0 %v2775
  %v3053 = vpop.f32.mrb[0].mxu0
  %v3054 = vadd.f32 %v357, %v3053
  %v3055 = vpop.f32.mrb[0].mxu0
  %3056 = vmatprep.mubr.f32.mxu0 %v2779
  %3057 = vmatmul.mubr.f32.gmra.mrb[0].mxu0 %v2778
  %v3058 = vpop.f32.mrb[0].mxu0
  %v3059 = vadd.f32 %v358, %v3058
  %v3060 = vpop.f32.mrb[0].mxu0
  %3061 = vmatprep.mubr.f32.mxu0 %v2782
  %3062 = vmatmul.mubr.f32.gmra.mrb[0].mxu0 %v2781
  %v3063 = vpop.f32.mrb[0].mxu0
  %v3064 = vadd.f32 %v359, %v3063
  %v3065 = vpop.f32.mrb[0].mxu0
  %3066 = vmatprep.mubr.f32.mxu0 %v2785
  %3067 = vmatmul.mubr.f32.gmra.mrb[0].mxu0 %v2784
  %v3068 = vpop.f32.mrb[0].mxu0
  %v3069 = vadd.f32 %v360, %v3068
  %v3070 = vpop.f32.mrb[0].mxu0
  %3071 = vmatprep.mubr.f32.mxu0 %v2788
  %3072 = vmatmul.mubr.f32.gmra.mrb[0].mxu0 %v2787
  %v3073 = vpop.f32.mrb[0].mxu0
  %v3074 = vadd.f32 %v361, %v3073
  %v3075 = vpop.f32.mrb[0].mxu0
  %3076 = vdwg.mxu0
  %3077 = vmatprep.subr.mxu0 0.0
  %3078 = vmatpush1.xpose.msra.mxu0 %v2872
  %3079 = vmatprep.subr.mxu0 0.0
  %3080 = vmatpush1.xpose.msra.mxu0 %v2875
  %3081 = vmatprep.subr.mxu0 0.0
  %3082 = vmatpush1.xpose.msra.mxu0 0.0
  %3083 = vmatprep.subr.mxu0 0.0
  %3084 = vmatpush1.xpose.msra.mxu0 0.0
  %3085 = vmatprep.subr.mxu0 0.0
  %3086 = vmatpush1.xpose.msra.mxu0 0.0
  %3087 = vmatprep.subr.mxu0 0.0
  %3088 = vmatpush1.xpose.msra.mxu0 0.0
  %3089 = vmatprep.subr.mxu0 0.0
  %3090 = vmatpush1.xpose.msra.mxu0 0.0
  %3091 = vmatprep.subr.mxu0 0.0
  %3092 = vmatpush1.xpose.msra.mxu0 0.0
  %3093 = vmatprep.subr.mxu0 0.0
  %3094 = vmatpush1.xpose.msra.mxu0 0.0
  %3095 = vmatprep.subr.mxu0 0.0
  %3096 = vmatpush1.xpose.msra.mxu0 0.0
  %3097 = vmatprep.subr.mxu0 0.0
  %3098 = vmatpush1.xpose.msra.mxu0 0.0
  %3099 = vmatprep.subr.mxu0 0.0
  %3100 = vmatpush1.xpose.msra.mxu0 0.0
  %3101 = vmatprep.subr.mxu0 0.0
  %3102 = vmatpush1.xpose.msra.mxu0 0.0
  %3103 = vmatprep.subr.mxu0 0.0
  %3104 = vmatpush1.xpose.msra.mxu0 0.0
  %3105 = vmatprep.subr.mxu0 0.0
  %3106 = vmatpush1.xpose.msra.mxu0 0.0
  %3107 = vmatprep.subr.mxu0 0.0
  %3108 = vmatpush1.xpose.msra.mxu0 0.0
  %3109 = vmatprep.subr.mxu0 0.0
  %3110 = vmatpush1.xpose.msra.mxu0 0.0
  %3111 = vmatprep.subr.mxu0 0.0
  %3112 = vmatpush1.xpose.msra.mxu0 0.0
  %3113 = vmatprep.subr.mxu0 0.0
  %3114 = vmatpush1.xpose.msra.mxu0 0.0
  %3115 = vmatprep.subr.mxu0 0.0
  %3116 = vmatpush1.xpose.msra.mxu0 0.0
  %3117 = vmatprep.subr.mxu0 0.0
  %3118 = vmatpush1.xpose.msra.mxu0 0.0
  %3119 = vmatprep.subr.mxu0 0.0
  %3120 = vmatpush1.xpose.msra.mxu0 0.0
  %3121 = vmatprep.subr.mxu0 0.0
  %3122 = vmatpush1.xpose.msra.mxu0 0.0
  %3123 = vmatprep.subr.mxu0 0.0
  %3124 = vmatpush1.xpose.msra.mxu0 0.0
  %3125 = vmatprep.subr.mxu0 0.0
  %3126 = vmatpush1.xpose.msra.mxu0 0.0
  %3127 = vmatprep.subr.mxu0 0.0
  %3128 = vmatpush1.xpose.msra.mxu0 0.0
  %3129 = vmatprep.subr.mxu0 0.0
  %3130 = vmatpush1.xpose.msra.mxu0 0.0
  %3131 = vmatprep.subr.mxu0 0.0
  %3132 = vmatpush1.xpose.msra.mxu0 0.0
  %3133 = vmatprep.subr.mxu0 0.0
  %3134 = vmatpush1.xpose.msra.mxu0 0.0
  %3135 = vmatprep.subr.mxu0 0.0
  %3136 = vmatpush1.xpose.msra.mxu0 0.0
  %3137 = vmatprep.subr.mxu0 0.0
  %3138 = vmatpush1.xpose.msra.mxu0 0.0
  %3139 = vmatprep.subr.mxu0 0.0
  %3140 = vmatpush1.xpose.msra.mxu0 0.0
  %3141 = vmatprep.mubr.f32.mxu0 0.0
  %3142 = vmatmul.mubr.f32.gmra.mrb[0].mxu0 %v2791
  %v3143 = vpop.f32.mrb[0].mxu0
  %v3144 = vadd.f32 %v2944, %v3143
  %v3145 = vpop.f32.mrb[0].mxu0
  %3146 = vmatprep.mubr.f32.mxu0 0.0
  %3147 = vmatmul.mubr.f32.gmra.mrb[0].mxu0 %v2794
  %v3148 = vpop.f32.mrb[0].mxu0
  %v3149 = vadd.f32 %v2949, %v3148
  %v3150 = vpop.f32.mrb[0].mxu0
  %3151 = vmatprep.mubr.f32.mxu0 0.0
  %3152 = vmatmul.mubr.f32.gmra.mrb[0].mxu0 %v2797
  %v3153 = vpop.f32.mrb[0].mxu0
  %v3154 = vadd.f32 %v2954, %v3153
  %v3155 = vpop.f32.mrb[0].mxu0
  %3156 = vmatprep.mubr.f32.mxu0 0.0
  %3157 = vmatmul.mubr.f32.gmra.mrb[0].mxu0 %v2800
  %v3158 = vpop.f32.mrb[0].mxu0
  %v3159 = vadd.f32 %v2959, %v3158
  %v3160 = vpop.f32.mrb[0].mxu0
  %3161 = vmatprep.mubr.f32.mxu0 0.0
  %3162 = vmatmul.mubr.f32.gmra.mrb[0].mxu0 %v2803
  %v3163 = vpop.f32.mrb[0].mxu0
  %v3164 = vadd.f32 %v2964, %v3163
  %v3165 = vpop.f32.mrb[0].mxu0
  %3166 = vmatprep.mubr.f32.mxu0 0.0
  %3167 = vmatmul.mubr.f32.gmra.mrb[0].mxu0 %v2806
  %v3168 = vpop.f32.mrb[0].mxu0
  %v3169 = vadd.f32 %v2969, %v3168
  %v3170 = vpop.f32.mrb[0].mxu0
  %3171 = vmatprep.mubr.f32.mxu0 0.0
  %3172 = vmatmul.mubr.f32.gmra.mrb[0].mxu0 %v2809
  %v3173 = vpop.f32.mrb[0].mxu0
  %v3174 = vadd.f32 %v2974, %v3173
  %v3175 = vpop.f32.mrb[0].mxu0
  %3176 = vmatprep.mubr.f32.mxu0 0.0
  %3177 = vmatmul.mubr.f32.gmra.mrb[0].mxu0 %v2812
  %v3178 = vpop.f32.mrb[0].mxu0
  %v3179 = vadd.f32 %v2979, %v3178
  %v3180 = vpop.f32.mrb[0].mxu0
  %3181 = vmatprep.mubr.f32.mxu0 0.0
  %3182 = vmatmul.mubr.f32.gmra.mrb[0].mxu0 %v2815
  %v3183 = vpop.f32.mrb[0].mxu0
  %v3184 = vadd.f32 %v2984, %v3183
  %v3185 = vpop.f32.mrb[0].mxu0
  %3186 = vmatprep.mubr.f32.mxu0 0.0
  %3187 = vmatmul.mubr.f32.gmra.mrb[0].mxu0 %v2818
  %v3188 = vpop.f32.mrb[0].mxu0
  %v3189 = vadd.f32 %v2989, %v3188
  %v3190 = vpop.f32.mrb[0].mxu0
  %3191 = vmatprep.mubr.f32.mxu0 0.0
  %3192 = vmatmul.mubr.f32.gmra.mrb[0].mxu0 %v2821
  %v3193 = vpop.f32.mrb[0].mxu0
  %v3194 = vadd.f32 %v2994, %v3193
  %v3195 = vpop.f32.mrb[0].mxu0
  %3196 = vmatprep.mubr.f32.mxu0 0.0
  %3197 = vmatmul.mubr.f32.gmra.mrb[0].mxu0 %v2824
  %v3198 = vpop.f32.mrb[0].mxu0
  %v3199 = vadd.f32 %v2999, %v3198
  %v3200 = vpop.f32.mrb[0].mxu0
  %3201 = vmatprep.mubr.f32.mxu0 0.0
  %3202 = vmatmul.mubr.f32.gmra.mrb[0].mxu0 %v2827
  %v3203 = vpop.f32.mrb[0].mxu0
  %v3204 = vadd.f32 %v3004, %v3203
  %v3205 = vpop.f32.mrb[0].mxu0
  %3206 = vmatprep.mubr.f32.mxu0 0.0
  %3207 = vmatmul.mubr.f32.gmra.mrb[0].mxu0 %v2830
  %v3208 = vpop.f32.mrb[0].mxu0
  %v3209 = vadd.f32 %v3009, %v3208
  %v3210 = vpop.f32.mrb[0].mxu0
  %3211 = vmatprep.mubr.f32.mxu0 0.0
  %3212 = vmatmul.mubr.f32.gmra.mrb[0].mxu0 %v2833
  %v3213 = vpop.f32.mrb[0].mxu0
  %v3214 = vadd.f32 %v3014, %v3213
  %v3215 = vpop.f32.mrb[0].mxu0
  %3216 = vmatprep.mubr.f32.mxu0 0.0
  %3217 = vmatmul.mubr.f32.gmra.mrb[0].mxu0 %v2836
  %v3218 = vpop.f32.mrb[0].mxu0
  %v3219 = vadd.f32 %v3019, %v3218
  %v3220 = vpop.f32.mrb[0].mxu0
  %3221 = vmatprep.mubr.f32.mxu0 0.0
  %3222 = vmatmul.mubr.f32.gmra.mrb[0].mxu0 %v2839
  %v3223 = vpop.f32.mrb[0].mxu0
  %v3224 = vadd.f32 %v3024, %v3223
  %v3225 = vpop.f32.mrb[0].mxu0
  %3226 = vmatprep.mubr.f32.mxu0 0.0
  %3227 = vmatmul.mubr.f32.gmra.mrb[0].mxu0 %v2842
  %v3228 = vpop.f32.mrb[0].mxu0
  %v3229 = vadd.f32 %v3029, %v3228
  %v3230 = vpop.f32.mrb[0].mxu0
  %3231 = vmatprep.mubr.f32.mxu0 0.0
  %3232 = vmatmul.mubr.f32.gmra.mrb[0].mxu0 %v2845
  %v3233 = vpop.f32.mrb[0].mxu0
  %v3234 = vadd.f32 %v3034, %v3233
  %v3235 = vpop.f32.mrb[0].mxu0
  %3236 = vmatprep.mubr.f32.mxu0 0.0
  %3237 = vmatmul.mubr.f32.gmra.mrb[0].mxu0 %v2848
  %v3238 = vpop.f32.mrb[0].mxu0
  %v3239 = vadd.f32 %v3039, %v3238
  %v3240 = vpop.f32.mrb[0].mxu0
  %3241 = vmatprep.mubr.f32.mxu0 0.0
  %3242 = vmatmul.mubr.f32.gmra.mrb[0].mxu0 %v2851
  %v3243 = vpop.f32.mrb[0].mxu0
  %v3244 = vadd.f32 %v3044, %v3243
  %v3245 = vpop.f32.mrb[0].mxu0
  %3246 = vmatprep.mubr.f32.mxu0 0.0
  %3247 = vmatmul.mubr.f32.gmra.mrb[0].mxu0 %v2854
  %v3248 = vpop.f32.mrb[0].mxu0
  %v3249 = vadd.f32 %v3049, %v3248
  %v3250 = vpop.f32.mrb[0].mxu0
  %3251 = vmatprep.mubr.f32.mxu0 0.0
  %3252 = vmatmul.mubr.f32.gmra.mrb[0].mxu0 %v2857
  %v3253 = vpop.f32.mrb[0].mxu0
  %v3254 = vadd.f32 %v3054, %v3253
  %v3255 = vpop.f32.mrb[0].mxu0
  %3256 = vmatprep.mubr.f32.mxu0 0.0
  %3257 = vmatmul.mubr.f32.gmra.mrb[0].mxu0 %v2860
  %v3258 = vpop.f32.mrb[0].mxu0
  %v3259 = vadd.f32 %v3059, %v3258
  %v3260 = vpop.f32.mrb[0].mxu0
  %3261 = vmatprep.mubr.f32.mxu0 0.0
  %3262 = vmatmul.mubr.f32.gmra.mrb[0].mxu0 %v2863
  %v3263 = vpop.f32.mrb[0].mxu0
  %v3264 = vadd.f32 %v3064, %v3263
  %v3265 = vpop.f32.mrb[0].mxu0
  %3266 = vmatprep.mubr.f32.mxu0 0.0
  %3267 = vmatmul.mubr.f32.gmra.mrb[0].mxu0 %v2866
  %v3268 = vpop.f32.mrb[0].mxu0
  %v3269 = vadd.f32 %v3069, %v3268
  %v3270 = vpop.f32.mrb[0].mxu0
  %3271 = vmatprep.mubr.f32.mxu0 0.0
  %3272 = vmatmul.mubr.f32.gmra.mrb[0].mxu0 %v2869
  %v3273 = vpop.f32.mrb[0].mxu0
  %v3274 = vadd.f32 %v3074, %v3273
  %v3275 = vpop.f32.mrb[0].mxu0
  %3276 = vdwg.mxu0
  %v3277 = vsel %vm2110, %v3144, -inf
  %3278 = vmax.xlane.f32.xlu0 %v3277
  %v3279 = vpop.xlane.xlu0 %3278
  %v3280 = vsel %vm2110, %v3149, -inf
  %3281 = vmax.xlane.f32.xlu0 %v3280
  %v3282 = vpop.xlane.xlu0 %3281
  %v3283 = vsel %vm2110, %v3154, -inf
  %3284 = vmax.xlane.f32.xlu0 %v3283
  %v3285 = vpop.xlane.xlu0 %3284
  %v3286 = vsel %vm2110, %v3159, -inf
  %3287 = vmax.xlane.f32.xlu0 %v3286
  %v3288 = vpop.xlane.xlu0 %3287
  %v3289 = vsel %vm2110, %v3164, -inf
  %3290 = vmax.xlane.f32.xlu0 %v3289
  %v3291 = vpop.xlane.xlu0 %3290
  %v3292 = vsel %vm2110, %v3169, -inf
  %3293 = vmax.xlane.f32.xlu0 %v3292
  %v3294 = vpop.xlane.xlu0 %3293
  %v3295 = vsel %vm2110, %v3174, -inf
  %3296 = vmax.xlane.f32.xlu0 %v3295
  %v3297 = vpop.xlane.xlu0 %3296
  %v3298 = vsel %vm2110, %v3179, -inf
  %3299 = vmax.xlane.f32.xlu0 %v3298
  %v3300 = vpop.xlane.xlu0 %3299
  %v3301 = vsel %vm2110, %v3184, -inf
  %3302 = vmax.xlane.f32.xlu0 %v3301
  %v3303 = vpop.xlane.xlu0 %3302
  %v3304 = vsel %vm2110, %v3189, -inf
  %3305 = vmax.xlane.f32.xlu0 %v3304
  %v3306 = vpop.xlane.xlu0 %3305
  %v3307 = vsel %vm2110, %v3194, -inf
  %3308 = vmax.xlane.f32.xlu0 %v3307
  %v3309 = vpop.xlane.xlu0 %3308
  %v3310 = vsel %vm2110, %v3199, -inf
  %3311 = vmax.xlane.f32.xlu0 %v3310
  %v3312 = vpop.xlane.xlu0 %3311
  %v3313 = vsel %vm2110, %v3204, -inf
  %3314 = vmax.xlane.f32.xlu0 %v3313
  %v3315 = vpop.xlane.xlu0 %3314
  %v3316 = vsel %vm2110, %v3209, -inf
  %3317 = vmax.xlane.f32.xlu0 %v3316
  %v3318 = vpop.xlane.xlu0 %3317
  %v3319 = vsel %vm2110, %v3214, -inf
  %3320 = vmax.xlane.f32.xlu0 %v3319
  %v3321 = vpop.xlane.xlu0 %3320
  %v3322 = vsel %vm2110, %v3219, -inf
  %3323 = vmax.xlane.f32.xlu0 %v3322
  %v3324 = vpop.xlane.xlu0 %3323
  %v3325 = vsel %vm2110, %v3224, -inf
  %3326 = vmax.xlane.f32.xlu0 %v3325
  %v3327 = vpop.xlane.xlu0 %3326
  %v3328 = vsel %vm2110, %v3229, -inf
  %3329 = vmax.xlane.f32.xlu0 %v3328
  %v3330 = vpop.xlane.xlu0 %3329
  %v3331 = vsel %vm2110, %v3234, -inf
  %3332 = vmax.xlane.f32.xlu0 %v3331
  %v3333 = vpop.xlane.xlu0 %3332
  %v3334 = vsel %vm2110, %v3239, -inf
  %3335 = vmax.xlane.f32.xlu0 %v3334
  %v3336 = vpop.xlane.xlu0 %3335
  %v3337 = vsel %vm2110, %v3244, -inf
  %3338 = vmax.xlane.f32.xlu0 %v3337
  %v3339 = vpop.xlane.xlu0 %3338
  %v3340 = vsel %vm2110, %v3249, -inf
  %3341 = vmax.xlane.f32.xlu0 %v3340
  %v3342 = vpop.xlane.xlu0 %3341
  %v3343 = vsel %vm2110, %v3254, -inf
  %3344 = vmax.xlane.f32.xlu0 %v3343
  %v3345 = vpop.xlane.xlu0 %3344
  %v3346 = vsel %vm2110, %v3259, -inf
  %3347 = vmax.xlane.f32.xlu0 %v3346
  %v3348 = vpop.xlane.xlu0 %3347
  %v3349 = vsel %vm2110, %v3264, -inf
  %3350 = vmax.xlane.f32.xlu0 %v3349
  %v3351 = vpop.xlane.xlu0 %3350
  %v3352 = vsel %vm2110, %v3269, -inf
  %3353 = vmax.xlane.f32.xlu0 %v3352
  %v3354 = vpop.xlane.xlu0 %3353
  %vm3355 = vcmask 107520
  %v3356 = vsel %vm3355, %v3274, -inf
  %3357 = vmax.xlane.f32.xlu0 %v3356
  %v3358 = vpop.xlane.xlu0 %3357
  %v3359 = vsub.f32 %v3144, %v3279
  %v3360 = vsub.f32 %v3149, %v3282
  %v3361 = vsub.f32 %v3154, %v3285
  %v3362 = vsub.f32 %v3159, %v3288
  %v3363 = vsub.f32 %v3164, %v3291
  %v3364 = vsub.f32 %v3169, %v3294
  %v3365 = vsub.f32 %v3174, %v3297
  %v3366 = vsub.f32 %v3179, %v3300
  %v3367 = vsub.f32 %v3184, %v3303
  %v3368 = vsub.f32 %v3189, %v3306
  %v3369 = vsub.f32 %v3194, %v3309
  %v3370 = vsub.f32 %v3199, %v3312
  %v3371 = vsub.f32 %v3204, %v3315
  %v3372 = vsub.f32 %v3209, %v3318
  %v3373 = vsub.f32 %v3214, %v3321
  %v3374 = vsub.f32 %v3219, %v3324
  %v3375 = vsub.f32 %v3224, %v3327
  %v3376 = vsub.f32 %v3229, %v3330
  %v3377 = vsub.f32 %v3234, %v3333
  %v3378 = vsub.f32 %v3239, %v3336
  %v3379 = vsub.f32 %v3244, %v3339
  %v3380 = vsub.f32 %v3249, %v3342
  %v3381 = vsub.f32 %v3254, %v3345
  %v3382 = vsub.f32 %v3259, %v3348
  %v3383 = vsub.f32 %v3264, %v3351
  %v3384 = vsub.f32 %v3269, %v3354
  %v3385 = vsub.f32 %v3274, %v3358
  %v3386 = vmul.f32 %v3359, 1.442695
  %v3387 = vpow.pop %v3386
  %v3388 = vmul.f32 %v3360, 1.442695
  %v3389 = vpow.pop %v3388
  %v3390 = vmul.f32 %v3361, 1.442695
  %v3391 = vpow.pop %v3390
  %v3392 = vmul.f32 %v3362, 1.442695
  %v3393 = vpow.pop %v3392
  %v3394 = vmul.f32 %v3363, 1.442695
  %v3395 = vpow.pop %v3394
  %v3396 = vmul.f32 %v3364, 1.442695
  %v3397 = vpow.pop %v3396
  %v3398 = vmul.f32 %v3365, 1.442695
  %v3399 = vpow.pop %v3398
  %v3400 = vmul.f32 %v3366, 1.442695
  %v3401 = vpow.pop %v3400
  %v3402 = vmul.f32 %v3367, 1.442695
  %v3403 = vpow.pop %v3402
  %v3404 = vmul.f32 %v3368, 1.442695
  %v3405 = vpow.pop %v3404
  %v3406 = vmul.f32 %v3369, 1.442695
  %v3407 = vpow.pop %v3406
  %v3408 = vmul.f32 %v3370, 1.442695
  %v3409 = vpow.pop %v3408
  %v3410 = vmul.f32 %v3371, 1.442695
  %v3411 = vpow.pop %v3410
  %v3412 = vmul.f32 %v3372, 1.442695
  %v3413 = vpow.pop %v3412
  %v3414 = vmul.f32 %v3373, 1.442695
  %v3415 = vpow.pop %v3414
  %v3416 = vmul.f32 %v3374, 1.442695
  %v3417 = vpow.pop %v3416
  %v3418 = vmul.f32 %v3375, 1.442695
  %v3419 = vpow.pop %v3418
  %v3420 = vmul.f32 %v3376, 1.442695
  %v3421 = vpow.pop %v3420
  %v3422 = vmul.f32 %v3377, 1.442695
  %v3423 = vpow.pop %v3422
  %v3424 = vmul.f32 %v3378, 1.442695
  %v3425 = vpow.pop %v3424
  %v3426 = vmul.f32 %v3379, 1.442695
  %v3427 = vpow.pop %v3426
  %v3428 = vmul.f32 %v3380, 1.442695
  %v3429 = vpow.pop %v3428
  %v3430 = vmul.f32 %v3381, 1.442695
  %v3431 = vpow.pop %v3430
  %v3432 = vmul.f32 %v3382, 1.442695
  %v3433 = vpow.pop %v3432
  %v3434 = vmul.f32 %v3383, 1.442695
  %v3435 = vpow.pop %v3434
  %v3436 = vmul.f32 %v3384, 1.442695
  %v3437 = vpow.pop %v3436
  %v3438 = vmul.f32 %v3385, 1.442695
  %v3439 = vpow.pop %v3438
  %v3440 = vsel %vm2110, %v3387, 0.0
  %3441 = vadd.xlane.f32.xlu0 %v3440
  %v3442 = vpop.xlane.xlu0 %3441
  %v3443 = vsel %vm2110, %v3389, 0.0
  %3444 = vadd.xlane.f32.xlu0 %v3443
  %v3445 = vpop.xlane.xlu0 %3444
  %v3446 = vsel %vm2110, %v3391, 0.0
  %3447 = vadd.xlane.f32.xlu0 %v3446
  %v3448 = vpop.xlane.xlu0 %3447
  %v3449 = vsel %vm2110, %v3393, 0.0
  %3450 = vadd.xlane.f32.xlu0 %v3449
  %v3451 = vpop.xlane.xlu0 %3450
  %v3452 = vsel %vm2110, %v3395, 0.0
  %3453 = vadd.xlane.f32.xlu0 %v3452
  %v3454 = vpop.xlane.xlu0 %3453
  %v3455 = vsel %vm2110, %v3397, 0.0
  %3456 = vadd.xlane.f32.xlu0 %v3455
  %v3457 = vpop.xlane.xlu0 %3456
  %v3458 = vsel %vm2110, %v3399, 0.0
  %3459 = vadd.xlane.f32.xlu0 %v3458
  %v3460 = vpop.xlane.xlu0 %3459
  %v3461 = vsel %vm2110, %v3401, 0.0
  %3462 = vadd.xlane.f32.xlu0 %v3461
  %v3463 = vpop.xlane.xlu0 %3462
  %v3464 = vsel %vm2110, %v3403, 0.0
  %3465 = vadd.xlane.f32.xlu0 %v3464
  %v3466 = vpop.xlane.xlu0 %3465
  %v3467 = vsel %vm2110, %v3405, 0.0
  %3468 = vadd.xlane.f32.xlu0 %v3467
  %v3469 = vpop.xlane.xlu0 %3468
  %v3470 = vsel %vm2110, %v3407, 0.0
  %3471 = vadd.xlane.f32.xlu0 %v3470
  %v3472 = vpop.xlane.xlu0 %3471
  %v3473 = vsel %vm2110, %v3409, 0.0
  %3474 = vadd.xlane.f32.xlu0 %v3473
  %v3475 = vpop.xlane.xlu0 %3474
  %v3476 = vsel %vm2110, %v3411, 0.0
  %3477 = vadd.xlane.f32.xlu0 %v3476
  %v3478 = vpop.xlane.xlu0 %3477
  %v3479 = vsel %vm2110, %v3413, 0.0
  %3480 = vadd.xlane.f32.xlu0 %v3479
  %v3481 = vpop.xlane.xlu0 %3480
  %v3482 = vsel %vm2110, %v3415, 0.0
  %3483 = vadd.xlane.f32.xlu0 %v3482
  %v3484 = vpop.xlane.xlu0 %3483
  %v3485 = vsel %vm2110, %v3417, 0.0
  %3486 = vadd.xlane.f32.xlu0 %v3485
  %v3487 = vpop.xlane.xlu0 %3486
  %v3488 = vsel %vm2110, %v3419, 0.0
  %3489 = vadd.xlane.f32.xlu0 %v3488
  %v3490 = vpop.xlane.xlu0 %3489
  %v3491 = vsel %vm2110, %v3421, 0.0
  %3492 = vadd.xlane.f32.xlu0 %v3491
  %v3493 = vpop.xlane.xlu0 %3492
  %v3494 = vsel %vm2110, %v3423, 0.0
  %3495 = vadd.xlane.f32.xlu0 %v3494
  %v3496 = vpop.xlane.xlu0 %3495
  %v3497 = vsel %vm2110, %v3425, 0.0
  %3498 = vadd.xlane.f32.xlu0 %v3497
  %v3499 = vpop.xlane.xlu0 %3498
  %v3500 = vsel %vm2110, %v3427, 0.0
  %3501 = vadd.xlane.f32.xlu0 %v3500
  %v3502 = vpop.xlane.xlu0 %3501
  %v3503 = vsel %vm2110, %v3429, 0.0
  %3504 = vadd.xlane.f32.xlu0 %v3503
  %v3505 = vpop.xlane.xlu0 %3504
  %v3506 = vsel %vm2110, %v3431, 0.0
  %3507 = vadd.xlane.f32.xlu0 %v3506
  %v3508 = vpop.xlane.xlu0 %3507
  %v3509 = vsel %vm2110, %v3433, 0.0
  %3510 = vadd.xlane.f32.xlu0 %v3509
  %v3511 = vpop.xlane.xlu0 %3510
  %v3512 = vsel %vm2110, %v3435, 0.0
  %3513 = vadd.xlane.f32.xlu0 %v3512
  %v3514 = vpop.xlane.xlu0 %3513
  %v3515 = vsel %vm2110, %v3437, 0.0
  %3516 = vadd.xlane.f32.xlu0 %v3515
  %v3517 = vpop.xlane.xlu0 %3516
  %v3518 = vsel %vm3355, %v3439, 0.0
  %3519 = vadd.xlane.f32.xlu0 %v3518
  %v3520 = vpop.xlane.xlu0 %3519
  %v3521 = vrcp.pop %v3442
  %v3522 = vrcp.pop %v3445
  %v3523 = vrcp.pop %v3448
  %v3524 = vrcp.pop %v3451
  %v3525 = vrcp.pop %v3454
  %v3526 = vrcp.pop %v3457
  %v3527 = vrcp.pop %v3460
  %v3528 = vrcp.pop %v3463
  %v3529 = vrcp.pop %v3466
  %v3530 = vrcp.pop %v3469
  %v3531 = vrcp.pop %v3472
  %v3532 = vrcp.pop %v3475
  %v3533 = vrcp.pop %v3478
  %v3534 = vrcp.pop %v3481
  %v3535 = vrcp.pop %v3484
  %v3536 = vrcp.pop %v3487
  %v3537 = vrcp.pop %v3490
  %v3538 = vrcp.pop %v3493
  %v3539 = vrcp.pop %v3496
  %v3540 = vrcp.pop %v3499
  %v3541 = vrcp.pop %v3502
  %v3542 = vrcp.pop %v3505
  %v3543 = vrcp.pop %v3508
  %v3544 = vrcp.pop %v3511
  %v3545 = vrcp.pop %v3514
  %v3546 = vrcp.pop %v3517
  %v3547 = vrcp.pop %v3520
  %v3548 = vmul.f32 %v3387, %v3521
  %v3549 = vmul.f32 %v3389, %v3522
  %v3550 = vmul.f32 %v3391, %v3523
  %v3551 = vmul.f32 %v3393, %v3524
  %v3552 = vmul.f32 %v3395, %v3525
  %v3553 = vmul.f32 %v3397, %v3526
  %v3554 = vmul.f32 %v3399, %v3527
  %v3555 = vmul.f32 %v3401, %v3528
  %v3556 = vmul.f32 %v3403, %v3529
  %v3557 = vmul.f32 %v3405, %v3530
  %v3558 = vmul.f32 %v3407, %v3531
  %v3559 = vmul.f32 %v3409, %v3532
  %v3560 = vmul.f32 %v3411, %v3533
  %v3561 = vmul.f32 %v3413, %v3534
  %v3562 = vmul.f32 %v3415, %v3535
  %v3563 = vmul.f32 %v3417, %v3536
  %v3564 = vmul.f32 %v3419, %v3537
  %v3565 = vmul.f32 %v3421, %v3538
  %v3566 = vmul.f32 %v3423, %v3539
  %v3567 = vmul.f32 %v3425, %v3540
  %v3568 = vmul.f32 %v3427, %v3541
  %v3569 = vmul.f32 %v3429, %v3542
  %v3570 = vmul.f32 %v3431, %v3543
  %v3571 = vmul.f32 %v3433, %v3544
  %v3572 = vmul.f32 %v3435, %v3545
  %v3573 = vmul.f32 %v3437, %v3546
  %v3574 = vmul.f32 %v3439, %v3547
  %v3576 = vsel %vm2110, %v3548, 0
  %v3579 = vsel %vm2110, %v3549, 0
  %v3582 = vsel %vm2110, %v3550, 0
  %v3585 = vsel %vm2110, %v3551, 0
  %v3588 = vsel %vm2110, %v3552, 0
  %v3591 = vsel %vm2110, %v3553, 0
  %v3594 = vsel %vm2110, %v3554, 0
  %v3597 = vsel %vm2110, %v3555, 0
  %v3600 = vsel %vm2110, %v3556, 0
  %v3603 = vsel %vm2110, %v3557, 0
  %v3606 = vsel %vm2110, %v3558, 0
  %v3609 = vsel %vm2110, %v3559, 0
  %v3612 = vsel %vm2110, %v3560, 0
  %v3615 = vsel %vm2110, %v3561, 0
  %v3618 = vsel %vm2110, %v3562, 0
  %v3621 = vsel %vm2110, %v3563, 0
  %v3624 = vsel %vm2110, %v3564, 0
  %v3627 = vsel %vm2110, %v3565, 0
  %v3630 = vsel %vm2110, %v3566, 0
  %v3633 = vsel %vm2110, %v3567, 0
  %v3636 = vsel %vm2110, %v3568, 0
  %v3639 = vsel %vm2110, %v3569, 0
  %v3642 = vsel %vm2110, %v3570, 0
  %v3645 = vsel %vm2110, %v3571, 0
  %v3648 = vsel %vm2110, %v3572, 0
  %v3651 = vsel %vm2110, %v3573, 0
  %v3654 = vsel %vm2110, %v3574, 0
  %v3657 = vsel %vm763, %v1997, 0
  %v3660 = vsel %vm763, %v1999, 0
  %v3663 = vsel %vm763, %v2080, 0
  %3665 = vmatprep.subr.mxu0 %v1995
  %3666 = vmatpush1.msra.mxu0 %v1993
  %3667 = vmatprep.subr.mxu0 %v3660
  %3668 = vmatpush1.msra.mxu0 %v3657
  %3669 = vmatprep.subr.mxu0 0.0
  %3670 = vmatpush1.msra.mxu0 0.0
  %3671 = vmatprep.subr.mxu0 0.0
  %3672 = vmatpush1.msra.mxu0 0.0
  %3673 = vmatprep.subr.mxu0 0.0
  %3674 = vmatpush1.msra.mxu0 0.0
  %3675 = vmatprep.subr.mxu0 0.0
  %3676 = vmatpush1.msra.mxu0 0.0
  %3677 = vmatprep.subr.mxu0 0.0
  %3678 = vmatpush1.msra.mxu0 0.0
  %3679 = vmatprep.subr.mxu0 0.0
  %3680 = vmatpush1.msra.mxu0 0.0
  %3681 = vmatprep.subr.mxu0 0.0
  %3682 = vmatpush1.msra.mxu0 0.0
  %3683 = vmatprep.subr.mxu0 0.0
  %3684 = vmatpush1.msra.mxu0 0.0
  %3685 = vmatprep.subr.mxu0 0.0
  %3686 = vmatpush1.msra.mxu0 0.0
  %3687 = vmatprep.subr.mxu0 0.0
  %3688 = vmatpush1.msra.mxu0 0.0
  %3689 = vmatprep.subr.mxu0 0.0
  %3690 = vmatpush1.msra.mxu0 0.0
  %3691 = vmatprep.subr.mxu0 0.0
  %3692 = vmatpush1.msra.mxu0 0.0
  %3693 = vmatprep.subr.mxu0 0.0
  %3694 = vmatpush1.msra.mxu0 0.0
  %3695 = vmatprep.subr.mxu0 0.0
  %3696 = vmatpush1.msra.mxu0 0.0
  %3697 = vmatprep.subr.mxu0 0.0
  %3698 = vmatpush1.msra.mxu0 0.0
  %3699 = vmatprep.subr.mxu0 0.0
  %3700 = vmatpush1.msra.mxu0 0.0
  %3701 = vmatprep.subr.mxu0 0.0
  %3702 = vmatpush1.msra.mxu0 0.0
  %3703 = vmatprep.subr.mxu0 0.0
  %3704 = vmatpush1.msra.mxu0 0.0
  %3705 = vmatprep.subr.mxu0 0.0
  %3706 = vmatpush1.msra.mxu0 0.0
  %3707 = vmatprep.subr.mxu0 0.0
  %3708 = vmatpush1.msra.mxu0 0.0
  %3709 = vmatprep.subr.mxu0 0.0
  %3710 = vmatpush1.msra.mxu0 0.0
  %3711 = vmatprep.subr.mxu0 0.0
  %3712 = vmatpush1.msra.mxu0 0.0
  %3713 = vmatprep.subr.mxu0 0.0
  %3714 = vmatpush1.msra.mxu0 0.0
  %3715 = vmatprep.subr.mxu0 0.0
  %3716 = vmatpush1.msra.mxu0 0.0
  %3717 = vmatprep.subr.mxu0 0.0
  %3718 = vmatpush1.msra.mxu0 0.0
  %3719 = vmatprep.subr.mxu0 0.0
  %3720 = vmatpush1.msra.mxu0 0.0
  %3721 = vmatprep.subr.mxu0 0.0
  %3722 = vmatpush1.msra.mxu0 0.0
  %3723 = vmatprep.subr.mxu0 0.0
  %3724 = vmatpush1.msra.mxu0 0.0
  %3725 = vmatprep.subr.mxu0 0.0
  %3726 = vmatpush1.msra.mxu0 0.0
  %3727 = vmatprep.subr.mxu0 0.0
  %3728 = vmatpush1.msra.mxu0 0.0
  %3729 = vmatprep.mubr.f32.mxu0 0.0
  %3730 = vmatmul.mubr.f32.gmra.mrb[0].mxu0 %v3576
  %v3731 = vpop.f32.mrb[0].mxu0
  %v3732 = vadd.f32 0.0, %v3731
  %v3733 = vpop.f32.mrb[0].mxu0
  %v3734 = vadd.f32 0.0, %v3733
  %3735 = vmatprep.mubr.f32.mxu0 0.0
  %3736 = vmatmul.mubr.f32.gmra.mrb[0].mxu0 %v3579
  %v3737 = vpop.f32.mrb[0].mxu0
  %v3738 = vadd.f32 0.0, %v3737
  %v3739 = vpop.f32.mrb[0].mxu0
  %v3740 = vadd.f32 0.0, %v3739
  %3741 = vmatprep.mubr.f32.mxu0 0.0
  %3742 = vmatmul.mubr.f32.gmra.mrb[0].mxu0 %v3582
  %v3743 = vpop.f32.mrb[0].mxu0
  %v3744 = vadd.f32 0.0, %v3743
  %v3745 = vpop.f32.mrb[0].mxu0
  %v3746 = vadd.f32 0.0, %v3745
  %3747 = vmatprep.mubr.f32.mxu0 0.0
  %3748 = vmatmul.mubr.f32.gmra.mrb[0].mxu0 %v3585
  %v3749 = vpop.f32.mrb[0].mxu0
  %v3750 = vadd.f32 0.0, %v3749
  %v3751 = vpop.f32.mrb[0].mxu0
  %v3752 = vadd.f32 0.0, %v3751
  %3753 = vmatprep.mubr.f32.mxu0 0.0
  %3754 = vmatmul.mubr.f32.gmra.mrb[0].mxu0 %v3588
  %v3755 = vpop.f32.mrb[0].mxu0
  %v3756 = vadd.f32 0.0, %v3755
  %v3757 = vpop.f32.mrb[0].mxu0
  %v3758 = vadd.f32 0.0, %v3757
  %3759 = vmatprep.mubr.f32.mxu0 0.0
  %3760 = vmatmul.mubr.f32.gmra.mrb[0].mxu0 %v3591
  %v3761 = vpop.f32.mrb[0].mxu0
  %v3762 = vadd.f32 0.0, %v3761
  %v3763 = vpop.f32.mrb[0].mxu0
  %v3764 = vadd.f32 0.0, %v3763
  %3765 = vmatprep.mubr.f32.mxu0 0.0
  %3766 = vmatmul.mubr.f32.gmra.mrb[0].mxu0 %v3594
  %v3767 = vpop.f32.mrb[0].mxu0
  %v3768 = vadd.f32 0.0, %v3767
  %v3769 = vpop.f32.mrb[0].mxu0
  %v3770 = vadd.f32 0.0, %v3769
  %3771 = vmatprep.mubr.f32.mxu0 0.0
  %3772 = vmatmul.mubr.f32.gmra.mrb[0].mxu0 %v3597
  %v3773 = vpop.f32.mrb[0].mxu0
  %v3774 = vadd.f32 0.0, %v3773
  %v3775 = vpop.f32.mrb[0].mxu0
  %v3776 = vadd.f32 0.0, %v3775
  %3777 = vmatprep.mubr.f32.mxu0 0.0
  %3778 = vmatmul.mubr.f32.gmra.mrb[0].mxu0 %v3600
  %v3779 = vpop.f32.mrb[0].mxu0
  %v3780 = vadd.f32 0.0, %v3779
  %v3781 = vpop.f32.mrb[0].mxu0
  %v3782 = vadd.f32 0.0, %v3781
  %3783 = vmatprep.mubr.f32.mxu0 0.0
  %3784 = vmatmul.mubr.f32.gmra.mrb[0].mxu0 %v3603
  %v3785 = vpop.f32.mrb[0].mxu0
  %v3786 = vadd.f32 0.0, %v3785
  %v3787 = vpop.f32.mrb[0].mxu0
  %v3788 = vadd.f32 0.0, %v3787
  %3789 = vmatprep.mubr.f32.mxu0 0.0
  %3790 = vmatmul.mubr.f32.gmra.mrb[0].mxu0 %v3606
  %v3791 = vpop.f32.mrb[0].mxu0
  %v3792 = vadd.f32 0.0, %v3791
  %v3793 = vpop.f32.mrb[0].mxu0
  %v3794 = vadd.f32 0.0, %v3793
  %3795 = vmatprep.mubr.f32.mxu0 0.0
  %3796 = vmatmul.mubr.f32.gmra.mrb[0].mxu0 %v3609
  %v3797 = vpop.f32.mrb[0].mxu0
  %v3798 = vadd.f32 0.0, %v3797
  %v3799 = vpop.f32.mrb[0].mxu0
  %v3800 = vadd.f32 0.0, %v3799
  %3801 = vmatprep.mubr.f32.mxu0 0.0
  %3802 = vmatmul.mubr.f32.gmra.mrb[0].mxu0 %v3612
  %v3803 = vpop.f32.mrb[0].mxu0
  %v3804 = vadd.f32 0.0, %v3803
  %v3805 = vpop.f32.mrb[0].mxu0
  %v3806 = vadd.f32 0.0, %v3805
  %3807 = vmatprep.mubr.f32.mxu0 0.0
  %3808 = vmatmul.mubr.f32.gmra.mrb[0].mxu0 %v3615
  %v3809 = vpop.f32.mrb[0].mxu0
  %v3810 = vadd.f32 0.0, %v3809
  %v3811 = vpop.f32.mrb[0].mxu0
  %v3812 = vadd.f32 0.0, %v3811
  %3813 = vmatprep.mubr.f32.mxu0 0.0
  %3814 = vmatmul.mubr.f32.gmra.mrb[0].mxu0 %v3618
  %v3815 = vpop.f32.mrb[0].mxu0
  %v3816 = vadd.f32 0.0, %v3815
  %v3817 = vpop.f32.mrb[0].mxu0
  %v3818 = vadd.f32 0.0, %v3817
  %3819 = vmatprep.mubr.f32.mxu0 0.0
  %3820 = vmatmul.mubr.f32.gmra.mrb[0].mxu0 %v3621
  %v3821 = vpop.f32.mrb[0].mxu0
  %v3822 = vadd.f32 0.0, %v3821
  %v3823 = vpop.f32.mrb[0].mxu0
  %v3824 = vadd.f32 0.0, %v3823
  %3825 = vmatprep.mubr.f32.mxu0 0.0
  %3826 = vmatmul.mubr.f32.gmra.mrb[0].mxu0 %v3624
  %v3827 = vpop.f32.mrb[0].mxu0
  %v3828 = vadd.f32 0.0, %v3827
  %v3829 = vpop.f32.mrb[0].mxu0
  %v3830 = vadd.f32 0.0, %v3829
  %3831 = vmatprep.mubr.f32.mxu0 0.0
  %3832 = vmatmul.mubr.f32.gmra.mrb[0].mxu0 %v3627
  %v3833 = vpop.f32.mrb[0].mxu0
  %v3834 = vadd.f32 0.0, %v3833
  %v3835 = vpop.f32.mrb[0].mxu0
  %v3836 = vadd.f32 0.0, %v3835
  %3837 = vmatprep.mubr.f32.mxu0 0.0
  %3838 = vmatmul.mubr.f32.gmra.mrb[0].mxu0 %v3630
  %v3839 = vpop.f32.mrb[0].mxu0
  %v3840 = vadd.f32 0.0, %v3839
  %v3841 = vpop.f32.mrb[0].mxu0
  %v3842 = vadd.f32 0.0, %v3841
  %3843 = vmatprep.mubr.f32.mxu0 0.0
  %3844 = vmatmul.mubr.f32.gmra.mrb[0].mxu0 %v3633
  %v3845 = vpop.f32.mrb[0].mxu0
  %v3846 = vadd.f32 0.0, %v3845
  %v3847 = vpop.f32.mrb[0].mxu0
  %v3848 = vadd.f32 0.0, %v3847
  %3849 = vmatprep.mubr.f32.mxu0 0.0
  %3850 = vmatmul.mubr.f32.gmra.mrb[0].mxu0 %v3636
  %v3851 = vpop.f32.mrb[0].mxu0
  %v3852 = vadd.f32 0.0, %v3851
  %v3853 = vpop.f32.mrb[0].mxu0
  %v3854 = vadd.f32 0.0, %v3853
  %3855 = vmatprep.mubr.f32.mxu0 0.0
  %3856 = vmatmul.mubr.f32.gmra.mrb[0].mxu0 %v3639
  %v3857 = vpop.f32.mrb[0].mxu0
  %v3858 = vadd.f32 0.0, %v3857
  %v3859 = vpop.f32.mrb[0].mxu0
  %v3860 = vadd.f32 0.0, %v3859
  %3861 = vmatprep.mubr.f32.mxu0 0.0
  %3862 = vmatmul.mubr.f32.gmra.mrb[0].mxu0 %v3642
  %v3863 = vpop.f32.mrb[0].mxu0
  %v3864 = vadd.f32 0.0, %v3863
  %v3865 = vpop.f32.mrb[0].mxu0
  %v3866 = vadd.f32 0.0, %v3865
  %3867 = vmatprep.mubr.f32.mxu0 0.0
  %3868 = vmatmul.mubr.f32.gmra.mrb[0].mxu0 %v3645
  %v3869 = vpop.f32.mrb[0].mxu0
  %v3870 = vadd.f32 0.0, %v3869
  %v3871 = vpop.f32.mrb[0].mxu0
  %v3872 = vadd.f32 0.0, %v3871
  %3873 = vmatprep.mubr.f32.mxu0 0.0
  %3874 = vmatmul.mubr.f32.gmra.mrb[0].mxu0 %v3648
  %v3875 = vpop.f32.mrb[0].mxu0
  %v3876 = vadd.f32 0.0, %v3875
  %v3877 = vpop.f32.mrb[0].mxu0
  %v3878 = vadd.f32 0.0, %v3877
  %3879 = vmatprep.mubr.f32.mxu0 0.0
  %3880 = vmatmul.mubr.f32.gmra.mrb[0].mxu0 %v3651
  %v3881 = vpop.f32.mrb[0].mxu0
  %v3882 = vadd.f32 0.0, %v3881
  %v3883 = vpop.f32.mrb[0].mxu0
  %v3884 = vadd.f32 0.0, %v3883
  %3885 = vmatprep.mubr.f32.mxu0 0.0
  %3886 = vmatmul.mubr.f32.gmra.mrb[0].mxu0 %v3654
  %v3887 = vpop.f32.mrb[0].mxu0
  %v3888 = vadd.f32 0.0, %v3887
  %v3889 = vpop.f32.mrb[0].mxu0
  %v3890 = vadd.f32 0.0, %v3889
  %3891 = vdwg.mxu0
  %3892 = vmatprep.subr.mxu0 0.0
  %3893 = vmatpush1.msra.mxu0 %v2077
  %3894 = vmatprep.subr.mxu0 0.0
  %3895 = vmatpush1.msra.mxu0 %v3663
  %3896 = vmatprep.subr.mxu0 0.0
  %3897 = vmatpush1.msra.mxu0 0.0
  %3898 = vmatprep.subr.mxu0 0.0
  %3899 = vmatpush1.msra.mxu0 0.0
  %3900 = vmatprep.subr.mxu0 0.0
  %3901 = vmatpush1.msra.mxu0 0.0
  %3902 = vmatprep.subr.mxu0 0.0
  %3903 = vmatpush1.msra.mxu0 0.0
  %3904 = vmatprep.subr.mxu0 0.0
  %3905 = vmatpush1.msra.mxu0 0.0
  %3906 = vmatprep.subr.mxu0 0.0
  %3907 = vmatpush1.msra.mxu0 0.0
  %3908 = vmatprep.subr.mxu0 0.0
  %3909 = vmatpush1.msra.mxu0 0.0
  %3910 = vmatprep.subr.mxu0 0.0
  %3911 = vmatpush1.msra.mxu0 0.0
  %3912 = vmatprep.subr.mxu0 0.0
  %3913 = vmatpush1.msra.mxu0 0.0
  %3914 = vmatprep.subr.mxu0 0.0
  %3915 = vmatpush1.msra.mxu0 0.0
  %3916 = vmatprep.subr.mxu0 0.0
  %3917 = vmatpush1.msra.mxu0 0.0
  %3918 = vmatprep.subr.mxu0 0.0
  %3919 = vmatpush1.msra.mxu0 0.0
  %3920 = vmatprep.subr.mxu0 0.0
  %3921 = vmatpush1.msra.mxu0 0.0
  %3922 = vmatprep.subr.mxu0 0.0
  %3923 = vmatpush1.msra.mxu0 0.0
  %3924 = vmatprep.subr.mxu0 0.0
  %3925 = vmatpush1.msra.mxu0 0.0
  %3926 = vmatprep.subr.mxu0 0.0
  %3927 = vmatpush1.msra.mxu0 0.0
  %3928 = vmatprep.subr.mxu0 0.0
  %3929 = vmatpush1.msra.mxu0 0.0
  %3930 = vmatprep.subr.mxu0 0.0
  %3931 = vmatpush1.msra.mxu0 0.0
  %3932 = vmatprep.subr.mxu0 0.0
  %3933 = vmatpush1.msra.mxu0 0.0
  %3934 = vmatprep.subr.mxu0 0.0
  %3935 = vmatpush1.msra.mxu0 0.0
  %3936 = vmatprep.subr.mxu0 0.0
  %3937 = vmatpush1.msra.mxu0 0.0
  %3938 = vmatprep.subr.mxu0 0.0
  %3939 = vmatpush1.msra.mxu0 0.0
  %3940 = vmatprep.subr.mxu0 0.0
  %3941 = vmatpush1.msra.mxu0 0.0
  %3942 = vmatprep.subr.mxu0 0.0
  %3943 = vmatpush1.msra.mxu0 0.0
  %3944 = vmatprep.subr.mxu0 0.0
  %3945 = vmatpush1.msra.mxu0 0.0
  %3946 = vmatprep.subr.mxu0 0.0
  %3947 = vmatpush1.msra.mxu0 0.0
  %3948 = vmatprep.subr.mxu0 0.0
  %3949 = vmatpush1.msra.mxu0 0.0
  %3950 = vmatprep.subr.mxu0 0.0
  %3951 = vmatpush1.msra.mxu0 0.0
  %3952 = vmatprep.subr.mxu0 0.0
  %3953 = vmatpush1.msra.mxu0 0.0
  %3954 = vmatprep.subr.mxu0 0.0
  %3955 = vmatpush1.msra.mxu0 0.0
  %3956 = vmatprep.mubr.f32.mxu0 0.0
  %3957 = vmatmul.mubr.f32.gmra.mrb[0].mxu0 %v3576
  %v3958 = vpop.f32.mrb[0].mxu0
  %v3959 = vadd.f32 0.0, %v3958
  %v3960 = vpop.f32.mrb[0].mxu0
  %3961 = vmatprep.mubr.f32.mxu0 0.0
  %3962 = vmatmul.mubr.f32.gmra.mrb[0].mxu0 %v3579
  %v3963 = vpop.f32.mrb[0].mxu0
  %v3964 = vadd.f32 0.0, %v3963
  %v3965 = vpop.f32.mrb[0].mxu0
  %3966 = vmatprep.mubr.f32.mxu0 0.0
  %3967 = vmatmul.mubr.f32.gmra.mrb[0].mxu0 %v3582
  %v3968 = vpop.f32.mrb[0].mxu0
  %v3969 = vadd.f32 0.0, %v3968
  %v3970 = vpop.f32.mrb[0].mxu0
  %3971 = vmatprep.mubr.f32.mxu0 0.0
  %3972 = vmatmul.mubr.f32.gmra.mrb[0].mxu0 %v3585
  %v3973 = vpop.f32.mrb[0].mxu0
  %v3974 = vadd.f32 0.0, %v3973
  %v3975 = vpop.f32.mrb[0].mxu0
  %3976 = vmatprep.mubr.f32.mxu0 0.0
  %3977 = vmatmul.mubr.f32.gmra.mrb[0].mxu0 %v3588
  %v3978 = vpop.f32.mrb[0].mxu0
  %v3979 = vadd.f32 0.0, %v3978
  %v3980 = vpop.f32.mrb[0].mxu0
  %3981 = vmatprep.mubr.f32.mxu0 0.0
  %3982 = vmatmul.mubr.f32.gmra.mrb[0].mxu0 %v3591
  %v3983 = vpop.f32.mrb[0].mxu0
  %v3984 = vadd.f32 0.0, %v3983
  %v3985 = vpop.f32.mrb[0].mxu0
  %3986 = vmatprep.mubr.f32.mxu0 0.0
  %3987 = vmatmul.mubr.f32.gmra.mrb[0].mxu0 %v3594
  %v3988 = vpop.f32.mrb[0].mxu0
  %v3989 = vadd.f32 0.0, %v3988
  %v3990 = vpop.f32.mrb[0].mxu0
  %3991 = vmatprep.mubr.f32.mxu0 0.0
  %3992 = vmatmul.mubr.f32.gmra.mrb[0].mxu0 %v3597
  %v3993 = vpop.f32.mrb[0].mxu0
  %v3994 = vadd.f32 0.0, %v3993
  %v3995 = vpop.f32.mrb[0].mxu0
  %3996 = vmatprep.mubr.f32.mxu0 0.0
  %3997 = vmatmul.mubr.f32.gmra.mrb[0].mxu0 %v3600
  %v3998 = vpop.f32.mrb[0].mxu0
  %v3999 = vadd.f32 0.0, %v3998
  %v4000 = vpop.f32.mrb[0].mxu0
  %4001 = vmatprep.mubr.f32.mxu0 0.0
  %4002 = vmatmul.mubr.f32.gmra.mrb[0].mxu0 %v3603
  %v4003 = vpop.f32.mrb[0].mxu0
  %v4004 = vadd.f32 0.0, %v4003
  %v4005 = vpop.f32.mrb[0].mxu0
  %4006 = vmatprep.mubr.f32.mxu0 0.0
  %4007 = vmatmul.mubr.f32.gmra.mrb[0].mxu0 %v3606
  %v4008 = vpop.f32.mrb[0].mxu0
  %v4009 = vadd.f32 0.0, %v4008
  %v4010 = vpop.f32.mrb[0].mxu0
  %4011 = vmatprep.mubr.f32.mxu0 0.0
  %4012 = vmatmul.mubr.f32.gmra.mrb[0].mxu0 %v3609
  %v4013 = vpop.f32.mrb[0].mxu0
  %v4014 = vadd.f32 0.0, %v4013
  %v4015 = vpop.f32.mrb[0].mxu0
  %4016 = vmatprep.mubr.f32.mxu0 0.0
  %4017 = vmatmul.mubr.f32.gmra.mrb[0].mxu0 %v3612
  %v4018 = vpop.f32.mrb[0].mxu0
  %v4019 = vadd.f32 0.0, %v4018
  %v4020 = vpop.f32.mrb[0].mxu0
  %4021 = vmatprep.mubr.f32.mxu0 0.0
  %4022 = vmatmul.mubr.f32.gmra.mrb[0].mxu0 %v3615
  %v4023 = vpop.f32.mrb[0].mxu0
  %v4024 = vadd.f32 0.0, %v4023
  %v4025 = vpop.f32.mrb[0].mxu0
  %4026 = vmatprep.mubr.f32.mxu0 0.0
  %4027 = vmatmul.mubr.f32.gmra.mrb[0].mxu0 %v3618
  %v4028 = vpop.f32.mrb[0].mxu0
  %v4029 = vadd.f32 0.0, %v4028
  %v4030 = vpop.f32.mrb[0].mxu0
  %4031 = vmatprep.mubr.f32.mxu0 0.0
  %4032 = vmatmul.mubr.f32.gmra.mrb[0].mxu0 %v3621
  %v4033 = vpop.f32.mrb[0].mxu0
  %v4034 = vadd.f32 0.0, %v4033
  %v4035 = vpop.f32.mrb[0].mxu0
  %4036 = vmatprep.mubr.f32.mxu0 0.0
  %4037 = vmatmul.mubr.f32.gmra.mrb[0].mxu0 %v3624
  %v4038 = vpop.f32.mrb[0].mxu0
  %v4039 = vadd.f32 0.0, %v4038
  %v4040 = vpop.f32.mrb[0].mxu0
  %4041 = vmatprep.mubr.f32.mxu0 0.0
  %4042 = vmatmul.mubr.f32.gmra.mrb[0].mxu0 %v3627
  %v4043 = vpop.f32.mrb[0].mxu0
  %v4044 = vadd.f32 0.0, %v4043
  %v4045 = vpop.f32.mrb[0].mxu0
  %4046 = vmatprep.mubr.f32.mxu0 0.0
  %4047 = vmatmul.mubr.f32.gmra.mrb[0].mxu0 %v3630
  %v4048 = vpop.f32.mrb[0].mxu0
  %v4049 = vadd.f32 0.0, %v4048
  %v4050 = vpop.f32.mrb[0].mxu0
  %4051 = vmatprep.mubr.f32.mxu0 0.0
  %4052 = vmatmul.mubr.f32.gmra.mrb[0].mxu0 %v3633
  %v4053 = vpop.f32.mrb[0].mxu0
  %v4054 = vadd.f32 0.0, %v4053
  %v4055 = vpop.f32.mrb[0].mxu0
  %4056 = vmatprep.mubr.f32.mxu0 0.0
  %4057 = vmatmul.mubr.f32.gmra.mrb[0].mxu0 %v3636
  %v4058 = vpop.f32.mrb[0].mxu0
  %v4059 = vadd.f32 0.0, %v4058
  %v4060 = vpop.f32.mrb[0].mxu0
  %4061 = vmatprep.mubr.f32.mxu0 0.0
  %4062 = vmatmul.mubr.f32.gmra.mrb[0].mxu0 %v3639
  %v4063 = vpop.f32.mrb[0].mxu0
  %v4064 = vadd.f32 0.0, %v4063
  %v4065 = vpop.f32.mrb[0].mxu0
  %4066 = vmatprep.mubr.f32.mxu0 0.0
  %4067 = vmatmul.mubr.f32.gmra.mrb[0].mxu0 %v3642
  %v4068 = vpop.f32.mrb[0].mxu0
  %v4069 = vadd.f32 0.0, %v4068
  %v4070 = vpop.f32.mrb[0].mxu0
  %4071 = vmatprep.mubr.f32.mxu0 0.0
  %4072 = vmatmul.mubr.f32.gmra.mrb[0].mxu0 %v3645
  %v4073 = vpop.f32.mrb[0].mxu0
  %v4074 = vadd.f32 0.0, %v4073
  %v4075 = vpop.f32.mrb[0].mxu0
  %4076 = vmatprep.mubr.f32.mxu0 0.0
  %4077 = vmatmul.mubr.f32.gmra.mrb[0].mxu0 %v3648
  %v4078 = vpop.f32.mrb[0].mxu0
  %v4079 = vadd.f32 0.0, %v4078
  %v4080 = vpop.f32.mrb[0].mxu0
  %4081 = vmatprep.mubr.f32.mxu0 0.0
  %4082 = vmatmul.mubr.f32.gmra.mrb[0].mxu0 %v3651
  %v4083 = vpop.f32.mrb[0].mxu0
  %v4084 = vadd.f32 0.0, %v4083
  %v4085 = vpop.f32.mrb[0].mxu0
  %4086 = vmatprep.mubr.f32.mxu0 0.0
  %4087 = vmatmul.mubr.f32.gmra.mrb[0].mxu0 %v3654
  %v4088 = vpop.f32.mrb[0].mxu0
  %v4089 = vadd.f32 0.0, %v4088
  %v4090 = vpop.f32.mrb[0].mxu0
  %4091 = vdwg.mxu0
  %v4092 = vmul.f32 %v3732, %v2628
  %v4093 = vmul.f32 %v3734, %v2629
  %v4094 = vmul.f32 %v3959, %v2630
  %v4095 = vmul.f32 %v3738, %v2631
  %v4096 = vmul.f32 %v3740, %v2632
  %v4097 = vmul.f32 %v3964, %v2633
  %v4098 = vmul.f32 %v3744, %v2634
  %v4099 = vmul.f32 %v3746, %v2635
  %v4100 = vmul.f32 %v3969, %v2636
  %v4101 = vmul.f32 %v3750, %v2637
  %v4102 = vmul.f32 %v3752, %v2638
  %v4103 = vmul.f32 %v3974, %v2639
  %v4104 = vmul.f32 %v3756, %v2640
  %v4105 = vmul.f32 %v3758, %v2641
  %v4106 = vmul.f32 %v3979, %v2642
  %v4107 = vmul.f32 %v3762, %v2643
  %v4108 = vmul.f32 %v3764, %v2644
  %v4109 = vmul.f32 %v3984, %v2645
  %v4110 = vmul.f32 %v3768, %v2646
  %v4111 = vmul.f32 %v3770, %v2647
  %v4112 = vmul.f32 %v3989, %v2648
  %v4113 = vmul.f32 %v3774, %v2649
  %v4114 = vmul.f32 %v3776, %v2650
  %v4115 = vmul.f32 %v3994, %v2651
  %v4116 = vmul.f32 %v3780, %v2652
  %v4117 = vmul.f32 %v3782, %v2653
  %v4118 = vmul.f32 %v3999, %v2654
  %v4119 = vmul.f32 %v3786, %v2655
  %v4120 = vmul.f32 %v3788, %v2656
  %v4121 = vmul.f32 %v4004, %v2657
  %v4122 = vmul.f32 %v3792, %v2658
  %v4123 = vmul.f32 %v3794, %v2659
  %v4124 = vmul.f32 %v4009, %v2660
  %v4125 = vmul.f32 %v3798, %v2661
  %v4126 = vmul.f32 %v3800, %v2662
  %v4127 = vmul.f32 %v4014, %v2663
  %v4128 = vmul.f32 %v3804, %v2664
  %v4129 = vmul.f32 %v3806, %v2665
  %v4130 = vmul.f32 %v4019, %v2666
  %v4131 = vmul.f32 %v3810, %v2667
  %v4132 = vmul.f32 %v3812, %v2668
  %v4133 = vmul.f32 %v4024, %v2669
  %v4134 = vmul.f32 %v3816, %v2670
  %v4135 = vmul.f32 %v3818, %v2671
  %v4136 = vmul.f32 %v4029, %v2672
  %v4137 = vmul.f32 %v3822, %v2673
  %v4138 = vmul.f32 %v3824, %v2674
  %v4139 = vmul.f32 %v4034, %v2675
  %v4140 = vmul.f32 %v3828, %v2676
  %v4141 = vmul.f32 %v3830, %v2677
  %v4142 = vmul.f32 %v4039, %v2678
  %v4143 = vmul.f32 %v3834, %v2679
  %v4144 = vmul.f32 %v3836, %v2680
  %v4145 = vmul.f32 %v4044, %v2681
  %v4146 = vmul.f32 %v3840, %v2682
  %v4147 = vmul.f32 %v3842, %v2683
  %v4148 = vmul.f32 %v4049, %v2684
  %v4149 = vmul.f32 %v3846, %v2685
  %v4150 = vmul.f32 %v3848, %v2686
  %v4151 = vmul.f32 %v4054, %v2687
  %v4152 = vmul.f32 %v3852, %v2688
  %v4153 = vmul.f32 %v3854, %v2689
  %v4154 = vmul.f32 %v4059, %v2690
  %v4155 = vmul.f32 %v3858, %v2691
  %v4156 = vmul.f32 %v3860, %v2692
  %v4157 = vmul.f32 %v4064, %v2693
  %v4158 = vmul.f32 %v3864, %v2694
  %v4159 = vmul.f32 %v3866, %v2695
  %v4160 = vmul.f32 %v4069, %v2696
  %v4161 = vmul.f32 %v3870, %v2697
  %v4162 = vmul.f32 %v3872, %v2698
  %v4163 = vmul.f32 %v4074, %v2699
  %v4164 = vmul.f32 %v3876, %v2700
  %v4165 = vmul.f32 %v3878, %v2701
  %v4166 = vmul.f32 %v4079, %v2702
  %v4167 = vmul.f32 %v3882, %v2703
  %v4168 = vmul.f32 %v3884, %v2704
  %v4169 = vmul.f32 %v4084, %v2705
  %v4170 = vmul.f32 %v3888, %v2706
  %v4171 = vmul.f32 %v3890, %v2707
  %v4172 = vmul.f32 %v4089, %v2708
  %v4173 = vld [vmem:[%s4] sm:$0xff]
  %v4174 = vld [vmem:[%s4 + $0x8] sm:$0xff]
  %v4175 = vld [vmem:[%s4 + $0x10] sm:$0x3f]
  %v4176 = vld [vmem:[%s4 + $0x18] sm:$0x3f]
  %vm4177 = vcmask 670720
  %v4179 = vsel %vm4177, %v4174, 0
  %v4182 = vsel %vm4177, %v4176, 0
  %vm4184 = vcmask 1041408
  %v4186 = vsel %vm4184, %v4170, 0
  %v4189 = vsel %vm4184, %v4171, 0
  %v4192 = vsel %vm4184, %v4172, 0
  %4194 = vmatprep.subr.mxu0 %v4093
  %4195 = vmatpush1.msra.mxu0 %v4092
  %4196 = vmatprep.subr.mxu0 %v4096
  %4197 = vmatpush1.msra.mxu0 %v4095
  %4198 = vmatprep.subr.mxu0 %v4099
  %4199 = vmatpush1.msra.mxu0 %v4098
  %4200 = vmatprep.subr.mxu0 %v4102
  %4201 = vmatpush1.msra.mxu0 %v4101
  %4202 = vmatprep.subr.mxu0 %v4105
  %4203 = vmatpush1.msra.mxu0 %v4104
  %4204 = vmatprep.subr.mxu0 %v4108
  %4205 = vmatpush1.msra.mxu0 %v4107
  %4206 = vmatprep.subr.mxu0 %v4111
  %4207 = vmatpush1.msra.mxu0 %v4110
  %4208 = vmatprep.subr.mxu0 %v4114
  %4209 = vmatpush1.msra.mxu0 %v4113
  %4210 = vmatprep.subr.mxu0 %v4117
  %4211 = vmatpush1.msra.mxu0 %v4116
  %4212 = vmatprep.subr.mxu0 %v4120
  %4213 = vmatpush1.msra.mxu0 %v4119
  %4214 = vmatprep.subr.mxu0 %v4123
  %4215 = vmatpush1.msra.mxu0 %v4122
  %4216 = vmatprep.subr.mxu0 %v4126
  %4217 = vmatpush1.msra.mxu0 %v4125
  %4218 = vmatprep.subr.mxu0 %v4129
  %4219 = vmatpush1.msra.mxu0 %v4128
  %4220 = vmatprep.subr.mxu0 %v4132
  %4221 = vmatpush1.msra.mxu0 %v4131
  %4222 = vmatprep.subr.mxu0 %v4135
  %4223 = vmatpush1.msra.mxu0 %v4134
  %4224 = vmatprep.subr.mxu0 %v4138
  %4225 = vmatpush1.msra.mxu0 %v4137
  %4226 = vmatprep.subr.mxu0 %v4141
  %4227 = vmatpush1.msra.mxu0 %v4140
  %4228 = vmatprep.subr.mxu0 %v4144
  %4229 = vmatpush1.msra.mxu0 %v4143
  %4230 = vmatprep.subr.mxu0 %v4147
  %4231 = vmatpush1.msra.mxu0 %v4146
  %4232 = vmatprep.subr.mxu0 %v4150
  %4233 = vmatpush1.msra.mxu0 %v4149
  %4234 = vmatprep.subr.mxu0 %v4153
  %4235 = vmatpush1.msra.mxu0 %v4152
  %4236 = vmatprep.subr.mxu0 %v4156
  %4237 = vmatpush1.msra.mxu0 %v4155
  %4238 = vmatprep.subr.mxu0 %v4159
  %4239 = vmatpush1.msra.mxu0 %v4158
  %4240 = vmatprep.subr.mxu0 %v4162
  %4241 = vmatpush1.msra.mxu0 %v4161
  %4242 = vmatprep.subr.mxu0 %v4165
  %4243 = vmatpush1.msra.mxu0 %v4164
  %4244 = vmatprep.subr.mxu0 %v4168
  %4245 = vmatpush1.msra.mxu0 %v4167
  %4246 = vmatprep.subr.mxu0 %v4189
  %4247 = vmatpush1.msra.mxu0 %v4186
  %4248 = vmatprep.subr.mxu0 0.0
  %4249 = vmatpush1.msra.mxu0 0.0
  %4250 = vmatprep.subr.mxu0 0.0
  %4251 = vmatpush1.msra.mxu0 0.0
  %4252 = vmatprep.subr.mxu0 0.0
  %4253 = vmatpush1.msra.mxu0 0.0
  %4254 = vmatprep.subr.mxu0 0.0
  %4255 = vmatpush1.msra.mxu0 0.0
  %4256 = vmatprep.subr.mxu0 0.0
  %4257 = vmatpush1.msra.mxu0 0.0
  %4258 = vmatprep.mubr.f32.mxu0 %v4179
  %4259 = vmatmul.mubr.f32.gmra.mrb[0].mxu0 %v4173
  %v4260 = vpop.f32.mrb[0].mxu0
  %v4261 = vadd.f32 0.0, %v4260
  %v4262 = vpop.f32.mrb[0].mxu0
  %v4263 = vadd.f32 0.0, %v4262
  %4264 = vmatprep.mubr.f32.mxu0 %v4182
  %4265 = vmatmul.mubr.f32.gmra.mrb[0].mxu0 %v4175
  %v4266 = vpop.f32.mrb[0].mxu0
  %v4267 = vadd.f32 0.0, %v4266
  %v4268 = vpop.f32.mrb[0].mxu0
  %v4269 = vadd.f32 0.0, %v4268
  %4270 = vdwg.mxu0
  %4271 = vmatprep.subr.mxu0 0.0
  %4272 = vmatpush1.msra.mxu0 %v4094
  %4273 = vmatprep.subr.mxu0 0.0
  %4274 = vmatpush1.msra.mxu0 %v4097
  %4275 = vmatprep.subr.mxu0 0.0
  %4276 = vmatpush1.msra.mxu0 %v4100
  %4277 = vmatprep.subr.mxu0 0.0
  %4278 = vmatpush1.msra.mxu0 %v4103
  %4279 = vmatprep.subr.mxu0 0.0
  %4280 = vmatpush1.msra.mxu0 %v4106
  %4281 = vmatprep.subr.mxu0 0.0
  %4282 = vmatpush1.msra.mxu0 %v4109
  %4283 = vmatprep.subr.mxu0 0.0
  %4284 = vmatpush1.msra.mxu0 %v4112
  %4285 = vmatprep.subr.mxu0 0.0
  %4286 = vmatpush1.msra.mxu0 %v4115
  %4287 = vmatprep.subr.mxu0 0.0
  %4288 = vmatpush1.msra.mxu0 %v4118
  %4289 = vmatprep.subr.mxu0 0.0
  %4290 = vmatpush1.msra.mxu0 %v4121
  %4291 = vmatprep.subr.mxu0 0.0
  %4292 = vmatpush1.msra.mxu0 %v4124
  %4293 = vmatprep.subr.mxu0 0.0
  %4294 = vmatpush1.msra.mxu0 %v4127
  %4295 = vmatprep.subr.mxu0 0.0
  %4296 = vmatpush1.msra.mxu0 %v4130
  %4297 = vmatprep.subr.mxu0 0.0
  %4298 = vmatpush1.msra.mxu0 %v4133
  %4299 = vmatprep.subr.mxu0 0.0
  %4300 = vmatpush1.msra.mxu0 %v4136
  %4301 = vmatprep.subr.mxu0 0.0
  %4302 = vmatpush1.msra.mxu0 %v4139
  %4303 = vmatprep.subr.mxu0 0.0
  %4304 = vmatpush1.msra.mxu0 %v4142
  %4305 = vmatprep.subr.mxu0 0.0
  %4306 = vmatpush1.msra.mxu0 %v4145
  %4307 = vmatprep.subr.mxu0 0.0
  %4308 = vmatpush1.msra.mxu0 %v4148
  %4309 = vmatprep.subr.mxu0 0.0
  %4310 = vmatpush1.msra.mxu0 %v4151
  %4311 = vmatprep.subr.mxu0 0.0
  %4312 = vmatpush1.msra.mxu0 %v4154
  %4313 = vmatprep.subr.mxu0 0.0
  %4314 = vmatpush1.msra.mxu0 %v4157
  %4315 = vmatprep.subr.mxu0 0.0
  %4316 = vmatpush1.msra.mxu0 %v4160
  %4317 = vmatprep.subr.mxu0 0.0
  %4318 = vmatpush1.msra.mxu0 %v4163
  %4319 = vmatprep.subr.mxu0 0.0
  %4320 = vmatpush1.msra.mxu0 %v4166
  %4321 = vmatprep.subr.mxu0 0.0
  %4322 = vmatpush1.msra.mxu0 %v4169
  %4323 = vmatprep.subr.mxu0 0.0
  %4324 = vmatpush1.msra.mxu0 %v4192
  %4325 = vmatprep.subr.mxu0 0.0
  %4326 = vmatpush1.msra.mxu0 0.0
  %4327 = vmatprep.subr.mxu0 0.0
  %4328 = vmatpush1.msra.mxu0 0.0
  %4329 = vmatprep.subr.mxu0 0.0
  %4330 = vmatpush1.msra.mxu0 0.0
  %4331 = vmatprep.subr.mxu0 0.0
  %4332 = vmatpush1.msra.mxu0 0.0
  %4333 = vmatprep.subr.mxu0 0.0
  %4334 = vmatpush1.msra.mxu0 0.0
  %4335 = vmatprep.mubr.f32.mxu0 %v4179
  %4336 = vmatmul.mubr.f32.gmra.mrb[0].mxu0 %v4173
  %v4337 = vpop.f32.mrb[0].mxu0
  %v4338 = vadd.f32 0.0, %v4337
  %v4339 = vpop.f32.mrb[0].mxu0
  %4340 = vmatprep.mubr.f32.mxu0 %v4182
  %4341 = vmatmul.mubr.f32.gmra.mrb[0].mxu0 %v4175
  %v4342 = vpop.f32.mrb[0].mxu0
  %v4343 = vadd.f32 0.0, %v4342
  %v4344 = vpop.f32.mrb[0].mxu0
  %4345 = vdwg.mxu0
  %v4346 = vpack.c.bf16 %v4267, %v4261
  %v4347 = vpack.c.bf16 %v4269, %v4263
  %v4348 = vpack.c.bf16 %v4343, %v4338
  %v4349 = vld [vmem:[%s13] sm:$0xff]
  %v4350 = vld [vmem:[%s13 + $0x8] sm:$0xf]
  %v4351 = vld [vmem:[%s13 + $0xc] sm:$0xff]
  %v4352 = vld [vmem:[%s13 + $0x14] sm:$0xf]
  %v4353 = vld [vmem:[%s13 + $0x18] sm:$0xff]
  %v4354 = vld [vmem:[%s13 + $0x20] sm:$0xf]
  %v4355 = vld [vmem:[%s13 + $0x24] sm:$0xff]
  %v4356 = vld [vmem:[%s13 + $0x2c] sm:$0xf]
  %v4357 = vld [vmem:[%s13 + $0x30] sm:$0xff]
  %v4358 = vld [vmem:[%s13 + $0x38] sm:$0xf]
  %v4359 = vld [vmem:[%s13 + $0x3c] sm:$0xff]
  %v4360 = vld [vmem:[%s13 + $0x44] sm:$0xf]
  %v4361 = vld [vmem:[%s13 + $0x48] sm:$0xff]
  %v4362 = vld [vmem:[%s13 + $0x50] sm:$0xf]
  %v4363 = vld [vmem:[%s13 + $0x54] sm:$0xff]
  %v4364 = vld [vmem:[%s13 + $0x5c] sm:$0xf]
  %v4365 = vld [vmem:[%s13 + $0x60] sm:$0xff]
  %v4366 = vld [vmem:[%s13 + $0x68] sm:$0xf]
  %v4367 = vld [vmem:[%s13 + $0x6c] sm:$0xff]
  %v4368 = vld [vmem:[%s13 + $0x74] sm:$0xf]
  %v4369 = vld [vmem:[%s13 + $0x78] sm:$0xff]
  %v4370 = vld [vmem:[%s13 + $0x80] sm:$0xf]
  %v4371 = vld [vmem:[%s13 + $0x84] sm:$0xff]
  %v4372 = vld [vmem:[%s13 + $0x8c] sm:$0xf]
  %v4373 = vld [vmem:[%s13 + $0x90] sm:$0xff]
  %v4374 = vld [vmem:[%s13 + $0x98] sm:$0xf]
  %v4375 = vld [vmem:[%s13 + $0x9c] sm:$0xff]
  %v4376 = vld [vmem:[%s13 + $0xa4] sm:$0xf]
  %v4377 = vld [vmem:[%s13 + $0xa8] sm:$0xff]
  %v4378 = vld [vmem:[%s13 + $0xb0] sm:$0xf]
  %v4379 = vld [vmem:[%s13 + $0xb4] sm:$0xff]
  %v4380 = vld [vmem:[%s13 + $0xbc] sm:$0xf]
  %v4381 = vld [vmem:[%s13 + $0xc0] sm:$0xff]
  %v4382 = vld [vmem:[%s13 + $0xc8] sm:$0xf]
  %v4383 = vld [vmem:[%s13 + $0xcc] sm:$0xff]
  %v4384 = vld [vmem:[%s13 + $0xd4] sm:$0xf]
  %v4385 = vld [vmem:[%s13 + $0xd8] sm:$0xff]
  %v4386 = vld [vmem:[%s13 + $0xe0] sm:$0xf]
  %v4387 = vld [vmem:[%s13 + $0xe4] sm:$0xff]
  %v4388 = vld [vmem:[%s13 + $0xec] sm:$0xf]
  %v4389 = vld [vmem:[%s13 + $0xf0] sm:$0xff]
  %v4390 = vld [vmem:[%s13 + $0xf8] sm:$0xf]
  %v4391 = vld [vmem:[%s13 + $0xfc] sm:$0xff]
  %v4392 = vld [vmem:[%s13 + $0x104] sm:$0xf]
  %v4393 = vld [vmem:[%s13 + $0x108] sm:$0xff]
  %v4394 = vld [vmem:[%s13 + $0x110] sm:$0xf]
  %v4395 = vld [vmem:[%s13 + $0x114] sm:$0xff]
  %v4396 = vld [vmem:[%s13 + $0x11c] sm:$0xf]
  %v4397 = vld [vmem:[%s13 + $0x120] sm:$0xff]
  %v4398 = vld [vmem:[%s13 + $0x128] sm:$0xf]
  %v4399 = vld [vmem:[%s13 + $0x12c] sm:$0xff]
  %v4400 = vld [vmem:[%s13 + $0x134] sm:$0xf]
  %v4401 = vld [vmem:[%s13 + $0x138] sm:$0xff]
  %v4402 = vld [vmem:[%s13 + $0x140] sm:$0xf]
  %v4403 = vld [vmem:[%s13 + $0x144] sm:$0xff]
  %v4404 = vld [vmem:[%s13 + $0x14c] sm:$0xf]
  %v4405 = vld [vmem:[%s13 + $0x150] sm:$0xff]
  %v4406 = vld [vmem:[%s13 + $0x158] sm:$0xf]
  %v4407 = vld [vmem:[%s13 + $0x15c] sm:$0xff]
  %v4408 = vld [vmem:[%s13 + $0x164] sm:$0xf]
  %v4409 = vld [vmem:[%s13 + $0x168] sm:$0xff]
  %v4410 = vld [vmem:[%s13 + $0x170] sm:$0xf]
  %v4411 = vld [vmem:[%s13 + $0x174] sm:$0xff]
  %v4412 = vld [vmem:[%s13 + $0x17c] sm:$0xf]
  %v4413 = vld [vmem:[%s13 + $0x180] sm:$0xff]
  %v4414 = vld [vmem:[%s13 + $0x188] sm:$0xf]
  %v4415 = vld [vmem:[%s13 + $0x18c] sm:$0xff]
  %v4416 = vld [vmem:[%s13 + $0x194] sm:$0xf]
  %v4417 = vld [vmem:[%s13 + $0x198] sm:$0xff]
  %v4418 = vld [vmem:[%s13 + $0x1a0] sm:$0xf]
  %v4419 = vld [vmem:[%s13 + $0x1a4] sm:$0xff]
  %v4420 = vld [vmem:[%s13 + $0x1ac] sm:$0xf]
  %v4421 = vld [vmem:[%s13 + $0x1b0] sm:$0xff]
  %v4422 = vld [vmem:[%s13 + $0x1b8] sm:$0xf]
  %v4423 = vld [vmem:[%s13 + $0x1bc] sm:$0x33]
  %v4424 = vld [vmem:[%s13 + $0x1c4] sm:$0x3]
  %v4425 = vld [vmem:[%s14] sm:$0x7]
  %v4427 = vlaneseq
  %v4428 = vshrl.u32 %v4427, 7
  %v4429 = vsub.s32 0, %v4428
  %v4430 = vrot.slane %v4425, %v4429
  %v4431 = vlaneseq
  %v4432 = vshrl.u32 %v4431, 7
  %v4433 = vsub.s32 1, %v4432
  %v4434 = vrot.slane %v4425, %v4433
  %v4435 = vlaneseq
  %v4436 = vshrl.u32 %v4435, 7
  %v4437 = vsub.s32 2, %v4436
  %v4438 = vrot.slane %v4425, %v4437
  %v4518 = vunpack.c.l.b16 %v4349
  %v4519 = vunpack.c.h.b16 %v4349
  %v4520 = vunpack.c.l.b16 %v4350
  %v4521 = vunpack.c.l.b16 %v4351
  %v4522 = vunpack.c.h.b16 %v4351
  %v4523 = vunpack.c.l.b16 %v4352
  %v4524 = vunpack.c.l.b16 %v4353
  %v4525 = vunpack.c.h.b16 %v4353
  %v4526 = vunpack.c.l.b16 %v4354
  %v4527 = vunpack.c.l.b16 %v4355
  %v4528 = vunpack.c.h.b16 %v4355
  %v4529 = vunpack.c.l.b16 %v4356
  %v4530 = vunpack.c.l.b16 %v4357
  %v4531 = vunpack.c.h.b16 %v4357
  %v4532 = vunpack.c.l.b16 %v4358
  %v4533 = vunpack.c.l.b16 %v4359
  %v4534 = vunpack.c.h.b16 %v4359
  %v4535 = vunpack.c.l.b16 %v4360
  %v4536 = vunpack.c.l.b16 %v4361
  %v4537 = vunpack.c.h.b16 %v4361
  %v4538 = vunpack.c.l.b16 %v4362
  %v4539 = vunpack.c.l.b16 %v4363
  %v4540 = vunpack.c.h.b16 %v4363
  %v4541 = vunpack.c.l.b16 %v4364
  %v4542 = vunpack.c.l.b16 %v4365
  %v4543 = vunpack.c.h.b16 %v4365
  %v4544 = vunpack.c.l.b16 %v4366
  %v4545 = vunpack.c.l.b16 %v4367
  %v4546 = vunpack.c.h.b16 %v4367
  %v4547 = vunpack.c.l.b16 %v4368
  %v4548 = vunpack.c.l.b16 %v4369
  %v4549 = vunpack.c.h.b16 %v4369
  %v4550 = vunpack.c.l.b16 %v4370
  %v4551 = vunpack.c.l.b16 %v4371
  %v4552 = vunpack.c.h.b16 %v4371
  %v4553 = vunpack.c.l.b16 %v4372
  %v4554 = vunpack.c.l.b16 %v4373
  %v4555 = vunpack.c.h.b16 %v4373
  %v4556 = vunpack.c.l.b16 %v4374
  %v4557 = vunpack.c.l.b16 %v4375
  %v4558 = vunpack.c.h.b16 %v4375
  %v4559 = vunpack.c.l.b16 %v4376
  %v4560 = vunpack.c.l.b16 %v4377
  %v4561 = vunpack.c.h.b16 %v4377
  %v4562 = vunpack.c.l.b16 %v4378
  %v4563 = vunpack.c.l.b16 %v4379
  %v4564 = vunpack.c.h.b16 %v4379
  %v4565 = vunpack.c.l.b16 %v4380
  %v4566 = vunpack.c.l.b16 %v4381
  %v4567 = vunpack.c.h.b16 %v4381
  %v4568 = vunpack.c.l.b16 %v4382
  %v4569 = vunpack.c.l.b16 %v4383
  %v4570 = vunpack.c.h.b16 %v4383
  %v4571 = vunpack.c.l.b16 %v4384
  %v4572 = vunpack.c.l.b16 %v4385
  %v4573 = vunpack.c.h.b16 %v4385
  %v4574 = vunpack.c.l.b16 %v4386
  %v4575 = vunpack.c.l.b16 %v4387
  %v4576 = vunpack.c.h.b16 %v4387
  %v4577 = vunpack.c.l.b16 %v4388
  %v4578 = vunpack.c.l.b16 %v4389
  %v4579 = vunpack.c.h.b16 %v4389
  %v4580 = vunpack.c.l.b16 %v4390
  %v4581 = vunpack.c.l.b16 %v4391
  %v4582 = vunpack.c.h.b16 %v4391
  %v4583 = vunpack.c.l.b16 %v4392
  %v4584 = vunpack.c.l.b16 %v4393
  %v4585 = vunpack.c.h.b16 %v4393
  %v4586 = vunpack.c.l.b16 %v4394
  %v4587 = vunpack.c.l.b16 %v4395
  %v4588 = vunpack.c.h.b16 %v4395
  %v4589 = vunpack.c.l.b16 %v4396
  %v4590 = vunpack.c.l.b16 %v4397
  %v4591 = vunpack.c.h.b16 %v4397
  %v4592 = vunpack.c.l.b16 %v4398
  %v4593 = vunpack.c.l.b16 %v4399
  %v4594 = vunpack.c.h.b16 %v4399
  %v4595 = vunpack.c.l.b16 %v4400
  %v4596 = vunpack.c.l.b16 %v4401
  %v4597 = vunpack.c.h.b16 %v4401
  %v4598 = vunpack.c.l.b16 %v4402
  %v4599 = vunpack.c.l.b16 %v4403
  %v4600 = vunpack.c.h.b16 %v4403
  %v4601 = vunpack.c.l.b16 %v4404
  %v4602 = vunpack.c.l.b16 %v4405
  %v4603 = vunpack.c.h.b16 %v4405
  %v4604 = vunpack.c.l.b16 %v4406
  %v4605 = vunpack.c.l.b16 %v4407
  %v4606 = vunpack.c.h.b16 %v4407
  %v4607 = vunpack.c.l.b16 %v4408
  %v4608 = vunpack.c.l.b16 %v4409
  %v4609 = vunpack.c.h.b16 %v4409
  %v4610 = vunpack.c.l.b16 %v4410
  %v4611 = vunpack.c.l.b16 %v4411
  %v4612 = vunpack.c.h.b16 %v4411
  %v4613 = vunpack.c.l.b16 %v4412
  %v4614 = vunpack.c.l.b16 %v4413
  %v4615 = vunpack.c.h.b16 %v4413
  %v4616 = vunpack.c.l.b16 %v4414
  %v4617 = vunpack.c.l.b16 %v4415
  %v4618 = vunpack.c.h.b16 %v4415
  %v4619 = vunpack.c.l.b16 %v4416
  %v4620 = vunpack.c.l.b16 %v4417
  %v4621 = vunpack.c.h.b16 %v4417
  %v4622 = vunpack.c.l.b16 %v4418
  %v4623 = vunpack.c.l.b16 %v4419
  %v4624 = vunpack.c.h.b16 %v4419
  %v4625 = vunpack.c.l.b16 %v4420
  %v4626 = vunpack.c.l.b16 %v4421
  %v4627 = vunpack.c.h.b16 %v4421
  %v4628 = vunpack.c.l.b16 %v4422
  %v4629 = vunpack.c.l.b16 %v4423
  %v4630 = vunpack.c.h.b16 %v4423
  %v4631 = vunpack.c.l.b16 %v4424
  %v4632 = vpack.c.b16 %v4521, %v4518
  %v4633 = vpack.c.b16 %v4522, %v4519
  %v4634 = vpack.c.b16 %v4523, %v4520
  %v4635 = vpack.c.b16 %v4527, %v4524
  %v4636 = vpack.c.b16 %v4528, %v4525
  %v4637 = vpack.c.b16 %v4529, %v4526
  %v4638 = vpack.c.b16 %v4533, %v4530
  %v4639 = vpack.c.b16 %v4534, %v4531
  %v4640 = vpack.c.b16 %v4535, %v4532
  %v4641 = vpack.c.b16 %v4539, %v4536
  %v4642 = vpack.c.b16 %v4540, %v4537
  %v4643 = vpack.c.b16 %v4541, %v4538
  %v4644 = vpack.c.b16 %v4545, %v4542
  %v4645 = vpack.c.b16 %v4546, %v4543
  %v4646 = vpack.c.b16 %v4547, %v4544
  %v4647 = vpack.c.b16 %v4551, %v4548
  %v4648 = vpack.c.b16 %v4552, %v4549
  %v4649 = vpack.c.b16 %v4553, %v4550
  %v4650 = vpack.c.b16 %v4557, %v4554
  %v4651 = vpack.c.b16 %v4558, %v4555
  %v4652 = vpack.c.b16 %v4559, %v4556
  %v4653 = vpack.c.b16 %v4563, %v4560
  %v4654 = vpack.c.b16 %v4564, %v4561
  %v4655 = vpack.c.b16 %v4565, %v4562
  %v4656 = vpack.c.b16 %v4569, %v4566
  %v4657 = vpack.c.b16 %v4570, %v4567
  %v4658 = vpack.c.b16 %v4571, %v4568
  %v4659 = vpack.c.b16 %v4575, %v4572
  %v4660 = vpack.c.b16 %v4576, %v4573
  %v4661 = vpack.c.b16 %v4577, %v4574
  %v4662 = vpack.c.b16 %v4581, %v4578
  %v4663 = vpack.c.b16 %v4582, %v4579
  %v4664 = vpack.c.b16 %v4583, %v4580
  %v4665 = vpack.c.b16 %v4587, %v4584
  %v4666 = vpack.c.b16 %v4588, %v4585
  %v4667 = vpack.c.b16 %v4589, %v4586
  %v4668 = vpack.c.b16 %v4593, %v4590
  %v4669 = vpack.c.b16 %v4594, %v4591
  %v4670 = vpack.c.b16 %v4595, %v4592
  %v4671 = vpack.c.b16 %v4599, %v4596
  %v4672 = vpack.c.b16 %v4600, %v4597
  %v4673 = vpack.c.b16 %v4601, %v4598
  %v4674 = vpack.c.b16 %v4605, %v4602
  %v4675 = vpack.c.b16 %v4606, %v4603
  %v4676 = vpack.c.b16 %v4607, %v4604
  %v4677 = vpack.c.b16 %v4611, %v4608
  %v4678 = vpack.c.b16 %v4612, %v4609
  %v4679 = vpack.c.b16 %v4613, %v4610
  %v4680 = vpack.c.b16 %v4617, %v4614
  %v4681 = vpack.c.b16 %v4618, %v4615
  %v4682 = vpack.c.b16 %v4619, %v4616
  %v4683 = vpack.c.b16 %v4623, %v4620
  %v4684 = vpack.c.b16 %v4624, %v4621
  %v4685 = vpack.c.b16 %v4625, %v4622
  %v4686 = vpack.c.b16 %v4629, %v4626
  %v4687 = vpack.c.b16 %v4630, %v4627
  %v4688 = vpack.c.b16 %v4631, %v4628
  %v4744 = vsel %vm759, %v4348, 0
  %v4747 = vsel %vm763, %v4686, 0
  %v4750 = vsel %vm763, %v4687, 0
  %v4753 = vsel %vm763, %v4688, 0
  %4755 = vmatprep.subr.bf16.mxu0 %v4633
  %4756 = vmatpush1.bf16.msra.mxu0 %v4632
  %4757 = vmatprep.subr.bf16.mxu0 %v4636
  %4758 = vmatpush1.bf16.msra.mxu0 %v4635
  %4759 = vmatprep.subr.bf16.mxu0 %v4639
  %4760 = vmatpush1.bf16.msra.mxu0 %v4638
  %4761 = vmatprep.subr.bf16.mxu0 %v4642
  %4762 = vmatpush1.bf16.msra.mxu0 %v4641
  %4763 = vmatprep.subr.bf16.mxu0 %v4645
  %4764 = vmatpush1.bf16.msra.mxu0 %v4644
  %4765 = vmatprep.subr.bf16.mxu0 %v4648
  %4766 = vmatpush1.bf16.msra.mxu0 %v4647
  %4767 = vmatprep.subr.bf16.mxu0 %v4651
  %4768 = vmatpush1.bf16.msra.mxu0 %v4650
  %4769 = vmatprep.subr.bf16.mxu0 %v4654
  %4770 = vmatpush1.bf16.msra.mxu0 %v4653
  %4771 = vmatprep.subr.bf16.mxu0 %v4657
  %4772 = vmatpush1.bf16.msra.mxu0 %v4656
  %4773 = vmatprep.subr.bf16.mxu0 %v4660
  %4774 = vmatpush1.bf16.msra.mxu0 %v4659
  %4775 = vmatprep.subr.bf16.mxu0 %v4663
  %4776 = vmatpush1.bf16.msra.mxu0 %v4662
  %4777 = vmatprep.subr.bf16.mxu0 %v4666
  %4778 = vmatpush1.bf16.msra.mxu0 %v4665
  %4779 = vmatprep.subr.bf16.mxu0 %v4669
  %4780 = vmatpush1.bf16.msra.mxu0 %v4668
  %4781 = vmatprep.subr.bf16.mxu0 %v4672
  %4782 = vmatpush1.bf16.msra.mxu0 %v4671
  %4783 = vmatprep.subr.bf16.mxu0 %v4675
  %4784 = vmatpush1.bf16.msra.mxu0 %v4674
  %4785 = vmatprep.subr.bf16.mxu0 %v4678
  %4786 = vmatpush1.bf16.msra.mxu0 %v4677
  %4787 = vmatprep.mubr.bf16.mxu0 %v4347
  %4788 = vmatmul.mubr.bf16.gmra.mrb[0].mxu0 %v4346
  %v4789 = vpop.f32.mrb[0].mxu0
  %v4790 = vadd.f32 %v4430, %v4789
  %v4791 = vpop.f32.mrb[0].mxu0
  %v4792 = vadd.f32 %v4434, %v4791
  %v4793 = vpop.f32.mrb[0].mxu0
  %v4794 = vadd.f32 %v4430, %v4793
  %v4795 = vpop.f32.mrb[0].mxu0
  %v4796 = vadd.f32 %v4434, %v4795
  %4797 = vdwg.mxu0
  %4798 = vmatprep.subr.bf16.mxu0 %v4681
  %4799 = vmatpush1.bf16.msra.mxu0 %v4680
  %4800 = vmatprep.subr.bf16.mxu0 %v4684
  %4801 = vmatpush1.bf16.msra.mxu0 %v4683
  %4802 = vmatprep.subr.bf16.mxu0 %v4750
  %4803 = vmatpush1.bf16.msra.mxu0 %v4747
  %4804 = vmatprep.subr.bf16.mxu0 0
  %4805 = vmatpush1.bf16.msra.mxu0 0
  %4806 = vmatprep.subr.bf16.mxu0 0
  %4807 = vmatpush1.bf16.msra.mxu0 0
  %4808 = vmatprep.subr.bf16.mxu0 0
  %4809 = vmatpush1.bf16.msra.mxu0 0
  %4810 = vmatprep.subr.bf16.mxu0 0
  %4811 = vmatpush1.bf16.msra.mxu0 0
  %4812 = vmatprep.subr.bf16.mxu0 0
  %4813 = vmatpush1.bf16.msra.mxu0 0
  %4814 = vmatprep.subr.bf16.mxu0 0
  %4815 = vmatpush1.bf16.msra.mxu0 0
  %4816 = vmatprep.subr.bf16.mxu0 0
  %4817 = vmatpush1.bf16.msra.mxu0 0
  %4818 = vmatprep.subr.bf16.mxu0 0
  %4819 = vmatpush1.bf16.msra.mxu0 0
  %4820 = vmatprep.subr.bf16.mxu0 0
  %4821 = vmatpush1.bf16.msra.mxu0 0
  %4822 = vmatprep.subr.bf16.mxu0 0
  %4823 = vmatpush1.bf16.msra.mxu0 0
  %4824 = vmatprep.subr.bf16.mxu0 0
  %4825 = vmatpush1.bf16.msra.mxu0 0
  %4826 = vmatprep.subr.bf16.mxu0 0
  %4827 = vmatpush1.bf16.msra.mxu0 0
  %4828 = vmatprep.subr.bf16.mxu0 0
  %4829 = vmatpush1.bf16.msra.mxu0 0
  %4830 = vmatprep.mubr.bf16.mxu0 0
  %4831 = vmatmul.mubr.bf16.gmra.mrb[0].mxu0 %v4744
  %v4832 = vpop.f32.mrb[0].mxu0
  %v4833 = vadd.f32 %v4790, %v4832
  %v4834 = vpop.f32.mrb[0].mxu0
  %v4835 = vadd.f32 %v4792, %v4834
  %v4836 = vpop.f32.mrb[0].mxu0
  %v4837 = vadd.f32 %v4794, %v4836
  %v4838 = vpop.f32.mrb[0].mxu0
  %v4839 = vadd.f32 %v4796, %v4838
  %4840 = vdwg.mxu0
  %4841 = vmatprep.subr.bf16.mxu0 0
  %4842 = vmatpush1.bf16.msra.mxu0 %v4634
  %4843 = vmatprep.subr.bf16.mxu0 0
  %4844 = vmatpush1.bf16.msra.mxu0 %v4637
  %4845 = vmatprep.subr.bf16.mxu0 0
  %4846 = vmatpush1.bf16.msra.mxu0 %v4640
  %4847 = vmatprep.subr.bf16.mxu0 0
  %4848 = vmatpush1.bf16.msra.mxu0 %v4643
  %4849 = vmatprep.subr.bf16.mxu0 0
  %4850 = vmatpush1.bf16.msra.mxu0 %v4646
  %4851 = vmatprep.subr.bf16.mxu0 0
  %4852 = vmatpush1.bf16.msra.mxu0 %v4649
  %4853 = vmatprep.subr.bf16.mxu0 0
  %4854 = vmatpush1.bf16.msra.mxu0 %v4652
  %4855 = vmatprep.subr.bf16.mxu0 0
  %4856 = vmatpush1.bf16.msra.mxu0 %v4655
  %4857 = vmatprep.subr.bf16.mxu0 0
  %4858 = vmatpush1.bf16.msra.mxu0 %v4658
  %4859 = vmatprep.subr.bf16.mxu0 0
  %4860 = vmatpush1.bf16.msra.mxu0 %v4661
  %4861 = vmatprep.subr.bf16.mxu0 0
  %4862 = vmatpush1.bf16.msra.mxu0 %v4664
  %4863 = vmatprep.subr.bf16.mxu0 0
  %4864 = vmatpush1.bf16.msra.mxu0 %v4667
  %4865 = vmatprep.subr.bf16.mxu0 0
  %4866 = vmatpush1.bf16.msra.mxu0 %v4670
  %4867 = vmatprep.subr.bf16.mxu0 0
  %4868 = vmatpush1.bf16.msra.mxu0 %v4673
  %4869 = vmatprep.subr.bf16.mxu0 0
  %4870 = vmatpush1.bf16.msra.mxu0 %v4676
  %4871 = vmatprep.subr.bf16.mxu0 0
  %4872 = vmatpush1.bf16.msra.mxu0 %v4679
  %4873 = vmatprep.mubr.bf16.mxu0 %v4347
  %4874 = vmatmul.mubr.bf16.gmra.mrb[0].mxu0 %v4346
  %v4875 = vpop.f32.mrb[0].mxu0
  %v4876 = vadd.f32 %v4438, %v4875
  %v4877 = vpop.f32.mrb[0].mxu0
  %v4878 = vpop.f32.mrb[0].mxu0
  %v4879 = vadd.f32 %v4438, %v4878
  %v4880 = vpop.f32.mrb[0].mxu0
  %4881 = vdwg.mxu0
  %4882 = vmatprep.subr.bf16.mxu0 0
  %4883 = vmatpush1.bf16.msra.mxu0 %v4682
  %4884 = vmatprep.subr.bf16.mxu0 0
  %4885 = vmatpush1.bf16.msra.mxu0 %v4685
  %4886 = vmatprep.subr.bf16.mxu0 0
  %4887 = vmatpush1.bf16.msra.mxu0 %v4753
  %4888 = vmatprep.subr.bf16.mxu0 0
  %4889 = vmatpush1.bf16.msra.mxu0 0
  %4890 = vmatprep.subr.bf16.mxu0 0
  %4891 = vmatpush1.bf16.msra.mxu0 0
  %4892 = vmatprep.subr.bf16.mxu0 0
  %4893 = vmatpush1.bf16.msra.mxu0 0
  %4894 = vmatprep.subr.bf16.mxu0 0
  %4895 = vmatpush1.bf16.msra.mxu0 0
  %4896 = vmatprep.subr.bf16.mxu0 0
  %4897 = vmatpush1.bf16.msra.mxu0 0
  %4898 = vmatprep.subr.bf16.mxu0 0
  %4899 = vmatpush1.bf16.msra.mxu0 0
  %4900 = vmatprep.subr.bf16.mxu0 0
  %4901 = vmatpush1.bf16.msra.mxu0 0
  %4902 = vmatprep.subr.bf16.mxu0 0
  %4903 = vmatpush1.bf16.msra.mxu0 0
  %4904 = vmatprep.subr.bf16.mxu0 0
  %4905 = vmatpush1.bf16.msra.mxu0 0
  %4906 = vmatprep.subr.bf16.mxu0 0
  %4907 = vmatpush1.bf16.msra.mxu0 0
  %4908 = vmatprep.subr.bf16.mxu0 0
  %4909 = vmatpush1.bf16.msra.mxu0 0
  %4910 = vmatprep.subr.bf16.mxu0 0
  %4911 = vmatpush1.bf16.msra.mxu0 0
  %4912 = vmatprep.subr.bf16.mxu0 0
  %4913 = vmatpush1.bf16.msra.mxu0 0
  %4914 = vmatprep.mubr.bf16.mxu0 0
  %4915 = vmatmul.mubr.bf16.gmra.mrb[0].mxu0 %v4744
  %v4916 = vpop.f32.mrb[0].mxu0
  %v4917 = vadd.f32 %v4876, %v4916
  %v4918 = vpop.f32.mrb[0].mxu0
  %v4919 = vpop.f32.mrb[0].mxu0
  %v4920 = vadd.f32 %v4879, %v4919
  %v4921 = vpop.f32.mrb[0].mxu0
  %4922 = vdwg.mxu0
  %v4923 = vadd.f32 %v214, %v4833
  %v4924 = vadd.f32 %v216, %v4835
  %v4925 = vadd.f32 %v291, %v4917
  %v4926 = vadd.f32 %v220, %v4837
  %v4927 = vadd.f32 %v222, %v4839
  %v4928 = vadd.f32 %v296, %v4920
  %v4929 = vld [vmem:[%s15] sm:$0x7]
  %v4930 = vld [vmem:[%s16] sm:$0x7]
  %v4931 = vadd.f32 %v4923, %v4924
  %v4932 = vsel %vm759, %v4925, 0.0
  %v4933 = vadd.f32 %v4931, %v4932
  %4934 = vadd.xlane.f32.xlu0 %v4933
  %v4935 = vpop.xlane.xlu0 %4934
  %v4936 = vsel %vm763, %v4926, 0.0
  %v4937 = vsel %vm763, %v4927, 0.0
  %v4938 = vadd.f32 %v4936, %v4937
  %vm4939 = vcmask 357376
  %v4940 = vsel %vm4939, %v4928, 0.0
  %v4941 = vadd.f32 %v4938, %v4940
  %4942 = vadd.xlane.f32.xlu0 %v4941
  %v4943 = vpop.xlane.xlu0 %4942
  %v4944 = vrcp.pop 300.0
  %v4945 = vmul.f32 %v4935, %v4944
  %v4946 = vmul.f32 %v4943, %v4944
  %v4947 = vsub.f32 %v4923, %v4945
  %v4948 = vsub.f32 %v4924, %v4945
  %v4949 = vsub.f32 %v4925, %v4945
  %v4950 = vsub.f32 %v4926, %v4946
  %v4951 = vsub.f32 %v4927, %v4946
  %v4952 = vsub.f32 %v4928, %v4946
  %v4953 = vmul.f32 %v4947, %v4947
  %v4954 = vmul.f32 %v4948, %v4948
  %v4955 = vmul.f32 %v4949, %v4949
  %v4956 = vmul.f32 %v4950, %v4950
  %v4957 = vmul.f32 %v4951, %v4951
  %v4958 = vmul.f32 %v4952, %v4952
  %v4959 = vadd.f32 %v4953, %v4954
  %v4960 = vsel %vm759, %v4955, 0.0
  %v4961 = vadd.f32 %v4959, %v4960
  %4962 = vadd.xlane.f32.xlu0 %v4961
  %v4963 = vpop.xlane.xlu0 %4962
  %v4964 = vsel %vm763, %v4956, 0.0
  %v4965 = vsel %vm763, %v4957, 0.0
  %v4966 = vadd.f32 %v4964, %v4965
  %v4967 = vsel %vm4939, %v4958, 0.0
  %v4968 = vadd.f32 %v4966, %v4967
  %4969 = vadd.xlane.f32.xlu0 %v4968
  %v4970 = vpop.xlane.xlu0 %4969
  %v4971 = vmul.f32 %v4963, %v4944
  %v4972 = vmul.f32 %v4970, %v4944
  %v4973 = vadd.f32 %v4971, 1e-05
  %v4974 = vadd.f32 %v4972, 1e-05
  %v4975 = vrsqrt.pop %v4973
  %v4976 = vrsqrt.pop %v4974
  %v4977 = vmul.f32 %v4947, %v4975
  %v4978 = vmul.f32 %v4948, %v4975
  %v4979 = vmul.f32 %v4949, %v4975
  %v4980 = vmul.f32 %v4950, %v4976
  %v4981 = vmul.f32 %v4951, %v4976
  %v4982 = vmul.f32 %v4952, %v4976
  %v4984 = vlaneseq
  %v4985 = vshrl.u32 %v4984, 7
  %v4986 = vsub.s32 0, %v4985
  %v4987 = vrot.slane %v4929, %v4986
  %v4988 = vlaneseq
  %v4989 = vshrl.u32 %v4988, 7
  %v4990 = vsub.s32 1, %v4989
  %v4991 = vrot.slane %v4929, %v4990
  %v4992 = vlaneseq
  %v4993 = vshrl.u32 %v4992, 7
  %v4994 = vsub.s32 2, %v4993
  %v4995 = vrot.slane %v4929, %v4994
  %v4999 = vmul.f32 %v4977, %v4987
  %v5000 = vmul.f32 %v4978, %v4991
  %v5001 = vmul.f32 %v4979, %v4995
  %v5002 = vmul.f32 %v4980, %v4987
  %v5003 = vmul.f32 %v4981, %v4991
  %v5004 = vmul.f32 %v4982, %v4995
  %v5006 = vlaneseq
  %v5007 = vshrl.u32 %v5006, 7
  %v5008 = vsub.s32 0, %v5007
  %v5009 = vrot.slane %v4930, %v5008
  %v5010 = vlaneseq
  %v5011 = vshrl.u32 %v5010, 7
  %v5012 = vsub.s32 1, %v5011
  %v5013 = vrot.slane %v4930, %v5012
  %v5014 = vlaneseq
  %v5015 = vshrl.u32 %v5014, 7
  %v5016 = vsub.s32 2, %v5015
  %v5017 = vrot.slane %v4930, %v5016
  %v5021 = vadd.f32 %v4999, %v5009
  %v5022 = vadd.f32 %v5000, %v5013
  %v5023 = vadd.f32 %v5001, %v5017
  %v5024 = vadd.f32 %v5002, %v5009
  %v5025 = vadd.f32 %v5003, %v5013
  %v5026 = vadd.f32 %v5004, %v5017
  %v5027 = vpack.c.bf16 %v5024, %v5021
  %v5028 = vpack.c.bf16 %v5025, %v5022
  %v5029 = vpack.c.bf16 %v5026, %v5023
  %v5030 = vld [vmem:[%s17] sm:$0xff]
  %v5031 = vld [vmem:[%s17 + $0x8] sm:$0xff]
  %v5032 = vld [vmem:[%s17 + $0x10] sm:$0xff]
  %v5033 = vld [vmem:[%s17 + $0x18] sm:$0xff]
  %v5034 = vld [vmem:[%s17 + $0x20] sm:$0xff]
  %v5035 = vld [vmem:[%s17 + $0x28] sm:$0xff]
  %v5036 = vld [vmem:[%s17 + $0x30] sm:$0xff]
  %v5037 = vld [vmem:[%s17 + $0x38] sm:$0xff]
  %v5038 = vld [vmem:[%s17 + $0x40] sm:$0xff]
  %v5039 = vld [vmem:[%s17 + $0x48] sm:$0xff]
  %v5040 = vld [vmem:[%s17 + $0x50] sm:$0xff]
  %v5041 = vld [vmem:[%s17 + $0x58] sm:$0xff]
  %v5042 = vld [vmem:[%s17 + $0x60] sm:$0xff]
  %v5043 = vld [vmem:[%s17 + $0x68] sm:$0xff]
  %v5044 = vld [vmem:[%s17 + $0x70] sm:$0xff]
  %v5045 = vld [vmem:[%s17 + $0x78] sm:$0xff]
  %v5046 = vld [vmem:[%s17 + $0x80] sm:$0xff]
  %v5047 = vld [vmem:[%s17 + $0x88] sm:$0xff]
  %v5048 = vld [vmem:[%s17 + $0x90] sm:$0xff]
  %v5049 = vld [vmem:[%s17 + $0x98] sm:$0xff]
  %v5050 = vld [vmem:[%s17 + $0xa0] sm:$0xff]
  %v5051 = vld [vmem:[%s17 + $0xa8] sm:$0xff]
  %v5052 = vld [vmem:[%s17 + $0xb0] sm:$0xff]
  %v5053 = vld [vmem:[%s17 + $0xb8] sm:$0xff]
  %v5054 = vld [vmem:[%s17 + $0xc0] sm:$0xff]
  %v5055 = vld [vmem:[%s17 + $0xc8] sm:$0xff]
  %v5056 = vld [vmem:[%s17 + $0xd0] sm:$0xff]
  %v5057 = vld [vmem:[%s17 + $0xd8] sm:$0xff]
  %v5058 = vld [vmem:[%s17 + $0xe0] sm:$0xff]
  %v5059 = vld [vmem:[%s17 + $0xe8] sm:$0xff]
  %v5060 = vld [vmem:[%s17 + $0xf0] sm:$0xff]
  %v5061 = vld [vmem:[%s17 + $0xf8] sm:$0xff]
  %v5062 = vld [vmem:[%s17 + $0x100] sm:$0xff]
  %v5063 = vld [vmem:[%s17 + $0x108] sm:$0xff]
  %v5064 = vld [vmem:[%s17 + $0x110] sm:$0xff]
  %v5065 = vld [vmem:[%s17 + $0x118] sm:$0xff]
  %v5066 = vld [vmem:[%s17 + $0x120] sm:$0xff]
  %v5067 = vld [vmem:[%s17 + $0x128] sm:$0xff]
  %v5068 = vld [vmem:[%s17 + $0x130] sm:$0xff]
  %v5069 = vld [vmem:[%s17 + $0x138] sm:$0xff]
  %v5070 = vld [vmem:[%s17 + $0x140] sm:$0xff]
  %v5071 = vld [vmem:[%s17 + $0x148] sm:$0xff]
  %v5072 = vld [vmem:[%s17 + $0x150] sm:$0xff]
  %v5073 = vld [vmem:[%s17 + $0x158] sm:$0xff]
  %v5074 = vld [vmem:[%s17 + $0x160] sm:$0xff]
  %v5075 = vld [vmem:[%s17 + $0x168] sm:$0xff]
  %v5076 = vld [vmem:[%s17 + $0x170] sm:$0xff]
  %v5077 = vld [vmem:[%s17 + $0x178] sm:$0xff]
  %v5078 = vld [vmem:[%s17 + $0x180] sm:$0xff]
  %v5079 = vld [vmem:[%s17 + $0x188] sm:$0xff]
  %v5080 = vld [vmem:[%s17 + $0x190] sm:$0xff]
  %v5081 = vld [vmem:[%s17 + $0x198] sm:$0xff]
  %v5082 = vld [vmem:[%s17 + $0x1a0] sm:$0xff]
  %v5083 = vld [vmem:[%s17 + $0x1a8] sm:$0xff]
  %v5084 = vld [vmem:[%s17 + $0x1b0] sm:$0xff]
  %v5085 = vld [vmem:[%s17 + $0x1b8] sm:$0xff]
  %v5086 = vld [vmem:[%s17 + $0x1c0] sm:$0xff]
  %v5087 = vld [vmem:[%s17 + $0x1c8] sm:$0xff]
  %v5088 = vld [vmem:[%s17 + $0x1d0] sm:$0xff]
  %v5089 = vld [vmem:[%s17 + $0x1d8] sm:$0xff]
  %v5090 = vld [vmem:[%s17 + $0x1e0] sm:$0xff]
  %v5091 = vld [vmem:[%s17 + $0x1e8] sm:$0xff]
  %v5092 = vld [vmem:[%s17 + $0x1f0] sm:$0xff]
  %v5093 = vld [vmem:[%s17 + $0x1f8] sm:$0xff]
  %v5094 = vld [vmem:[%s17 + $0x200] sm:$0xff]
  %v5095 = vld [vmem:[%s17 + $0x208] sm:$0xff]
  %v5096 = vld [vmem:[%s17 + $0x210] sm:$0xff]
  %v5097 = vld [vmem:[%s17 + $0x218] sm:$0xff]
  %v5098 = vld [vmem:[%s17 + $0x220] sm:$0xff]
  %v5099 = vld [vmem:[%s17 + $0x228] sm:$0xff]
  %v5100 = vld [vmem:[%s17 + $0x230] sm:$0xff]
  %v5101 = vld [vmem:[%s17 + $0x238] sm:$0xff]
  %v5102 = vld [vmem:[%s17 + $0x240] sm:$0xff]
  %v5103 = vld [vmem:[%s17 + $0x248] sm:$0xff]
  %v5104 = vld [vmem:[%s17 + $0x250] sm:$0xff]
  %v5105 = vld [vmem:[%s17 + $0x258] sm:$0xff]
  %v5106 = vld [vmem:[%s17 + $0x260] sm:$0xff]
  %v5107 = vld [vmem:[%s17 + $0x268] sm:$0xff]
  %v5108 = vld [vmem:[%s17 + $0x270] sm:$0xff]
  %v5109 = vld [vmem:[%s17 + $0x278] sm:$0xff]
  %v5110 = vld [vmem:[%s17 + $0x280] sm:$0xff]
  %v5111 = vld [vmem:[%s17 + $0x288] sm:$0xff]
  %v5112 = vld [vmem:[%s17 + $0x290] sm:$0xff]
  %v5113 = vld [vmem:[%s17 + $0x298] sm:$0xff]
  %v5114 = vld [vmem:[%s17 + $0x2a0] sm:$0xff]
  %v5115 = vld [vmem:[%s17 + $0x2a8] sm:$0xff]
  %v5116 = vld [vmem:[%s17 + $0x2b0] sm:$0xff]
  %v5117 = vld [vmem:[%s17 + $0x2b8] sm:$0xff]
  %v5118 = vld [vmem:[%s17 + $0x2c0] sm:$0xff]
  %v5119 = vld [vmem:[%s17 + $0x2c8] sm:$0xff]
  %v5120 = vld [vmem:[%s17 + $0x2d0] sm:$0xff]
  %v5121 = vld [vmem:[%s17 + $0x2d8] sm:$0xff]
  %v5122 = vld [vmem:[%s17 + $0x2e0] sm:$0xff]
  %v5123 = vld [vmem:[%s17 + $0x2e8] sm:$0xff]
  %v5124 = vld [vmem:[%s17 + $0x2f0] sm:$0xff]
  %v5125 = vld [vmem:[%s17 + $0x2f8] sm:$0xff]
  %v5126 = vld [vmem:[%s17 + $0x300] sm:$0xff]
  %v5127 = vld [vmem:[%s17 + $0x308] sm:$0xff]
  %v5128 = vld [vmem:[%s17 + $0x310] sm:$0xff]
  %v5129 = vld [vmem:[%s17 + $0x318] sm:$0xff]
  %v5130 = vld [vmem:[%s17 + $0x320] sm:$0xff]
  %v5131 = vld [vmem:[%s17 + $0x328] sm:$0xff]
  %v5132 = vld [vmem:[%s17 + $0x330] sm:$0xff]
  %v5133 = vld [vmem:[%s17 + $0x338] sm:$0xff]
  %v5134 = vld [vmem:[%s17 + $0x340] sm:$0xff]
  %v5135 = vld [vmem:[%s17 + $0x348] sm:$0xff]
  %v5136 = vld [vmem:[%s17 + $0x350] sm:$0xff]
  %v5137 = vld [vmem:[%s17 + $0x358] sm:$0xff]
  %v5138 = vld [vmem:[%s17 + $0x360] sm:$0xff]
  %v5139 = vld [vmem:[%s17 + $0x368] sm:$0xff]
  %v5140 = vld [vmem:[%s17 + $0x370] sm:$0xff]
  %v5141 = vld [vmem:[%s17 + $0x378] sm:$0xff]
  %v5142 = vld [vmem:[%s17 + $0x380] sm:$0xff]
  %v5143 = vld [vmem:[%s17 + $0x388] sm:$0xff]
  %v5144 = vld [vmem:[%s17 + $0x390] sm:$0xff]
  %v5145 = vld [vmem:[%s17 + $0x398] sm:$0xff]
  %v5146 = vld [vmem:[%s17 + $0x3a0] sm:$0xff]
  %v5147 = vld [vmem:[%s17 + $0x3a8] sm:$0xff]
  %v5148 = vld [vmem:[%s17 + $0x3b0] sm:$0xff]
  %v5149 = vld [vmem:[%s17 + $0x3b8] sm:$0xff]
  %v5150 = vld [vmem:[%s17 + $0x3c0] sm:$0xff]
  %v5151 = vld [vmem:[%s17 + $0x3c8] sm:$0xff]
  %v5152 = vld [vmem:[%s17 + $0x3d0] sm:$0xff]
  %v5153 = vld [vmem:[%s17 + $0x3d8] sm:$0xff]
  %v5154 = vld [vmem:[%s17 + $0x3e0] sm:$0xff]
  %v5155 = vld [vmem:[%s17 + $0x3e8] sm:$0xff]
  %v5156 = vld [vmem:[%s17 + $0x3f0] sm:$0xff]
  %v5157 = vld [vmem:[%s17 + $0x3f8] sm:$0xff]
  %v5158 = vld [vmem:[%s17 + $0x400] sm:$0xff]
  %v5159 = vld [vmem:[%s17 + $0x408] sm:$0xff]
  %v5160 = vld [vmem:[%s17 + $0x410] sm:$0xff]
  %v5161 = vld [vmem:[%s17 + $0x418] sm:$0xff]
  %v5162 = vld [vmem:[%s17 + $0x420] sm:$0xff]
  %v5163 = vld [vmem:[%s17 + $0x428] sm:$0xff]
  %v5164 = vld [vmem:[%s17 + $0x430] sm:$0xff]
  %v5165 = vld [vmem:[%s17 + $0x438] sm:$0xff]
  %v5166 = vld [vmem:[%s17 + $0x440] sm:$0xff]
  %v5167 = vld [vmem:[%s17 + $0x448] sm:$0xff]
  %v5168 = vld [vmem:[%s17 + $0x450] sm:$0xff]
  %v5169 = vld [vmem:[%s17 + $0x458] sm:$0xff]
  %v5170 = vld [vmem:[%s17 + $0x460] sm:$0xff]
  %v5171 = vld [vmem:[%s17 + $0x468] sm:$0xff]
  %v5172 = vld [vmem:[%s17 + $0x470] sm:$0xff]
  %v5173 = vld [vmem:[%s17 + $0x478] sm:$0xff]
  %v5174 = vld [vmem:[%s17 + $0x480] sm:$0xff]
  %v5175 = vld [vmem:[%s17 + $0x488] sm:$0xff]
  %v5176 = vld [vmem:[%s17 + $0x490] sm:$0xff]
  %v5177 = vld [vmem:[%s17 + $0x498] sm:$0xff]
  %v5178 = vld [vmem:[%s17 + $0x4a0] sm:$0xff]
  %v5179 = vld [vmem:[%s17 + $0x4a8] sm:$0xff]
  %v5180 = vld [vmem:[%s17 + $0x4b0] sm:$0xff]
  %v5181 = vld [vmem:[%s17 + $0x4b8] sm:$0xff]
  %v5182 = vld [vmem:[%s17 + $0x4c0] sm:$0xff]
  %v5183 = vld [vmem:[%s17 + $0x4c8] sm:$0xff]
  %v5184 = vld [vmem:[%s17 + $0x4d0] sm:$0xff]
  %v5185 = vld [vmem:[%s17 + $0x4d8] sm:$0xff]
  %v5186 = vld [vmem:[%s17 + $0x4e0] sm:$0xff]
  %v5187 = vld [vmem:[%s17 + $0x4e8] sm:$0xff]
  %v5188 = vld [vmem:[%s17 + $0x4f0] sm:$0xff]
  %v5189 = vld [vmem:[%s17 + $0x4f8] sm:$0xff]
  %v5190 = vld [vmem:[%s17 + $0x500] sm:$0xff]
  %v5191 = vld [vmem:[%s17 + $0x508] sm:$0xff]
  %v5192 = vld [vmem:[%s17 + $0x510] sm:$0xff]
  %v5193 = vld [vmem:[%s17 + $0x518] sm:$0xff]
  %v5194 = vld [vmem:[%s17 + $0x520] sm:$0xff]
  %v5195 = vld [vmem:[%s17 + $0x528] sm:$0xff]
  %v5196 = vld [vmem:[%s17 + $0x530] sm:$0xff]
  %v5197 = vld [vmem:[%s17 + $0x538] sm:$0xff]
  %v5198 = vld [vmem:[%s17 + $0x540] sm:$0xff]
  %v5199 = vld [vmem:[%s17 + $0x548] sm:$0xff]
  %v5200 = vld [vmem:[%s17 + $0x550] sm:$0xff]
  %v5201 = vld [vmem:[%s17 + $0x558] sm:$0xff]
  %v5202 = vld [vmem:[%s17 + $0x560] sm:$0xff]
  %v5203 = vld [vmem:[%s17 + $0x568] sm:$0xff]
  %v5204 = vld [vmem:[%s17 + $0x570] sm:$0xff]
  %v5205 = vld [vmem:[%s17 + $0x578] sm:$0xff]
  %v5206 = vld [vmem:[%s17 + $0x580] sm:$0xff]
  %v5207 = vld [vmem:[%s17 + $0x588] sm:$0xff]
  %v5208 = vld [vmem:[%s17 + $0x590] sm:$0xff]
  %v5209 = vld [vmem:[%s17 + $0x598] sm:$0xff]
  %v5210 = vld [vmem:[%s17 + $0x5a0] sm:$0xff]
  %v5211 = vld [vmem:[%s17 + $0x5a8] sm:$0xff]
  %v5212 = vld [vmem:[%s17 + $0x5b0] sm:$0xff]
  %v5213 = vld [vmem:[%s17 + $0x5b8] sm:$0xff]
  %v5214 = vld [vmem:[%s17 + $0x5c0] sm:$0xff]
  %v5215 = vld [vmem:[%s17 + $0x5c8] sm:$0xff]
  %v5216 = vld [vmem:[%s17 + $0x5d0] sm:$0xff]
  %v5217 = vld [vmem:[%s17 + $0x5d8] sm:$0xff]
  %v5218 = vld [vmem:[%s17 + $0x5e0] sm:$0xff]
  %v5219 = vld [vmem:[%s17 + $0x5e8] sm:$0xff]
  %v5220 = vld [vmem:[%s17 + $0x5f0] sm:$0xff]
  %v5221 = vld [vmem:[%s17 + $0x5f8] sm:$0xff]
  %v5222 = vld [vmem:[%s17 + $0x600] sm:$0xff]
  %v5223 = vld [vmem:[%s17 + $0x608] sm:$0xff]
  %v5224 = vld [vmem:[%s17 + $0x610] sm:$0xff]
  %v5225 = vld [vmem:[%s17 + $0x618] sm:$0xff]
  %v5226 = vld [vmem:[%s17 + $0x620] sm:$0xff]
  %v5227 = vld [vmem:[%s17 + $0x628] sm:$0xff]
  %v5228 = vld [vmem:[%s17 + $0x630] sm:$0xff]
  %v5229 = vld [vmem:[%s17 + $0x638] sm:$0xff]
  %v5230 = vld [vmem:[%s17 + $0x640] sm:$0xff]
  %v5231 = vld [vmem:[%s17 + $0x648] sm:$0xff]
  %v5232 = vld [vmem:[%s17 + $0x650] sm:$0xff]
  %v5233 = vld [vmem:[%s17 + $0x658] sm:$0xff]
  %v5234 = vld [vmem:[%s17 + $0x660] sm:$0xff]
  %v5235 = vld [vmem:[%s17 + $0x668] sm:$0xff]
  %v5236 = vld [vmem:[%s17 + $0x670] sm:$0xff]
  %v5237 = vld [vmem:[%s17 + $0x678] sm:$0xff]
  %v5238 = vld [vmem:[%s17 + $0x680] sm:$0xff]
  %v5239 = vld [vmem:[%s17 + $0x688] sm:$0xff]
  %v5240 = vld [vmem:[%s17 + $0x690] sm:$0xff]
  %v5241 = vld [vmem:[%s17 + $0x698] sm:$0xff]
  %v5242 = vld [vmem:[%s17 + $0x6a0] sm:$0xff]
  %v5243 = vld [vmem:[%s17 + $0x6a8] sm:$0xff]
  %v5244 = vld [vmem:[%s17 + $0x6b0] sm:$0xff]
  %v5245 = vld [vmem:[%s17 + $0x6b8] sm:$0xff]
  %v5246 = vld [vmem:[%s17 + $0x6c0] sm:$0xff]
  %v5247 = vld [vmem:[%s17 + $0x6c8] sm:$0xff]
  %v5248 = vld [vmem:[%s17 + $0x6d0] sm:$0xff]
  %v5249 = vld [vmem:[%s17 + $0x6d8] sm:$0xff]
  %v5250 = vld [vmem:[%s17 + $0x6e0] sm:$0xff]
  %v5251 = vld [vmem:[%s17 + $0x6e8] sm:$0xff]
  %v5252 = vld [vmem:[%s17 + $0x6f0] sm:$0xff]
  %v5253 = vld [vmem:[%s17 + $0x6f8] sm:$0xff]
  %v5254 = vld [vmem:[%s17 + $0x700] sm:$0xff]
  %v5255 = vld [vmem:[%s17 + $0x708] sm:$0xff]
  %v5256 = vld [vmem:[%s17 + $0x710] sm:$0xff]
  %v5257 = vld [vmem:[%s17 + $0x718] sm:$0xff]
  %v5258 = vld [vmem:[%s17 + $0x720] sm:$0xff]
  %v5259 = vld [vmem:[%s17 + $0x728] sm:$0xff]
  %v5260 = vld [vmem:[%s17 + $0x730] sm:$0xff]
  %v5261 = vld [vmem:[%s17 + $0x738] sm:$0xff]
  %v5262 = vld [vmem:[%s17 + $0x740] sm:$0xff]
  %v5263 = vld [vmem:[%s17 + $0x748] sm:$0xff]
  %v5264 = vld [vmem:[%s17 + $0x750] sm:$0xff]
  %v5265 = vld [vmem:[%s17 + $0x758] sm:$0xff]
  %v5266 = vld [vmem:[%s17 + $0x760] sm:$0xff]
  %v5267 = vld [vmem:[%s17 + $0x768] sm:$0xff]
  %v5268 = vld [vmem:[%s17 + $0x770] sm:$0xff]
  %v5269 = vld [vmem:[%s17 + $0x778] sm:$0xff]
  %v5270 = vld [vmem:[%s17 + $0x780] sm:$0xff]
  %v5271 = vld [vmem:[%s17 + $0x788] sm:$0xff]
  %v5272 = vld [vmem:[%s17 + $0x790] sm:$0xff]
  %v5273 = vld [vmem:[%s17 + $0x798] sm:$0xff]
  %v5274 = vld [vmem:[%s17 + $0x7a0] sm:$0xff]
  %v5275 = vld [vmem:[%s17 + $0x7a8] sm:$0xff]
  %v5276 = vld [vmem:[%s17 + $0x7b0] sm:$0xff]
  %v5277 = vld [vmem:[%s17 + $0x7b8] sm:$0xff]
  %v5278 = vld [vmem:[%s17 + $0x7c0] sm:$0xff]
  %v5279 = vld [vmem:[%s17 + $0x7c8] sm:$0xff]
  %v5280 = vld [vmem:[%s17 + $0x7d0] sm:$0xff]
  %v5281 = vld [vmem:[%s17 + $0x7d8] sm:$0xff]
  %v5282 = vld [vmem:[%s17 + $0x7e0] sm:$0xff]
  %v5283 = vld [vmem:[%s17 + $0x7e8] sm:$0xff]
  %v5284 = vld [vmem:[%s17 + $0x7f0] sm:$0xff]
  %v5285 = vld [vmem:[%s17 + $0x7f8] sm:$0xff]
  %v5286 = vld [vmem:[%s17 + $0x800] sm:$0xff]
  %v5287 = vld [vmem:[%s17 + $0x808] sm:$0xff]
  %v5288 = vld [vmem:[%s17 + $0x810] sm:$0xff]
  %v5289 = vld [vmem:[%s17 + $0x818] sm:$0xff]
  %v5290 = vld [vmem:[%s17 + $0x820] sm:$0xff]
  %v5291 = vld [vmem:[%s17 + $0x828] sm:$0xff]
  %v5292 = vld [vmem:[%s17 + $0x830] sm:$0xff]
  %v5293 = vld [vmem:[%s17 + $0x838] sm:$0xff]
  %v5294 = vld [vmem:[%s17 + $0x840] sm:$0xff]
  %v5295 = vld [vmem:[%s17 + $0x848] sm:$0xff]
  %v5296 = vld [vmem:[%s17 + $0x850] sm:$0xff]
  %v5297 = vld [vmem:[%s17 + $0x858] sm:$0xff]
  %v5298 = vld [vmem:[%s17 + $0x860] sm:$0xff]
  %v5299 = vld [vmem:[%s17 + $0x868] sm:$0xff]
  %v5300 = vld [vmem:[%s17 + $0x870] sm:$0xff]
  %v5301 = vld [vmem:[%s17 + $0x878] sm:$0xff]
  %v5302 = vld [vmem:[%s17 + $0x880] sm:$0xff]
  %v5303 = vld [vmem:[%s17 + $0x888] sm:$0xff]
  %v5304 = vld [vmem:[%s17 + $0x890] sm:$0xff]
  %v5305 = vld [vmem:[%s17 + $0x898] sm:$0xff]
  %v5306 = vld [vmem:[%s17 + $0x8a0] sm:$0xff]
  %v5307 = vld [vmem:[%s17 + $0x8a8] sm:$0xff]
  %v5308 = vld [vmem:[%s17 + $0x8b0] sm:$0xff]
  %v5309 = vld [vmem:[%s17 + $0x8b8] sm:$0xff]
  %v5310 = vld [vmem:[%s17 + $0x8c0] sm:$0xff]
  %v5311 = vld [vmem:[%s17 + $0x8c8] sm:$0xff]
  %v5312 = vld [vmem:[%s17 + $0x8d0] sm:$0xff]
  %v5313 = vld [vmem:[%s17 + $0x8d8] sm:$0xff]
  %v5314 = vld [vmem:[%s17 + $0x8e0] sm:$0xff]
  %v5315 = vld [vmem:[%s17 + $0x8e8] sm:$0xff]
  %v5316 = vld [vmem:[%s17 + $0x8f0] sm:$0xff]
  %v5317 = vld [vmem:[%s17 + $0x8f8] sm:$0xff]
  %v5318 = vld [vmem:[%s17 + $0x900] sm:$0xff]
  %v5319 = vld [vmem:[%s17 + $0x908] sm:$0xff]
  %v5320 = vld [vmem:[%s17 + $0x910] sm:$0xff]
  %v5321 = vld [vmem:[%s17 + $0x918] sm:$0xff]
  %v5322 = vld [vmem:[%s17 + $0x920] sm:$0xff]
  %v5323 = vld [vmem:[%s17 + $0x928] sm:$0xff]
  %v5324 = vld [vmem:[%s17 + $0x930] sm:$0xff]
  %v5325 = vld [vmem:[%s17 + $0x938] sm:$0xff]
  %v5326 = vld [vmem:[%s17 + $0x940] sm:$0x33]
  %v5327 = vld [vmem:[%s17 + $0x948] sm:$0x33]
  %v5328 = vld [vmem:[%s17 + $0x950] sm:$0x33]
  %v5329 = vld [vmem:[%s17 + $0x958] sm:$0x33]
  %v5330 = vld [vmem:[%s17 + $0x960] sm:$0x33]
  %v5331 = vld [vmem:[%s17 + $0x968] sm:$0x33]
  %v5332 = vld [vmem:[%s17 + $0x970] sm:$0x33]
  %v5333 = vld [vmem:[%s17 + $0x978] sm:$0x33]
  %v5334 = vld [vmem:[%s18] sm:$0xff]
  %v5335 = vld [vmem:[%s18 + $0x8] sm:$0xff]
  %v5338 = vlaneseq
  %v5339 = vshrl.u32 %v5338, 7
  %v5340 = vsub.s32 0, %v5339
  %v5341 = vrot.slane %v5334, %v5340
  %v5342 = vlaneseq
  %v5343 = vshrl.u32 %v5342, 7
  %v5344 = vsub.s32 1, %v5343
  %v5345 = vrot.slane %v5334, %v5344
  %v5346 = vlaneseq
  %v5347 = vshrl.u32 %v5346, 7
  %v5348 = vsub.s32 2, %v5347
  %v5349 = vrot.slane %v5334, %v5348
  %v5350 = vlaneseq
  %v5351 = vshrl.u32 %v5350, 7
  %v5352 = vsub.s32 3, %v5351
  %v5353 = vrot.slane %v5334, %v5352
  %v5354 = vlaneseq
  %v5355 = vshrl.u32 %v5354, 7
  %v5356 = vsub.s32 4, %v5355
  %v5357 = vrot.slane %v5334, %v5356
  %v5358 = vlaneseq
  %v5359 = vshrl.u32 %v5358, 7
  %v5360 = vsub.s32 5, %v5359
  %v5361 = vrot.slane %v5334, %v5360
  %v5362 = vlaneseq
  %v5363 = vshrl.u32 %v5362, 7
  %v5364 = vsub.s32 6, %v5363
  %v5365 = vrot.slane %v5334, %v5364
  %v5366 = vlaneseq
  %v5367 = vshrl.u32 %v5366, 7
  %v5368 = vsub.s32 7, %v5367
  %v5369 = vrot.slane %v5334, %v5368
  %v5370 = vlaneseq
  %v5371 = vshrl.u32 %v5370, 7
  %v5372 = vsub.s32 0, %v5371
  %v5373 = vrot.slane %v5335, %v5372
  %v5374 = vlaneseq
  %v5375 = vshrl.u32 %v5374, 7
  %v5376 = vsub.s32 1, %v5375
  %v5377 = vrot.slane %v5335, %v5376
  %v5378 = vlaneseq
  %v5379 = vshrl.u32 %v5378, 7
  %v5380 = vsub.s32 2, %v5379
  %v5381 = vrot.slane %v5335, %v5380
  %v5382 = vlaneseq
  %v5383 = vshrl.u32 %v5382, 7
  %v5384 = vsub.s32 3, %v5383
  %v5385 = vrot.slane %v5335, %v5384
  %v5386 = vlaneseq
  %v5387 = vshrl.u32 %v5386, 7
  %v5388 = vsub.s32 4, %v5387
  %v5389 = vrot.slane %v5335, %v5388
  %v5390 = vlaneseq
  %v5391 = vshrl.u32 %v5390, 7
  %v5392 = vsub.s32 5, %v5391
  %v5393 = vrot.slane %v5335, %v5392
  %v5394 = vlaneseq
  %v5395 = vshrl.u32 %v5394, 7
  %v5396 = vsub.s32 6, %v5395
  %v5397 = vrot.slane %v5335, %v5396
  %v5398 = vlaneseq
  %v5399 = vshrl.u32 %v5398, 7
  %v5400 = vsub.s32 7, %v5399
  %v5401 = vrot.slane %v5335, %v5400
  %v5722 = vunpack.c.l.b16 %v5030
  %v5723 = vunpack.c.h.b16 %v5030
  %v5724 = vunpack.c.l.b16 %v5031
  %v5725 = vunpack.c.h.b16 %v5031
  %v5726 = vunpack.c.l.b16 %v5032
  %v5727 = vunpack.c.h.b16 %v5032
  %v5728 = vunpack.c.l.b16 %v5033
  %v5729 = vunpack.c.h.b16 %v5033
  %v5730 = vunpack.c.l.b16 %v5034
  %v5731 = vunpack.c.h.b16 %v5034
  %v5732 = vunpack.c.l.b16 %v5035
  %v5733 = vunpack.c.h.b16 %v5035
  %v5734 = vunpack.c.l.b16 %v5036
  %v5735 = vunpack.c.h.b16 %v5036
  %v5736 = vunpack.c.l.b16 %v5037
  %v5737 = vunpack.c.h.b16 %v5037
  %v5738 = vunpack.c.l.b16 %v5038
  %v5739 = vunpack.c.h.b16 %v5038
  %v5740 = vunpack.c.l.b16 %v5039
  %v5741 = vunpack.c.h.b16 %v5039
  %v5742 = vunpack.c.l.b16 %v5040
  %v5743 = vunpack.c.h.b16 %v5040
  %v5744 = vunpack.c.l.b16 %v5041
  %v5745 = vunpack.c.h.b16 %v5041
  %v5746 = vunpack.c.l.b16 %v5042
  %v5747 = vunpack.c.h.b16 %v5042
  %v5748 = vunpack.c.l.b16 %v5043
  %v5749 = vunpack.c.h.b16 %v5043
  %v5750 = vunpack.c.l.b16 %v5044
  %v5751 = vunpack.c.h.b16 %v5044
  %v5752 = vunpack.c.l.b16 %v5045
  %v5753 = vunpack.c.h.b16 %v5045
  %v5754 = vunpack.c.l.b16 %v5046
  %v5755 = vunpack.c.h.b16 %v5046
  %v5756 = vunpack.c.l.b16 %v5047
  %v5757 = vunpack.c.h.b16 %v5047
  %v5758 = vunpack.c.l.b16 %v5048
  %v5759 = vunpack.c.h.b16 %v5048
  %v5760 = vunpack.c.l.b16 %v5049
  %v5761 = vunpack.c.h.b16 %v5049
  %v5762 = vunpack.c.l.b16 %v5050
  %v5763 = vunpack.c.h.b16 %v5050
  %v5764 = vunpack.c.l.b16 %v5051
  %v5765 = vunpack.c.h.b16 %v5051
  %v5766 = vunpack.c.l.b16 %v5052
  %v5767 = vunpack.c.h.b16 %v5052
  %v5768 = vunpack.c.l.b16 %v5053
  %v5769 = vunpack.c.h.b16 %v5053
  %v5770 = vunpack.c.l.b16 %v5054
  %v5771 = vunpack.c.h.b16 %v5054
  %v5772 = vunpack.c.l.b16 %v5055
  %v5773 = vunpack.c.h.b16 %v5055
  %v5774 = vunpack.c.l.b16 %v5056
  %v5775 = vunpack.c.h.b16 %v5056
  %v5776 = vunpack.c.l.b16 %v5057
  %v5777 = vunpack.c.h.b16 %v5057
  %v5778 = vunpack.c.l.b16 %v5058
  %v5779 = vunpack.c.h.b16 %v5058
  %v5780 = vunpack.c.l.b16 %v5059
  %v5781 = vunpack.c.h.b16 %v5059
  %v5782 = vunpack.c.l.b16 %v5060
  %v5783 = vunpack.c.h.b16 %v5060
  %v5784 = vunpack.c.l.b16 %v5061
  %v5785 = vunpack.c.h.b16 %v5061
  %v5786 = vunpack.c.l.b16 %v5062
  %v5787 = vunpack.c.h.b16 %v5062
  %v5788 = vunpack.c.l.b16 %v5063
  %v5789 = vunpack.c.h.b16 %v5063
  %v5790 = vunpack.c.l.b16 %v5064
  %v5791 = vunpack.c.h.b16 %v5064
  %v5792 = vunpack.c.l.b16 %v5065
  %v5793 = vunpack.c.h.b16 %v5065
  %v5794 = vunpack.c.l.b16 %v5066
  %v5795 = vunpack.c.h.b16 %v5066
  %v5796 = vunpack.c.l.b16 %v5067
  %v5797 = vunpack.c.h.b16 %v5067
  %v5798 = vunpack.c.l.b16 %v5068
  %v5799 = vunpack.c.h.b16 %v5068
  %v5800 = vunpack.c.l.b16 %v5069
  %v5801 = vunpack.c.h.b16 %v5069
  %v5802 = vunpack.c.l.b16 %v5070
  %v5803 = vunpack.c.h.b16 %v5070
  %v5804 = vunpack.c.l.b16 %v5071
  %v5805 = vunpack.c.h.b16 %v5071
  %v5806 = vunpack.c.l.b16 %v5072
  %v5807 = vunpack.c.h.b16 %v5072
  %v5808 = vunpack.c.l.b16 %v5073
  %v5809 = vunpack.c.h.b16 %v5073
  %v5810 = vunpack.c.l.b16 %v5074
  %v5811 = vunpack.c.h.b16 %v5074
  %v5812 = vunpack.c.l.b16 %v5075
  %v5813 = vunpack.c.h.b16 %v5075
  %v5814 = vunpack.c.l.b16 %v5076
  %v5815 = vunpack.c.h.b16 %v5076
  %v5816 = vunpack.c.l.b16 %v5077
  %v5817 = vunpack.c.h.b16 %v5077
  %v5818 = vunpack.c.l.b16 %v5078
  %v5819 = vunpack.c.h.b16 %v5078
  %v5820 = vunpack.c.l.b16 %v5079
  %v5821 = vunpack.c.h.b16 %v5079
  %v5822 = vunpack.c.l.b16 %v5080
  %v5823 = vunpack.c.h.b16 %v5080
  %v5824 = vunpack.c.l.b16 %v5081
  %v5825 = vunpack.c.h.b16 %v5081
  %v5826 = vunpack.c.l.b16 %v5082
  %v5827 = vunpack.c.h.b16 %v5082
  %v5828 = vunpack.c.l.b16 %v5083
  %v5829 = vunpack.c.h.b16 %v5083
  %v5830 = vunpack.c.l.b16 %v5084
  %v5831 = vunpack.c.h.b16 %v5084
  %v5832 = vunpack.c.l.b16 %v5085
  %v5833 = vunpack.c.h.b16 %v5085
  %v5834 = vunpack.c.l.b16 %v5086
  %v5835 = vunpack.c.h.b16 %v5086
  %v5836 = vunpack.c.l.b16 %v5087
  %v5837 = vunpack.c.h.b16 %v5087
  %v5838 = vunpack.c.l.b16 %v5088
  %v5839 = vunpack.c.h.b16 %v5088
  %v5840 = vunpack.c.l.b16 %v5089
  %v5841 = vunpack.c.h.b16 %v5089
  %v5842 = vunpack.c.l.b16 %v5090
  %v5843 = vunpack.c.h.b16 %v5090
  %v5844 = vunpack.c.l.b16 %v5091
  %v5845 = vunpack.c.h.b16 %v5091
  %v5846 = vunpack.c.l.b16 %v5092
  %v5847 = vunpack.c.h.b16 %v5092
  %v5848 = vunpack.c.l.b16 %v5093
  %v5849 = vunpack.c.h.b16 %v5093
  %v5850 = vunpack.c.l.b16 %v5094
  %v5851 = vunpack.c.h.b16 %v5094
  %v5852 = vunpack.c.l.b16 %v5095
  %v5853 = vunpack.c.h.b16 %v5095
  %v5854 = vunpack.c.l.b16 %v5096
  %v5855 = vunpack.c.h.b16 %v5096
  %v5856 = vunpack.c.l.b16 %v5097
  %v5857 = vunpack.c.h.b16 %v5097
  %v5858 = vunpack.c.l.b16 %v5098
  %v5859 = vunpack.c.h.b16 %v5098
  %v5860 = vunpack.c.l.b16 %v5099
  %v5861 = vunpack.c.h.b16 %v5099
  %v5862 = vunpack.c.l.b16 %v5100
  %v5863 = vunpack.c.h.b16 %v5100
  %v5864 = vunpack.c.l.b16 %v5101
  %v5865 = vunpack.c.h.b16 %v5101
  %v5866 = vunpack.c.l.b16 %v5102
  %v5867 = vunpack.c.h.b16 %v5102
  %v5868 = vunpack.c.l.b16 %v5103
  %v5869 = vunpack.c.h.b16 %v5103
  %v5870 = vunpack.c.l.b16 %v5104
  %v5871 = vunpack.c.h.b16 %v5104
  %v5872 = vunpack.c.l.b16 %v5105
  %v5873 = vunpack.c.h.b16 %v5105
  %v5874 = vunpack.c.l.b16 %v5106
  %v5875 = vunpack.c.h.b16 %v5106
  %v5876 = vunpack.c.l.b16 %v5107
  %v5877 = vunpack.c.h.b16 %v5107
  %v5878 = vunpack.c.l.b16 %v5108
  %v5879 = vunpack.c.h.b16 %v5108
  %v5880 = vunpack.c.l.b16 %v5109
  %v5881 = vunpack.c.h.b16 %v5109
  %v5882 = vunpack.c.l.b16 %v5110
  %v5883 = vunpack.c.h.b16 %v5110
  %v5884 = vunpack.c.l.b16 %v5111
  %v5885 = vunpack.c.h.b16 %v5111
  %v5886 = vunpack.c.l.b16 %v5112
  %v5887 = vunpack.c.h.b16 %v5112
  %v5888 = vunpack.c.l.b16 %v5113
  %v5889 = vunpack.c.h.b16 %v5113
  %v5890 = vunpack.c.l.b16 %v5114
  %v5891 = vunpack.c.h.b16 %v5114
  %v5892 = vunpack.c.l.b16 %v5115
  %v5893 = vunpack.c.h.b16 %v5115
  %v5894 = vunpack.c.l.b16 %v5116
  %v5895 = vunpack.c.h.b16 %v5116
  %v5896 = vunpack.c.l.b16 %v5117
  %v5897 = vunpack.c.h.b16 %v5117
  %v5898 = vunpack.c.l.b16 %v5118
  %v5899 = vunpack.c.h.b16 %v5118
  %v5900 = vunpack.c.l.b16 %v5119
  %v5901 = vunpack.c.h.b16 %v5119
  %v5902 = vunpack.c.l.b16 %v5120
  %v5903 = vunpack.c.h.b16 %v5120
  %v5904 = vunpack.c.l.b16 %v5121
  %v5905 = vunpack.c.h.b16 %v5121
  %v5906 = vunpack.c.l.b16 %v5122
  %v5907 = vunpack.c.h.b16 %v5122
  %v5908 = vunpack.c.l.b16 %v5123
  %v5909 = vunpack.c.h.b16 %v5123
  %v5910 = vunpack.c.l.b16 %v5124
  %v5911 = vunpack.c.h.b16 %v5124
  %v5912 = vunpack.c.l.b16 %v5125
  %v5913 = vunpack.c.h.b16 %v5125
  %v5914 = vunpack.c.l.b16 %v5126
  %v5915 = vunpack.c.h.b16 %v5126
  %v5916 = vunpack.c.l.b16 %v5127
  %v5917 = vunpack.c.h.b16 %v5127
  %v5918 = vunpack.c.l.b16 %v5128
  %v5919 = vunpack.c.h.b16 %v5128
  %v5920 = vunpack.c.l.b16 %v5129
  %v5921 = vunpack.c.h.b16 %v5129
  %v5922 = vunpack.c.l.b16 %v5130
  %v5923 = vunpack.c.h.b16 %v5130
  %v5924 = vunpack.c.l.b16 %v5131
  %v5925 = vunpack.c.h.b16 %v5131
  %v5926 = vunpack.c.l.b16 %v5132
  %v5927 = vunpack.c.h.b16 %v5132
  %v5928 = vunpack.c.l.b16 %v5133
  %v5929 = vunpack.c.h.b16 %v5133
  %v5930 = vunpack.c.l.b16 %v5134
  %v5931 = vunpack.c.h.b16 %v5134
  %v5932 = vunpack.c.l.b16 %v5135
  %v5933 = vunpack.c.h.b16 %v5135
  %v5934 = vunpack.c.l.b16 %v5136
  %v5935 = vunpack.c.h.b16 %v5136
  %v5936 = vunpack.c.l.b16 %v5137
  %v5937 = vunpack.c.h.b16 %v5137
  %v5938 = vunpack.c.l.b16 %v5138
  %v5939 = vunpack.c.h.b16 %v5138
  %v5940 = vunpack.c.l.b16 %v5139
  %v5941 = vunpack.c.h.b16 %v5139
  %v5942 = vunpack.c.l.b16 %v5140
  %v5943 = vunpack.c.h.b16 %v5140
  %v5944 = vunpack.c.l.b16 %v5141
  %v5945 = vunpack.c.h.b16 %v5141
  %v5946 = vunpack.c.l.b16 %v5142
  %v5947 = vunpack.c.h.b16 %v5142
  %v5948 = vunpack.c.l.b16 %v5143
  %v5949 = vunpack.c.h.b16 %v5143
  %v5950 = vunpack.c.l.b16 %v5144
  %v5951 = vunpack.c.h.b16 %v5144
  %v5952 = vunpack.c.l.b16 %v5145
  %v5953 = vunpack.c.h.b16 %v5145
  %v5954 = vunpack.c.l.b16 %v5146
  %v5955 = vunpack.c.h.b16 %v5146
  %v5956 = vunpack.c.l.b16 %v5147
  %v5957 = vunpack.c.h.b16 %v5147
  %v5958 = vunpack.c.l.b16 %v5148
  %v5959 = vunpack.c.h.b16 %v5148
  %v5960 = vunpack.c.l.b16 %v5149
  %v5961 = vunpack.c.h.b16 %v5149
  %v5962 = vunpack.c.l.b16 %v5150
  %v5963 = vunpack.c.h.b16 %v5150
  %v5964 = vunpack.c.l.b16 %v5151
  %v5965 = vunpack.c.h.b16 %v5151
  %v5966 = vunpack.c.l.b16 %v5152
  %v5967 = vunpack.c.h.b16 %v5152
  %v5968 = vunpack.c.l.b16 %v5153
  %v5969 = vunpack.c.h.b16 %v5153
  %v5970 = vunpack.c.l.b16 %v5154
  %v5971 = vunpack.c.h.b16 %v5154
  %v5972 = vunpack.c.l.b16 %v5155
  %v5973 = vunpack.c.h.b16 %v5155
  %v5974 = vunpack.c.l.b16 %v5156
  %v5975 = vunpack.c.h.b16 %v5156
  %v5976 = vunpack.c.l.b16 %v5157
  %v5977 = vunpack.c.h.b16 %v5157
  %v5978 = vunpack.c.l.b16 %v5158
  %v5979 = vunpack.c.h.b16 %v5158
  %v5980 = vunpack.c.l.b16 %v5159
  %v5981 = vunpack.c.h.b16 %v5159
  %v5982 = vunpack.c.l.b16 %v5160
  %v5983 = vunpack.c.h.b16 %v5160
  %v5984 = vunpack.c.l.b16 %v5161
  %v5985 = vunpack.c.h.b16 %v5161
  %v5986 = vunpack.c.l.b16 %v5162
  %v5987 = vunpack.c.h.b16 %v5162
  %v5988 = vunpack.c.l.b16 %v5163
  %v5989 = vunpack.c.h.b16 %v5163
  %v5990 = vunpack.c.l.b16 %v5164
  %v5991 = vunpack.c.h.b16 %v5164
  %v5992 = vunpack.c.l.b16 %v5165
  %v5993 = vunpack.c.h.b16 %v5165
  %v5994 = vunpack.c.l.b16 %v5166
  %v5995 = vunpack.c.h.b16 %v5166
  %v5996 = vunpack.c.l.b16 %v5167
  %v5997 = vunpack.c.h.b16 %v5167
  %v5998 = vunpack.c.l.b16 %v5168
  %v5999 = vunpack.c.h.b16 %v5168
  %v6000 = vunpack.c.l.b16 %v5169
  %v6001 = vunpack.c.h.b16 %v5169
  %v6002 = vunpack.c.l.b16 %v5170
  %v6003 = vunpack.c.h.b16 %v5170
  %v6004 = vunpack.c.l.b16 %v5171
  %v6005 = vunpack.c.h.b16 %v5171
  %v6006 = vunpack.c.l.b16 %v5172
  %v6007 = vunpack.c.h.b16 %v5172
  %v6008 = vunpack.c.l.b16 %v5173
  %v6009 = vunpack.c.h.b16 %v5173
  %v6010 = vunpack.c.l.b16 %v5174
  %v6011 = vunpack.c.h.b16 %v5174
  %v6012 = vunpack.c.l.b16 %v5175
  %v6013 = vunpack.c.h.b16 %v5175
  %v6014 = vunpack.c.l.b16 %v5176
  %v6015 = vunpack.c.h.b16 %v5176
  %v6016 = vunpack.c.l.b16 %v5177
  %v6017 = vunpack.c.h.b16 %v5177
  %v6018 = vunpack.c.l.b16 %v5178
  %v6019 = vunpack.c.h.b16 %v5178
  %v6020 = vunpack.c.l.b16 %v5179
  %v6021 = vunpack.c.h.b16 %v5179
  %v6022 = vunpack.c.l.b16 %v5180
  %v6023 = vunpack.c.h.b16 %v5180
  %v6024 = vunpack.c.l.b16 %v5181
  %v6025 = vunpack.c.h.b16 %v5181
  %v6026 = vunpack.c.l.b16 %v5182
  %v6027 = vunpack.c.h.b16 %v5182
  %v6028 = vunpack.c.l.b16 %v5183
  %v6029 = vunpack.c.h.b16 %v5183
  %v6030 = vunpack.c.l.b16 %v5184
  %v6031 = vunpack.c.h.b16 %v5184
  %v6032 = vunpack.c.l.b16 %v5185
  %v6033 = vunpack.c.h.b16 %v5185
  %v6034 = vunpack.c.l.b16 %v5186
  %v6035 = vunpack.c.h.b16 %v5186
  %v6036 = vunpack.c.l.b16 %v5187
  %v6037 = vunpack.c.h.b16 %v5187
  %v6038 = vunpack.c.l.b16 %v5188
  %v6039 = vunpack.c.h.b16 %v5188
  %v6040 = vunpack.c.l.b16 %v5189
  %v6041 = vunpack.c.h.b16 %v5189
  %v6042 = vunpack.c.l.b16 %v5190
  %v6043 = vunpack.c.h.b16 %v5190
  %v6044 = vunpack.c.l.b16 %v5191
  %v6045 = vunpack.c.h.b16 %v5191
  %v6046 = vunpack.c.l.b16 %v5192
  %v6047 = vunpack.c.h.b16 %v5192
  %v6048 = vunpack.c.l.b16 %v5193
  %v6049 = vunpack.c.h.b16 %v5193
  %v6050 = vunpack.c.l.b16 %v5194
  %v6051 = vunpack.c.h.b16 %v5194
  %v6052 = vunpack.c.l.b16 %v5195
  %v6053 = vunpack.c.h.b16 %v5195
  %v6054 = vunpack.c.l.b16 %v5196
  %v6055 = vunpack.c.h.b16 %v5196
  %v6056 = vunpack.c.l.b16 %v5197
  %v6057 = vunpack.c.h.b16 %v5197
  %v6058 = vunpack.c.l.b16 %v5198
  %v6059 = vunpack.c.h.b16 %v5198
  %v6060 = vunpack.c.l.b16 %v5199
  %v6061 = vunpack.c.h.b16 %v5199
  %v6062 = vunpack.c.l.b16 %v5200
  %v6063 = vunpack.c.h.b16 %v5200
  %v6064 = vunpack.c.l.b16 %v5201
  %v6065 = vunpack.c.h.b16 %v5201
  %v6066 = vunpack.c.l.b16 %v5202
  %v6067 = vunpack.c.h.b16 %v5202
  %v6068 = vunpack.c.l.b16 %v5203
  %v6069 = vunpack.c.h.b16 %v5203
  %v6070 = vunpack.c.l.b16 %v5204
  %v6071 = vunpack.c.h.b16 %v5204
  %v6072 = vunpack.c.l.b16 %v5205
  %v6073 = vunpack.c.h.b16 %v5205
  %v6074 = vunpack.c.l.b16 %v5206
  %v6075 = vunpack.c.h.b16 %v5206
  %v6076 = vunpack.c.l.b16 %v5207
  %v6077 = vunpack.c.h.b16 %v5207
  %v6078 = vunpack.c.l.b16 %v5208
  %v6079 = vunpack.c.h.b16 %v5208
  %v6080 = vunpack.c.l.b16 %v5209
  %v6081 = vunpack.c.h.b16 %v5209
  %v6082 = vunpack.c.l.b16 %v5210
  %v6083 = vunpack.c.h.b16 %v5210
  %v6084 = vunpack.c.l.b16 %v5211
  %v6085 = vunpack.c.h.b16 %v5211
  %v6086 = vunpack.c.l.b16 %v5212
  %v6087 = vunpack.c.h.b16 %v5212
  %v6088 = vunpack.c.l.b16 %v5213
  %v6089 = vunpack.c.h.b16 %v5213
  %v6090 = vunpack.c.l.b16 %v5214
  %v6091 = vunpack.c.h.b16 %v5214
  %v6092 = vunpack.c.l.b16 %v5215
  %v6093 = vunpack.c.h.b16 %v5215
  %v6094 = vunpack.c.l.b16 %v5216
  %v6095 = vunpack.c.h.b16 %v5216
  %v6096 = vunpack.c.l.b16 %v5217
  %v6097 = vunpack.c.h.b16 %v5217
  %v6098 = vunpack.c.l.b16 %v5218
  %v6099 = vunpack.c.h.b16 %v5218
  %v6100 = vunpack.c.l.b16 %v5219
  %v6101 = vunpack.c.h.b16 %v5219
  %v6102 = vunpack.c.l.b16 %v5220
  %v6103 = vunpack.c.h.b16 %v5220
  %v6104 = vunpack.c.l.b16 %v5221
  %v6105 = vunpack.c.h.b16 %v5221
  %v6106 = vunpack.c.l.b16 %v5222
  %v6107 = vunpack.c.h.b16 %v5222
  %v6108 = vunpack.c.l.b16 %v5223
  %v6109 = vunpack.c.h.b16 %v5223
  %v6110 = vunpack.c.l.b16 %v5224
  %v6111 = vunpack.c.h.b16 %v5224
  %v6112 = vunpack.c.l.b16 %v5225
  %v6113 = vunpack.c.h.b16 %v5225
  %v6114 = vunpack.c.l.b16 %v5226
  %v6115 = vunpack.c.h.b16 %v5226
  %v6116 = vunpack.c.l.b16 %v5227
  %v6117 = vunpack.c.h.b16 %v5227
  %v6118 = vunpack.c.l.b16 %v5228
  %v6119 = vunpack.c.h.b16 %v5228
  %v6120 = vunpack.c.l.b16 %v5229
  %v6121 = vunpack.c.h.b16 %v5229
  %v6122 = vunpack.c.l.b16 %v5230
  %v6123 = vunpack.c.h.b16 %v5230
  %v6124 = vunpack.c.l.b16 %v5231
  %v6125 = vunpack.c.h.b16 %v5231
  %v6126 = vunpack.c.l.b16 %v5232
  %v6127 = vunpack.c.h.b16 %v5232
  %v6128 = vunpack.c.l.b16 %v5233
  %v6129 = vunpack.c.h.b16 %v5233
  %v6130 = vunpack.c.l.b16 %v5234
  %v6131 = vunpack.c.h.b16 %v5234
  %v6132 = vunpack.c.l.b16 %v5235
  %v6133 = vunpack.c.h.b16 %v5235
  %v6134 = vunpack.c.l.b16 %v5236
  %v6135 = vunpack.c.h.b16 %v5236
  %v6136 = vunpack.c.l.b16 %v5237
  %v6137 = vunpack.c.h.b16 %v5237
  %v6138 = vunpack.c.l.b16 %v5238
  %v6139 = vunpack.c.h.b16 %v5238
  %v6140 = vunpack.c.l.b16 %v5239
  %v6141 = vunpack.c.h.b16 %v5239
  %v6142 = vunpack.c.l.b16 %v5240
  %v6143 = vunpack.c.h.b16 %v5240
  %v6144 = vunpack.c.l.b16 %v5241
  %v6145 = vunpack.c.h.b16 %v5241
  %v6146 = vunpack.c.l.b16 %v5242
  %v6147 = vunpack.c.h.b16 %v5242
  %v6148 = vunpack.c.l.b16 %v5243
  %v6149 = vunpack.c.h.b16 %v5243
  %v6150 = vunpack.c.l.b16 %v5244
  %v6151 = vunpack.c.h.b16 %v5244
  %v6152 = vunpack.c.l.b16 %v5245
  %v6153 = vunpack.c.h.b16 %v5245
  %v6154 = vunpack.c.l.b16 %v5246
  %v6155 = vunpack.c.h.b16 %v5246
  %v6156 = vunpack.c.l.b16 %v5247
  %v6157 = vunpack.c.h.b16 %v5247
  %v6158 = vunpack.c.l.b16 %v5248
  %v6159 = vunpack.c.h.b16 %v5248
  %v6160 = vunpack.c.l.b16 %v5249
  %v6161 = vunpack.c.h.b16 %v5249
  %v6162 = vunpack.c.l.b16 %v5250
  %v6163 = vunpack.c.h.b16 %v5250
  %v6164 = vunpack.c.l.b16 %v5251
  %v6165 = vunpack.c.h.b16 %v5251
  %v6166 = vunpack.c.l.b16 %v5252
  %v6167 = vunpack.c.h.b16 %v5252
  %v6168 = vunpack.c.l.b16 %v5253
  %v6169 = vunpack.c.h.b16 %v5253
  %v6170 = vunpack.c.l.b16 %v5254
  %v6171 = vunpack.c.h.b16 %v5254
  %v6172 = vunpack.c.l.b16 %v5255
  %v6173 = vunpack.c.h.b16 %v5255
  %v6174 = vunpack.c.l.b16 %v5256
  %v6175 = vunpack.c.h.b16 %v5256
  %v6176 = vunpack.c.l.b16 %v5257
  %v6177 = vunpack.c.h.b16 %v5257
  %v6178 = vunpack.c.l.b16 %v5258
  %v6179 = vunpack.c.h.b16 %v5258
  %v6180 = vunpack.c.l.b16 %v5259
  %v6181 = vunpack.c.h.b16 %v5259
  %v6182 = vunpack.c.l.b16 %v5260
  %v6183 = vunpack.c.h.b16 %v5260
  %v6184 = vunpack.c.l.b16 %v5261
  %v6185 = vunpack.c.h.b16 %v5261
  %v6186 = vunpack.c.l.b16 %v5262
  %v6187 = vunpack.c.h.b16 %v5262
  %v6188 = vunpack.c.l.b16 %v5263
  %v6189 = vunpack.c.h.b16 %v5263
  %v6190 = vunpack.c.l.b16 %v5264
  %v6191 = vunpack.c.h.b16 %v5264
  %v6192 = vunpack.c.l.b16 %v5265
  %v6193 = vunpack.c.h.b16 %v5265
  %v6194 = vunpack.c.l.b16 %v5266
  %v6195 = vunpack.c.h.b16 %v5266
  %v6196 = vunpack.c.l.b16 %v5267
  %v6197 = vunpack.c.h.b16 %v5267
  %v6198 = vunpack.c.l.b16 %v5268
  %v6199 = vunpack.c.h.b16 %v5268
  %v6200 = vunpack.c.l.b16 %v5269
  %v6201 = vunpack.c.h.b16 %v5269
  %v6202 = vunpack.c.l.b16 %v5270
  %v6203 = vunpack.c.h.b16 %v5270
  %v6204 = vunpack.c.l.b16 %v5271
  %v6205 = vunpack.c.h.b16 %v5271
  %v6206 = vunpack.c.l.b16 %v5272
  %v6207 = vunpack.c.h.b16 %v5272
  %v6208 = vunpack.c.l.b16 %v5273
  %v6209 = vunpack.c.h.b16 %v5273
  %v6210 = vunpack.c.l.b16 %v5274
  %v6211 = vunpack.c.h.b16 %v5274
  %v6212 = vunpack.c.l.b16 %v5275
  %v6213 = vunpack.c.h.b16 %v5275
  %v6214 = vunpack.c.l.b16 %v5276
  %v6215 = vunpack.c.h.b16 %v5276
  %v6216 = vunpack.c.l.b16 %v5277
  %v6217 = vunpack.c.h.b16 %v5277
  %v6218 = vunpack.c.l.b16 %v5278
  %v6219 = vunpack.c.h.b16 %v5278
  %v6220 = vunpack.c.l.b16 %v5279
  %v6221 = vunpack.c.h.b16 %v5279
  %v6222 = vunpack.c.l.b16 %v5280
  %v6223 = vunpack.c.h.b16 %v5280
  %v6224 = vunpack.c.l.b16 %v5281
  %v6225 = vunpack.c.h.b16 %v5281
  %v6226 = vunpack.c.l.b16 %v5282
  %v6227 = vunpack.c.h.b16 %v5282
  %v6228 = vunpack.c.l.b16 %v5283
  %v6229 = vunpack.c.h.b16 %v5283
  %v6230 = vunpack.c.l.b16 %v5284
  %v6231 = vunpack.c.h.b16 %v5284
  %v6232 = vunpack.c.l.b16 %v5285
  %v6233 = vunpack.c.h.b16 %v5285
  %v6234 = vunpack.c.l.b16 %v5286
  %v6235 = vunpack.c.h.b16 %v5286
  %v6236 = vunpack.c.l.b16 %v5287
  %v6237 = vunpack.c.h.b16 %v5287
  %v6238 = vunpack.c.l.b16 %v5288
  %v6239 = vunpack.c.h.b16 %v5288
  %v6240 = vunpack.c.l.b16 %v5289
  %v6241 = vunpack.c.h.b16 %v5289
  %v6242 = vunpack.c.l.b16 %v5290
  %v6243 = vunpack.c.h.b16 %v5290
  %v6244 = vunpack.c.l.b16 %v5291
  %v6245 = vunpack.c.h.b16 %v5291
  %v6246 = vunpack.c.l.b16 %v5292
  %v6247 = vunpack.c.h.b16 %v5292
  %v6248 = vunpack.c.l.b16 %v5293
  %v6249 = vunpack.c.h.b16 %v5293
  %v6250 = vunpack.c.l.b16 %v5294
  %v6251 = vunpack.c.h.b16 %v5294
  %v6252 = vunpack.c.l.b16 %v5295
  %v6253 = vunpack.c.h.b16 %v5295
  %v6254 = vunpack.c.l.b16 %v5296
  %v6255 = vunpack.c.h.b16 %v5296
  %v6256 = vunpack.c.l.b16 %v5297
  %v6257 = vunpack.c.h.b16 %v5297
  %v6258 = vunpack.c.l.b16 %v5298
  %v6259 = vunpack.c.h.b16 %v5298
  %v6260 = vunpack.c.l.b16 %v5299
  %v6261 = vunpack.c.h.b16 %v5299
  %v6262 = vunpack.c.l.b16 %v5300
  %v6263 = vunpack.c.h.b16 %v5300
  %v6264 = vunpack.c.l.b16 %v5301
  %v6265 = vunpack.c.h.b16 %v5301
  %v6266 = vunpack.c.l.b16 %v5302
  %v6267 = vunpack.c.h.b16 %v5302
  %v6268 = vunpack.c.l.b16 %v5303
  %v6269 = vunpack.c.h.b16 %v5303
  %v6270 = vunpack.c.l.b16 %v5304
  %v6271 = vunpack.c.h.b16 %v5304
  %v6272 = vunpack.c.l.b16 %v5305
  %v6273 = vunpack.c.h.b16 %v5305
  %v6274 = vunpack.c.l.b16 %v5306
  %v6275 = vunpack.c.h.b16 %v5306
  %v6276 = vunpack.c.l.b16 %v5307
  %v6277 = vunpack.c.h.b16 %v5307
  %v6278 = vunpack.c.l.b16 %v5308
  %v6279 = vunpack.c.h.b16 %v5308
  %v6280 = vunpack.c.l.b16 %v5309
  %v6281 = vunpack.c.h.b16 %v5309
  %v6282 = vunpack.c.l.b16 %v5310
  %v6283 = vunpack.c.h.b16 %v5310
  %v6284 = vunpack.c.l.b16 %v5311
  %v6285 = vunpack.c.h.b16 %v5311
  %v6286 = vunpack.c.l.b16 %v5312
  %v6287 = vunpack.c.h.b16 %v5312
  %v6288 = vunpack.c.l.b16 %v5313
  %v6289 = vunpack.c.h.b16 %v5313
  %v6290 = vunpack.c.l.b16 %v5314
  %v6291 = vunpack.c.h.b16 %v5314
  %v6292 = vunpack.c.l.b16 %v5315
  %v6293 = vunpack.c.h.b16 %v5315
  %v6294 = vunpack.c.l.b16 %v5316
  %v6295 = vunpack.c.h.b16 %v5316
  %v6296 = vunpack.c.l.b16 %v5317
  %v6297 = vunpack.c.h.b16 %v5317
  %v6298 = vunpack.c.l.b16 %v5318
  %v6299 = vunpack.c.h.b16 %v5318
  %v6300 = vunpack.c.l.b16 %v5319
  %v6301 = vunpack.c.h.b16 %v5319
  %v6302 = vunpack.c.l.b16 %v5320
  %v6303 = vunpack.c.h.b16 %v5320
  %v6304 = vunpack.c.l.b16 %v5321
  %v6305 = vunpack.c.h.b16 %v5321
  %v6306 = vunpack.c.l.b16 %v5322
  %v6307 = vunpack.c.h.b16 %v5322
  %v6308 = vunpack.c.l.b16 %v5323
  %v6309 = vunpack.c.h.b16 %v5323
  %v6310 = vunpack.c.l.b16 %v5324
  %v6311 = vunpack.c.h.b16 %v5324
  %v6312 = vunpack.c.l.b16 %v5325
  %v6313 = vunpack.c.h.b16 %v5325
  %v6314 = vunpack.c.l.b16 %v5326
  %v6315 = vunpack.c.h.b16 %v5326
  %v6316 = vunpack.c.l.b16 %v5327
  %v6317 = vunpack.c.h.b16 %v5327
  %v6318 = vunpack.c.l.b16 %v5328
  %v6319 = vunpack.c.h.b16 %v5328
  %v6320 = vunpack.c.l.b16 %v5329
  %v6321 = vunpack.c.h.b16 %v5329
  %v6322 = vunpack.c.l.b16 %v5330
  %v6323 = vunpack.c.h.b16 %v5330
  %v6324 = vunpack.c.l.b16 %v5331
  %v6325 = vunpack.c.h.b16 %v5331
  %v6326 = vunpack.c.l.b16 %v5332
  %v6327 = vunpack.c.h.b16 %v5332
  %v6328 = vunpack.c.l.b16 %v5333
  %v6329 = vunpack.c.h.b16 %v5333
  %v6330 = vpack.c.b16 %v5738, %v5722
  %v6331 = vpack.c.b16 %v5739, %v5723
  %v6332 = vpack.c.b16 %v5740, %v5724
  %v6333 = vpack.c.b16 %v5741, %v5725
  %v6334 = vpack.c.b16 %v5742, %v5726
  %v6335 = vpack.c.b16 %v5743, %v5727
  %v6336 = vpack.c.b16 %v5744, %v5728
  %v6337 = vpack.c.b16 %v5745, %v5729
  %v6338 = vpack.c.b16 %v5746, %v5730
  %v6339 = vpack.c.b16 %v5747, %v5731
  %v6340 = vpack.c.b16 %v5748, %v5732
  %v6341 = vpack.c.b16 %v5749, %v5733
  %v6342 = vpack.c.b16 %v5750, %v5734
  %v6343 = vpack.c.b16 %v5751, %v5735
  %v6344 = vpack.c.b16 %v5752, %v5736
  %v6345 = vpack.c.b16 %v5753, %v5737
  %v6346 = vpack.c.b16 %v5770, %v5754
  %v6347 = vpack.c.b16 %v5771, %v5755
  %v6348 = vpack.c.b16 %v5772, %v5756
  %v6349 = vpack.c.b16 %v5773, %v5757
  %v6350 = vpack.c.b16 %v5774, %v5758
  %v6351 = vpack.c.b16 %v5775, %v5759
  %v6352 = vpack.c.b16 %v5776, %v5760
  %v6353 = vpack.c.b16 %v5777, %v5761
  %v6354 = vpack.c.b16 %v5778, %v5762
  %v6355 = vpack.c.b16 %v5779, %v5763
  %v6356 = vpack.c.b16 %v5780, %v5764
  %v6357 = vpack.c.b16 %v5781, %v5765
  %v6358 = vpack.c.b16 %v5782, %v5766
  %v6359 = vpack.c.b16 %v5783, %v5767
  %v6360 = vpack.c.b16 %v5784, %v5768
  %v6361 = vpack.c.b16 %v5785, %v5769
  %v6362 = vpack.c.b16 %v5802, %v5786
  %v6363 = vpack.c.b16 %v5803, %v5787
  %v6364 = vpack.c.b16 %v5804, %v5788
  %v6365 = vpack.c.b16 %v5805, %v5789
  %v6366 = vpack.c.b16 %v5806, %v5790
  %v6367 = vpack.c.b16 %v5807, %v5791
  %v6368 = vpack.c.b16 %v5808, %v5792
  %v6369 = vpack.c.b16 %v5809, %v5793
  %v6370 = vpack.c.b16 %v5810, %v5794
  %v6371 = vpack.c.b16 %v5811, %v5795
  %v6372 = vpack.c.b16 %v5812, %v5796
  %v6373 = vpack.c.b16 %v5813, %v5797
  %v6374 = vpack.c.b16 %v5814, %v5798
  %v6375 = vpack.c.b16 %v5815, %v5799
  %v6376 = vpack.c.b16 %v5816, %v5800
  %v6377 = vpack.c.b16 %v5817, %v5801
  %v6378 = vpack.c.b16 %v5834, %v5818
  %v6379 = vpack.c.b16 %v5835, %v5819
  %v6380 = vpack.c.b16 %v5836, %v5820
  %v6381 = vpack.c.b16 %v5837, %v5821
  %v6382 = vpack.c.b16 %v5838, %v5822
  %v6383 = vpack.c.b16 %v5839, %v5823
  %v6384 = vpack.c.b16 %v5840, %v5824
  %v6385 = vpack.c.b16 %v5841, %v5825
  %v6386 = vpack.c.b16 %v5842, %v5826
  %v6387 = vpack.c.b16 %v5843, %v5827
  %v6388 = vpack.c.b16 %v5844, %v5828
  %v6389 = vpack.c.b16 %v5845, %v5829
  %v6390 = vpack.c.b16 %v5846, %v5830
  %v6391 = vpack.c.b16 %v5847, %v5831
  %v6392 = vpack.c.b16 %v5848, %v5832
  %v6393 = vpack.c.b16 %v5849, %v5833
  %v6394 = vpack.c.b16 %v5866, %v5850
  %v6395 = vpack.c.b16 %v5867, %v5851
  %v6396 = vpack.c.b16 %v5868, %v5852
  %v6397 = vpack.c.b16 %v5869, %v5853
  %v6398 = vpack.c.b16 %v5870, %v5854
  %v6399 = vpack.c.b16 %v5871, %v5855
  %v6400 = vpack.c.b16 %v5872, %v5856
  %v6401 = vpack.c.b16 %v5873, %v5857
  %v6402 = vpack.c.b16 %v5874, %v5858
  %v6403 = vpack.c.b16 %v5875, %v5859
  %v6404 = vpack.c.b16 %v5876, %v5860
  %v6405 = vpack.c.b16 %v5877, %v5861
  %v6406 = vpack.c.b16 %v5878, %v5862
  %v6407 = vpack.c.b16 %v5879, %v5863
  %v6408 = vpack.c.b16 %v5880, %v5864
  %v6409 = vpack.c.b16 %v5881, %v5865
  %v6410 = vpack.c.b16 %v5898, %v5882
  %v6411 = vpack.c.b16 %v5899, %v5883
  %v6412 = vpack.c.b16 %v5900, %v5884
  %v6413 = vpack.c.b16 %v5901, %v5885
  %v6414 = vpack.c.b16 %v5902, %v5886
  %v6415 = vpack.c.b16 %v5903, %v5887
  %v6416 = vpack.c.b16 %v5904, %v5888
  %v6417 = vpack.c.b16 %v5905, %v5889
  %v6418 = vpack.c.b16 %v5906, %v5890
  %v6419 = vpack.c.b16 %v5907, %v5891
  %v6420 = vpack.c.b16 %v5908, %v5892
  %v6421 = vpack.c.b16 %v5909, %v5893
  %v6422 = vpack.c.b16 %v5910, %v5894
  %v6423 = vpack.c.b16 %v5911, %v5895
  %v6424 = vpack.c.b16 %v5912, %v5896
  %v6425 = vpack.c.b16 %v5913, %v5897
  %v6426 = vpack.c.b16 %v5930, %v5914
  %v6427 = vpack.c.b16 %v5931, %v5915
  %v6428 = vpack.c.b16 %v5932, %v5916
  %v6429 = vpack.c.b16 %v5933, %v5917
  %v6430 = vpack.c.b16 %v5934, %v5918
  %v6431 = vpack.c.b16 %v5935, %v5919
  %v6432 = vpack.c.b16 %v5936, %v5920
  %v6433 = vpack.c.b16 %v5937, %v5921
  %v6434 = vpack.c.b16 %v5938, %v5922
  %v6435 = vpack.c.b16 %v5939, %v5923
  %v6436 = vpack.c.b16 %v5940, %v5924
  %v6437 = vpack.c.b16 %v5941, %v5925
  %v6438 = vpack.c.b16 %v5942, %v5926
  %v6439 = vpack.c.b16 %v5943, %v5927
  %v6440 = vpack.c.b16 %v5944, %v5928
  %v6441 = vpack.c.b16 %v5945, %v5929
  %v6442 = vpack.c.b16 %v5962, %v5946
  %v6443 = vpack.c.b16 %v5963, %v5947
  %v6444 = vpack.c.b16 %v5964, %v5948
  %v6445 = vpack.c.b16 %v5965, %v5949
  %v6446 = vpack.c.b16 %v5966, %v5950
  %v6447 = vpack.c.b16 %v5967, %v5951
  %v6448 = vpack.c.b16 %v5968, %v5952
  %v6449 = vpack.c.b16 %v5969, %v5953
  %v6450 = vpack.c.b16 %v5970, %v5954
  %v6451 = vpack.c.b16 %v5971, %v5955
  %v6452 = vpack.c.b16 %v5972, %v5956
  %v6453 = vpack.c.b16 %v5973, %v5957
  %v6454 = vpack.c.b16 %v5974, %v5958
  %v6455 = vpack.c.b16 %v5975, %v5959
  %v6456 = vpack.c.b16 %v5976, %v5960
  %v6457 = vpack.c.b16 %v5977, %v5961
  %v6458 = vpack.c.b16 %v5994, %v5978
  %v6459 = vpack.c.b16 %v5995, %v5979
  %v6460 = vpack.c.b16 %v5996, %v5980
  %v6461 = vpack.c.b16 %v5997, %v5981
  %v6462 = vpack.c.b16 %v5998, %v5982
  %v6463 = vpack.c.b16 %v5999, %v5983
  %v6464 = vpack.c.b16 %v6000, %v5984
  %v6465 = vpack.c.b16 %v6001, %v5985
  %v6466 = vpack.c.b16 %v6002, %v5986
  %v6467 = vpack.c.b16 %v6003, %v5987
  %v6468 = vpack.c.b16 %v6004, %v5988
  %v6469 = vpack.c.b16 %v6005, %v5989
  %v6470 = vpack.c.b16 %v6006, %v5990
  %v6471 = vpack.c.b16 %v6007, %v5991
  %v6472 = vpack.c.b16 %v6008, %v5992
  %v6473 = vpack.c.b16 %v6009, %v5993
  %v6474 = vpack.c.b16 %v6026, %v6010
  %v6475 = vpack.c.b16 %v6027, %v6011
  %v6476 = vpack.c.b16 %v6028, %v6012
  %v6477 = vpack.c.b16 %v6029, %v6013
  %v6478 = vpack.c.b16 %v6030, %v6014
  %v6479 = vpack.c.b16 %v6031, %v6015
  %v6480 = vpack.c.b16 %v6032, %v6016
  %v6481 = vpack.c.b16 %v6033, %v6017
  %v6482 = vpack.c.b16 %v6034, %v6018
  %v6483 = vpack.c.b16 %v6035, %v6019
  %v6484 = vpack.c.b16 %v6036, %v6020
  %v6485 = vpack.c.b16 %v6037, %v6021
  %v6486 = vpack.c.b16 %v6038, %v6022
  %v6487 = vpack.c.b16 %v6039, %v6023
  %v6488 = vpack.c.b16 %v6040, %v6024
  %v6489 = vpack.c.b16 %v6041, %v6025
  %v6490 = vpack.c.b16 %v6058, %v6042
  %v6491 = vpack.c.b16 %v6059, %v6043
  %v6492 = vpack.c.b16 %v6060, %v6044
  %v6493 = vpack.c.b16 %v6061, %v6045
  %v6494 = vpack.c.b16 %v6062, %v6046
  %v6495 = vpack.c.b16 %v6063, %v6047
  %v6496 = vpack.c.b16 %v6064, %v6048
  %v6497 = vpack.c.b16 %v6065, %v6049
  %v6498 = vpack.c.b16 %v6066, %v6050
  %v6499 = vpack.c.b16 %v6067, %v6051
  %v6500 = vpack.c.b16 %v6068, %v6052
  %v6501 = vpack.c.b16 %v6069, %v6053
  %v6502 = vpack.c.b16 %v6070, %v6054
  %v6503 = vpack.c.b16 %v6071, %v6055
  %v6504 = vpack.c.b16 %v6072, %v6056
  %v6505 = vpack.c.b16 %v6073, %v6057
  %v6506 = vpack.c.b16 %v6090, %v6074
  %v6507 = vpack.c.b16 %v6091, %v6075
  %v6508 = vpack.c.b16 %v6092, %v6076
  %v6509 = vpack.c.b16 %v6093, %v6077
  %v6510 = vpack.c.b16 %v6094, %v6078
  %v6511 = vpack.c.b16 %v6095, %v6079
  %v6512 = vpack.c.b16 %v6096, %v6080
  %v6513 = vpack.c.b16 %v6097, %v6081
  %v6514 = vpack.c.b16 %v6098, %v6082
  %v6515 = vpack.c.b16 %v6099, %v6083
  %v6516 = vpack.c.b16 %v6100, %v6084
  %v6517 = vpack.c.b16 %v6101, %v6085
  %v6518 = vpack.c.b16 %v6102, %v6086
  %v6519 = vpack.c.b16 %v6103, %v6087
  %v6520 = vpack.c.b16 %v6104, %v6088
  %v6521 = vpack.c.b16 %v6105, %v6089
  %v6522 = vpack.c.b16 %v6122, %v6106
  %v6523 = vpack.c.b16 %v6123, %v6107
  %v6524 = vpack.c.b16 %v6124, %v6108
  %v6525 = vpack.c.b16 %v6125, %v6109
  %v6526 = vpack.c.b16 %v6126, %v6110
  %v6527 = vpack.c.b16 %v6127, %v6111
  %v6528 = vpack.c.b16 %v6128, %v6112
  %v6529 = vpack.c.b16 %v6129, %v6113
  %v6530 = vpack.c.b16 %v6130, %v6114
  %v6531 = vpack.c.b16 %v6131, %v6115
  %v6532 = vpack.c.b16 %v6132, %v6116
  %v6533 = vpack.c.b16 %v6133, %v6117
  %v6534 = vpack.c.b16 %v6134, %v6118
  %v6535 = vpack.c.b16 %v6135, %v6119
  %v6536 = vpack.c.b16 %v6136, %v6120
  %v6537 = vpack.c.b16 %v6137, %v6121
  %v6538 = vpack.c.b16 %v6154, %v6138
  %v6539 = vpack.c.b16 %v6155, %v6139
  %v6540 = vpack.c.b16 %v6156, %v6140
  %v6541 = vpack.c.b16 %v6157, %v6141
  %v6542 = vpack.c.b16 %v6158, %v6142
  %v6543 = vpack.c.b16 %v6159, %v6143
  %v6544 = vpack.c.b16 %v6160, %v6144
  %v6545 = vpack.c.b16 %v6161, %v6145
  %v6546 = vpack.c.b16 %v6162, %v6146
  %v6547 = vpack.c.b16 %v6163, %v6147
  %v6548 = vpack.c.b16 %v6164, %v6148
  %v6549 = vpack.c.b16 %v6165, %v6149
  %v6550 = vpack.c.b16 %v6166, %v6150
  %v6551 = vpack.c.b16 %v6167, %v6151
  %v6552 = vpack.c.b16 %v6168, %v6152
  %v6553 = vpack.c.b16 %v6169, %v6153
  %v6554 = vpack.c.b16 %v6186, %v6170
  %v6555 = vpack.c.b16 %v6187, %v6171
  %v6556 = vpack.c.b16 %v6188, %v6172
  %v6557 = vpack.c.b16 %v6189, %v6173
  %v6558 = vpack.c.b16 %v6190, %v6174
  %v6559 = vpack.c.b16 %v6191, %v6175
  %v6560 = vpack.c.b16 %v6192, %v6176
  %v6561 = vpack.c.b16 %v6193, %v6177
  %v6562 = vpack.c.b16 %v6194, %v6178
  %v6563 = vpack.c.b16 %v6195, %v6179
  %v6564 = vpack.c.b16 %v6196, %v6180
  %v6565 = vpack.c.b16 %v6197, %v6181
  %v6566 = vpack.c.b16 %v6198, %v6182
  %v6567 = vpack.c.b16 %v6199, %v6183
  %v6568 = vpack.c.b16 %v6200, %v6184
  %v6569 = vpack.c.b16 %v6201, %v6185
  %v6570 = vpack.c.b16 %v6218, %v6202
  %v6571 = vpack.c.b16 %v6219, %v6203
  %v6572 = vpack.c.b16 %v6220, %v6204
  %v6573 = vpack.c.b16 %v6221, %v6205
  %v6574 = vpack.c.b16 %v6222, %v6206
  %v6575 = vpack.c.b16 %v6223, %v6207
  %v6576 = vpack.c.b16 %v6224, %v6208
  %v6577 = vpack.c.b16 %v6225, %v6209
  %v6578 = vpack.c.b16 %v6226, %v6210
  %v6579 = vpack.c.b16 %v6227, %v6211
  %v6580 = vpack.c.b16 %v6228, %v6212
  %v6581 = vpack.c.b16 %v6229, %v6213
  %v6582 = vpack.c.b16 %v6230, %v6214
  %v6583 = vpack.c.b16 %v6231, %v6215
  %v6584 = vpack.c.b16 %v6232, %v6216
  %v6585 = vpack.c.b16 %v6233, %v6217
  %v6586 = vpack.c.b16 %v6250, %v6234
  %v6587 = vpack.c.b16 %v6251, %v6235
  %v6588 = vpack.c.b16 %v6252, %v6236
  %v6589 = vpack.c.b16 %v6253, %v6237
  %v6590 = vpack.c.b16 %v6254, %v6238
  %v6591 = vpack.c.b16 %v6255, %v6239
  %v6592 = vpack.c.b16 %v6256, %v6240
  %v6593 = vpack.c.b16 %v6257, %v6241
  %v6594 = vpack.c.b16 %v6258, %v6242
  %v6595 = vpack.c.b16 %v6259, %v6243
  %v6596 = vpack.c.b16 %v6260, %v6244
  %v6597 = vpack.c.b16 %v6261, %v6245
  %v6598 = vpack.c.b16 %v6262, %v6246
  %v6599 = vpack.c.b16 %v6263, %v6247
  %v6600 = vpack.c.b16 %v6264, %v6248
  %v6601 = vpack.c.b16 %v6265, %v6249
  %v6602 = vpack.c.b16 %v6282, %v6266
  %v6603 = vpack.c.b16 %v6283, %v6267
  %v6604 = vpack.c.b16 %v6284, %v6268
  %v6605 = vpack.c.b16 %v6285, %v6269
  %v6606 = vpack.c.b16 %v6286, %v6270
  %v6607 = vpack.c.b16 %v6287, %v6271
  %v6608 = vpack.c.b16 %v6288, %v6272
  %v6609 = vpack.c.b16 %v6289, %v6273
  %v6610 = vpack.c.b16 %v6290, %v6274
  %v6611 = vpack.c.b16 %v6291, %v6275
  %v6612 = vpack.c.b16 %v6292, %v6276
  %v6613 = vpack.c.b16 %v6293, %v6277
  %v6614 = vpack.c.b16 %v6294, %v6278
  %v6615 = vpack.c.b16 %v6295, %v6279
  %v6616 = vpack.c.b16 %v6296, %v6280
  %v6617 = vpack.c.b16 %v6297, %v6281
  %v6618 = vpack.c.b16 %v6314, %v6298
  %v6619 = vpack.c.b16 %v6315, %v6299
  %v6620 = vpack.c.b16 %v6316, %v6300
  %v6621 = vpack.c.b16 %v6317, %v6301
  %v6622 = vpack.c.b16 %v6318, %v6302
  %v6623 = vpack.c.b16 %v6319, %v6303
  %v6624 = vpack.c.b16 %v6320, %v6304
  %v6625 = vpack.c.b16 %v6321, %v6305
  %v6626 = vpack.c.b16 %v6322, %v6306
  %v6627 = vpack.c.b16 %v6323, %v6307
  %v6628 = vpack.c.b16 %v6324, %v6308
  %v6629 = vpack.c.b16 %v6325, %v6309
  %v6630 = vpack.c.b16 %v6326, %v6310
  %v6631 = vpack.c.b16 %v6327, %v6311
  %v6632 = vpack.c.b16 %v6328, %v6312
  %v6633 = vpack.c.b16 %v6329, %v6313
  %v6923 = vsel %vm759, %v5029, 0
  %v6926 = vsel %vm763, %v6618, 0
  %v6929 = vsel %vm763, %v6619, 0
  %v6932 = vsel %vm763, %v6620, 0
  %v6935 = vsel %vm763, %v6621, 0
  %v6938 = vsel %vm763, %v6622, 0
  %v6941 = vsel %vm763, %v6623, 0
  %v6944 = vsel %vm763, %v6624, 0
  %v6947 = vsel %vm763, %v6625, 0
  %v6950 = vsel %vm763, %v6626, 0
  %v6953 = vsel %vm763, %v6627, 0
  %v6956 = vsel %vm763, %v6628, 0
  %v6959 = vsel %vm763, %v6629, 0
  %v6962 = vsel %vm763, %v6630, 0
  %v6965 = vsel %vm763, %v6631, 0
  %v6968 = vsel %vm763, %v6632, 0
  %v6971 = vsel %vm763, %v6633, 0
  %6973 = vmatprep.subr.bf16.mxu0 %v6331
  %6974 = vmatpush1.bf16.msra.mxu0 %v6330
  %6975 = vmatprep.subr.bf16.mxu0 %v6347
  %6976 = vmatpush1.bf16.msra.mxu0 %v6346
  %6977 = vmatprep.subr.bf16.mxu0 %v6363
  %6978 = vmatpush1.bf16.msra.mxu0 %v6362
  %6979 = vmatprep.subr.bf16.mxu0 %v6379
  %6980 = vmatpush1.bf16.msra.mxu0 %v6378
  %6981 = vmatprep.subr.bf16.mxu0 %v6395
  %6982 = vmatpush1.bf16.msra.mxu0 %v6394
  %6983 = vmatprep.subr.bf16.mxu0 %v6411
  %6984 = vmatpush1.bf16.msra.mxu0 %v6410
  %6985 = vmatprep.subr.bf16.mxu0 %v6427
  %6986 = vmatpush1.bf16.msra.mxu0 %v6426
  %6987 = vmatprep.subr.bf16.mxu0 %v6443
  %6988 = vmatpush1.bf16.msra.mxu0 %v6442
  %6989 = vmatprep.subr.bf16.mxu0 %v6459
  %6990 = vmatpush1.bf16.msra.mxu0 %v6458
  %6991 = vmatprep.subr.bf16.mxu0 %v6475
  %6992 = vmatpush1.bf16.msra.mxu0 %v6474
  %6993 = vmatprep.subr.bf16.mxu0 %v6491
  %6994 = vmatpush1.bf16.msra.mxu0 %v6490
  %6995 = vmatprep.subr.bf16.mxu0 %v6507
  %6996 = vmatpush1.bf16.msra.mxu0 %v6506
  %6997 = vmatprep.subr.bf16.mxu0 %v6523
  %6998 = vmatpush1.bf16.msra.mxu0 %v6522
  %6999 = vmatprep.subr.bf16.mxu0 %v6539
  %7000 = vmatpush1.bf16.msra.mxu0 %v6538
  %7001 = vmatprep.subr.bf16.mxu0 %v6555
  %7002 = vmatpush1.bf16.msra.mxu0 %v6554
  %7003 = vmatprep.subr.bf16.mxu0 %v6571
  %7004 = vmatpush1.bf16.msra.mxu0 %v6570
  %7005 = vmatprep.mubr.bf16.mxu0 %v5028
  %7006 = vmatmul.mubr.bf16.gmra.mrb[0].mxu0 %v5027
  %v7007 = vpop.f32.mrb[0].mxu0
  %v7008 = vadd.f32 %v5341, %v7007
  %v7009 = vpop.f32.mrb[0].mxu0
  %v7010 = vadd.f32 %v5345, %v7009
  %v7011 = vpop.f32.mrb[0].mxu0
  %v7012 = vadd.f32 %v5341, %v7011
  %v7013 = vpop.f32.mrb[0].mxu0
  %v7014 = vadd.f32 %v5345, %v7013
  %7015 = vdwg.mxu0
  %7016 = vmatprep.subr.bf16.mxu0 %v6587
  %7017 = vmatpush1.bf16.msra.mxu0 %v6586
  %7018 = vmatprep.subr.bf16.mxu0 %v6603
  %7019 = vmatpush1.bf16.msra.mxu0 %v6602
  %7020 = vmatprep.subr.bf16.mxu0 %v6929
  %7021 = vmatpush1.bf16.msra.mxu0 %v6926
  %7022 = vmatprep.subr.bf16.mxu0 0
  %7023 = vmatpush1.bf16.msra.mxu0 0
  %7024 = vmatprep.subr.bf16.mxu0 0
  %7025 = vmatpush1.bf16.msra.mxu0 0
  %7026 = vmatprep.subr.bf16.mxu0 0
  %7027 = vmatpush1.bf16.msra.mxu0 0
  %7028 = vmatprep.subr.bf16.mxu0 0
  %7029 = vmatpush1.bf16.msra.mxu0 0
  %7030 = vmatprep.subr.bf16.mxu0 0
  %7031 = vmatpush1.bf16.msra.mxu0 0
  %7032 = vmatprep.subr.bf16.mxu0 0
  %7033 = vmatpush1.bf16.msra.mxu0 0
  %7034 = vmatprep.subr.bf16.mxu0 0
  %7035 = vmatpush1.bf16.msra.mxu0 0
  %7036 = vmatprep.subr.bf16.mxu0 0
  %7037 = vmatpush1.bf16.msra.mxu0 0
  %7038 = vmatprep.subr.bf16.mxu0 0
  %7039 = vmatpush1.bf16.msra.mxu0 0
  %7040 = vmatprep.subr.bf16.mxu0 0
  %7041 = vmatpush1.bf16.msra.mxu0 0
  %7042 = vmatprep.subr.bf16.mxu0 0
  %7043 = vmatpush1.bf16.msra.mxu0 0
  %7044 = vmatprep.subr.bf16.mxu0 0
  %7045 = vmatpush1.bf16.msra.mxu0 0
  %7046 = vmatprep.subr.bf16.mxu0 0
  %7047 = vmatpush1.bf16.msra.mxu0 0
  %7048 = vmatprep.mubr.bf16.mxu0 0
  %7049 = vmatmul.mubr.bf16.gmra.mrb[0].mxu0 %v6923
  %v7050 = vpop.f32.mrb[0].mxu0
  %v7051 = vadd.f32 %v7008, %v7050
  %v7052 = vpop.f32.mrb[0].mxu0
  %v7053 = vadd.f32 %v7010, %v7052
  %v7054 = vpop.f32.mrb[0].mxu0
  %v7055 = vadd.f32 %v7012, %v7054
  %v7056 = vpop.f32.mrb[0].mxu0
  %v7057 = vadd.f32 %v7014, %v7056
  %7058 = vdwg.mxu0
  %7059 = vmatprep.subr.bf16.mxu0 %v6333
  %7060 = vmatpush1.bf16.msra.mxu0 %v6332
  %7061 = vmatprep.subr.bf16.mxu0 %v6349
  %7062 = vmatpush1.bf16.msra.mxu0 %v6348
  %7063 = vmatprep.subr.bf16.mxu0 %v6365
  %7064 = vmatpush1.bf16.msra.mxu0 %v6364
  %7065 = vmatprep.subr.bf16.mxu0 %v6381
  %7066 = vmatpush1.bf16.msra.mxu0 %v6380
  %7067 = vmatprep.subr.bf16.mxu0 %v6397
  %7068 = vmatpush1.bf16.msra.mxu0 %v6396
  %7069 = vmatprep.subr.bf16.mxu0 %v6413
  %7070 = vmatpush1.bf16.msra.mxu0 %v6412
  %7071 = vmatprep.subr.bf16.mxu0 %v6429
  %7072 = vmatpush1.bf16.msra.mxu0 %v6428
  %7073 = vmatprep.subr.bf16.mxu0 %v6445
  %7074 = vmatpush1.bf16.msra.mxu0 %v6444
  %7075 = vmatprep.subr.bf16.mxu0 %v6461
  %7076 = vmatpush1.bf16.msra.mxu0 %v6460
  %7077 = vmatprep.subr.bf16.mxu0 %v6477
  %7078 = vmatpush1.bf16.msra.mxu0 %v6476
  %7079 = vmatprep.subr.bf16.mxu0 %v6493
  %7080 = vmatpush1.bf16.msra.mxu0 %v6492
  %7081 = vmatprep.subr.bf16.mxu0 %v6509
  %7082 = vmatpush1.bf16.msra.mxu0 %v6508
  %7083 = vmatprep.subr.bf16.mxu0 %v6525
  %7084 = vmatpush1.bf16.msra.mxu0 %v6524
  %7085 = vmatprep.subr.bf16.mxu0 %v6541
  %7086 = vmatpush1.bf16.msra.mxu0 %v6540
  %7087 = vmatprep.subr.bf16.mxu0 %v6557
  %7088 = vmatpush1.bf16.msra.mxu0 %v6556
  %7089 = vmatprep.subr.bf16.mxu0 %v6573
  %7090 = vmatpush1.bf16.msra.mxu0 %v6572
  %7091 = vmatprep.mubr.bf16.mxu0 %v5028
  %7092 = vmatmul.mubr.bf16.gmra.mrb[0].mxu0 %v5027
  %v7093 = vpop.f32.mrb[0].mxu0
  %v7094 = vadd.f32 %v5349, %v7093
  %v7095 = vpop.f32.mrb[0].mxu0
  %v7096 = vadd.f32 %v5353, %v7095
  %v7097 = vpop.f32.mrb[0].mxu0
  %v7098 = vadd.f32 %v5349, %v7097
  %v7099 = vpop.f32.mrb[0].mxu0
  %v7100 = vadd.f32 %v5353, %v7099
  %7101 = vdwg.mxu0
  %7102 = vmatprep.subr.bf16.mxu0 %v6589
  %7103 = vmatpush1.bf16.msra.mxu0 %v6588
  %7104 = vmatprep.subr.bf16.mxu0 %v6605
  %7105 = vmatpush1.bf16.msra.mxu0 %v6604
  %7106 = vmatprep.subr.bf16.mxu0 %v6935
  %7107 = vmatpush1.bf16.msra.mxu0 %v6932
  %7108 = vmatprep.subr.bf16.mxu0 0
  %7109 = vmatpush1.bf16.msra.mxu0 0
  %7110 = vmatprep.subr.bf16.mxu0 0
  %7111 = vmatpush1.bf16.msra.mxu0 0
  %7112 = vmatprep.subr.bf16.mxu0 0
  %7113 = vmatpush1.bf16.msra.mxu0 0
  %7114 = vmatprep.subr.bf16.mxu0 0
  %7115 = vmatpush1.bf16.msra.mxu0 0
  %7116 = vmatprep.subr.bf16.mxu0 0
  %7117 = vmatpush1.bf16.msra.mxu0 0
  %7118 = vmatprep.subr.bf16.mxu0 0
  %7119 = vmatpush1.bf16.msra.mxu0 0
  %7120 = vmatprep.subr.bf16.mxu0 0
  %7121 = vmatpush1.bf16.msra.mxu0 0
  %7122 = vmatprep.subr.bf16.mxu0 0
  %7123 = vmatpush1.bf16.msra.mxu0 0
  %7124 = vmatprep.subr.bf16.mxu0 0
  %7125 = vmatpush1.bf16.msra.mxu0 0
  %7126 = vmatprep.subr.bf16.mxu0 0
  %7127 = vmatpush1.bf16.msra.mxu0 0
  %7128 = vmatprep.subr.bf16.mxu0 0
  %7129 = vmatpush1.bf16.msra.mxu0 0
  %7130 = vmatprep.subr.bf16.mxu0 0
  %7131 = vmatpush1.bf16.msra.mxu0 0
  %7132 = vmatprep.subr.bf16.mxu0 0
  %7133 = vmatpush1.bf16.msra.mxu0 0
  %7134 = vmatprep.mubr.bf16.mxu0 0
  %7135 = vmatmul.mubr.bf16.gmra.mrb[0].mxu0 %v6923
  %v7136 = vpop.f32.mrb[0].mxu0
  %v7137 = vadd.f32 %v7094, %v7136
  %v7138 = vpop.f32.mrb[0].mxu0
  %v7139 = vadd.f32 %v7096, %v7138
  %v7140 = vpop.f32.mrb[0].mxu0
  %v7141 = vadd.f32 %v7098, %v7140
  %v7142 = vpop.f32.mrb[0].mxu0
  %v7143 = vadd.f32 %v7100, %v7142
  %7144 = vdwg.mxu0
  %7145 = vmatprep.subr.bf16.mxu0 %v6335
  %7146 = vmatpush1.bf16.msra.mxu0 %v6334
  %7147 = vmatprep.subr.bf16.mxu0 %v6351
  %7148 = vmatpush1.bf16.msra.mxu0 %v6350
  %7149 = vmatprep.subr.bf16.mxu0 %v6367
  %7150 = vmatpush1.bf16.msra.mxu0 %v6366
  %7151 = vmatprep.subr.bf16.mxu0 %v6383
  %7152 = vmatpush1.bf16.msra.mxu0 %v6382
  %7153 = vmatprep.subr.bf16.mxu0 %v6399
  %7154 = vmatpush1.bf16.msra.mxu0 %v6398
  %7155 = vmatprep.subr.bf16.mxu0 %v6415
  %7156 = vmatpush1.bf16.msra.mxu0 %v6414
  %7157 = vmatprep.subr.bf16.mxu0 %v6431
  %7158 = vmatpush1.bf16.msra.mxu0 %v6430
  %7159 = vmatprep.subr.bf16.mxu0 %v6447
  %7160 = vmatpush1.bf16.msra.mxu0 %v6446
  %7161 = vmatprep.subr.bf16.mxu0 %v6463
  %7162 = vmatpush1.bf16.msra.mxu0 %v6462
  %7163 = vmatprep.subr.bf16.mxu0 %v6479
  %7164 = vmatpush1.bf16.msra.mxu0 %v6478
  %7165 = vmatprep.subr.bf16.mxu0 %v6495
  %7166 = vmatpush1.bf16.msra.mxu0 %v6494
  %7167 = vmatprep.subr.bf16.mxu0 %v6511
  %7168 = vmatpush1.bf16.msra.mxu0 %v6510
  %7169 = vmatprep.subr.bf16.mxu0 %v6527
  %7170 = vmatpush1.bf16.msra.mxu0 %v6526
  %7171 = vmatprep.subr.bf16.mxu0 %v6543
  %7172 = vmatpush1.bf16.msra.mxu0 %v6542
  %7173 = vmatprep.subr.bf16.mxu0 %v6559
  %7174 = vmatpush1.bf16.msra.mxu0 %v6558
  %7175 = vmatprep.subr.bf16.mxu0 %v6575
  %7176 = vmatpush1.bf16.msra.mxu0 %v6574
  %7177 = vmatprep.mubr.bf16.mxu0 %v5028
  %7178 = vmatmul.mubr.bf16.gmra.mrb[0].mxu0 %v5027
  %v7179 = vpop.f32.mrb[0].mxu0
  %v7180 = vadd.f32 %v5357, %v7179
  %v7181 = vpop.f32.mrb[0].mxu0
  %v7182 = vadd.f32 %v5361, %v7181
  %v7183 = vpop.f32.mrb[0].mxu0
  %v7184 = vadd.f32 %v5357, %v7183
  %v7185 = vpop.f32.mrb[0].mxu0
  %v7186 = vadd.f32 %v5361, %v7185
  %7187 = vdwg.mxu0
  %7188 = vmatprep.subr.bf16.mxu0 %v6591
  %7189 = vmatpush1.bf16.msra.mxu0 %v6590
  %7190 = vmatprep.subr.bf16.mxu0 %v6607
  %7191 = vmatpush1.bf16.msra.mxu0 %v6606
  %7192 = vmatprep.subr.bf16.mxu0 %v6941
  %7193 = vmatpush1.bf16.msra.mxu0 %v6938
  %7194 = vmatprep.subr.bf16.mxu0 0
  %7195 = vmatpush1.bf16.msra.mxu0 0
  %7196 = vmatprep.subr.bf16.mxu0 0
  %7197 = vmatpush1.bf16.msra.mxu0 0
  %7198 = vmatprep.subr.bf16.mxu0 0
  %7199 = vmatpush1.bf16.msra.mxu0 0
  %7200 = vmatprep.subr.bf16.mxu0 0
  %7201 = vmatpush1.bf16.msra.mxu0 0
  %7202 = vmatprep.subr.bf16.mxu0 0
  %7203 = vmatpush1.bf16.msra.mxu0 0
  %7204 = vmatprep.subr.bf16.mxu0 0
  %7205 = vmatpush1.bf16.msra.mxu0 0
  %7206 = vmatprep.subr.bf16.mxu0 0
  %7207 = vmatpush1.bf16.msra.mxu0 0
  %7208 = vmatprep.subr.bf16.mxu0 0
  %7209 = vmatpush1.bf16.msra.mxu0 0
  %7210 = vmatprep.subr.bf16.mxu0 0
  %7211 = vmatpush1.bf16.msra.mxu0 0
  %7212 = vmatprep.subr.bf16.mxu0 0
  %7213 = vmatpush1.bf16.msra.mxu0 0
  %7214 = vmatprep.subr.bf16.mxu0 0
  %7215 = vmatpush1.bf16.msra.mxu0 0
  %7216 = vmatprep.subr.bf16.mxu0 0
  %7217 = vmatpush1.bf16.msra.mxu0 0
  %7218 = vmatprep.subr.bf16.mxu0 0
  %7219 = vmatpush1.bf16.msra.mxu0 0
  %7220 = vmatprep.mubr.bf16.mxu0 0
  %7221 = vmatmul.mubr.bf16.gmra.mrb[0].mxu0 %v6923
  %v7222 = vpop.f32.mrb[0].mxu0
  %v7223 = vadd.f32 %v7180, %v7222
  %v7224 = vpop.f32.mrb[0].mxu0
  %v7225 = vadd.f32 %v7182, %v7224
  %v7226 = vpop.f32.mrb[0].mxu0
  %v7227 = vadd.f32 %v7184, %v7226
  %v7228 = vpop.f32.mrb[0].mxu0
  %v7229 = vadd.f32 %v7186, %v7228
  %7230 = vdwg.mxu0
  %7231 = vmatprep.subr.bf16.mxu0 %v6337
  %7232 = vmatpush1.bf16.msra.mxu0 %v6336
  %7233 = vmatprep.subr.bf16.mxu0 %v6353
  %7234 = vmatpush1.bf16.msra.mxu0 %v6352
  %7235 = vmatprep.subr.bf16.mxu0 %v6369
  %7236 = vmatpush1.bf16.msra.mxu0 %v6368
  %7237 = vmatprep.subr.bf16.mxu0 %v6385
  %7238 = vmatpush1.bf16.msra.mxu0 %v6384
  %7239 = vmatprep.subr.bf16.mxu0 %v6401
  %7240 = vmatpush1.bf16.msra.mxu0 %v6400
  %7241 = vmatprep.subr.bf16.mxu0 %v6417
  %7242 = vmatpush1.bf16.msra.mxu0 %v6416
  %7243 = vmatprep.subr.bf16.mxu0 %v6433
  %7244 = vmatpush1.bf16.msra.mxu0 %v6432
  %7245 = vmatprep.subr.bf16.mxu0 %v6449
  %7246 = vmatpush1.bf16.msra.mxu0 %v6448
  %7247 = vmatprep.subr.bf16.mxu0 %v6465
  %7248 = vmatpush1.bf16.msra.mxu0 %v6464
  %7249 = vmatprep.subr.bf16.mxu0 %v6481
  %7250 = vmatpush1.bf16.msra.mxu0 %v6480
  %7251 = vmatprep.subr.bf16.mxu0 %v6497
  %7252 = vmatpush1.bf16.msra.mxu0 %v6496
  %7253 = vmatprep.subr.bf16.mxu0 %v6513
  %7254 = vmatpush1.bf16.msra.mxu0 %v6512
  %7255 = vmatprep.subr.bf16.mxu0 %v6529
  %7256 = vmatpush1.bf16.msra.mxu0 %v6528
  %7257 = vmatprep.subr.bf16.mxu0 %v6545
  %7258 = vmatpush1.bf16.msra.mxu0 %v6544
  %7259 = vmatprep.subr.bf16.mxu0 %v6561
  %7260 = vmatpush1.bf16.msra.mxu0 %v6560
  %7261 = vmatprep.subr.bf16.mxu0 %v6577
  %7262 = vmatpush1.bf16.msra.mxu0 %v6576
  %7263 = vmatprep.mubr.bf16.mxu0 %v5028
  %7264 = vmatmul.mubr.bf16.gmra.mrb[0].mxu0 %v5027
  %v7265 = vpop.f32.mrb[0].mxu0
  %v7266 = vadd.f32 %v5365, %v7265
  %v7267 = vpop.f32.mrb[0].mxu0
  %v7268 = vadd.f32 %v5369, %v7267
  %v7269 = vpop.f32.mrb[0].mxu0
  %v7270 = vadd.f32 %v5365, %v7269
  %v7271 = vpop.f32.mrb[0].mxu0
  %v7272 = vadd.f32 %v5369, %v7271
  %7273 = vdwg.mxu0
  %7274 = vmatprep.subr.bf16.mxu0 %v6593
  %7275 = vmatpush1.bf16.msra.mxu0 %v6592
  %7276 = vmatprep.subr.bf16.mxu0 %v6609
  %7277 = vmatpush1.bf16.msra.mxu0 %v6608
  %7278 = vmatprep.subr.bf16.mxu0 %v6947
  %7279 = vmatpush1.bf16.msra.mxu0 %v6944
  %7280 = vmatprep.subr.bf16.mxu0 0
  %7281 = vmatpush1.bf16.msra.mxu0 0
  %7282 = vmatprep.subr.bf16.mxu0 0
  %7283 = vmatpush1.bf16.msra.mxu0 0
  %7284 = vmatprep.subr.bf16.mxu0 0
  %7285 = vmatpush1.bf16.msra.mxu0 0
  %7286 = vmatprep.subr.bf16.mxu0 0
  %7287 = vmatpush1.bf16.msra.mxu0 0
  %7288 = vmatprep.subr.bf16.mxu0 0
  %7289 = vmatpush1.bf16.msra.mxu0 0
  %7290 = vmatprep.subr.bf16.mxu0 0
  %7291 = vmatpush1.bf16.msra.mxu0 0
  %7292 = vmatprep.subr.bf16.mxu0 0
  %7293 = vmatpush1.bf16.msra.mxu0 0
  %7294 = vmatprep.subr.bf16.mxu0 0
  %7295 = vmatpush1.bf16.msra.mxu0 0
  %7296 = vmatprep.subr.bf16.mxu0 0
  %7297 = vmatpush1.bf16.msra.mxu0 0
  %7298 = vmatprep.subr.bf16.mxu0 0
  %7299 = vmatpush1.bf16.msra.mxu0 0
  %7300 = vmatprep.subr.bf16.mxu0 0
  %7301 = vmatpush1.bf16.msra.mxu0 0
  %7302 = vmatprep.subr.bf16.mxu0 0
  %7303 = vmatpush1.bf16.msra.mxu0 0
  %7304 = vmatprep.subr.bf16.mxu0 0
  %7305 = vmatpush1.bf16.msra.mxu0 0
  %7306 = vmatprep.mubr.bf16.mxu0 0
  %7307 = vmatmul.mubr.bf16.gmra.mrb[0].mxu0 %v6923
  %v7308 = vpop.f32.mrb[0].mxu0
  %v7309 = vadd.f32 %v7266, %v7308
  %v7310 = vpop.f32.mrb[0].mxu0
  %v7311 = vadd.f32 %v7268, %v7310
  %v7312 = vpop.f32.mrb[0].mxu0
  %v7313 = vadd.f32 %v7270, %v7312
  %v7314 = vpop.f32.mrb[0].mxu0
  %v7315 = vadd.f32 %v7272, %v7314
  %7316 = vdwg.mxu0
  %7317 = vmatprep.subr.bf16.mxu0 %v6339
  %7318 = vmatpush1.bf16.msra.mxu0 %v6338
  %7319 = vmatprep.subr.bf16.mxu0 %v6355
  %7320 = vmatpush1.bf16.msra.mxu0 %v6354
  %7321 = vmatprep.subr.bf16.mxu0 %v6371
  %7322 = vmatpush1.bf16.msra.mxu0 %v6370
  %7323 = vmatprep.subr.bf16.mxu0 %v6387
  %7324 = vmatpush1.bf16.msra.mxu0 %v6386
  %7325 = vmatprep.subr.bf16.mxu0 %v6403
  %7326 = vmatpush1.bf16.msra.mxu0 %v6402
  %7327 = vmatprep.subr.bf16.mxu0 %v6419
  %7328 = vmatpush1.bf16.msra.mxu0 %v6418
  %7329 = vmatprep.subr.bf16.mxu0 %v6435
  %7330 = vmatpush1.bf16.msra.mxu0 %v6434
  %7331 = vmatprep.subr.bf16.mxu0 %v6451
  %7332 = vmatpush1.bf16.msra.mxu0 %v6450
  %7333 = vmatprep.subr.bf16.mxu0 %v6467
  %7334 = vmatpush1.bf16.msra.mxu0 %v6466
  %7335 = vmatprep.subr.bf16.mxu0 %v6483
  %7336 = vmatpush1.bf16.msra.mxu0 %v6482
  %7337 = vmatprep.subr.bf16.mxu0 %v6499
  %7338 = vmatpush1.bf16.msra.mxu0 %v6498
  %7339 = vmatprep.subr.bf16.mxu0 %v6515
  %7340 = vmatpush1.bf16.msra.mxu0 %v6514
  %7341 = vmatprep.subr.bf16.mxu0 %v6531
  %7342 = vmatpush1.bf16.msra.mxu0 %v6530
  %7343 = vmatprep.subr.bf16.mxu0 %v6547
  %7344 = vmatpush1.bf16.msra.mxu0 %v6546
  %7345 = vmatprep.subr.bf16.mxu0 %v6563
  %7346 = vmatpush1.bf16.msra.mxu0 %v6562
  %7347 = vmatprep.subr.bf16.mxu0 %v6579
  %7348 = vmatpush1.bf16.msra.mxu0 %v6578
  %7349 = vmatprep.mubr.bf16.mxu0 %v5028
  %7350 = vmatmul.mubr.bf16.gmra.mrb[0].mxu0 %v5027
  %v7351 = vpop.f32.mrb[0].mxu0
  %v7352 = vadd.f32 %v5373, %v7351
  %v7353 = vpop.f32.mrb[0].mxu0
  %v7354 = vadd.f32 %v5377, %v7353
  %v7355 = vpop.f32.mrb[0].mxu0
  %v7356 = vadd.f32 %v5373, %v7355
  %v7357 = vpop.f32.mrb[0].mxu0
  %v7358 = vadd.f32 %v5377, %v7357
  %7359 = vdwg.mxu0
  %7360 = vmatprep.subr.bf16.mxu0 %v6595
  %7361 = vmatpush1.bf16.msra.mxu0 %v6594
  %7362 = vmatprep.subr.bf16.mxu0 %v6611
  %7363 = vmatpush1.bf16.msra.mxu0 %v6610
  %7364 = vmatprep.subr.bf16.mxu0 %v6953
  %7365 = vmatpush1.bf16.msra.mxu0 %v6950
  %7366 = vmatprep.subr.bf16.mxu0 0
  %7367 = vmatpush1.bf16.msra.mxu0 0
  %7368 = vmatprep.subr.bf16.mxu0 0
  %7369 = vmatpush1.bf16.msra.mxu0 0
  %7370 = vmatprep.subr.bf16.mxu0 0
  %7371 = vmatpush1.bf16.msra.mxu0 0
  %7372 = vmatprep.subr.bf16.mxu0 0
  %7373 = vmatpush1.bf16.msra.mxu0 0
  %7374 = vmatprep.subr.bf16.mxu0 0
  %7375 = vmatpush1.bf16.msra.mxu0 0
  %7376 = vmatprep.subr.bf16.mxu0 0
  %7377 = vmatpush1.bf16.msra.mxu0 0
  %7378 = vmatprep.subr.bf16.mxu0 0
  %7379 = vmatpush1.bf16.msra.mxu0 0
  %7380 = vmatprep.subr.bf16.mxu0 0
  %7381 = vmatpush1.bf16.msra.mxu0 0
  %7382 = vmatprep.subr.bf16.mxu0 0
  %7383 = vmatpush1.bf16.msra.mxu0 0
  %7384 = vmatprep.subr.bf16.mxu0 0
  %7385 = vmatpush1.bf16.msra.mxu0 0
  %7386 = vmatprep.subr.bf16.mxu0 0
  %7387 = vmatpush1.bf16.msra.mxu0 0
  %7388 = vmatprep.subr.bf16.mxu0 0
  %7389 = vmatpush1.bf16.msra.mxu0 0
  %7390 = vmatprep.subr.bf16.mxu0 0
  %7391 = vmatpush1.bf16.msra.mxu0 0
  %7392 = vmatprep.mubr.bf16.mxu0 0
  %7393 = vmatmul.mubr.bf16.gmra.mrb[0].mxu0 %v6923
  %v7394 = vpop.f32.mrb[0].mxu0
  %v7395 = vadd.f32 %v7352, %v7394
  %v7396 = vpop.f32.mrb[0].mxu0
  %v7397 = vadd.f32 %v7354, %v7396
  %v7398 = vpop.f32.mrb[0].mxu0
  %v7399 = vadd.f32 %v7356, %v7398
  %v7400 = vpop.f32.mrb[0].mxu0
  %v7401 = vadd.f32 %v7358, %v7400
  %7402 = vdwg.mxu0
  %7403 = vmatprep.subr.bf16.mxu0 %v6341
  %7404 = vmatpush1.bf16.msra.mxu0 %v6340
  %7405 = vmatprep.subr.bf16.mxu0 %v6357
  %7406 = vmatpush1.bf16.msra.mxu0 %v6356
  %7407 = vmatprep.subr.bf16.mxu0 %v6373
  %7408 = vmatpush1.bf16.msra.mxu0 %v6372
  %7409 = vmatprep.subr.bf16.mxu0 %v6389
  %7410 = vmatpush1.bf16.msra.mxu0 %v6388
  %7411 = vmatprep.subr.bf16.mxu0 %v6405
  %7412 = vmatpush1.bf16.msra.mxu0 %v6404
  %7413 = vmatprep.subr.bf16.mxu0 %v6421
  %7414 = vmatpush1.bf16.msra.mxu0 %v6420
  %7415 = vmatprep.subr.bf16.mxu0 %v6437
  %7416 = vmatpush1.bf16.msra.mxu0 %v6436
  %7417 = vmatprep.subr.bf16.mxu0 %v6453
  %7418 = vmatpush1.bf16.msra.mxu0 %v6452
  %7419 = vmatprep.subr.bf16.mxu0 %v6469
  %7420 = vmatpush1.bf16.msra.mxu0 %v6468
  %7421 = vmatprep.subr.bf16.mxu0 %v6485
  %7422 = vmatpush1.bf16.msra.mxu0 %v6484
  %7423 = vmatprep.subr.bf16.mxu0 %v6501
  %7424 = vmatpush1.bf16.msra.mxu0 %v6500
  %7425 = vmatprep.subr.bf16.mxu0 %v6517
  %7426 = vmatpush1.bf16.msra.mxu0 %v6516
  %7427 = vmatprep.subr.bf16.mxu0 %v6533
  %7428 = vmatpush1.bf16.msra.mxu0 %v6532
  %7429 = vmatprep.subr.bf16.mxu0 %v6549
  %7430 = vmatpush1.bf16.msra.mxu0 %v6548
  %7431 = vmatprep.subr.bf16.mxu0 %v6565
  %7432 = vmatpush1.bf16.msra.mxu0 %v6564
  %7433 = vmatprep.subr.bf16.mxu0 %v6581
  %7434 = vmatpush1.bf16.msra.mxu0 %v6580
  %7435 = vmatprep.mubr.bf16.mxu0 %v5028
  %7436 = vmatmul.mubr.bf16.gmra.mrb[0].mxu0 %v5027
  %v7437 = vpop.f32.mrb[0].mxu0
  %v7438 = vadd.f32 %v5381, %v7437
  %v7439 = vpop.f32.mrb[0].mxu0
  %v7440 = vadd.f32 %v5385, %v7439
  %v7441 = vpop.f32.mrb[0].mxu0
  %v7442 = vadd.f32 %v5381, %v7441
  %v7443 = vpop.f32.mrb[0].mxu0
  %v7444 = vadd.f32 %v5385, %v7443
  %7445 = vdwg.mxu0
  %7446 = vmatprep.subr.bf16.mxu0 %v6597
  %7447 = vmatpush1.bf16.msra.mxu0 %v6596
  %7448 = vmatprep.subr.bf16.mxu0 %v6613
  %7449 = vmatpush1.bf16.msra.mxu0 %v6612
  %7450 = vmatprep.subr.bf16.mxu0 %v6959
  %7451 = vmatpush1.bf16.msra.mxu0 %v6956
  %7452 = vmatprep.subr.bf16.mxu0 0
  %7453 = vmatpush1.bf16.msra.mxu0 0
  %7454 = vmatprep.subr.bf16.mxu0 0
  %7455 = vmatpush1.bf16.msra.mxu0 0
  %7456 = vmatprep.subr.bf16.mxu0 0
  %7457 = vmatpush1.bf16.msra.mxu0 0
  %7458 = vmatprep.subr.bf16.mxu0 0
  %7459 = vmatpush1.bf16.msra.mxu0 0
  %7460 = vmatprep.subr.bf16.mxu0 0
  %7461 = vmatpush1.bf16.msra.mxu0 0
  %7462 = vmatprep.subr.bf16.mxu0 0
  %7463 = vmatpush1.bf16.msra.mxu0 0
  %7464 = vmatprep.subr.bf16.mxu0 0
  %7465 = vmatpush1.bf16.msra.mxu0 0
  %7466 = vmatprep.subr.bf16.mxu0 0
  %7467 = vmatpush1.bf16.msra.mxu0 0
  %7468 = vmatprep.subr.bf16.mxu0 0
  %7469 = vmatpush1.bf16.msra.mxu0 0
  %7470 = vmatprep.subr.bf16.mxu0 0
  %7471 = vmatpush1.bf16.msra.mxu0 0
  %7472 = vmatprep.subr.bf16.mxu0 0
  %7473 = vmatpush1.bf16.msra.mxu0 0
  %7474 = vmatprep.subr.bf16.mxu0 0
  %7475 = vmatpush1.bf16.msra.mxu0 0
  %7476 = vmatprep.subr.bf16.mxu0 0
  %7477 = vmatpush1.bf16.msra.mxu0 0
  %7478 = vmatprep.mubr.bf16.mxu0 0
  %7479 = vmatmul.mubr.bf16.gmra.mrb[0].mxu0 %v6923
  %v7480 = vpop.f32.mrb[0].mxu0
  %v7481 = vadd.f32 %v7438, %v7480
  %v7482 = vpop.f32.mrb[0].mxu0
  %v7483 = vadd.f32 %v7440, %v7482
  %v7484 = vpop.f32.mrb[0].mxu0
  %v7485 = vadd.f32 %v7442, %v7484
  %v7486 = vpop.f32.mrb[0].mxu0
  %v7487 = vadd.f32 %v7444, %v7486
  %7488 = vdwg.mxu0
  %7489 = vmatprep.subr.bf16.mxu0 %v6343
  %7490 = vmatpush1.bf16.msra.mxu0 %v6342
  %7491 = vmatprep.subr.bf16.mxu0 %v6359
  %7492 = vmatpush1.bf16.msra.mxu0 %v6358
  %7493 = vmatprep.subr.bf16.mxu0 %v6375
  %7494 = vmatpush1.bf16.msra.mxu0 %v6374
  %7495 = vmatprep.subr.bf16.mxu0 %v6391
  %7496 = vmatpush1.bf16.msra.mxu0 %v6390
  %7497 = vmatprep.subr.bf16.mxu0 %v6407
  %7498 = vmatpush1.bf16.msra.mxu0 %v6406
  %7499 = vmatprep.subr.bf16.mxu0 %v6423
  %7500 = vmatpush1.bf16.msra.mxu0 %v6422
  %7501 = vmatprep.subr.bf16.mxu0 %v6439
  %7502 = vmatpush1.bf16.msra.mxu0 %v6438
  %7503 = vmatprep.subr.bf16.mxu0 %v6455
  %7504 = vmatpush1.bf16.msra.mxu0 %v6454
  %7505 = vmatprep.subr.bf16.mxu0 %v6471
  %7506 = vmatpush1.bf16.msra.mxu0 %v6470
  %7507 = vmatprep.subr.bf16.mxu0 %v6487
  %7508 = vmatpush1.bf16.msra.mxu0 %v6486
  %7509 = vmatprep.subr.bf16.mxu0 %v6503
  %7510 = vmatpush1.bf16.msra.mxu0 %v6502
  %7511 = vmatprep.subr.bf16.mxu0 %v6519
  %7512 = vmatpush1.bf16.msra.mxu0 %v6518
  %7513 = vmatprep.subr.bf16.mxu0 %v6535
  %7514 = vmatpush1.bf16.msra.mxu0 %v6534
  %7515 = vmatprep.subr.bf16.mxu0 %v6551
  %7516 = vmatpush1.bf16.msra.mxu0 %v6550
  %7517 = vmatprep.subr.bf16.mxu0 %v6567
  %7518 = vmatpush1.bf16.msra.mxu0 %v6566
  %7519 = vmatprep.subr.bf16.mxu0 %v6583
  %7520 = vmatpush1.bf16.msra.mxu0 %v6582
  %7521 = vmatprep.mubr.bf16.mxu0 %v5028
  %7522 = vmatmul.mubr.bf16.gmra.mrb[0].mxu0 %v5027
  %v7523 = vpop.f32.mrb[0].mxu0
  %v7524 = vadd.f32 %v5389, %v7523
  %v7525 = vpop.f32.mrb[0].mxu0
  %v7526 = vadd.f32 %v5393, %v7525
  %v7527 = vpop.f32.mrb[0].mxu0
  %v7528 = vadd.f32 %v5389, %v7527
  %v7529 = vpop.f32.mrb[0].mxu0
  %v7530 = vadd.f32 %v5393, %v7529
  %7531 = vdwg.mxu0
  %7532 = vmatprep.subr.bf16.mxu0 %v6599
  %7533 = vmatpush1.bf16.msra.mxu0 %v6598
  %7534 = vmatprep.subr.bf16.mxu0 %v6615
  %7535 = vmatpush1.bf16.msra.mxu0 %v6614
  %7536 = vmatprep.subr.bf16.mxu0 %v6965
  %7537 = vmatpush1.bf16.msra.mxu0 %v6962
  %7538 = vmatprep.subr.bf16.mxu0 0
  %7539 = vmatpush1.bf16.msra.mxu0 0
  %7540 = vmatprep.subr.bf16.mxu0 0
  %7541 = vmatpush1.bf16.msra.mxu0 0
  %7542 = vmatprep.subr.bf16.mxu0 0
  %7543 = vmatpush1.bf16.msra.mxu0 0
  %7544 = vmatprep.subr.bf16.mxu0 0
  %7545 = vmatpush1.bf16.msra.mxu0 0
  %7546 = vmatprep.subr.bf16.mxu0 0
  %7547 = vmatpush1.bf16.msra.mxu0 0
  %7548 = vmatprep.subr.bf16.mxu0 0
  %7549 = vmatpush1.bf16.msra.mxu0 0
  %7550 = vmatprep.subr.bf16.mxu0 0
  %7551 = vmatpush1.bf16.msra.mxu0 0
  %7552 = vmatprep.subr.bf16.mxu0 0
  %7553 = vmatpush1.bf16.msra.mxu0 0
  %7554 = vmatprep.subr.bf16.mxu0 0
  %7555 = vmatpush1.bf16.msra.mxu0 0
  %7556 = vmatprep.subr.bf16.mxu0 0
  %7557 = vmatpush1.bf16.msra.mxu0 0
  %7558 = vmatprep.subr.bf16.mxu0 0
  %7559 = vmatpush1.bf16.msra.mxu0 0
  %7560 = vmatprep.subr.bf16.mxu0 0
  %7561 = vmatpush1.bf16.msra.mxu0 0
  %7562 = vmatprep.subr.bf16.mxu0 0
  %7563 = vmatpush1.bf16.msra.mxu0 0
  %7564 = vmatprep.mubr.bf16.mxu0 0
  %7565 = vmatmul.mubr.bf16.gmra.mrb[0].mxu0 %v6923
  %v7566 = vpop.f32.mrb[0].mxu0
  %v7567 = vadd.f32 %v7524, %v7566
  %v7568 = vpop.f32.mrb[0].mxu0
  %v7569 = vadd.f32 %v7526, %v7568
  %v7570 = vpop.f32.mrb[0].mxu0
  %v7571 = vadd.f32 %v7528, %v7570
  %v7572 = vpop.f32.mrb[0].mxu0
  %v7573 = vadd.f32 %v7530, %v7572
  %7574 = vdwg.mxu0
  %7575 = vmatprep.subr.bf16.mxu0 %v6345
  %7576 = vmatpush1.bf16.msra.mxu0 %v6344
  %7577 = vmatprep.subr.bf16.mxu0 %v6361
  %7578 = vmatpush1.bf16.msra.mxu0 %v6360
  %7579 = vmatprep.subr.bf16.mxu0 %v6377
  %7580 = vmatpush1.bf16.msra.mxu0 %v6376
  %7581 = vmatprep.subr.bf16.mxu0 %v6393
  %7582 = vmatpush1.bf16.msra.mxu0 %v6392
  %7583 = vmatprep.subr.bf16.mxu0 %v6409
  %7584 = vmatpush1.bf16.msra.mxu0 %v6408
  %7585 = vmatprep.subr.bf16.mxu0 %v6425
  %7586 = vmatpush1.bf16.msra.mxu0 %v6424
  %7587 = vmatprep.subr.bf16.mxu0 %v6441
  %7588 = vmatpush1.bf16.msra.mxu0 %v6440
  %7589 = vmatprep.subr.bf16.mxu0 %v6457
  %7590 = vmatpush1.bf16.msra.mxu0 %v6456
  %7591 = vmatprep.subr.bf16.mxu0 %v6473
  %7592 = vmatpush1.bf16.msra.mxu0 %v6472
  %7593 = vmatprep.subr.bf16.mxu0 %v6489
  %7594 = vmatpush1.bf16.msra.mxu0 %v6488
  %7595 = vmatprep.subr.bf16.mxu0 %v6505
  %7596 = vmatpush1.bf16.msra.mxu0 %v6504
  %7597 = vmatprep.subr.bf16.mxu0 %v6521
  %7598 = vmatpush1.bf16.msra.mxu0 %v6520
  %7599 = vmatprep.subr.bf16.mxu0 %v6537
  %7600 = vmatpush1.bf16.msra.mxu0 %v6536
  %7601 = vmatprep.subr.bf16.mxu0 %v6553
  %7602 = vmatpush1.bf16.msra.mxu0 %v6552
  %7603 = vmatprep.subr.bf16.mxu0 %v6569
  %7604 = vmatpush1.bf16.msra.mxu0 %v6568
  %7605 = vmatprep.subr.bf16.mxu0 %v6585
  %7606 = vmatpush1.bf16.msra.mxu0 %v6584
  %7607 = vmatprep.mubr.bf16.mxu0 %v5028
  %7608 = vmatmul.mubr.bf16.gmra.mrb[0].mxu0 %v5027
  %v7609 = vpop.f32.mrb[0].mxu0
  %v7610 = vadd.f32 %v5397, %v7609
  %v7611 = vpop.f32.mrb[0].mxu0
  %v7612 = vadd.f32 %v5401, %v7611
  %v7613 = vpop.f32.mrb[0].mxu0
  %v7614 = vadd.f32 %v5397, %v7613
  %v7615 = vpop.f32.mrb[0].mxu0
  %v7616 = vadd.f32 %v5401, %v7615
  %7617 = vdwg.mxu0
  %7618 = vmatprep.subr.bf16.mxu0 %v6601
  %7619 = vmatpush1.bf16.msra.mxu0 %v6600
  %7620 = vmatprep.subr.bf16.mxu0 %v6617
  %7621 = vmatpush1.bf16.msra.mxu0 %v6616
  %7622 = vmatprep.subr.bf16.mxu0 %v6971
  %7623 = vmatpush1.bf16.msra.mxu0 %v6968
  %7624 = vmatprep.subr.bf16.mxu0 0
  %7625 = vmatpush1.bf16.msra.mxu0 0
  %7626 = vmatprep.subr.bf16.mxu0 0
  %7627 = vmatpush1.bf16.msra.mxu0 0
  %7628 = vmatprep.subr.bf16.mxu0 0
  %7629 = vmatpush1.bf16.msra.mxu0 0
  %7630 = vmatprep.subr.bf16.mxu0 0
  %7631 = vmatpush1.bf16.msra.mxu0 0
  %7632 = vmatprep.subr.bf16.mxu0 0
  %7633 = vmatpush1.bf16.msra.mxu0 0
  %7634 = vmatprep.subr.bf16.mxu0 0
  %7635 = vmatpush1.bf16.msra.mxu0 0
  %7636 = vmatprep.subr.bf16.mxu0 0
  %7637 = vmatpush1.bf16.msra.mxu0 0
  %7638 = vmatprep.subr.bf16.mxu0 0
  %7639 = vmatpush1.bf16.msra.mxu0 0
  %7640 = vmatprep.subr.bf16.mxu0 0
  %7641 = vmatpush1.bf16.msra.mxu0 0
  %7642 = vmatprep.subr.bf16.mxu0 0
  %7643 = vmatpush1.bf16.msra.mxu0 0
  %7644 = vmatprep.subr.bf16.mxu0 0
  %7645 = vmatpush1.bf16.msra.mxu0 0
  %7646 = vmatprep.subr.bf16.mxu0 0
  %7647 = vmatpush1.bf16.msra.mxu0 0
  %7648 = vmatprep.subr.bf16.mxu0 0
  %7649 = vmatpush1.bf16.msra.mxu0 0
  %7650 = vmatprep.mubr.bf16.mxu0 0
  %7651 = vmatmul.mubr.bf16.gmra.mrb[0].mxu0 %v6923
  %v7652 = vpop.f32.mrb[0].mxu0
  %v7653 = vadd.f32 %v7610, %v7652
  %v7654 = vpop.f32.mrb[0].mxu0
  %v7655 = vadd.f32 %v7612, %v7654
  %v7656 = vpop.f32.mrb[0].mxu0
  %v7657 = vadd.f32 %v7614, %v7656
  %v7658 = vpop.f32.mrb[0].mxu0
  %v7659 = vadd.f32 %v7616, %v7658
  %7660 = vdwg.mxu0
  %v7661 = vmax.f32 %v7051, 0.0
  %v7662 = vmax.f32 %v7053, 0.0
  %v7663 = vmax.f32 %v7137, 0.0
  %v7664 = vmax.f32 %v7139, 0.0
  %v7665 = vmax.f32 %v7223, 0.0
  %v7666 = vmax.f32 %v7225, 0.0
  %v7667 = vmax.f32 %v7309, 0.0
  %v7668 = vmax.f32 %v7311, 0.0
  %v7669 = vmax.f32 %v7395, 0.0
  %v7670 = vmax.f32 %v7397, 0.0
  %v7671 = vmax.f32 %v7481, 0.0
  %v7672 = vmax.f32 %v7483, 0.0
  %v7673 = vmax.f32 %v7567, 0.0
  %v7674 = vmax.f32 %v7569, 0.0
  %v7675 = vmax.f32 %v7653, 0.0
  %v7676 = vmax.f32 %v7655, 0.0
  %v7677 = vmax.f32 %v7055, 0.0
  %v7678 = vmax.f32 %v7057, 0.0
  %v7679 = vmax.f32 %v7141, 0.0
  %v7680 = vmax.f32 %v7143, 0.0
  %v7681 = vmax.f32 %v7227, 0.0
  %v7682 = vmax.f32 %v7229, 0.0
  %v7683 = vmax.f32 %v7313, 0.0
  %v7684 = vmax.f32 %v7315, 0.0
  %v7685 = vmax.f32 %v7399, 0.0
  %v7686 = vmax.f32 %v7401, 0.0
  %v7687 = vmax.f32 %v7485, 0.0
  %v7688 = vmax.f32 %v7487, 0.0
  %v7689 = vmax.f32 %v7571, 0.0
  %v7690 = vmax.f32 %v7573, 0.0
  %v7691 = vmax.f32 %v7657, 0.0
  %v7692 = vmax.f32 %v7659, 0.0
  %v7693 = vpack.c.bf16 %v7677, %v7661
  %v7694 = vpack.c.bf16 %v7678, %v7662
  %v7695 = vpack.c.bf16 %v7679, %v7663
  %v7696 = vpack.c.bf16 %v7680, %v7664
  %v7697 = vpack.c.bf16 %v7681, %v7665
  %v7698 = vpack.c.bf16 %v7682, %v7666
  %v7699 = vpack.c.bf16 %v7683, %v7667
  %v7700 = vpack.c.bf16 %v7684, %v7668
  %v7701 = vpack.c.bf16 %v7685, %v7669
  %v7702 = vpack.c.bf16 %v7686, %v7670
  %v7703 = vpack.c.bf16 %v7687, %v7671
  %v7704 = vpack.c.bf16 %v7688, %v7672
  %v7705 = vpack.c.bf16 %v7689, %v7673
  %v7706 = vpack.c.bf16 %v7690, %v7674
  %v7707 = vpack.c.bf16 %v7691, %v7675
  %v7708 = vpack.c.bf16 %v7692, %v7676
  %v7709 = vld [vmem:[%s19] sm:$0xff]
  %v7710 = vld [vmem:[%s19 + $0x8] sm:$0xf]
  %v7711 = vld [vmem:[%s19 + $0xc] sm:$0xff]
  %v7712 = vld [vmem:[%s19 + $0x14] sm:$0xf]
  %v7713 = vld [vmem:[%s19 + $0x18] sm:$0xff]
  %v7714 = vld [vmem:[%s19 + $0x20] sm:$0xf]
  %v7715 = vld [vmem:[%s19 + $0x24] sm:$0xff]
  %v7716 = vld [vmem:[%s19 + $0x2c] sm:$0xf]
  %v7717 = vld [vmem:[%s19 + $0x30] sm:$0xff]
  %v7718 = vld [vmem:[%s19 + $0x38] sm:$0xf]
  %v7719 = vld [vmem:[%s19 + $0x3c] sm:$0xff]
  %v7720 = vld [vmem:[%s19 + $0x44] sm:$0xf]
  %v7721 = vld [vmem:[%s19 + $0x48] sm:$0xff]
  %v7722 = vld [vmem:[%s19 + $0x50] sm:$0xf]
  %v7723 = vld [vmem:[%s19 + $0x54] sm:$0xff]
  %v7724 = vld [vmem:[%s19 + $0x5c] sm:$0xf]
  %v7725 = vld [vmem:[%s19 + $0x60] sm:$0xff]
  %v7726 = vld [vmem:[%s19 + $0x68] sm:$0xf]
  %v7727 = vld [vmem:[%s19 + $0x6c] sm:$0xff]
  %v7728 = vld [vmem:[%s19 + $0x74] sm:$0xf]
  %v7729 = vld [vmem:[%s19 + $0x78] sm:$0xff]
  %v7730 = vld [vmem:[%s19 + $0x80] sm:$0xf]
  %v7731 = vld [vmem:[%s19 + $0x84] sm:$0xff]
  %v7732 = vld [vmem:[%s19 + $0x8c] sm:$0xf]
  %v7733 = vld [vmem:[%s19 + $0x90] sm:$0xff]
  %v7734 = vld [vmem:[%s19 + $0x98] sm:$0xf]
  %v7735 = vld [vmem:[%s19 + $0x9c] sm:$0xff]
  %v7736 = vld [vmem:[%s19 + $0xa4] sm:$0xf]
  %v7737 = vld [vmem:[%s19 + $0xa8] sm:$0xff]
  %v7738 = vld [vmem:[%s19 + $0xb0] sm:$0xf]
  %v7739 = vld [vmem:[%s19 + $0xb4] sm:$0xff]
  %v7740 = vld [vmem:[%s19 + $0xbc] sm:$0xf]
  %v7741 = vld [vmem:[%s19 + $0xc0] sm:$0xff]
  %v7742 = vld [vmem:[%s19 + $0xc8] sm:$0xf]
  %v7743 = vld [vmem:[%s19 + $0xcc] sm:$0xff]
  %v7744 = vld [vmem:[%s19 + $0xd4] sm:$0xf]
  %v7745 = vld [vmem:[%s19 + $0xd8] sm:$0xff]
  %v7746 = vld [vmem:[%s19 + $0xe0] sm:$0xf]
  %v7747 = vld [vmem:[%s19 + $0xe4] sm:$0xff]
  %v7748 = vld [vmem:[%s19 + $0xec] sm:$0xf]
  %v7749 = vld [vmem:[%s19 + $0xf0] sm:$0xff]
  %v7750 = vld [vmem:[%s19 + $0xf8] sm:$0xf]
  %v7751 = vld [vmem:[%s19 + $0xfc] sm:$0xff]
  %v7752 = vld [vmem:[%s19 + $0x104] sm:$0xf]
  %v7753 = vld [vmem:[%s19 + $0x108] sm:$0xff]
  %v7754 = vld [vmem:[%s19 + $0x110] sm:$0xf]
  %v7755 = vld [vmem:[%s19 + $0x114] sm:$0xff]
  %v7756 = vld [vmem:[%s19 + $0x11c] sm:$0xf]
  %v7757 = vld [vmem:[%s19 + $0x120] sm:$0xff]
  %v7758 = vld [vmem:[%s19 + $0x128] sm:$0xf]
  %v7759 = vld [vmem:[%s19 + $0x12c] sm:$0xff]
  %v7760 = vld [vmem:[%s19 + $0x134] sm:$0xf]
  %v7761 = vld [vmem:[%s19 + $0x138] sm:$0xff]
  %v7762 = vld [vmem:[%s19 + $0x140] sm:$0xf]
  %v7763 = vld [vmem:[%s19 + $0x144] sm:$0xff]
  %v7764 = vld [vmem:[%s19 + $0x14c] sm:$0xf]
  %v7765 = vld [vmem:[%s19 + $0x150] sm:$0xff]
  %v7766 = vld [vmem:[%s19 + $0x158] sm:$0xf]
  %v7767 = vld [vmem:[%s19 + $0x15c] sm:$0xff]
  %v7768 = vld [vmem:[%s19 + $0x164] sm:$0xf]
  %v7769 = vld [vmem:[%s19 + $0x168] sm:$0xff]
  %v7770 = vld [vmem:[%s19 + $0x170] sm:$0xf]
  %v7771 = vld [vmem:[%s19 + $0x174] sm:$0xff]
  %v7772 = vld [vmem:[%s19 + $0x17c] sm:$0xf]
  %v7773 = vld [vmem:[%s19 + $0x180] sm:$0xff]
  %v7774 = vld [vmem:[%s19 + $0x188] sm:$0xf]
  %v7775 = vld [vmem:[%s19 + $0x18c] sm:$0xff]
  %v7776 = vld [vmem:[%s19 + $0x194] sm:$0xf]
  %v7777 = vld [vmem:[%s19 + $0x198] sm:$0xff]
  %v7778 = vld [vmem:[%s19 + $0x1a0] sm:$0xf]
  %v7779 = vld [vmem:[%s19 + $0x1a4] sm:$0xff]
  %v7780 = vld [vmem:[%s19 + $0x1ac] sm:$0xf]
  %v7781 = vld [vmem:[%s19 + $0x1b0] sm:$0xff]
  %v7782 = vld [vmem:[%s19 + $0x1b8] sm:$0xf]
  %v7783 = vld [vmem:[%s19 + $0x1bc] sm:$0xff]
  %v7784 = vld [vmem:[%s19 + $0x1c4] sm:$0xf]
  %v7785 = vld [vmem:[%s19 + $0x1c8] sm:$0xff]
  %v7786 = vld [vmem:[%s19 + $0x1d0] sm:$0xf]
  %v7787 = vld [vmem:[%s19 + $0x1d4] sm:$0xff]
  %v7788 = vld [vmem:[%s19 + $0x1dc] sm:$0xf]
  %v7789 = vld [vmem:[%s19 + $0x1e0] sm:$0xff]
  %v7790 = vld [vmem:[%s19 + $0x1e8] sm:$0xf]
  %v7791 = vld [vmem:[%s19 + $0x1ec] sm:$0xff]
  %v7792 = vld [vmem:[%s19 + $0x1f4] sm:$0xf]
  %v7793 = vld [vmem:[%s19 + $0x1f8] sm:$0xff]
  %v7794 = vld [vmem:[%s19 + $0x200] sm:$0xf]
  %v7795 = vld [vmem:[%s19 + $0x204] sm:$0xff]
  %v7796 = vld [vmem:[%s19 + $0x20c] sm:$0xf]
  %v7797 = vld [vmem:[%s19 + $0x210] sm:$0xff]
  %v7798 = vld [vmem:[%s19 + $0x218] sm:$0xf]
  %v7799 = vld [vmem:[%s19 + $0x21c] sm:$0xff]
  %v7800 = vld [vmem:[%s19 + $0x224] sm:$0xf]
  %v7801 = vld [vmem:[%s19 + $0x228] sm:$0xff]
  %v7802 = vld [vmem:[%s19 + $0x230] sm:$0xf]
  %v7803 = vld [vmem:[%s19 + $0x234] sm:$0xff]
  %v7804 = vld [vmem:[%s19 + $0x23c] sm:$0xf]
  %v7805 = vld [vmem:[%s19 + $0x240] sm:$0xff]
  %v7806 = vld [vmem:[%s19 + $0x248] sm:$0xf]
  %v7807 = vld [vmem:[%s19 + $0x24c] sm:$0xff]
  %v7808 = vld [vmem:[%s19 + $0x254] sm:$0xf]
  %v7809 = vld [vmem:[%s19 + $0x258] sm:$0xff]
  %v7810 = vld [vmem:[%s19 + $0x260] sm:$0xf]
  %v7811 = vld [vmem:[%s19 + $0x264] sm:$0xff]
  %v7812 = vld [vmem:[%s19 + $0x26c] sm:$0xf]
  %v7813 = vld [vmem:[%s19 + $0x270] sm:$0xff]
  %v7814 = vld [vmem:[%s19 + $0x278] sm:$0xf]
  %v7815 = vld [vmem:[%s19 + $0x27c] sm:$0xff]
  %v7816 = vld [vmem:[%s19 + $0x284] sm:$0xf]
  %v7817 = vld [vmem:[%s19 + $0x288] sm:$0xff]
  %v7818 = vld [vmem:[%s19 + $0x290] sm:$0xf]
  %v7819 = vld [vmem:[%s19 + $0x294] sm:$0xff]
  %v7820 = vld [vmem:[%s19 + $0x29c] sm:$0xf]
  %v7821 = vld [vmem:[%s19 + $0x2a0] sm:$0xff]
  %v7822 = vld [vmem:[%s19 + $0x2a8] sm:$0xf]
  %v7823 = vld [vmem:[%s19 + $0x2ac] sm:$0xff]
  %v7824 = vld [vmem:[%s19 + $0x2b4] sm:$0xf]
  %v7825 = vld [vmem:[%s19 + $0x2b8] sm:$0xff]
  %v7826 = vld [vmem:[%s19 + $0x2c0] sm:$0xf]
  %v7827 = vld [vmem:[%s19 + $0x2c4] sm:$0xff]
  %v7828 = vld [vmem:[%s19 + $0x2cc] sm:$0xf]
  %v7829 = vld [vmem:[%s19 + $0x2d0] sm:$0xff]
  %v7830 = vld [vmem:[%s19 + $0x2d8] sm:$0xf]
  %v7831 = vld [vmem:[%s19 + $0x2dc] sm:$0xff]
  %v7832 = vld [vmem:[%s19 + $0x2e4] sm:$0xf]
  %v7833 = vld [vmem:[%s19 + $0x2e8] sm:$0xff]
  %v7834 = vld [vmem:[%s19 + $0x2f0] sm:$0xf]
  %v7835 = vld [vmem:[%s19 + $0x2f4] sm:$0xff]
  %v7836 = vld [vmem:[%s19 + $0x2fc] sm:$0xf]
  %v7837 = vld [vmem:[%s19 + $0x300] sm:$0xff]
  %v7838 = vld [vmem:[%s19 + $0x308] sm:$0xf]
  %v7839 = vld [vmem:[%s19 + $0x30c] sm:$0xff]
  %v7840 = vld [vmem:[%s19 + $0x314] sm:$0xf]
  %v7841 = vld [vmem:[%s19 + $0x318] sm:$0xff]
  %v7842 = vld [vmem:[%s19 + $0x320] sm:$0xf]
  %v7843 = vld [vmem:[%s19 + $0x324] sm:$0xff]
  %v7844 = vld [vmem:[%s19 + $0x32c] sm:$0xf]
  %v7845 = vld [vmem:[%s19 + $0x330] sm:$0xff]
  %v7846 = vld [vmem:[%s19 + $0x338] sm:$0xf]
  %v7847 = vld [vmem:[%s19 + $0x33c] sm:$0xff]
  %v7848 = vld [vmem:[%s19 + $0x344] sm:$0xf]
  %v7849 = vld [vmem:[%s19 + $0x348] sm:$0xff]
  %v7850 = vld [vmem:[%s19 + $0x350] sm:$0xf]
  %v7851 = vld [vmem:[%s19 + $0x354] sm:$0xff]
  %v7852 = vld [vmem:[%s19 + $0x35c] sm:$0xf]
  %v7853 = vld [vmem:[%s19 + $0x360] sm:$0xff]
  %v7854 = vld [vmem:[%s19 + $0x368] sm:$0xf]
  %v7855 = vld [vmem:[%s19 + $0x36c] sm:$0xff]
  %v7856 = vld [vmem:[%s19 + $0x374] sm:$0xf]
  %v7857 = vld [vmem:[%s19 + $0x378] sm:$0xff]
  %v7858 = vld [vmem:[%s19 + $0x380] sm:$0xf]
  %v7859 = vld [vmem:[%s19 + $0x384] sm:$0xff]
  %v7860 = vld [vmem:[%s19 + $0x38c] sm:$0xf]
  %v7861 = vld [vmem:[%s19 + $0x390] sm:$0xff]
  %v7862 = vld [vmem:[%s19 + $0x398] sm:$0xf]
  %v7863 = vld [vmem:[%s19 + $0x39c] sm:$0xff]
  %v7864 = vld [vmem:[%s19 + $0x3a4] sm:$0xf]
  %v7865 = vld [vmem:[%s19 + $0x3a8] sm:$0xff]
  %v7866 = vld [vmem:[%s19 + $0x3b0] sm:$0xf]
  %v7867 = vld [vmem:[%s19 + $0x3b4] sm:$0xff]
  %v7868 = vld [vmem:[%s19 + $0x3bc] sm:$0xf]
  %v7869 = vld [vmem:[%s19 + $0x3c0] sm:$0xff]
  %v7870 = vld [vmem:[%s19 + $0x3c8] sm:$0xf]
  %v7871 = vld [vmem:[%s19 + $0x3cc] sm:$0xff]
  %v7872 = vld [vmem:[%s19 + $0x3d4] sm:$0xf]
  %v7873 = vld [vmem:[%s19 + $0x3d8] sm:$0xff]
  %v7874 = vld [vmem:[%s19 + $0x3e0] sm:$0xf]
  %v7875 = vld [vmem:[%s19 + $0x3e4] sm:$0xff]
  %v7876 = vld [vmem:[%s19 + $0x3ec] sm:$0xf]
  %v7877 = vld [vmem:[%s19 + $0x3f0] sm:$0xff]
  %v7878 = vld [vmem:[%s19 + $0x3f8] sm:$0xf]
  %v7879 = vld [vmem:[%s19 + $0x3fc] sm:$0xff]
  %v7880 = vld [vmem:[%s19 + $0x404] sm:$0xf]
  %v7881 = vld [vmem:[%s19 + $0x408] sm:$0xff]
  %v7882 = vld [vmem:[%s19 + $0x410] sm:$0xf]
  %v7883 = vld [vmem:[%s19 + $0x414] sm:$0xff]
  %v7884 = vld [vmem:[%s19 + $0x41c] sm:$0xf]
  %v7885 = vld [vmem:[%s19 + $0x420] sm:$0xff]
  %v7886 = vld [vmem:[%s19 + $0x428] sm:$0xf]
  %v7887 = vld [vmem:[%s19 + $0x42c] sm:$0xff]
  %v7888 = vld [vmem:[%s19 + $0x434] sm:$0xf]
  %v7889 = vld [vmem:[%s19 + $0x438] sm:$0xff]
  %v7890 = vld [vmem:[%s19 + $0x440] sm:$0xf]
  %v7891 = vld [vmem:[%s19 + $0x444] sm:$0xff]
  %v7892 = vld [vmem:[%s19 + $0x44c] sm:$0xf]
  %v7893 = vld [vmem:[%s19 + $0x450] sm:$0xff]
  %v7894 = vld [vmem:[%s19 + $0x458] sm:$0xf]
  %v7895 = vld [vmem:[%s19 + $0x45c] sm:$0xff]
  %v7896 = vld [vmem:[%s19 + $0x464] sm:$0xf]
  %v7897 = vld [vmem:[%s19 + $0x468] sm:$0xff]
  %v7898 = vld [vmem:[%s19 + $0x470] sm:$0xf]
  %v7899 = vld [vmem:[%s19 + $0x474] sm:$0xff]
  %v7900 = vld [vmem:[%s19 + $0x47c] sm:$0xf]
  %v7901 = vld [vmem:[%s19 + $0x480] sm:$0xff]
  %v7902 = vld [vmem:[%s19 + $0x488] sm:$0xf]
  %v7903 = vld [vmem:[%s19 + $0x48c] sm:$0xff]
  %v7904 = vld [vmem:[%s19 + $0x494] sm:$0xf]
  %v7905 = vld [vmem:[%s19 + $0x498] sm:$0xff]
  %v7906 = vld [vmem:[%s19 + $0x4a0] sm:$0xf]
  %v7907 = vld [vmem:[%s19 + $0x4a4] sm:$0xff]
  %v7908 = vld [vmem:[%s19 + $0x4ac] sm:$0xf]
  %v7909 = vld [vmem:[%s19 + $0x4b0] sm:$0xff]
  %v7910 = vld [vmem:[%s19 + $0x4b8] sm:$0xf]
  %v7911 = vld [vmem:[%s19 + $0x4bc] sm:$0xff]
  %v7912 = vld [vmem:[%s19 + $0x4c4] sm:$0xf]
  %v7913 = vld [vmem:[%s19 + $0x4c8] sm:$0xff]
  %v7914 = vld [vmem:[%s19 + $0x4d0] sm:$0xf]
  %v7915 = vld [vmem:[%s19 + $0x4d4] sm:$0xff]
  %v7916 = vld [vmem:[%s19 + $0x4dc] sm:$0xf]
  %v7917 = vld [vmem:[%s19 + $0x4e0] sm:$0xff]
  %v7918 = vld [vmem:[%s19 + $0x4e8] sm:$0xf]
  %v7919 = vld [vmem:[%s19 + $0x4ec] sm:$0xff]
  %v7920 = vld [vmem:[%s19 + $0x4f4] sm:$0xf]
  %v7921 = vld [vmem:[%s19 + $0x4f8] sm:$0xff]
  %v7922 = vld [vmem:[%s19 + $0x500] sm:$0xf]
  %v7923 = vld [vmem:[%s19 + $0x504] sm:$0xff]
  %v7924 = vld [vmem:[%s19 + $0x50c] sm:$0xf]
  %v7925 = vld [vmem:[%s19 + $0x510] sm:$0xff]
  %v7926 = vld [vmem:[%s19 + $0x518] sm:$0xf]
  %v7927 = vld [vmem:[%s19 + $0x51c] sm:$0xff]
  %v7928 = vld [vmem:[%s19 + $0x524] sm:$0xf]
  %v7929 = vld [vmem:[%s19 + $0x528] sm:$0xff]
  %v7930 = vld [vmem:[%s19 + $0x530] sm:$0xf]
  %v7931 = vld [vmem:[%s19 + $0x534] sm:$0xff]
  %v7932 = vld [vmem:[%s19 + $0x53c] sm:$0xf]
  %v7933 = vld [vmem:[%s19 + $0x540] sm:$0xff]
  %v7934 = vld [vmem:[%s19 + $0x548] sm:$0xf]
  %v7935 = vld [vmem:[%s19 + $0x54c] sm:$0xff]
  %v7936 = vld [vmem:[%s19 + $0x554] sm:$0xf]
  %v7937 = vld [vmem:[%s19 + $0x558] sm:$0xff]
  %v7938 = vld [vmem:[%s19 + $0x560] sm:$0xf]
  %v7939 = vld [vmem:[%s19 + $0x564] sm:$0xff]
  %v7940 = vld [vmem:[%s19 + $0x56c] sm:$0xf]
  %v7941 = vld [vmem:[%s19 + $0x570] sm:$0xff]
  %v7942 = vld [vmem:[%s19 + $0x578] sm:$0xf]
  %v7943 = vld [vmem:[%s19 + $0x57c] sm:$0xff]
  %v7944 = vld [vmem:[%s19 + $0x584] sm:$0xf]
  %v7945 = vld [vmem:[%s19 + $0x588] sm:$0xff]
  %v7946 = vld [vmem:[%s19 + $0x590] sm:$0xf]
  %v7947 = vld [vmem:[%s19 + $0x594] sm:$0xff]
  %v7948 = vld [vmem:[%s19 + $0x59c] sm:$0xf]
  %v7949 = vld [vmem:[%s19 + $0x5a0] sm:$0xff]
  %v7950 = vld [vmem:[%s19 + $0x5a8] sm:$0xf]
  %v7951 = vld [vmem:[%s19 + $0x5ac] sm:$0xff]
  %v7952 = vld [vmem:[%s19 + $0x5b4] sm:$0xf]
  %v7953 = vld [vmem:[%s19 + $0x5b8] sm:$0xff]
  %v7954 = vld [vmem:[%s19 + $0x5c0] sm:$0xf]
  %v7955 = vld [vmem:[%s19 + $0x5c4] sm:$0xff]
  %v7956 = vld [vmem:[%s19 + $0x5cc] sm:$0xf]
  %v7957 = vld [vmem:[%s19 + $0x5d0] sm:$0xff]
  %v7958 = vld [vmem:[%s19 + $0x5d8] sm:$0xf]
  %v7959 = vld [vmem:[%s19 + $0x5dc] sm:$0xff]
  %v7960 = vld [vmem:[%s19 + $0x5e4] sm:$0xf]
  %v7961 = vld [vmem:[%s19 + $0x5e8] sm:$0xff]
  %v7962 = vld [vmem:[%s19 + $0x5f0] sm:$0xf]
  %v7963 = vld [vmem:[%s19 + $0x5f4] sm:$0xff]
  %v7964 = vld [vmem:[%s19 + $0x5fc] sm:$0xf]
  %v7965 = vld [vmem:[%s19 + $0x600] sm:$0xff]
  %v7966 = vld [vmem:[%s19 + $0x608] sm:$0xf]
  %v7967 = vld [vmem:[%s19 + $0x60c] sm:$0xff]
  %v7968 = vld [vmem:[%s19 + $0x614] sm:$0xf]
  %v7969 = vld [vmem:[%s19 + $0x618] sm:$0xff]
  %v7970 = vld [vmem:[%s19 + $0x620] sm:$0xf]
  %v7971 = vld [vmem:[%s19 + $0x624] sm:$0xff]
  %v7972 = vld [vmem:[%s19 + $0x62c] sm:$0xf]
  %v7973 = vld [vmem:[%s19 + $0x630] sm:$0xff]
  %v7974 = vld [vmem:[%s19 + $0x638] sm:$0xf]
  %v7975 = vld [vmem:[%s19 + $0x63c] sm:$0xff]
  %v7976 = vld [vmem:[%s19 + $0x644] sm:$0xf]
  %v7977 = vld [vmem:[%s19 + $0x648] sm:$0xff]
  %v7978 = vld [vmem:[%s19 + $0x650] sm:$0xf]
  %v7979 = vld [vmem:[%s19 + $0x654] sm:$0xff]
  %v7980 = vld [vmem:[%s19 + $0x65c] sm:$0xf]
  %v7981 = vld [vmem:[%s19 + $0x660] sm:$0xff]
  %v7982 = vld [vmem:[%s19 + $0x668] sm:$0xf]
  %v7983 = vld [vmem:[%s19 + $0x66c] sm:$0xff]
  %v7984 = vld [vmem:[%s19 + $0x674] sm:$0xf]
  %v7985 = vld [vmem:[%s19 + $0x678] sm:$0xff]
  %v7986 = vld [vmem:[%s19 + $0x680] sm:$0xf]
  %v7987 = vld [vmem:[%s19 + $0x684] sm:$0xff]
  %v7988 = vld [vmem:[%s19 + $0x68c] sm:$0xf]
  %v7989 = vld [vmem:[%s19 + $0x690] sm:$0xff]
  %v7990 = vld [vmem:[%s19 + $0x698] sm:$0xf]
  %v7991 = vld [vmem:[%s19 + $0x69c] sm:$0xff]
  %v7992 = vld [vmem:[%s19 + $0x6a4] sm:$0xf]
  %v7993 = vld [vmem:[%s19 + $0x6a8] sm:$0xff]
  %v7994 = vld [vmem:[%s19 + $0x6b0] sm:$0xf]
  %v7995 = vld [vmem:[%s19 + $0x6b4] sm:$0xff]
  %v7996 = vld [vmem:[%s19 + $0x6bc] sm:$0xf]
  %v7997 = vld [vmem:[%s19 + $0x6c0] sm:$0xff]
  %v7998 = vld [vmem:[%s19 + $0x6c8] sm:$0xf]
  %v7999 = vld [vmem:[%s19 + $0x6cc] sm:$0xff]
  %v8000 = vld [vmem:[%s19 + $0x6d4] sm:$0xf]
  %v8001 = vld [vmem:[%s19 + $0x6d8] sm:$0xff]
  %v8002 = vld [vmem:[%s19 + $0x6e0] sm:$0xf]
  %v8003 = vld [vmem:[%s19 + $0x6e4] sm:$0xff]
  %v8004 = vld [vmem:[%s19 + $0x6ec] sm:$0xf]
  %v8005 = vld [vmem:[%s19 + $0x6f0] sm:$0xff]
  %v8006 = vld [vmem:[%s19 + $0x6f8] sm:$0xf]
  %v8007 = vld [vmem:[%s19 + $0x6fc] sm:$0xff]
  %v8008 = vld [vmem:[%s19 + $0x704] sm:$0xf]
  %v8009 = vld [vmem:[%s19 + $0x708] sm:$0xff]
  %v8010 = vld [vmem:[%s19 + $0x710] sm:$0xf]
  %v8011 = vld [vmem:[%s19 + $0x714] sm:$0xff]
  %v8012 = vld [vmem:[%s19 + $0x71c] sm:$0xf]
  %v8013 = vld [vmem:[%s19 + $0x720] sm:$0xff]
  %v8014 = vld [vmem:[%s19 + $0x728] sm:$0xf]
  %v8015 = vld [vmem:[%s19 + $0x72c] sm:$0xff]
  %v8016 = vld [vmem:[%s19 + $0x734] sm:$0xf]
  %v8017 = vld [vmem:[%s19 + $0x738] sm:$0xff]
  %v8018 = vld [vmem:[%s19 + $0x740] sm:$0xf]
  %v8019 = vld [vmem:[%s19 + $0x744] sm:$0xff]
  %v8020 = vld [vmem:[%s19 + $0x74c] sm:$0xf]
  %v8021 = vld [vmem:[%s19 + $0x750] sm:$0xff]
  %v8022 = vld [vmem:[%s19 + $0x758] sm:$0xf]
  %v8023 = vld [vmem:[%s19 + $0x75c] sm:$0xff]
  %v8024 = vld [vmem:[%s19 + $0x764] sm:$0xf]
  %v8025 = vld [vmem:[%s19 + $0x768] sm:$0xff]
  %v8026 = vld [vmem:[%s19 + $0x770] sm:$0xf]
  %v8027 = vld [vmem:[%s19 + $0x774] sm:$0xff]
  %v8028 = vld [vmem:[%s19 + $0x77c] sm:$0xf]
  %v8029 = vld [vmem:[%s19 + $0x780] sm:$0xff]
  %v8030 = vld [vmem:[%s19 + $0x788] sm:$0xf]
  %v8031 = vld [vmem:[%s19 + $0x78c] sm:$0xff]
  %v8032 = vld [vmem:[%s19 + $0x794] sm:$0xf]
  %v8033 = vld [vmem:[%s19 + $0x798] sm:$0xff]
  %v8034 = vld [vmem:[%s19 + $0x7a0] sm:$0xf]
  %v8035 = vld [vmem:[%s19 + $0x7a4] sm:$0xff]
  %v8036 = vld [vmem:[%s19 + $0x7ac] sm:$0xf]
  %v8037 = vld [vmem:[%s19 + $0x7b0] sm:$0xff]
  %v8038 = vld [vmem:[%s19 + $0x7b8] sm:$0xf]
  %v8039 = vld [vmem:[%s19 + $0x7bc] sm:$0xff]
  %v8040 = vld [vmem:[%s19 + $0x7c4] sm:$0xf]
  %v8041 = vld [vmem:[%s19 + $0x7c8] sm:$0xff]
  %v8042 = vld [vmem:[%s19 + $0x7d0] sm:$0xf]
  %v8043 = vld [vmem:[%s19 + $0x7d4] sm:$0xff]
  %v8044 = vld [vmem:[%s19 + $0x7dc] sm:$0xf]
  %v8045 = vld [vmem:[%s19 + $0x7e0] sm:$0xff]
  %v8046 = vld [vmem:[%s19 + $0x7e8] sm:$0xf]
  %v8047 = vld [vmem:[%s19 + $0x7ec] sm:$0xff]
  %v8048 = vld [vmem:[%s19 + $0x7f4] sm:$0xf]
  %v8049 = vld [vmem:[%s19 + $0x7f8] sm:$0xff]
  %v8050 = vld [vmem:[%s19 + $0x800] sm:$0xf]
  %v8051 = vld [vmem:[%s19 + $0x804] sm:$0xff]
  %v8052 = vld [vmem:[%s19 + $0x80c] sm:$0xf]
  %v8053 = vld [vmem:[%s19 + $0x810] sm:$0xff]
  %v8054 = vld [vmem:[%s19 + $0x818] sm:$0xf]
  %v8055 = vld [vmem:[%s19 + $0x81c] sm:$0xff]
  %v8056 = vld [vmem:[%s19 + $0x824] sm:$0xf]
  %v8057 = vld [vmem:[%s19 + $0x828] sm:$0xff]
  %v8058 = vld [vmem:[%s19 + $0x830] sm:$0xf]
  %v8059 = vld [vmem:[%s19 + $0x834] sm:$0xff]
  %v8060 = vld [vmem:[%s19 + $0x83c] sm:$0xf]
  %v8061 = vld [vmem:[%s19 + $0x840] sm:$0xff]
  %v8062 = vld [vmem:[%s19 + $0x848] sm:$0xf]
  %v8063 = vld [vmem:[%s19 + $0x84c] sm:$0xff]
  %v8064 = vld [vmem:[%s19 + $0x854] sm:$0xf]
  %v8065 = vld [vmem:[%s19 + $0x858] sm:$0xff]
  %v8066 = vld [vmem:[%s19 + $0x860] sm:$0xf]
  %v8067 = vld [vmem:[%s19 + $0x864] sm:$0xff]
  %v8068 = vld [vmem:[%s19 + $0x86c] sm:$0xf]
  %v8069 = vld [vmem:[%s19 + $0x870] sm:$0xff]
  %v8070 = vld [vmem:[%s19 + $0x878] sm:$0xf]
  %v8071 = vld [vmem:[%s19 + $0x87c] sm:$0xff]
  %v8072 = vld [vmem:[%s19 + $0x884] sm:$0xf]
  %v8073 = vld [vmem:[%s19 + $0x888] sm:$0xff]
  %v8074 = vld [vmem:[%s19 + $0x890] sm:$0xf]
  %v8075 = vld [vmem:[%s19 + $0x894] sm:$0xff]
  %v8076 = vld [vmem:[%s19 + $0x89c] sm:$0xf]
  %v8077 = vld [vmem:[%s19 + $0x8a0] sm:$0xff]
  %v8078 = vld [vmem:[%s19 + $0x8a8] sm:$0xf]
  %v8079 = vld [vmem:[%s19 + $0x8ac] sm:$0xff]
  %v8080 = vld [vmem:[%s19 + $0x8b4] sm:$0xf]
  %v8081 = vld [vmem:[%s19 + $0x8b8] sm:$0xff]
  %v8082 = vld [vmem:[%s19 + $0x8c0] sm:$0xf]
  %v8083 = vld [vmem:[%s19 + $0x8c4] sm:$0xff]
  %v8084 = vld [vmem:[%s19 + $0x8cc] sm:$0xf]
  %v8085 = vld [vmem:[%s19 + $0x8d0] sm:$0xff]
  %v8086 = vld [vmem:[%s19 + $0x8d8] sm:$0xf]
  %v8087 = vld [vmem:[%s19 + $0x8dc] sm:$0xff]
  %v8088 = vld [vmem:[%s19 + $0x8e4] sm:$0xf]
  %v8089 = vld [vmem:[%s19 + $0x8e8] sm:$0xff]
  %v8090 = vld [vmem:[%s19 + $0x8f0] sm:$0xf]
  %v8091 = vld [vmem:[%s19 + $0x8f4] sm:$0xff]
  %v8092 = vld [vmem:[%s19 + $0x8fc] sm:$0xf]
  %v8093 = vld [vmem:[%s19 + $0x900] sm:$0xff]
  %v8094 = vld [vmem:[%s19 + $0x908] sm:$0xf]
  %v8095 = vld [vmem:[%s19 + $0x90c] sm:$0xff]
  %v8096 = vld [vmem:[%s19 + $0x914] sm:$0xf]
  %v8097 = vld [vmem:[%s19 + $0x918] sm:$0xff]
  %v8098 = vld [vmem:[%s19 + $0x920] sm:$0xf]
  %v8099 = vld [vmem:[%s19 + $0x924] sm:$0xff]
  %v8100 = vld [vmem:[%s19 + $0x92c] sm:$0xf]
  %v8101 = vld [vmem:[%s19 + $0x930] sm:$0xff]
  %v8102 = vld [vmem:[%s19 + $0x938] sm:$0xf]
  %v8103 = vld [vmem:[%s19 + $0x93c] sm:$0xff]
  %v8104 = vld [vmem:[%s19 + $0x944] sm:$0xf]
  %v8105 = vld [vmem:[%s19 + $0x948] sm:$0xff]
  %v8106 = vld [vmem:[%s19 + $0x950] sm:$0xf]
  %v8107 = vld [vmem:[%s19 + $0x954] sm:$0xff]
  %v8108 = vld [vmem:[%s19 + $0x95c] sm:$0xf]
  %v8109 = vld [vmem:[%s19 + $0x960] sm:$0xff]
  %v8110 = vld [vmem:[%s19 + $0x968] sm:$0xf]
  %v8111 = vld [vmem:[%s19 + $0x96c] sm:$0xff]
  %v8112 = vld [vmem:[%s19 + $0x974] sm:$0xf]
  %v8113 = vld [vmem:[%s19 + $0x978] sm:$0xff]
  %v8114 = vld [vmem:[%s19 + $0x980] sm:$0xf]
  %v8115 = vld [vmem:[%s19 + $0x984] sm:$0xff]
  %v8116 = vld [vmem:[%s19 + $0x98c] sm:$0xf]
  %v8117 = vld [vmem:[%s19 + $0x990] sm:$0xff]
  %v8118 = vld [vmem:[%s19 + $0x998] sm:$0xf]
  %v8119 = vld [vmem:[%s19 + $0x99c] sm:$0xff]
  %v8120 = vld [vmem:[%s19 + $0x9a4] sm:$0xf]
  %v8121 = vld [vmem:[%s19 + $0x9a8] sm:$0xff]
  %v8122 = vld [vmem:[%s19 + $0x9b0] sm:$0xf]
  %v8123 = vld [vmem:[%s19 + $0x9b4] sm:$0xff]
  %v8124 = vld [vmem:[%s19 + $0x9bc] sm:$0xf]
  %v8125 = vld [vmem:[%s19 + $0x9c0] sm:$0xff]
  %v8126 = vld [vmem:[%s19 + $0x9c8] sm:$0xf]
  %v8127 = vld [vmem:[%s19 + $0x9cc] sm:$0xff]
  %v8128 = vld [vmem:[%s19 + $0x9d4] sm:$0xf]
  %v8129 = vld [vmem:[%s19 + $0x9d8] sm:$0xff]
  %v8130 = vld [vmem:[%s19 + $0x9e0] sm:$0xf]
  %v8131 = vld [vmem:[%s19 + $0x9e4] sm:$0xff]
  %v8132 = vld [vmem:[%s19 + $0x9ec] sm:$0xf]
  %v8133 = vld [vmem:[%s19 + $0x9f0] sm:$0xff]
  %v8134 = vld [vmem:[%s19 + $0x9f8] sm:$0xf]
  %v8135 = vld [vmem:[%s19 + $0x9fc] sm:$0xff]
  %v8136 = vld [vmem:[%s19 + $0xa04] sm:$0xf]
  %v8137 = vld [vmem:[%s19 + $0xa08] sm:$0xff]
  %v8138 = vld [vmem:[%s19 + $0xa10] sm:$0xf]
  %v8139 = vld [vmem:[%s19 + $0xa14] sm:$0xff]
  %v8140 = vld [vmem:[%s19 + $0xa1c] sm:$0xf]
  %v8141 = vld [vmem:[%s19 + $0xa20] sm:$0xff]
  %v8142 = vld [vmem:[%s19 + $0xa28] sm:$0xf]
  %v8143 = vld [vmem:[%s19 + $0xa2c] sm:$0xff]
  %v8144 = vld [vmem:[%s19 + $0xa34] sm:$0xf]
  %v8145 = vld [vmem:[%s19 + $0xa38] sm:$0xff]
  %v8146 = vld [vmem:[%s19 + $0xa40] sm:$0xf]
  %v8147 = vld [vmem:[%s19 + $0xa44] sm:$0xff]
  %v8148 = vld [vmem:[%s19 + $0xa4c] sm:$0xf]
  %v8149 = vld [vmem:[%s19 + $0xa50] sm:$0xff]
  %v8150 = vld [vmem:[%s19 + $0xa58] sm:$0xf]
  %v8151 = vld [vmem:[%s19 + $0xa5c] sm:$0xff]
  %v8152 = vld [vmem:[%s19 + $0xa64] sm:$0xf]
  %v8153 = vld [vmem:[%s19 + $0xa68] sm:$0xff]
  %v8154 = vld [vmem:[%s19 + $0xa70] sm:$0xf]
  %v8155 = vld [vmem:[%s19 + $0xa74] sm:$0xff]
  %v8156 = vld [vmem:[%s19 + $0xa7c] sm:$0xf]
  %v8157 = vld [vmem:[%s19 + $0xa80] sm:$0xff]
  %v8158 = vld [vmem:[%s19 + $0xa88] sm:$0xf]
  %v8159 = vld [vmem:[%s19 + $0xa8c] sm:$0xff]
  %v8160 = vld [vmem:[%s19 + $0xa94] sm:$0xf]
  %v8161 = vld [vmem:[%s19 + $0xa98] sm:$0xff]
  %v8162 = vld [vmem:[%s19 + $0xaa0] sm:$0xf]
  %v8163 = vld [vmem:[%s19 + $0xaa4] sm:$0xff]
  %v8164 = vld [vmem:[%s19 + $0xaac] sm:$0xf]
  %v8165 = vld [vmem:[%s19 + $0xab0] sm:$0xff]
  %v8166 = vld [vmem:[%s19 + $0xab8] sm:$0xf]
  %v8167 = vld [vmem:[%s19 + $0xabc] sm:$0xff]
  %v8168 = vld [vmem:[%s19 + $0xac4] sm:$0xf]
  %v8169 = vld [vmem:[%s19 + $0xac8] sm:$0xff]
  %v8170 = vld [vmem:[%s19 + $0xad0] sm:$0xf]
  %v8171 = vld [vmem:[%s19 + $0xad4] sm:$0xff]
  %v8172 = vld [vmem:[%s19 + $0xadc] sm:$0xf]
  %v8173 = vld [vmem:[%s19 + $0xae0] sm:$0xff]
  %v8174 = vld [vmem:[%s19 + $0xae8] sm:$0xf]
  %v8175 = vld [vmem:[%s19 + $0xaec] sm:$0xff]
  %v8176 = vld [vmem:[%s19 + $0xaf4] sm:$0xf]
  %v8177 = vld [vmem:[%s19 + $0xaf8] sm:$0xff]
  %v8178 = vld [vmem:[%s19 + $0xb00] sm:$0xf]
  %v8179 = vld [vmem:[%s19 + $0xb04] sm:$0xff]
  %v8180 = vld [vmem:[%s19 + $0xb0c] sm:$0xf]
  %v8181 = vld [vmem:[%s19 + $0xb10] sm:$0xff]
  %v8182 = vld [vmem:[%s19 + $0xb18] sm:$0xf]
  %v8183 = vld [vmem:[%s19 + $0xb1c] sm:$0xff]
  %v8184 = vld [vmem:[%s19 + $0xb24] sm:$0xf]
  %v8185 = vld [vmem:[%s19 + $0xb28] sm:$0xff]
  %v8186 = vld [vmem:[%s19 + $0xb30] sm:$0xf]
  %v8187 = vld [vmem:[%s19 + $0xb34] sm:$0xff]
  %v8188 = vld [vmem:[%s19 + $0xb3c] sm:$0xf]
  %v8189 = vld [vmem:[%s19 + $0xb40] sm:$0xff]
  %v8190 = vld [vmem:[%s19 + $0xb48] sm:$0xf]
  %v8191 = vld [vmem:[%s19 + $0xb4c] sm:$0xff]
  %v8192 = vld [vmem:[%s19 + $0xb54] sm:$0xf]
  %v8193 = vld [vmem:[%s19 + $0xb58] sm:$0xff]
  %v8194 = vld [vmem:[%s19 + $0xb60] sm:$0xf]
  %v8195 = vld [vmem:[%s19 + $0xb64] sm:$0xff]
  %v8196 = vld [vmem:[%s19 + $0xb6c] sm:$0xf]
  %v8197 = vld [vmem:[%s19 + $0xb70] sm:$0xff]
  %v8198 = vld [vmem:[%s19 + $0xb78] sm:$0xf]
  %v8199 = vld [vmem:[%s19 + $0xb7c] sm:$0xff]
  %v8200 = vld [vmem:[%s19 + $0xb84] sm:$0xf]
  %v8201 = vld [vmem:[%s19 + $0xb88] sm:$0xff]
  %v8202 = vld [vmem:[%s19 + $0xb90] sm:$0xf]
  %v8203 = vld [vmem:[%s19 + $0xb94] sm:$0xff]
  %v8204 = vld [vmem:[%s19 + $0xb9c] sm:$0xf]
  %v8205 = vld [vmem:[%s19 + $0xba0] sm:$0xff]
  %v8206 = vld [vmem:[%s19 + $0xba8] sm:$0xf]
  %v8207 = vld [vmem:[%s19 + $0xbac] sm:$0xff]
  %v8208 = vld [vmem:[%s19 + $0xbb4] sm:$0xf]
  %v8209 = vld [vmem:[%s19 + $0xbb8] sm:$0xff]
  %v8210 = vld [vmem:[%s19 + $0xbc0] sm:$0xf]
  %v8211 = vld [vmem:[%s19 + $0xbc4] sm:$0xff]
  %v8212 = vld [vmem:[%s19 + $0xbcc] sm:$0xf]
  %v8213 = vld [vmem:[%s19 + $0xbd0] sm:$0xff]
  %v8214 = vld [vmem:[%s19 + $0xbd8] sm:$0xf]
  %v8215 = vld [vmem:[%s19 + $0xbdc] sm:$0xff]
  %v8216 = vld [vmem:[%s19 + $0xbe4] sm:$0xf]
  %v8217 = vld [vmem:[%s19 + $0xbe8] sm:$0xff]
  %v8218 = vld [vmem:[%s19 + $0xbf0] sm:$0xf]
  %v8219 = vld [vmem:[%s19 + $0xbf4] sm:$0xff]
  %v8220 = vld [vmem:[%s19 + $0xbfc] sm:$0xf]
  %v8221 = vld [vmem:[%s20] sm:$0x7]
  %v8223 = vlaneseq
  %v8224 = vshrl.u32 %v8223, 7
  %v8225 = vsub.s32 0, %v8224
  %v8226 = vrot.slane %v8221, %v8225
  %v8227 = vlaneseq
  %v8228 = vshrl.u32 %v8227, 7
  %v8229 = vsub.s32 1, %v8228
  %v8230 = vrot.slane %v8221, %v8229
  %v8231 = vlaneseq
  %v8232 = vshrl.u32 %v8231, 7
  %v8233 = vsub.s32 2, %v8232
  %v8234 = vrot.slane %v8221, %v8233
  %v8750 = vunpack.c.l.b16 %v7709
  %v8751 = vunpack.c.h.b16 %v7709
  %v8752 = vunpack.c.l.b16 %v7710
  %v8753 = vunpack.c.l.b16 %v7711
  %v8754 = vunpack.c.h.b16 %v7711
  %v8755 = vunpack.c.l.b16 %v7712
  %v8756 = vunpack.c.l.b16 %v7713
  %v8757 = vunpack.c.h.b16 %v7713
  %v8758 = vunpack.c.l.b16 %v7714
  %v8759 = vunpack.c.l.b16 %v7715
  %v8760 = vunpack.c.h.b16 %v7715
  %v8761 = vunpack.c.l.b16 %v7716
  %v8762 = vunpack.c.l.b16 %v7717
  %v8763 = vunpack.c.h.b16 %v7717
  %v8764 = vunpack.c.l.b16 %v7718
  %v8765 = vunpack.c.l.b16 %v7719
  %v8766 = vunpack.c.h.b16 %v7719
  %v8767 = vunpack.c.l.b16 %v7720
  %v8768 = vunpack.c.l.b16 %v7721
  %v8769 = vunpack.c.h.b16 %v7721
  %v8770 = vunpack.c.l.b16 %v7722
  %v8771 = vunpack.c.l.b16 %v7723
  %v8772 = vunpack.c.h.b16 %v7723
  %v8773 = vunpack.c.l.b16 %v7724
  %v8774 = vunpack.c.l.b16 %v7725
  %v8775 = vunpack.c.h.b16 %v7725
  %v8776 = vunpack.c.l.b16 %v7726
  %v8777 = vunpack.c.l.b16 %v7727
  %v8778 = vunpack.c.h.b16 %v7727
  %v8779 = vunpack.c.l.b16 %v7728
  %v8780 = vunpack.c.l.b16 %v7729
  %v8781 = vunpack.c.h.b16 %v7729
  %v8782 = vunpack.c.l.b16 %v7730
  %v8783 = vunpack.c.l.b16 %v7731
  %v8784 = vunpack.c.h.b16 %v7731
  %v8785 = vunpack.c.l.b16 %v7732
  %v8786 = vunpack.c.l.b16 %v7733
  %v8787 = vunpack.c.h.b16 %v7733
  %v8788 = vunpack.c.l.b16 %v7734
  %v8789 = vunpack.c.l.b16 %v7735
  %v8790 = vunpack.c.h.b16 %v7735
  %v8791 = vunpack.c.l.b16 %v7736
  %v8792 = vunpack.c.l.b16 %v7737
  %v8793 = vunpack.c.h.b16 %v7737
  %v8794 = vunpack.c.l.b16 %v7738
  %v8795 = vunpack.c.l.b16 %v7739
  %v8796 = vunpack.c.h.b16 %v7739
  %v8797 = vunpack.c.l.b16 %v7740
  %v8798 = vunpack.c.l.b16 %v7741
  %v8799 = vunpack.c.h.b16 %v7741
  %v8800 = vunpack.c.l.b16 %v7742
  %v8801 = vunpack.c.l.b16 %v7743
  %v8802 = vunpack.c.h.b16 %v7743
  %v8803 = vunpack.c.l.b16 %v7744
  %v8804 = vunpack.c.l.b16 %v7745
  %v8805 = vunpack.c.h.b16 %v7745
  %v8806 = vunpack.c.l.b16 %v7746
  %v8807 = vunpack.c.l.b16 %v7747
  %v8808 = vunpack.c.h.b16 %v7747
  %v8809 = vunpack.c.l.b16 %v7748
  %v8810 = vunpack.c.l.b16 %v7749
  %v8811 = vunpack.c.h.b16 %v7749
  %v8812 = vunpack.c.l.b16 %v7750
  %v8813 = vunpack.c.l.b16 %v7751
  %v8814 = vunpack.c.h.b16 %v7751
  %v8815 = vunpack.c.l.b16 %v7752
  %v8816 = vunpack.c.l.b16 %v7753
  %v8817 = vunpack.c.h.b16 %v7753
  %v8818 = vunpack.c.l.b16 %v7754
  %v8819 = vunpack.c.l.b16 %v7755
  %v8820 = vunpack.c.h.b16 %v7755
  %v8821 = vunpack.c.l.b16 %v7756
  %v8822 = vunpack.c.l.b16 %v7757
  %v8823 = vunpack.c.h.b16 %v7757
  %v8824 = vunpack.c.l.b16 %v7758
  %v8825 = vunpack.c.l.b16 %v7759
  %v8826 = vunpack.c.h.b16 %v7759
  %v8827 = vunpack.c.l.b16 %v7760
  %v8828 = vunpack.c.l.b16 %v7761
  %v8829 = vunpack.c.h.b16 %v7761
  %v8830 = vunpack.c.l.b16 %v7762
  %v8831 = vunpack.c.l.b16 %v7763
  %v8832 = vunpack.c.h.b16 %v7763
  %v8833 = vunpack.c.l.b16 %v7764
  %v8834 = vunpack.c.l.b16 %v7765
  %v8835 = vunpack.c.h.b16 %v7765
  %v8836 = vunpack.c.l.b16 %v7766
  %v8837 = vunpack.c.l.b16 %v7767
  %v8838 = vunpack.c.h.b16 %v7767
  %v8839 = vunpack.c.l.b16 %v7768
  %v8840 = vunpack.c.l.b16 %v7769
  %v8841 = vunpack.c.h.b16 %v7769
  %v8842 = vunpack.c.l.b16 %v7770
  %v8843 = vunpack.c.l.b16 %v7771
  %v8844 = vunpack.c.h.b16 %v7771
  %v8845 = vunpack.c.l.b16 %v7772
  %v8846 = vunpack.c.l.b16 %v7773
  %v8847 = vunpack.c.h.b16 %v7773
  %v8848 = vunpack.c.l.b16 %v7774
  %v8849 = vunpack.c.l.b16 %v7775
  %v8850 = vunpack.c.h.b16 %v7775
  %v8851 = vunpack.c.l.b16 %v7776
  %v8852 = vunpack.c.l.b16 %v7777
  %v8853 = vunpack.c.h.b16 %v7777
  %v8854 = vunpack.c.l.b16 %v7778
  %v8855 = vunpack.c.l.b16 %v7779
  %v8856 = vunpack.c.h.b16 %v7779
  %v8857 = vunpack.c.l.b16 %v7780
  %v8858 = vunpack.c.l.b16 %v7781
  %v8859 = vunpack.c.h.b16 %v7781
  %v8860 = vunpack.c.l.b16 %v7782
  %v8861 = vunpack.c.l.b16 %v7783
  %v8862 = vunpack.c.h.b16 %v7783
  %v8863 = vunpack.c.l.b16 %v7784
  %v8864 = vunpack.c.l.b16 %v7785
  %v8865 = vunpack.c.h.b16 %v7785
  %v8866 = vunpack.c.l.b16 %v7786
  %v8867 = vunpack.c.l.b16 %v7787
  %v8868 = vunpack.c.h.b16 %v7787
  %v8869 = vunpack.c.l.b16 %v7788
  %v8870 = vunpack.c.l.b16 %v7789
  %v8871 = vunpack.c.h.b16 %v7789
  %v8872 = vunpack.c.l.b16 %v7790
  %v8873 = vunpack.c.l.b16 %v7791
  %v8874 = vunpack.c.h.b16 %v7791
  %v8875 = vunpack.c.l.b16 %v7792
  %v8876 = vunpack.c.l.b16 %v7793
  %v8877 = vunpack.c.h.b16 %v7793
  %v8878 = vunpack.c.l.b16 %v7794
  %v8879 = vunpack.c.l.b16 %v7795
  %v8880 = vunpack.c.h.b16 %v7795
  %v8881 = vunpack.c.l.b16 %v7796
  %v8882 = vunpack.c.l.b16 %v7797
  %v8883 = vunpack.c.h.b16 %v7797
  %v8884 = vunpack.c.l.b16 %v7798
  %v8885 = vunpack.c.l.b16 %v7799
  %v8886 = vunpack.c.h.b16 %v7799
  %v8887 = vunpack.c.l.b16 %v7800
  %v8888 = vunpack.c.l.b16 %v7801
  %v8889 = vunpack.c.h.b16 %v7801
  %v8890 = vunpack.c.l.b16 %v7802
  %v8891 = vunpack.c.l.b16 %v7803
  %v8892 = vunpack.c.h.b16 %v7803
  %v8893 = vunpack.c.l.b16 %v7804
  %v8894 = vunpack.c.l.b16 %v7805
  %v8895 = vunpack.c.h.b16 %v7805
  %v8896 = vunpack.c.l.b16 %v7806
  %v8897 = vunpack.c.l.b16 %v7807
  %v8898 = vunpack.c.h.b16 %v7807
  %v8899 = vunpack.c.l.b16 %v7808
  %v8900 = vunpack.c.l.b16 %v7809
  %v8901 = vunpack.c.h.b16 %v7809
  %v8902 = vunpack.c.l.b16 %v7810
  %v8903 = vunpack.c.l.b16 %v7811
  %v8904 = vunpack.c.h.b16 %v7811
  %v8905 = vunpack.c.l.b16 %v7812
  %v8906 = vunpack.c.l.b16 %v7813
  %v8907 = vunpack.c.h.b16 %v7813
  %v8908 = vunpack.c.l.b16 %v7814
  %v8909 = vunpack.c.l.b16 %v7815
  %v8910 = vunpack.c.h.b16 %v7815
  %v8911 = vunpack.c.l.b16 %v7816
  %v8912 = vunpack.c.l.b16 %v7817
  %v8913 = vunpack.c.h.b16 %v7817
  %v8914 = vunpack.c.l.b16 %v7818
  %v8915 = vunpack.c.l.b16 %v7819
  %v8916 = vunpack.c.h.b16 %v7819
  %v8917 = vunpack.c.l.b16 %v7820
  %v8918 = vunpack.c.l.b16 %v7821
  %v8919 = vunpack.c.h.b16 %v7821
  %v8920 = vunpack.c.l.b16 %v7822
  %v8921 = vunpack.c.l.b16 %v7823
  %v8922 = vunpack.c.h.b16 %v7823
  %v8923 = vunpack.c.l.b16 %v7824
  %v8924 = vunpack.c.l.b16 %v7825
  %v8925 = vunpack.c.h.b16 %v7825
  %v8926 = vunpack.c.l.b16 %v7826
  %v8927 = vunpack.c.l.b16 %v7827
  %v8928 = vunpack.c.h.b16 %v7827
  %v8929 = vunpack.c.l.b16 %v7828
  %v8930 = vunpack.c.l.b16 %v7829
  %v8931 = vunpack.c.h.b16 %v7829
  %v8932 = vunpack.c.l.b16 %v7830
  %v8933 = vunpack.c.l.b16 %v7831
  %v8934 = vunpack.c.h.b16 %v7831
  %v8935 = vunpack.c.l.b16 %v7832
  %v8936 = vunpack.c.l.b16 %v7833
  %v8937 = vunpack.c.h.b16 %v7833
  %v8938 = vunpack.c.l.b16 %v7834
  %v8939 = vunpack.c.l.b16 %v7835
  %v8940 = vunpack.c.h.b16 %v7835
  %v8941 = vunpack.c.l.b16 %v7836
  %v8942 = vunpack.c.l.b16 %v7837
  %v8943 = vunpack.c.h.b16 %v7837
  %v8944 = vunpack.c.l.b16 %v7838
  %v8945 = vunpack.c.l.b16 %v7839
  %v8946 = vunpack.c.h.b16 %v7839
  %v8947 = vunpack.c.l.b16 %v7840
  %v8948 = vunpack.c.l.b16 %v7841
  %v8949 = vunpack.c.h.b16 %v7841
  %v8950 = vunpack.c.l.b16 %v7842
  %v8951 = vunpack.c.l.b16 %v7843
  %v8952 = vunpack.c.h.b16 %v7843
  %v8953 = vunpack.c.l.b16 %v7844
  %v8954 = vunpack.c.l.b16 %v7845
  %v8955 = vunpack.c.h.b16 %v7845
  %v8956 = vunpack.c.l.b16 %v7846
  %v8957 = vunpack.c.l.b16 %v7847
  %v8958 = vunpack.c.h.b16 %v7847
  %v8959 = vunpack.c.l.b16 %v7848
  %v8960 = vunpack.c.l.b16 %v7849
  %v8961 = vunpack.c.h.b16 %v7849
  %v8962 = vunpack.c.l.b16 %v7850
  %v8963 = vunpack.c.l.b16 %v7851
  %v8964 = vunpack.c.h.b16 %v7851
  %v8965 = vunpack.c.l.b16 %v7852
  %v8966 = vunpack.c.l.b16 %v7853
  %v8967 = vunpack.c.h.b16 %v7853
  %v8968 = vunpack.c.l.b16 %v7854
  %v8969 = vunpack.c.l.b16 %v7855
  %v8970 = vunpack.c.h.b16 %v7855
  %v8971 = vunpack.c.l.b16 %v7856
  %v8972 = vunpack.c.l.b16 %v7857
  %v8973 = vunpack.c.h.b16 %v7857
  %v8974 = vunpack.c.l.b16 %v7858
  %v8975 = vunpack.c.l.b16 %v7859
  %v8976 = vunpack.c.h.b16 %v7859
  %v8977 = vunpack.c.l.b16 %v7860
  %v8978 = vunpack.c.l.b16 %v7861
  %v8979 = vunpack.c.h.b16 %v7861
  %v8980 = vunpack.c.l.b16 %v7862
  %v8981 = vunpack.c.l.b16 %v7863
  %v8982 = vunpack.c.h.b16 %v7863
  %v8983 = vunpack.c.l.b16 %v7864
  %v8984 = vunpack.c.l.b16 %v7865
  %v8985 = vunpack.c.h.b16 %v7865
  %v8986 = vunpack.c.l.b16 %v7866
  %v8987 = vunpack.c.l.b16 %v7867
  %v8988 = vunpack.c.h.b16 %v7867
  %v8989 = vunpack.c.l.b16 %v7868
  %v8990 = vunpack.c.l.b16 %v7869
  %v8991 = vunpack.c.h.b16 %v7869
  %v8992 = vunpack.c.l.b16 %v7870
  %v8993 = vunpack.c.l.b16 %v7871
  %v8994 = vunpack.c.h.b16 %v7871
  %v8995 = vunpack.c.l.b16 %v7872
  %v8996 = vunpack.c.l.b16 %v7873
  %v8997 = vunpack.c.h.b16 %v7873
  %v8998 = vunpack.c.l.b16 %v7874
  %v8999 = vunpack.c.l.b16 %v7875
  %v9000 = vunpack.c.h.b16 %v7875
  %v9001 = vunpack.c.l.b16 %v7876
  %v9002 = vunpack.c.l.b16 %v7877
  %v9003 = vunpack.c.h.b16 %v7877
  %v9004 = vunpack.c.l.b16 %v7878
  %v9005 = vunpack.c.l.b16 %v7879
  %v9006 = vunpack.c.h.b16 %v7879
  %v9007 = vunpack.c.l.b16 %v7880
  %v9008 = vunpack.c.l.b16 %v7881
  %v9009 = vunpack.c.h.b16 %v7881
  %v9010 = vunpack.c.l.b16 %v7882
  %v9011 = vunpack.c.l.b16 %v7883
  %v9012 = vunpack.c.h.b16 %v7883
  %v9013 = vunpack.c.l.b16 %v7884
  %v9014 = vunpack.c.l.b16 %v7885
  %v9015 = vunpack.c.h.b16 %v7885
  %v9016 = vunpack.c.l.b16 %v7886
  %v9017 = vunpack.c.l.b16 %v7887
  %v9018 = vunpack.c.h.b16 %v7887
  %v9019 = vunpack.c.l.b16 %v7888
  %v9020 = vunpack.c.l.b16 %v7889
  %v9021 = vunpack.c.h.b16 %v7889
  %v9022 = vunpack.c.l.b16 %v7890
  %v9023 = vunpack.c.l.b16 %v7891
  %v9024 = vunpack.c.h.b16 %v7891
  %v9025 = vunpack.c.l.b16 %v7892
  %v9026 = vunpack.c.l.b16 %v7893
  %v9027 = vunpack.c.h.b16 %v7893
  %v9028 = vunpack.c.l.b16 %v7894
  %v9029 = vunpack.c.l.b16 %v7895
  %v9030 = vunpack.c.h.b16 %v7895
  %v9031 = vunpack.c.l.b16 %v7896
  %v9032 = vunpack.c.l.b16 %v7897
  %v9033 = vunpack.c.h.b16 %v7897
  %v9034 = vunpack.c.l.b16 %v7898
  %v9035 = vunpack.c.l.b16 %v7899
  %v9036 = vunpack.c.h.b16 %v7899
  %v9037 = vunpack.c.l.b16 %v7900
  %v9038 = vunpack.c.l.b16 %v7901
  %v9039 = vunpack.c.h.b16 %v7901
  %v9040 = vunpack.c.l.b16 %v7902
  %v9041 = vunpack.c.l.b16 %v7903
  %v9042 = vunpack.c.h.b16 %v7903
  %v9043 = vunpack.c.l.b16 %v7904
  %v9044 = vunpack.c.l.b16 %v7905
  %v9045 = vunpack.c.h.b16 %v7905
  %v9046 = vunpack.c.l.b16 %v7906
  %v9047 = vunpack.c.l.b16 %v7907
  %v9048 = vunpack.c.h.b16 %v7907
  %v9049 = vunpack.c.l.b16 %v7908
  %v9050 = vunpack.c.l.b16 %v7909
  %v9051 = vunpack.c.h.b16 %v7909
  %v9052 = vunpack.c.l.b16 %v7910
  %v9053 = vunpack.c.l.b16 %v7911
  %v9054 = vunpack.c.h.b16 %v7911
  %v9055 = vunpack.c.l.b16 %v7912
  %v9056 = vunpack.c.l.b16 %v7913
  %v9057 = vunpack.c.h.b16 %v7913
  %v9058 = vunpack.c.l.b16 %v7914
  %v9059 = vunpack.c.l.b16 %v7915
  %v9060 = vunpack.c.h.b16 %v7915
  %v9061 = vunpack.c.l.b16 %v7916
  %v9062 = vunpack.c.l.b16 %v7917
  %v9063 = vunpack.c.h.b16 %v7917
  %v9064 = vunpack.c.l.b16 %v7918
  %v9065 = vunpack.c.l.b16 %v7919
  %v9066 = vunpack.c.h.b16 %v7919
  %v9067 = vunpack.c.l.b16 %v7920
  %v9068 = vunpack.c.l.b16 %v7921
  %v9069 = vunpack.c.h.b16 %v7921
  %v9070 = vunpack.c.l.b16 %v7922
  %v9071 = vunpack.c.l.b16 %v7923
  %v9072 = vunpack.c.h.b16 %v7923
  %v9073 = vunpack.c.l.b16 %v7924
  %v9074 = vunpack.c.l.b16 %v7925
  %v9075 = vunpack.c.h.b16 %v7925
  %v9076 = vunpack.c.l.b16 %v7926
  %v9077 = vunpack.c.l.b16 %v7927
  %v9078 = vunpack.c.h.b16 %v7927
  %v9079 = vunpack.c.l.b16 %v7928
  %v9080 = vunpack.c.l.b16 %v7929
  %v9081 = vunpack.c.h.b16 %v7929
  %v9082 = vunpack.c.l.b16 %v7930
  %v9083 = vunpack.c.l.b16 %v7931
  %v9084 = vunpack.c.h.b16 %v7931
  %v9085 = vunpack.c.l.b16 %v7932
  %v9086 = vunpack.c.l.b16 %v7933
  %v9087 = vunpack.c.h.b16 %v7933
  %v9088 = vunpack.c.l.b16 %v7934
  %v9089 = vunpack.c.l.b16 %v7935
  %v9090 = vunpack.c.h.b16 %v7935
  %v9091 = vunpack.c.l.b16 %v7936
  %v9092 = vunpack.c.l.b16 %v7937
  %v9093 = vunpack.c.h.b16 %v7937
  %v9094 = vunpack.c.l.b16 %v7938
  %v9095 = vunpack.c.l.b16 %v7939
  %v9096 = vunpack.c.h.b16 %v7939
  %v9097 = vunpack.c.l.b16 %v7940
  %v9098 = vunpack.c.l.b16 %v7941
  %v9099 = vunpack.c.h.b16 %v7941
  %v9100 = vunpack.c.l.b16 %v7942
  %v9101 = vunpack.c.l.b16 %v7943
  %v9102 = vunpack.c.h.b16 %v7943
  %v9103 = vunpack.c.l.b16 %v7944
  %v9104 = vunpack.c.l.b16 %v7945
  %v9105 = vunpack.c.h.b16 %v7945
  %v9106 = vunpack.c.l.b16 %v7946
  %v9107 = vunpack.c.l.b16 %v7947
  %v9108 = vunpack.c.h.b16 %v7947
  %v9109 = vunpack.c.l.b16 %v7948
  %v9110 = vunpack.c.l.b16 %v7949
  %v9111 = vunpack.c.h.b16 %v7949
  %v9112 = vunpack.c.l.b16 %v7950
  %v9113 = vunpack.c.l.b16 %v7951
  %v9114 = vunpack.c.h.b16 %v7951
  %v9115 = vunpack.c.l.b16 %v7952
  %v9116 = vunpack.c.l.b16 %v7953
  %v9117 = vunpack.c.h.b16 %v7953
  %v9118 = vunpack.c.l.b16 %v7954
  %v9119 = vunpack.c.l.b16 %v7955
  %v9120 = vunpack.c.h.b16 %v7955
  %v9121 = vunpack.c.l.b16 %v7956
  %v9122 = vunpack.c.l.b16 %v7957
  %v9123 = vunpack.c.h.b16 %v7957
  %v9124 = vunpack.c.l.b16 %v7958
  %v9125 = vunpack.c.l.b16 %v7959
  %v9126 = vunpack.c.h.b16 %v7959
  %v9127 = vunpack.c.l.b16 %v7960
  %v9128 = vunpack.c.l.b16 %v7961
  %v9129 = vunpack.c.h.b16 %v7961
  %v9130 = vunpack.c.l.b16 %v7962
  %v9131 = vunpack.c.l.b16 %v7963
  %v9132 = vunpack.c.h.b16 %v7963
  %v9133 = vunpack.c.l.b16 %v7964
  %v9134 = vunpack.c.l.b16 %v7965
  %v9135 = vunpack.c.h.b16 %v7965
  %v9136 = vunpack.c.l.b16 %v7966
  %v9137 = vunpack.c.l.b16 %v7967
  %v9138 = vunpack.c.h.b16 %v7967
  %v9139 = vunpack.c.l.b16 %v7968
  %v9140 = vunpack.c.l.b16 %v7969
  %v9141 = vunpack.c.h.b16 %v7969
  %v9142 = vunpack.c.l.b16 %v7970
  %v9143 = vunpack.c.l.b16 %v7971
  %v9144 = vunpack.c.h.b16 %v7971
  %v9145 = vunpack.c.l.b16 %v7972
  %v9146 = vunpack.c.l.b16 %v7973
  %v9147 = vunpack.c.h.b16 %v7973
  %v9148 = vunpack.c.l.b16 %v7974
  %v9149 = vunpack.c.l.b16 %v7975
  %v9150 = vunpack.c.h.b16 %v7975
  %v9151 = vunpack.c.l.b16 %v7976
  %v9152 = vunpack.c.l.b16 %v7977
  %v9153 = vunpack.c.h.b16 %v7977
  %v9154 = vunpack.c.l.b16 %v7978
  %v9155 = vunpack.c.l.b16 %v7979
  %v9156 = vunpack.c.h.b16 %v7979
  %v9157 = vunpack.c.l.b16 %v7980
  %v9158 = vunpack.c.l.b16 %v7981
  %v9159 = vunpack.c.h.b16 %v7981
  %v9160 = vunpack.c.l.b16 %v7982
  %v9161 = vunpack.c.l.b16 %v7983
  %v9162 = vunpack.c.h.b16 %v7983
  %v9163 = vunpack.c.l.b16 %v7984
  %v9164 = vunpack.c.l.b16 %v7985
  %v9165 = vunpack.c.h.b16 %v7985
  %v9166 = vunpack.c.l.b16 %v7986
  %v9167 = vunpack.c.l.b16 %v7987
  %v9168 = vunpack.c.h.b16 %v7987
  %v9169 = vunpack.c.l.b16 %v7988
  %v9170 = vunpack.c.l.b16 %v7989
  %v9171 = vunpack.c.h.b16 %v7989
  %v9172 = vunpack.c.l.b16 %v7990
  %v9173 = vunpack.c.l.b16 %v7991
  %v9174 = vunpack.c.h.b16 %v7991
  %v9175 = vunpack.c.l.b16 %v7992
  %v9176 = vunpack.c.l.b16 %v7993
  %v9177 = vunpack.c.h.b16 %v7993
  %v9178 = vunpack.c.l.b16 %v7994
  %v9179 = vunpack.c.l.b16 %v7995
  %v9180 = vunpack.c.h.b16 %v7995
  %v9181 = vunpack.c.l.b16 %v7996
  %v9182 = vunpack.c.l.b16 %v7997
  %v9183 = vunpack.c.h.b16 %v7997
  %v9184 = vunpack.c.l.b16 %v7998
  %v9185 = vunpack.c.l.b16 %v7999
  %v9186 = vunpack.c.h.b16 %v7999
  %v9187 = vunpack.c.l.b16 %v8000
  %v9188 = vunpack.c.l.b16 %v8001
  %v9189 = vunpack.c.h.b16 %v8001
  %v9190 = vunpack.c.l.b16 %v8002
  %v9191 = vunpack.c.l.b16 %v8003
  %v9192 = vunpack.c.h.b16 %v8003
  %v9193 = vunpack.c.l.b16 %v8004
  %v9194 = vunpack.c.l.b16 %v8005
  %v9195 = vunpack.c.h.b16 %v8005
  %v9196 = vunpack.c.l.b16 %v8006
  %v9197 = vunpack.c.l.b16 %v8007
  %v9198 = vunpack.c.h.b16 %v8007
  %v9199 = vunpack.c.l.b16 %v8008
  %v9200 = vunpack.c.l.b16 %v8009
  %v9201 = vunpack.c.h.b16 %v8009
  %v9202 = vunpack.c.l.b16 %v8010
  %v9203 = vunpack.c.l.b16 %v8011
  %v9204 = vunpack.c.h.b16 %v8011
  %v9205 = vunpack.c.l.b16 %v8012
  %v9206 = vunpack.c.l.b16 %v8013
  %v9207 = vunpack.c.h.b16 %v8013
  %v9208 = vunpack.c.l.b16 %v8014
  %v9209 = vunpack.c.l.b16 %v8015
  %v9210 = vunpack.c.h.b16 %v8015
  %v9211 = vunpack.c.l.b16 %v8016
  %v9212 = vunpack.c.l.b16 %v8017
  %v9213 = vunpack.c.h.b16 %v8017
  %v9214 = vunpack.c.l.b16 %v8018
  %v9215 = vunpack.c.l.b16 %v8019
  %v9216 = vunpack.c.h.b16 %v8019
  %v9217 = vunpack.c.l.b16 %v8020
  %v9218 = vunpack.c.l.b16 %v8021
  %v9219 = vunpack.c.h.b16 %v8021
  %v9220 = vunpack.c.l.b16 %v8022
  %v9221 = vunpack.c.l.b16 %v8023
  %v9222 = vunpack.c.h.b16 %v8023
  %v9223 = vunpack.c.l.b16 %v8024
  %v9224 = vunpack.c.l.b16 %v8025
  %v9225 = vunpack.c.h.b16 %v8025
  %v9226 = vunpack.c.l.b16 %v8026
  %v9227 = vunpack.c.l.b16 %v8027
  %v9228 = vunpack.c.h.b16 %v8027
  %v9229 = vunpack.c.l.b16 %v8028
  %v9230 = vunpack.c.l.b16 %v8029
  %v9231 = vunpack.c.h.b16 %v8029
  %v9232 = vunpack.c.l.b16 %v8030
  %v9233 = vunpack.c.l.b16 %v8031
  %v9234 = vunpack.c.h.b16 %v8031
  %v9235 = vunpack.c.l.b16 %v8032
  %v9236 = vunpack.c.l.b16 %v8033
  %v9237 = vunpack.c.h.b16 %v8033
  %v9238 = vunpack.c.l.b16 %v8034
  %v9239 = vunpack.c.l.b16 %v8035
  %v9240 = vunpack.c.h.b16 %v8035
  %v9241 = vunpack.c.l.b16 %v8036
  %v9242 = vunpack.c.l.b16 %v8037
  %v9243 = vunpack.c.h.b16 %v8037
  %v9244 = vunpack.c.l.b16 %v8038
  %v9245 = vunpack.c.l.b16 %v8039
  %v9246 = vunpack.c.h.b16 %v8039
  %v9247 = vunpack.c.l.b16 %v8040
  %v9248 = vunpack.c.l.b16 %v8041
  %v9249 = vunpack.c.h.b16 %v8041
  %v9250 = vunpack.c.l.b16 %v8042
  %v9251 = vunpack.c.l.b16 %v8043
  %v9252 = vunpack.c.h.b16 %v8043
  %v9253 = vunpack.c.l.b16 %v8044
  %v9254 = vunpack.c.l.b16 %v8045
  %v9255 = vunpack.c.h.b16 %v8045
  %v9256 = vunpack.c.l.b16 %v8046
  %v9257 = vunpack.c.l.b16 %v8047
  %v9258 = vunpack.c.h.b16 %v8047
  %v9259 = vunpack.c.l.b16 %v8048
  %v9260 = vunpack.c.l.b16 %v8049
  %v9261 = vunpack.c.h.b16 %v8049
  %v9262 = vunpack.c.l.b16 %v8050
  %v9263 = vunpack.c.l.b16 %v8051
  %v9264 = vunpack.c.h.b16 %v8051
  %v9265 = vunpack.c.l.b16 %v8052
  %v9266 = vunpack.c.l.b16 %v8053
  %v9267 = vunpack.c.h.b16 %v8053
  %v9268 = vunpack.c.l.b16 %v8054
  %v9269 = vunpack.c.l.b16 %v8055
  %v9270 = vunpack.c.h.b16 %v8055
  %v9271 = vunpack.c.l.b16 %v8056
  %v9272 = vunpack.c.l.b16 %v8057
  %v9273 = vunpack.c.h.b16 %v8057
  %v9274 = vunpack.c.l.b16 %v8058
  %v9275 = vunpack.c.l.b16 %v8059
  %v9276 = vunpack.c.h.b16 %v8059
  %v9277 = vunpack.c.l.b16 %v8060
  %v9278 = vunpack.c.l.b16 %v8061
  %v9279 = vunpack.c.h.b16 %v8061
  %v9280 = vunpack.c.l.b16 %v8062
  %v9281 = vunpack.c.l.b16 %v8063
  %v9282 = vunpack.c.h.b16 %v8063
  %v9283 = vunpack.c.l.b16 %v8064
  %v9284 = vunpack.c.l.b16 %v8065
  %v9285 = vunpack.c.h.b16 %v8065
  %v9286 = vunpack.c.l.b16 %v8066
  %v9287 = vunpack.c.l.b16 %v8067
  %v9288 = vunpack.c.h.b16 %v8067
  %v9289 = vunpack.c.l.b16 %v8068
  %v9290 = vunpack.c.l.b16 %v8069
  %v9291 = vunpack.c.h.b16 %v8069
  %v9292 = vunpack.c.l.b16 %v8070
  %v9293 = vunpack.c.l.b16 %v8071
  %v9294 = vunpack.c.h.b16 %v8071
  %v9295 = vunpack.c.l.b16 %v8072
  %v9296 = vunpack.c.l.b16 %v8073
  %v9297 = vunpack.c.h.b16 %v8073
  %v9298 = vunpack.c.l.b16 %v8074
  %v9299 = vunpack.c.l.b16 %v8075
  %v9300 = vunpack.c.h.b16 %v8075
  %v9301 = vunpack.c.l.b16 %v8076
  %v9302 = vunpack.c.l.b16 %v8077
  %v9303 = vunpack.c.h.b16 %v8077
  %v9304 = vunpack.c.l.b16 %v8078
  %v9305 = vunpack.c.l.b16 %v8079
  %v9306 = vunpack.c.h.b16 %v8079
  %v9307 = vunpack.c.l.b16 %v8080
  %v9308 = vunpack.c.l.b16 %v8081
  %v9309 = vunpack.c.h.b16 %v8081
  %v9310 = vunpack.c.l.b16 %v8082
  %v9311 = vunpack.c.l.b16 %v8083
  %v9312 = vunpack.c.h.b16 %v8083
  %v9313 = vunpack.c.l.b16 %v8084
  %v9314 = vunpack.c.l.b16 %v8085
  %v9315 = vunpack.c.h.b16 %v8085
  %v9316 = vunpack.c.l.b16 %v8086
  %v9317 = vunpack.c.l.b16 %v8087
  %v9318 = vunpack.c.h.b16 %v8087
  %v9319 = vunpack.c.l.b16 %v8088
  %v9320 = vunpack.c.l.b16 %v8089
  %v9321 = vunpack.c.h.b16 %v8089
  %v9322 = vunpack.c.l.b16 %v8090
  %v9323 = vunpack.c.l.b16 %v8091
  %v9324 = vunpack.c.h.b16 %v8091
  %v9325 = vunpack.c.l.b16 %v8092
  %v9326 = vunpack.c.l.b16 %v8093
  %v9327 = vunpack.c.h.b16 %v8093
  %v9328 = vunpack.c.l.b16 %v8094
  %v9329 = vunpack.c.l.b16 %v8095
  %v9330 = vunpack.c.h.b16 %v8095
  %v9331 = vunpack.c.l.b16 %v8096
  %v9332 = vunpack.c.l.b16 %v8097
  %v9333 = vunpack.c.h.b16 %v8097
  %v9334 = vunpack.c.l.b16 %v8098
  %v9335 = vunpack.c.l.b16 %v8099
  %v9336 = vunpack.c.h.b16 %v8099
  %v9337 = vunpack.c.l.b16 %v8100
  %v9338 = vunpack.c.l.b16 %v8101
  %v9339 = vunpack.c.h.b16 %v8101
  %v9340 = vunpack.c.l.b16 %v8102
  %v9341 = vunpack.c.l.b16 %v8103
  %v9342 = vunpack.c.h.b16 %v8103
  %v9343 = vunpack.c.l.b16 %v8104
  %v9344 = vunpack.c.l.b16 %v8105
  %v9345 = vunpack.c.h.b16 %v8105
  %v9346 = vunpack.c.l.b16 %v8106
  %v9347 = vunpack.c.l.b16 %v8107
  %v9348 = vunpack.c.h.b16 %v8107
  %v9349 = vunpack.c.l.b16 %v8108
  %v9350 = vunpack.c.l.b16 %v8109
  %v9351 = vunpack.c.h.b16 %v8109
  %v9352 = vunpack.c.l.b16 %v8110
  %v9353 = vunpack.c.l.b16 %v8111
  %v9354 = vunpack.c.h.b16 %v8111
  %v9355 = vunpack.c.l.b16 %v8112
  %v9356 = vunpack.c.l.b16 %v8113
  %v9357 = vunpack.c.h.b16 %v8113
  %v9358 = vunpack.c.l.b16 %v8114
  %v9359 = vunpack.c.l.b16 %v8115
  %v9360 = vunpack.c.h.b16 %v8115
  %v9361 = vunpack.c.l.b16 %v8116
  %v9362 = vunpack.c.l.b16 %v8117
  %v9363 = vunpack.c.h.b16 %v8117
  %v9364 = vunpack.c.l.b16 %v8118
  %v9365 = vunpack.c.l.b16 %v8119
  %v9366 = vunpack.c.h.b16 %v8119
  %v9367 = vunpack.c.l.b16 %v8120
  %v9368 = vunpack.c.l.b16 %v8121
  %v9369 = vunpack.c.h.b16 %v8121
  %v9370 = vunpack.c.l.b16 %v8122
  %v9371 = vunpack.c.l.b16 %v8123
  %v9372 = vunpack.c.h.b16 %v8123
  %v9373 = vunpack.c.l.b16 %v8124
  %v9374 = vunpack.c.l.b16 %v8125
  %v9375 = vunpack.c.h.b16 %v8125
  %v9376 = vunpack.c.l.b16 %v8126
  %v9377 = vunpack.c.l.b16 %v8127
  %v9378 = vunpack.c.h.b16 %v8127
  %v9379 = vunpack.c.l.b16 %v8128
  %v9380 = vunpack.c.l.b16 %v8129
  %v9381 = vunpack.c.h.b16 %v8129
  %v9382 = vunpack.c.l.b16 %v8130
  %v9383 = vunpack.c.l.b16 %v8131
  %v9384 = vunpack.c.h.b16 %v8131
  %v9385 = vunpack.c.l.b16 %v8132
  %v9386 = vunpack.c.l.b16 %v8133
  %v9387 = vunpack.c.h.b16 %v8133
  %v9388 = vunpack.c.l.b16 %v8134
  %v9389 = vunpack.c.l.b16 %v8135
  %v9390 = vunpack.c.h.b16 %v8135
  %v9391 = vunpack.c.l.b16 %v8136
  %v9392 = vunpack.c.l.b16 %v8137
  %v9393 = vunpack.c.h.b16 %v8137
  %v9394 = vunpack.c.l.b16 %v8138
  %v9395 = vunpack.c.l.b16 %v8139
  %v9396 = vunpack.c.h.b16 %v8139
  %v9397 = vunpack.c.l.b16 %v8140
  %v9398 = vunpack.c.l.b16 %v8141
  %v9399 = vunpack.c.h.b16 %v8141
  %v9400 = vunpack.c.l.b16 %v8142
  %v9401 = vunpack.c.l.b16 %v8143
  %v9402 = vunpack.c.h.b16 %v8143
  %v9403 = vunpack.c.l.b16 %v8144
  %v9404 = vunpack.c.l.b16 %v8145
  %v9405 = vunpack.c.h.b16 %v8145
  %v9406 = vunpack.c.l.b16 %v8146
  %v9407 = vunpack.c.l.b16 %v8147
  %v9408 = vunpack.c.h.b16 %v8147
  %v9409 = vunpack.c.l.b16 %v8148
  %v9410 = vunpack.c.l.b16 %v8149
  %v9411 = vunpack.c.h.b16 %v8149
  %v9412 = vunpack.c.l.b16 %v8150
  %v9413 = vunpack.c.l.b16 %v8151
  %v9414 = vunpack.c.h.b16 %v8151
  %v9415 = vunpack.c.l.b16 %v8152
  %v9416 = vunpack.c.l.b16 %v8153
  %v9417 = vunpack.c.h.b16 %v8153
  %v9418 = vunpack.c.l.b16 %v8154
  %v9419 = vunpack.c.l.b16 %v8155
  %v9420 = vunpack.c.h.b16 %v8155
  %v9421 = vunpack.c.l.b16 %v8156
  %v9422 = vunpack.c.l.b16 %v8157
  %v9423 = vunpack.c.h.b16 %v8157
  %v9424 = vunpack.c.l.b16 %v8158
  %v9425 = vunpack.c.l.b16 %v8159
  %v9426 = vunpack.c.h.b16 %v8159
  %v9427 = vunpack.c.l.b16 %v8160
  %v9428 = vunpack.c.l.b16 %v8161
  %v9429 = vunpack.c.h.b16 %v8161
  %v9430 = vunpack.c.l.b16 %v8162
  %v9431 = vunpack.c.l.b16 %v8163
  %v9432 = vunpack.c.h.b16 %v8163
  %v9433 = vunpack.c.l.b16 %v8164
  %v9434 = vunpack.c.l.b16 %v8165
  %v9435 = vunpack.c.h.b16 %v8165
  %v9436 = vunpack.c.l.b16 %v8166
  %v9437 = vunpack.c.l.b16 %v8167
  %v9438 = vunpack.c.h.b16 %v8167
  %v9439 = vunpack.c.l.b16 %v8168
  %v9440 = vunpack.c.l.b16 %v8169
  %v9441 = vunpack.c.h.b16 %v8169
  %v9442 = vunpack.c.l.b16 %v8170
  %v9443 = vunpack.c.l.b16 %v8171
  %v9444 = vunpack.c.h.b16 %v8171
  %v9445 = vunpack.c.l.b16 %v8172
  %v9446 = vunpack.c.l.b16 %v8173
  %v9447 = vunpack.c.h.b16 %v8173
  %v9448 = vunpack.c.l.b16 %v8174
  %v9449 = vunpack.c.l.b16 %v8175
  %v9450 = vunpack.c.h.b16 %v8175
  %v9451 = vunpack.c.l.b16 %v8176
  %v9452 = vunpack.c.l.b16 %v8177
  %v9453 = vunpack.c.h.b16 %v8177
  %v9454 = vunpack.c.l.b16 %v8178
  %v9455 = vunpack.c.l.b16 %v8179
  %v9456 = vunpack.c.h.b16 %v8179
  %v9457 = vunpack.c.l.b16 %v8180
  %v9458 = vunpack.c.l.b16 %v8181
  %v9459 = vunpack.c.h.b16 %v8181
  %v9460 = vunpack.c.l.b16 %v8182
  %v9461 = vunpack.c.l.b16 %v8183
  %v9462 = vunpack.c.h.b16 %v8183
  %v9463 = vunpack.c.l.b16 %v8184
  %v9464 = vunpack.c.l.b16 %v8185
  %v9465 = vunpack.c.h.b16 %v8185
  %v9466 = vunpack.c.l.b16 %v8186
  %v9467 = vunpack.c.l.b16 %v8187
  %v9468 = vunpack.c.h.b16 %v8187
  %v9469 = vunpack.c.l.b16 %v8188
  %v9470 = vunpack.c.l.b16 %v8189
  %v9471 = vunpack.c.h.b16 %v8189
  %v9472 = vunpack.c.l.b16 %v8190
  %v9473 = vunpack.c.l.b16 %v8191
  %v9474 = vunpack.c.h.b16 %v8191
  %v9475 = vunpack.c.l.b16 %v8192
  %v9476 = vunpack.c.l.b16 %v8193
  %v9477 = vunpack.c.h.b16 %v8193
  %v9478 = vunpack.c.l.b16 %v8194
  %v9479 = vunpack.c.l.b16 %v8195
  %v9480 = vunpack.c.h.b16 %v8195
  %v9481 = vunpack.c.l.b16 %v8196
  %v9482 = vunpack.c.l.b16 %v8197
  %v9483 = vunpack.c.h.b16 %v8197
  %v9484 = vunpack.c.l.b16 %v8198
  %v9485 = vunpack.c.l.b16 %v8199
  %v9486 = vunpack.c.h.b16 %v8199
  %v9487 = vunpack.c.l.b16 %v8200
  %v9488 = vunpack.c.l.b16 %v8201
  %v9489 = vunpack.c.h.b16 %v8201
  %v9490 = vunpack.c.l.b16 %v8202
  %v9491 = vunpack.c.l.b16 %v8203
  %v9492 = vunpack.c.h.b16 %v8203
  %v9493 = vunpack.c.l.b16 %v8204
  %v9494 = vunpack.c.l.b16 %v8205
  %v9495 = vunpack.c.h.b16 %v8205
  %v9496 = vunpack.c.l.b16 %v8206
  %v9497 = vunpack.c.l.b16 %v8207
  %v9498 = vunpack.c.h.b16 %v8207
  %v9499 = vunpack.c.l.b16 %v8208
  %v9500 = vunpack.c.l.b16 %v8209
  %v9501 = vunpack.c.h.b16 %v8209
  %v9502 = vunpack.c.l.b16 %v8210
  %v9503 = vunpack.c.l.b16 %v8211
  %v9504 = vunpack.c.h.b16 %v8211
  %v9505 = vunpack.c.l.b16 %v8212
  %v9506 = vunpack.c.l.b16 %v8213
  %v9507 = vunpack.c.h.b16 %v8213
  %v9508 = vunpack.c.l.b16 %v8214
  %v9509 = vunpack.c.l.b16 %v8215
  %v9510 = vunpack.c.h.b16 %v8215
  %v9511 = vunpack.c.l.b16 %v8216
  %v9512 = vunpack.c.l.b16 %v8217
  %v9513 = vunpack.c.h.b16 %v8217
  %v9514 = vunpack.c.l.b16 %v8218
  %v9515 = vunpack.c.l.b16 %v8219
  %v9516 = vunpack.c.h.b16 %v8219
  %v9517 = vunpack.c.l.b16 %v8220
  %v9518 = vpack.c.b16 %v8753, %v8750
  %v9519 = vpack.c.b16 %v8754, %v8751
  %v9520 = vpack.c.b16 %v8755, %v8752
  %v9521 = vpack.c.b16 %v8759, %v8756
  %v9522 = vpack.c.b16 %v8760, %v8757
  %v9523 = vpack.c.b16 %v8761, %v8758
  %v9524 = vpack.c.b16 %v8765, %v8762
  %v9525 = vpack.c.b16 %v8766, %v8763
  %v9526 = vpack.c.b16 %v8767, %v8764
  %v9527 = vpack.c.b16 %v8771, %v8768
  %v9528 = vpack.c.b16 %v8772, %v8769
  %v9529 = vpack.c.b16 %v8773, %v8770
  %v9530 = vpack.c.b16 %v8777, %v8774
  %v9531 = vpack.c.b16 %v8778, %v8775
  %v9532 = vpack.c.b16 %v8779, %v8776
  %v9533 = vpack.c.b16 %v8783, %v8780
  %v9534 = vpack.c.b16 %v8784, %v8781
  %v9535 = vpack.c.b16 %v8785, %v8782
  %v9536 = vpack.c.b16 %v8789, %v8786
  %v9537 = vpack.c.b16 %v8790, %v8787
  %v9538 = vpack.c.b16 %v8791, %v8788
  %v9539 = vpack.c.b16 %v8795, %v8792
  %v9540 = vpack.c.b16 %v8796, %v8793
  %v9541 = vpack.c.b16 %v8797, %v8794
  %v9542 = vpack.c.b16 %v8801, %v8798
  %v9543 = vpack.c.b16 %v8802, %v8799
  %v9544 = vpack.c.b16 %v8803, %v8800
  %v9545 = vpack.c.b16 %v8807, %v8804
  %v9546 = vpack.c.b16 %v8808, %v8805
  %v9547 = vpack.c.b16 %v8809, %v8806
  %v9548 = vpack.c.b16 %v8813, %v8810
  %v9549 = vpack.c.b16 %v8814, %v8811
  %v9550 = vpack.c.b16 %v8815, %v8812
  %v9551 = vpack.c.b16 %v8819, %v8816
  %v9552 = vpack.c.b16 %v8820, %v8817
  %v9553 = vpack.c.b16 %v8821, %v8818
  %v9554 = vpack.c.b16 %v8825, %v8822
  %v9555 = vpack.c.b16 %v8826, %v8823
  %v9556 = vpack.c.b16 %v8827, %v8824
  %v9557 = vpack.c.b16 %v8831, %v8828
  %v9558 = vpack.c.b16 %v8832, %v8829
  %v9559 = vpack.c.b16 %v8833, %v8830
  %v9560 = vpack.c.b16 %v8837, %v8834
  %v9561 = vpack.c.b16 %v8838, %v8835
  %v9562 = vpack.c.b16 %v8839, %v8836
  %v9563 = vpack.c.b16 %v8843, %v8840
  %v9564 = vpack.c.b16 %v8844, %v8841
  %v9565 = vpack.c.b16 %v8845, %v8842
  %v9566 = vpack.c.b16 %v8849, %v8846
  %v9567 = vpack.c.b16 %v8850, %v8847
  %v9568 = vpack.c.b16 %v8851, %v8848
  %v9569 = vpack.c.b16 %v8855, %v8852
  %v9570 = vpack.c.b16 %v8856, %v8853
  %v9571 = vpack.c.b16 %v8857, %v8854
  %v9572 = vpack.c.b16 %v8861, %v8858
  %v9573 = vpack.c.b16 %v8862, %v8859
  %v9574 = vpack.c.b16 %v8863, %v8860
  %v9575 = vpack.c.b16 %v8867, %v8864
  %v9576 = vpack.c.b16 %v8868, %v8865
  %v9577 = vpack.c.b16 %v8869, %v8866
  %v9578 = vpack.c.b16 %v8873, %v8870
  %v9579 = vpack.c.b16 %v8874, %v8871
  %v9580 = vpack.c.b16 %v8875, %v8872
  %v9581 = vpack.c.b16 %v8879, %v8876
  %v9582 = vpack.c.b16 %v8880, %v8877
  %v9583 = vpack.c.b16 %v8881, %v8878
  %v9584 = vpack.c.b16 %v8885, %v8882
  %v9585 = vpack.c.b16 %v8886, %v8883
  %v9586 = vpack.c.b16 %v8887, %v8884
  %v9587 = vpack.c.b16 %v8891, %v8888
  %v9588 = vpack.c.b16 %v8892, %v8889
  %v9589 = vpack.c.b16 %v8893, %v8890
  %v9590 = vpack.c.b16 %v8897, %v8894
  %v9591 = vpack.c.b16 %v8898, %v8895
  %v9592 = vpack.c.b16 %v8899, %v8896
  %v9593 = vpack.c.b16 %v8903, %v8900
  %v9594 = vpack.c.b16 %v8904, %v8901
  %v9595 = vpack.c.b16 %v8905, %v8902
  %v9596 = vpack.c.b16 %v8909, %v8906
  %v9597 = vpack.c.b16 %v8910, %v8907
  %v9598 = vpack.c.b16 %v8911, %v8908
  %v9599 = vpack.c.b16 %v8915, %v8912
  %v9600 = vpack.c.b16 %v8916, %v8913
  %v9601 = vpack.c.b16 %v8917, %v8914
  %v9602 = vpack.c.b16 %v8921, %v8918
  %v9603 = vpack.c.b16 %v8922, %v8919
  %v9604 = vpack.c.b16 %v8923, %v8920
  %v9605 = vpack.c.b16 %v8927, %v8924
  %v9606 = vpack.c.b16 %v8928, %v8925
  %v9607 = vpack.c.b16 %v8929, %v8926
  %v9608 = vpack.c.b16 %v8933, %v8930
  %v9609 = vpack.c.b16 %v8934, %v8931
  %v9610 = vpack.c.b16 %v8935, %v8932
  %v9611 = vpack.c.b16 %v8939, %v8936
  %v9612 = vpack.c.b16 %v8940, %v8937
  %v9613 = vpack.c.b16 %v8941, %v8938
  %v9614 = vpack.c.b16 %v8945, %v8942
  %v9615 = vpack.c.b16 %v8946, %v8943
  %v9616 = vpack.c.b16 %v8947, %v8944
  %v9617 = vpack.c.b16 %v8951, %v8948
  %v9618 = vpack.c.b16 %v8952, %v8949
  %v9619 = vpack.c.b16 %v8953, %v8950
  %v9620 = vpack.c.b16 %v8957, %v8954
  %v9621 = vpack.c.b16 %v8958, %v8955
  %v9622 = vpack.c.b16 %v8959, %v8956
  %v9623 = vpack.c.b16 %v8963, %v8960
  %v9624 = vpack.c.b16 %v8964, %v8961
  %v9625 = vpack.c.b16 %v8965, %v8962
  %v9626 = vpack.c.b16 %v8969, %v8966
  %v9627 = vpack.c.b16 %v8970, %v8967
  %v9628 = vpack.c.b16 %v8971, %v8968
  %v9629 = vpack.c.b16 %v8975, %v8972
  %v9630 = vpack.c.b16 %v8976, %v8973
  %v9631 = vpack.c.b16 %v8977, %v8974
  %v9632 = vpack.c.b16 %v8981, %v8978
  %v9633 = vpack.c.b16 %v8982, %v8979
  %v9634 = vpack.c.b16 %v8983, %v8980
  %v9635 = vpack.c.b16 %v8987, %v8984
  %v9636 = vpack.c.b16 %v8988, %v8985
  %v9637 = vpack.c.b16 %v8989, %v8986
  %v9638 = vpack.c.b16 %v8993, %v8990
  %v9639 = vpack.c.b16 %v8994, %v8991
  %v9640 = vpack.c.b16 %v8995, %v8992
  %v9641 = vpack.c.b16 %v8999, %v8996
  %v9642 = vpack.c.b16 %v9000, %v8997
  %v9643 = vpack.c.b16 %v9001, %v8998
  %v9644 = vpack.c.b16 %v9005, %v9002
  %v9645 = vpack.c.b16 %v9006, %v9003
  %v9646 = vpack.c.b16 %v9007, %v9004
  %v9647 = vpack.c.b16 %v9011, %v9008
  %v9648 = vpack.c.b16 %v9012, %v9009
  %v9649 = vpack.c.b16 %v9013, %v9010
  %v9650 = vpack.c.b16 %v9017, %v9014
  %v9651 = vpack.c.b16 %v9018, %v9015
  %v9652 = vpack.c.b16 %v9019, %v9016
  %v9653 = vpack.c.b16 %v9023, %v9020
  %v9654 = vpack.c.b16 %v9024, %v9021
  %v9655 = vpack.c.b16 %v9025, %v9022
  %v9656 = vpack.c.b16 %v9029, %v9026
  %v9657 = vpack.c.b16 %v9030, %v9027
  %v9658 = vpack.c.b16 %v9031, %v9028
  %v9659 = vpack.c.b16 %v9035, %v9032
  %v9660 = vpack.c.b16 %v9036, %v9033
  %v9661 = vpack.c.b16 %v9037, %v9034
  %v9662 = vpack.c.b16 %v9041, %v9038
  %v9663 = vpack.c.b16 %v9042, %v9039
  %v9664 = vpack.c.b16 %v9043, %v9040
  %v9665 = vpack.c.b16 %v9047, %v9044
  %v9666 = vpack.c.b16 %v9048, %v9045
  %v9667 = vpack.c.b16 %v9049, %v9046
  %v9668 = vpack.c.b16 %v9053, %v9050
  %v9669 = vpack.c.b16 %v9054, %v9051
  %v9670 = vpack.c.b16 %v9055, %v9052
  %v9671 = vpack.c.b16 %v9059, %v9056
  %v9672 = vpack.c.b16 %v9060, %v9057
  %v9673 = vpack.c.b16 %v9061, %v9058
  %v9674 = vpack.c.b16 %v9065, %v9062
  %v9675 = vpack.c.b16 %v9066, %v9063
  %v9676 = vpack.c.b16 %v9067, %v9064
  %v9677 = vpack.c.b16 %v9071, %v9068
  %v9678 = vpack.c.b16 %v9072, %v9069
  %v9679 = vpack.c.b16 %v9073, %v9070
  %v9680 = vpack.c.b16 %v9077, %v9074
  %v9681 = vpack.c.b16 %v9078, %v9075
  %v9682 = vpack.c.b16 %v9079, %v9076
  %v9683 = vpack.c.b16 %v9083, %v9080
  %v9684 = vpack.c.b16 %v9084, %v9081
  %v9685 = vpack.c.b16 %v9085, %v9082
  %v9686 = vpack.c.b16 %v9089, %v9086
  %v9687 = vpack.c.b16 %v9090, %v9087
  %v9688 = vpack.c.b16 %v9091, %v9088
  %v9689 = vpack.c.b16 %v9095, %v9092
  %v9690 = vpack.c.b16 %v9096, %v9093
  %v9691 = vpack.c.b16 %v9097, %v9094
  %v9692 = vpack.c.b16 %v9101, %v9098
  %v9693 = vpack.c.b16 %v9102, %v9099
  %v9694 = vpack.c.b16 %v9103, %v9100
  %v9695 = vpack.c.b16 %v9107, %v9104
  %v9696 = vpack.c.b16 %v9108, %v9105
  %v9697 = vpack.c.b16 %v9109, %v9106
  %v9698 = vpack.c.b16 %v9113, %v9110
  %v9699 = vpack.c.b16 %v9114, %v9111
  %v9700 = vpack.c.b16 %v9115, %v9112
  %v9701 = vpack.c.b16 %v9119, %v9116
  %v9702 = vpack.c.b16 %v9120, %v9117
  %v9703 = vpack.c.b16 %v9121, %v9118
  %v9704 = vpack.c.b16 %v9125, %v9122
  %v9705 = vpack.c.b16 %v9126, %v9123
  %v9706 = vpack.c.b16 %v9127, %v9124
  %v9707 = vpack.c.b16 %v9131, %v9128
  %v9708 = vpack.c.b16 %v9132, %v9129
  %v9709 = vpack.c.b16 %v9133, %v9130
  %v9710 = vpack.c.b16 %v9137, %v9134
  %v9711 = vpack.c.b16 %v9138, %v9135
  %v9712 = vpack.c.b16 %v9139, %v9136
  %v9713 = vpack.c.b16 %v9143, %v9140
  %v9714 = vpack.c.b16 %v9144, %v9141
  %v9715 = vpack.c.b16 %v9145, %v9142
  %v9716 = vpack.c.b16 %v9149, %v9146
  %v9717 = vpack.c.b16 %v9150, %v9147
  %v9718 = vpack.c.b16 %v9151, %v9148
  %v9719 = vpack.c.b16 %v9155, %v9152
  %v9720 = vpack.c.b16 %v9156, %v9153
  %v9721 = vpack.c.b16 %v9157, %v9154
  %v9722 = vpack.c.b16 %v9161, %v9158
  %v9723 = vpack.c.b16 %v9162, %v9159
  %v9724 = vpack.c.b16 %v9163, %v9160
  %v9725 = vpack.c.b16 %v9167, %v9164
  %v9726 = vpack.c.b16 %v9168, %v9165
  %v9727 = vpack.c.b16 %v9169, %v9166
  %v9728 = vpack.c.b16 %v9173, %v9170
  %v9729 = vpack.c.b16 %v9174, %v9171
  %v9730 = vpack.c.b16 %v9175, %v9172
  %v9731 = vpack.c.b16 %v9179, %v9176
  %v9732 = vpack.c.b16 %v9180, %v9177
  %v9733 = vpack.c.b16 %v9181, %v9178
  %v9734 = vpack.c.b16 %v9185, %v9182
  %v9735 = vpack.c.b16 %v9186, %v9183
  %v9736 = vpack.c.b16 %v9187, %v9184
  %v9737 = vpack.c.b16 %v9191, %v9188
  %v9738 = vpack.c.b16 %v9192, %v9189
  %v9739 = vpack.c.b16 %v9193, %v9190
  %v9740 = vpack.c.b16 %v9197, %v9194
  %v9741 = vpack.c.b16 %v9198, %v9195
  %v9742 = vpack.c.b16 %v9199, %v9196
  %v9743 = vpack.c.b16 %v9203, %v9200
  %v9744 = vpack.c.b16 %v9204, %v9201
  %v9745 = vpack.c.b16 %v9205, %v9202
  %v9746 = vpack.c.b16 %v9209, %v9206
  %v9747 = vpack.c.b16 %v9210, %v9207
  %v9748 = vpack.c.b16 %v9211, %v9208
  %v9749 = vpack.c.b16 %v9215, %v9212
  %v9750 = vpack.c.b16 %v9216, %v9213
  %v9751 = vpack.c.b16 %v9217, %v9214
  %v9752 = vpack.c.b16 %v9221, %v9218
  %v9753 = vpack.c.b16 %v9222, %v9219
  %v9754 = vpack.c.b16 %v9223, %v9220
  %v9755 = vpack.c.b16 %v9227, %v9224
  %v9756 = vpack.c.b16 %v9228, %v9225
  %v9757 = vpack.c.b16 %v9229, %v9226
  %v9758 = vpack.c.b16 %v9233, %v9230
  %v9759 = vpack.c.b16 %v9234, %v9231
  %v9760 = vpack.c.b16 %v9235, %v9232
  %v9761 = vpack.c.b16 %v9239, %v9236
  %v9762 = vpack.c.b16 %v9240, %v9237
  %v9763 = vpack.c.b16 %v9241, %v9238
  %v9764 = vpack.c.b16 %v9245, %v9242
  %v9765 = vpack.c.b16 %v9246, %v9243
  %v9766 = vpack.c.b16 %v9247, %v9244
  %v9767 = vpack.c.b16 %v9251, %v9248
  %v9768 = vpack.c.b16 %v9252, %v9249
  %v9769 = vpack.c.b16 %v9253, %v9250
  %v9770 = vpack.c.b16 %v9257, %v9254
  %v9771 = vpack.c.b16 %v9258, %v9255
  %v9772 = vpack.c.b16 %v9259, %v9256
  %v9773 = vpack.c.b16 %v9263, %v9260
  %v9774 = vpack.c.b16 %v9264, %v9261
  %v9775 = vpack.c.b16 %v9265, %v9262
  %v9776 = vpack.c.b16 %v9269, %v9266
  %v9777 = vpack.c.b16 %v9270, %v9267
  %v9778 = vpack.c.b16 %v9271, %v9268
  %v9779 = vpack.c.b16 %v9275, %v9272
  %v9780 = vpack.c.b16 %v9276, %v9273
  %v9781 = vpack.c.b16 %v9277, %v9274
  %v9782 = vpack.c.b16 %v9281, %v9278
  %v9783 = vpack.c.b16 %v9282, %v9279
  %v9784 = vpack.c.b16 %v9283, %v9280
  %v9785 = vpack.c.b16 %v9287, %v9284
  %v9786 = vpack.c.b16 %v9288, %v9285
  %v9787 = vpack.c.b16 %v9289, %v9286
  %v9788 = vpack.c.b16 %v9293, %v9290
  %v9789 = vpack.c.b16 %v9294, %v9291
  %v9790 = vpack.c.b16 %v9295, %v9292
  %v9791 = vpack.c.b16 %v9299, %v9296
  %v9792 = vpack.c.b16 %v9300, %v9297
  %v9793 = vpack.c.b16 %v9301, %v9298
  %v9794 = vpack.c.b16 %v9305, %v9302
  %v9795 = vpack.c.b16 %v9306, %v9303
  %v9796 = vpack.c.b16 %v9307, %v9304
  %v9797 = vpack.c.b16 %v9311, %v9308
  %v9798 = vpack.c.b16 %v9312, %v9309
  %v9799 = vpack.c.b16 %v9313, %v9310
  %v9800 = vpack.c.b16 %v9317, %v9314
  %v9801 = vpack.c.b16 %v9318, %v9315
  %v9802 = vpack.c.b16 %v9319, %v9316
  %v9803 = vpack.c.b16 %v9323, %v9320
  %v9804 = vpack.c.b16 %v9324, %v9321
  %v9805 = vpack.c.b16 %v9325, %v9322
  %v9806 = vpack.c.b16 %v9329, %v9326
  %v9807 = vpack.c.b16 %v9330, %v9327
  %v9808 = vpack.c.b16 %v9331, %v9328
  %v9809 = vpack.c.b16 %v9335, %v9332
  %v9810 = vpack.c.b16 %v9336, %v9333
  %v9811 = vpack.c.b16 %v9337, %v9334
  %v9812 = vpack.c.b16 %v9341, %v9338
  %v9813 = vpack.c.b16 %v9342, %v9339
  %v9814 = vpack.c.b16 %v9343, %v9340
  %v9815 = vpack.c.b16 %v9347, %v9344
  %v9816 = vpack.c.b16 %v9348, %v9345
  %v9817 = vpack.c.b16 %v9349, %v9346
  %v9818 = vpack.c.b16 %v9353, %v9350
  %v9819 = vpack.c.b16 %v9354, %v9351
  %v9820 = vpack.c.b16 %v9355, %v9352
  %v9821 = vpack.c.b16 %v9359, %v9356
  %v9822 = vpack.c.b16 %v9360, %v9357
  %v9823 = vpack.c.b16 %v9361, %v9358
  %v9824 = vpack.c.b16 %v9365, %v9362
  %v9825 = vpack.c.b16 %v9366, %v9363
  %v9826 = vpack.c.b16 %v9367, %v9364
  %v9827 = vpack.c.b16 %v9371, %v9368
  %v9828 = vpack.c.b16 %v9372, %v9369
  %v9829 = vpack.c.b16 %v9373, %v9370
  %v9830 = vpack.c.b16 %v9377, %v9374
  %v9831 = vpack.c.b16 %v9378, %v9375
  %v9832 = vpack.c.b16 %v9379, %v9376
  %v9833 = vpack.c.b16 %v9383, %v9380
  %v9834 = vpack.c.b16 %v9384, %v9381
  %v9835 = vpack.c.b16 %v9385, %v9382
  %v9836 = vpack.c.b16 %v9389, %v9386
  %v9837 = vpack.c.b16 %v9390, %v9387
  %v9838 = vpack.c.b16 %v9391, %v9388
  %v9839 = vpack.c.b16 %v9395, %v9392
  %v9840 = vpack.c.b16 %v9396, %v9393
  %v9841 = vpack.c.b16 %v9397, %v9394
  %v9842 = vpack.c.b16 %v9401, %v9398
  %v9843 = vpack.c.b16 %v9402, %v9399
  %v9844 = vpack.c.b16 %v9403, %v9400
  %v9845 = vpack.c.b16 %v9407, %v9404
  %v9846 = vpack.c.b16 %v9408, %v9405
  %v9847 = vpack.c.b16 %v9409, %v9406
  %v9848 = vpack.c.b16 %v9413, %v9410
  %v9849 = vpack.c.b16 %v9414, %v9411
  %v9850 = vpack.c.b16 %v9415, %v9412
  %v9851 = vpack.c.b16 %v9419, %v9416
  %v9852 = vpack.c.b16 %v9420, %v9417
  %v9853 = vpack.c.b16 %v9421, %v9418
  %v9854 = vpack.c.b16 %v9425, %v9422
  %v9855 = vpack.c.b16 %v9426, %v9423
  %v9856 = vpack.c.b16 %v9427, %v9424
  %v9857 = vpack.c.b16 %v9431, %v9428
  %v9858 = vpack.c.b16 %v9432, %v9429
  %v9859 = vpack.c.b16 %v9433, %v9430
  %v9860 = vpack.c.b16 %v9437, %v9434
  %v9861 = vpack.c.b16 %v9438, %v9435
  %v9862 = vpack.c.b16 %v9439, %v9436
  %v9863 = vpack.c.b16 %v9443, %v9440
  %v9864 = vpack.c.b16 %v9444, %v9441
  %v9865 = vpack.c.b16 %v9445, %v9442
  %v9866 = vpack.c.b16 %v9449, %v9446
  %v9867 = vpack.c.b16 %v9450, %v9447
  %v9868 = vpack.c.b16 %v9451, %v9448
  %v9869 = vpack.c.b16 %v9455, %v9452
  %v9870 = vpack.c.b16 %v9456, %v9453
  %v9871 = vpack.c.b16 %v9457, %v9454
  %v9872 = vpack.c.b16 %v9461, %v9458
  %v9873 = vpack.c.b16 %v9462, %v9459
  %v9874 = vpack.c.b16 %v9463, %v9460
  %v9875 = vpack.c.b16 %v9467, %v9464
  %v9876 = vpack.c.b16 %v9468, %v9465
  %v9877 = vpack.c.b16 %v9469, %v9466
  %v9878 = vpack.c.b16 %v9473, %v9470
  %v9879 = vpack.c.b16 %v9474, %v9471
  %v9880 = vpack.c.b16 %v9475, %v9472
  %v9881 = vpack.c.b16 %v9479, %v9476
  %v9882 = vpack.c.b16 %v9480, %v9477
  %v9883 = vpack.c.b16 %v9481, %v9478
  %v9884 = vpack.c.b16 %v9485, %v9482
  %v9885 = vpack.c.b16 %v9486, %v9483
  %v9886 = vpack.c.b16 %v9487, %v9484
  %v9887 = vpack.c.b16 %v9491, %v9488
  %v9888 = vpack.c.b16 %v9492, %v9489
  %v9889 = vpack.c.b16 %v9493, %v9490
  %v9890 = vpack.c.b16 %v9497, %v9494
  %v9891 = vpack.c.b16 %v9498, %v9495
  %v9892 = vpack.c.b16 %v9499, %v9496
  %v9893 = vpack.c.b16 %v9503, %v9500
  %v9894 = vpack.c.b16 %v9504, %v9501
  %v9895 = vpack.c.b16 %v9505, %v9502
  %v9896 = vpack.c.b16 %v9509, %v9506
  %v9897 = vpack.c.b16 %v9510, %v9507
  %v9898 = vpack.c.b16 %v9511, %v9508
  %v9899 = vpack.c.b16 %v9515, %v9512
  %v9900 = vpack.c.b16 %v9516, %v9513
  %v9901 = vpack.c.b16 %v9517, %v9514
  %10286 = vmatprep.subr.bf16.mxu0 %v9519
  %10287 = vmatpush1.bf16.msra.mxu0 %v9518
  %10288 = vmatprep.subr.bf16.mxu0 %v9522
  %10289 = vmatpush1.bf16.msra.mxu0 %v9521
  %10290 = vmatprep.subr.bf16.mxu0 %v9525
  %10291 = vmatpush1.bf16.msra.mxu0 %v9524
  %10292 = vmatprep.subr.bf16.mxu0 %v9528
  %10293 = vmatpush1.bf16.msra.mxu0 %v9527
  %10294 = vmatprep.subr.bf16.mxu0 %v9531
  %10295 = vmatpush1.bf16.msra.mxu0 %v9530
  %10296 = vmatprep.subr.bf16.mxu0 %v9534
  %10297 = vmatpush1.bf16.msra.mxu0 %v9533
  %10298 = vmatprep.subr.bf16.mxu0 %v9537
  %10299 = vmatpush1.bf16.msra.mxu0 %v9536
  %10300 = vmatprep.subr.bf16.mxu0 %v9540
  %10301 = vmatpush1.bf16.msra.mxu0 %v9539
  %10302 = vmatprep.subr.bf16.mxu0 %v9543
  %10303 = vmatpush1.bf16.msra.mxu0 %v9542
  %10304 = vmatprep.subr.bf16.mxu0 %v9546
  %10305 = vmatpush1.bf16.msra.mxu0 %v9545
  %10306 = vmatprep.subr.bf16.mxu0 %v9549
  %10307 = vmatpush1.bf16.msra.mxu0 %v9548
  %10308 = vmatprep.subr.bf16.mxu0 %v9552
  %10309 = vmatpush1.bf16.msra.mxu0 %v9551
  %10310 = vmatprep.subr.bf16.mxu0 %v9555
  %10311 = vmatpush1.bf16.msra.mxu0 %v9554
  %10312 = vmatprep.subr.bf16.mxu0 %v9558
  %10313 = vmatpush1.bf16.msra.mxu0 %v9557
  %10314 = vmatprep.subr.bf16.mxu0 %v9561
  %10315 = vmatpush1.bf16.msra.mxu0 %v9560
  %10316 = vmatprep.subr.bf16.mxu0 %v9564
  %10317 = vmatpush1.bf16.msra.mxu0 %v9563
  %10318 = vmatprep.mubr.bf16.mxu0 %v7694
  %10319 = vmatmul.mubr.bf16.gmra.mrb[0].mxu0 %v7693
  %v10320 = vpop.f32.mrb[0].mxu0
  %v10321 = vadd.f32 %v8226, %v10320
  %v10322 = vpop.f32.mrb[0].mxu0
  %v10323 = vadd.f32 %v8230, %v10322
  %v10324 = vpop.f32.mrb[0].mxu0
  %v10325 = vadd.f32 %v8226, %v10324
  %v10326 = vpop.f32.mrb[0].mxu0
  %v10327 = vadd.f32 %v8230, %v10326
  %10328 = vdwg.mxu0
  %10329 = vmatprep.subr.bf16.mxu0 %v9567
  %10330 = vmatpush1.bf16.msra.mxu0 %v9566
  %10331 = vmatprep.subr.bf16.mxu0 %v9570
  %10332 = vmatpush1.bf16.msra.mxu0 %v9569
  %10333 = vmatprep.subr.bf16.mxu0 %v9573
  %10334 = vmatpush1.bf16.msra.mxu0 %v9572
  %10335 = vmatprep.subr.bf16.mxu0 %v9576
  %10336 = vmatpush1.bf16.msra.mxu0 %v9575
  %10337 = vmatprep.subr.bf16.mxu0 %v9579
  %10338 = vmatpush1.bf16.msra.mxu0 %v9578
  %10339 = vmatprep.subr.bf16.mxu0 %v9582
  %10340 = vmatpush1.bf16.msra.mxu0 %v9581
  %10341 = vmatprep.subr.bf16.mxu0 %v9585
  %10342 = vmatpush1.bf16.msra.mxu0 %v9584
  %10343 = vmatprep.subr.bf16.mxu0 %v9588
  %10344 = vmatpush1.bf16.msra.mxu0 %v9587
  %10345 = vmatprep.subr.bf16.mxu0 %v9591
  %10346 = vmatpush1.bf16.msra.mxu0 %v9590
  %10347 = vmatprep.subr.bf16.mxu0 %v9594
  %10348 = vmatpush1.bf16.msra.mxu0 %v9593
  %10349 = vmatprep.subr.bf16.mxu0 %v9597
  %10350 = vmatpush1.bf16.msra.mxu0 %v9596
  %10351 = vmatprep.subr.bf16.mxu0 %v9600
  %10352 = vmatpush1.bf16.msra.mxu0 %v9599
  %10353 = vmatprep.subr.bf16.mxu0 %v9603
  %10354 = vmatpush1.bf16.msra.mxu0 %v9602
  %10355 = vmatprep.subr.bf16.mxu0 %v9606
  %10356 = vmatpush1.bf16.msra.mxu0 %v9605
  %10357 = vmatprep.subr.bf16.mxu0 %v9609
  %10358 = vmatpush1.bf16.msra.mxu0 %v9608
  %10359 = vmatprep.subr.bf16.mxu0 %v9612
  %10360 = vmatpush1.bf16.msra.mxu0 %v9611
  %10361 = vmatprep.mubr.bf16.mxu0 %v7696
  %10362 = vmatmul.mubr.bf16.gmra.mrb[0].mxu0 %v7695
  %v10363 = vpop.f32.mrb[0].mxu0
  %v10364 = vadd.f32 %v10321, %v10363
  %v10365 = vpop.f32.mrb[0].mxu0
  %v10366 = vadd.f32 %v10323, %v10365
  %v10367 = vpop.f32.mrb[0].mxu0
  %v10368 = vadd.f32 %v10325, %v10367
  %v10369 = vpop.f32.mrb[0].mxu0
  %v10370 = vadd.f32 %v10327, %v10369
  %10371 = vdwg.mxu0
  %10372 = vmatprep.subr.bf16.mxu0 %v9615
  %10373 = vmatpush1.bf16.msra.mxu0 %v9614
  %10374 = vmatprep.subr.bf16.mxu0 %v9618
  %10375 = vmatpush1.bf16.msra.mxu0 %v9617
  %10376 = vmatprep.subr.bf16.mxu0 %v9621
  %10377 = vmatpush1.bf16.msra.mxu0 %v9620
  %10378 = vmatprep.subr.bf16.mxu0 %v9624
  %10379 = vmatpush1.bf16.msra.mxu0 %v9623
  %10380 = vmatprep.subr.bf16.mxu0 %v9627
  %10381 = vmatpush1.bf16.msra.mxu0 %v9626
  %10382 = vmatprep.subr.bf16.mxu0 %v9630
  %10383 = vmatpush1.bf16.msra.mxu0 %v9629
  %10384 = vmatprep.subr.bf16.mxu0 %v9633
  %10385 = vmatpush1.bf16.msra.mxu0 %v9632
  %10386 = vmatprep.subr.bf16.mxu0 %v9636
  %10387 = vmatpush1.bf16.msra.mxu0 %v9635
  %10388 = vmatprep.subr.bf16.mxu0 %v9639
  %10389 = vmatpush1.bf16.msra.mxu0 %v9638
  %10390 = vmatprep.subr.bf16.mxu0 %v9642
  %10391 = vmatpush1.bf16.msra.mxu0 %v9641
  %10392 = vmatprep.subr.bf16.mxu0 %v9645
  %10393 = vmatpush1.bf16.msra.mxu0 %v9644
  %10394 = vmatprep.subr.bf16.mxu0 %v9648
  %10395 = vmatpush1.bf16.msra.mxu0 %v9647
  %10396 = vmatprep.subr.bf16.mxu0 %v9651
  %10397 = vmatpush1.bf16.msra.mxu0 %v9650
  %10398 = vmatprep.subr.bf16.mxu0 %v9654
  %10399 = vmatpush1.bf16.msra.mxu0 %v9653
  %10400 = vmatprep.subr.bf16.mxu0 %v9657
  %10401 = vmatpush1.bf16.msra.mxu0 %v9656
  %10402 = vmatprep.subr.bf16.mxu0 %v9660
  %10403 = vmatpush1.bf16.msra.mxu0 %v9659
  %10404 = vmatprep.mubr.bf16.mxu0 %v7698
  %10405 = vmatmul.mubr.bf16.gmra.mrb[0].mxu0 %v7697
  %v10406 = vpop.f32.mrb[0].mxu0
  %v10407 = vadd.f32 %v10364, %v10406
  %v10408 = vpop.f32.mrb[0].mxu0
  %v10409 = vadd.f32 %v10366, %v10408
  %v10410 = vpop.f32.mrb[0].mxu0
  %v10411 = vadd.f32 %v10368, %v10410
  %v10412 = vpop.f32.mrb[0].mxu0
  %v10413 = vadd.f32 %v10370, %v10412
  %10414 = vdwg.mxu0
  %10415 = vmatprep.subr.bf16.mxu0 %v9663
  %10416 = vmatpush1.bf16.msra.mxu0 %v9662
  %10417 = vmatprep.subr.bf16.mxu0 %v9666
  %10418 = vmatpush1.bf16.msra.mxu0 %v9665
  %10419 = vmatprep.subr.bf16.mxu0 %v9669
  %10420 = vmatpush1.bf16.msra.mxu0 %v9668
  %10421 = vmatprep.subr.bf16.mxu0 %v9672
  %10422 = vmatpush1.bf16.msra.mxu0 %v9671
  %10423 = vmatprep.subr.bf16.mxu0 %v9675
  %10424 = vmatpush1.bf16.msra.mxu0 %v9674
  %10425 = vmatprep.subr.bf16.mxu0 %v9678
  %10426 = vmatpush1.bf16.msra.mxu0 %v9677
  %10427 = vmatprep.subr.bf16.mxu0 %v9681
  %10428 = vmatpush1.bf16.msra.mxu0 %v9680
  %10429 = vmatprep.subr.bf16.mxu0 %v9684
  %10430 = vmatpush1.bf16.msra.mxu0 %v9683
  %10431 = vmatprep.subr.bf16.mxu0 %v9687
  %10432 = vmatpush1.bf16.msra.mxu0 %v9686
  %10433 = vmatprep.subr.bf16.mxu0 %v9690
  %10434 = vmatpush1.bf16.msra.mxu0 %v9689
  %10435 = vmatprep.subr.bf16.mxu0 %v9693
  %10436 = vmatpush1.bf16.msra.mxu0 %v9692
  %10437 = vmatprep.subr.bf16.mxu0 %v9696
  %10438 = vmatpush1.bf16.msra.mxu0 %v9695
  %10439 = vmatprep.subr.bf16.mxu0 %v9699
  %10440 = vmatpush1.bf16.msra.mxu0 %v9698
  %10441 = vmatprep.subr.bf16.mxu0 %v9702
  %10442 = vmatpush1.bf16.msra.mxu0 %v9701
  %10443 = vmatprep.subr.bf16.mxu0 %v9705
  %10444 = vmatpush1.bf16.msra.mxu0 %v9704
  %10445 = vmatprep.subr.bf16.mxu0 %v9708
  %10446 = vmatpush1.bf16.msra.mxu0 %v9707
  %10447 = vmatprep.mubr.bf16.mxu0 %v7700
  %10448 = vmatmul.mubr.bf16.gmra.mrb[0].mxu0 %v7699
  %v10449 = vpop.f32.mrb[0].mxu0
  %v10450 = vadd.f32 %v10407, %v10449
  %v10451 = vpop.f32.mrb[0].mxu0
  %v10452 = vadd.f32 %v10409, %v10451
  %v10453 = vpop.f32.mrb[0].mxu0
  %v10454 = vadd.f32 %v10411, %v10453
  %v10455 = vpop.f32.mrb[0].mxu0
  %v10456 = vadd.f32 %v10413, %v10455
  %10457 = vdwg.mxu0
  %10458 = vmatprep.subr.bf16.mxu0 %v9711
  %10459 = vmatpush1.bf16.msra.mxu0 %v9710
  %10460 = vmatprep.subr.bf16.mxu0 %v9714
  %10461 = vmatpush1.bf16.msra.mxu0 %v9713
  %10462 = vmatprep.subr.bf16.mxu0 %v9717
  %10463 = vmatpush1.bf16.msra.mxu0 %v9716
  %10464 = vmatprep.subr.bf16.mxu0 %v9720
  %10465 = vmatpush1.bf16.msra.mxu0 %v9719
  %10466 = vmatprep.subr.bf16.mxu0 %v9723
  %10467 = vmatpush1.bf16.msra.mxu0 %v9722
  %10468 = vmatprep.subr.bf16.mxu0 %v9726
  %10469 = vmatpush1.bf16.msra.mxu0 %v9725
  %10470 = vmatprep.subr.bf16.mxu0 %v9729
  %10471 = vmatpush1.bf16.msra.mxu0 %v9728
  %10472 = vmatprep.subr.bf16.mxu0 %v9732
  %10473 = vmatpush1.bf16.msra.mxu0 %v9731
  %10474 = vmatprep.subr.bf16.mxu0 %v9735
  %10475 = vmatpush1.bf16.msra.mxu0 %v9734
  %10476 = vmatprep.subr.bf16.mxu0 %v9738
  %10477 = vmatpush1.bf16.msra.mxu0 %v9737
  %10478 = vmatprep.subr.bf16.mxu0 %v9741
  %10479 = vmatpush1.bf16.msra.mxu0 %v9740
  %10480 = vmatprep.subr.bf16.mxu0 %v9744
  %10481 = vmatpush1.bf16.msra.mxu0 %v9743
  %10482 = vmatprep.subr.bf16.mxu0 %v9747
  %10483 = vmatpush1.bf16.msra.mxu0 %v9746
  %10484 = vmatprep.subr.bf16.mxu0 %v9750
  %10485 = vmatpush1.bf16.msra.mxu0 %v9749
  %10486 = vmatprep.subr.bf16.mxu0 %v9753
  %10487 = vmatpush1.bf16.msra.mxu0 %v9752
  %10488 = vmatprep.subr.bf16.mxu0 %v9756
  %10489 = vmatpush1.bf16.msra.mxu0 %v9755
  %10490 = vmatprep.mubr.bf16.mxu0 %v7702
  %10491 = vmatmul.mubr.bf16.gmra.mrb[0].mxu0 %v7701
  %v10492 = vpop.f32.mrb[0].mxu0
  %v10493 = vadd.f32 %v10450, %v10492
  %v10494 = vpop.f32.mrb[0].mxu0
  %v10495 = vadd.f32 %v10452, %v10494
  %v10496 = vpop.f32.mrb[0].mxu0
  %v10497 = vadd.f32 %v10454, %v10496
  %v10498 = vpop.f32.mrb[0].mxu0
  %v10499 = vadd.f32 %v10456, %v10498
  %10500 = vdwg.mxu0
  %10501 = vmatprep.subr.bf16.mxu0 %v9759
  %10502 = vmatpush1.bf16.msra.mxu0 %v9758
  %10503 = vmatprep.subr.bf16.mxu0 %v9762
  %10504 = vmatpush1.bf16.msra.mxu0 %v9761
  %10505 = vmatprep.subr.bf16.mxu0 %v9765
  %10506 = vmatpush1.bf16.msra.mxu0 %v9764
  %10507 = vmatprep.subr.bf16.mxu0 %v9768
  %10508 = vmatpush1.bf16.msra.mxu0 %v9767
  %10509 = vmatprep.subr.bf16.mxu0 %v9771
  %10510 = vmatpush1.bf16.msra.mxu0 %v9770
  %10511 = vmatprep.subr.bf16.mxu0 %v9774
  %10512 = vmatpush1.bf16.msra.mxu0 %v9773
  %10513 = vmatprep.subr.bf16.mxu0 %v9777
  %10514 = vmatpush1.bf16.msra.mxu0 %v9776
  %10515 = vmatprep.subr.bf16.mxu0 %v9780
  %10516 = vmatpush1.bf16.msra.mxu0 %v9779
  %10517 = vmatprep.subr.bf16.mxu0 %v9783
  %10518 = vmatpush1.bf16.msra.mxu0 %v9782
  %10519 = vmatprep.subr.bf16.mxu0 %v9786
  %10520 = vmatpush1.bf16.msra.mxu0 %v9785
  %10521 = vmatprep.subr.bf16.mxu0 %v9789
  %10522 = vmatpush1.bf16.msra.mxu0 %v9788
  %10523 = vmatprep.subr.bf16.mxu0 %v9792
  %10524 = vmatpush1.bf16.msra.mxu0 %v9791
  %10525 = vmatprep.subr.bf16.mxu0 %v9795
  %10526 = vmatpush1.bf16.msra.mxu0 %v9794
  %10527 = vmatprep.subr.bf16.mxu0 %v9798
  %10528 = vmatpush1.bf16.msra.mxu0 %v9797
  %10529 = vmatprep.subr.bf16.mxu0 %v9801
  %10530 = vmatpush1.bf16.msra.mxu0 %v9800
  %10531 = vmatprep.subr.bf16.mxu0 %v9804
  %10532 = vmatpush1.bf16.msra.mxu0 %v9803
  %10533 = vmatprep.mubr.bf16.mxu0 %v7704
  %10534 = vmatmul.mubr.bf16.gmra.mrb[0].mxu0 %v7703
  %v10535 = vpop.f32.mrb[0].mxu0
  %v10536 = vadd.f32 %v10493, %v10535
  %v10537 = vpop.f32.mrb[0].mxu0
  %v10538 = vadd.f32 %v10495, %v10537
  %v10539 = vpop.f32.mrb[0].mxu0
  %v10540 = vadd.f32 %v10497, %v10539
  %v10541 = vpop.f32.mrb[0].mxu0
  %v10542 = vadd.f32 %v10499, %v10541
  %10543 = vdwg.mxu0
  %10544 = vmatprep.subr.bf16.mxu0 %v9807
  %10545 = vmatpush1.bf16.msra.mxu0 %v9806
  %10546 = vmatprep.subr.bf16.mxu0 %v9810
  %10547 = vmatpush1.bf16.msra.mxu0 %v9809
  %10548 = vmatprep.subr.bf16.mxu0 %v9813
  %10549 = vmatpush1.bf16.msra.mxu0 %v9812
  %10550 = vmatprep.subr.bf16.mxu0 %v9816
  %10551 = vmatpush1.bf16.msra.mxu0 %v9815
  %10552 = vmatprep.subr.bf16.mxu0 %v9819
  %10553 = vmatpush1.bf16.msra.mxu0 %v9818
  %10554 = vmatprep.subr.bf16.mxu0 %v9822
  %10555 = vmatpush1.bf16.msra.mxu0 %v9821
  %10556 = vmatprep.subr.bf16.mxu0 %v9825
  %10557 = vmatpush1.bf16.msra.mxu0 %v9824
  %10558 = vmatprep.subr.bf16.mxu0 %v9828
  %10559 = vmatpush1.bf16.msra.mxu0 %v9827
  %10560 = vmatprep.subr.bf16.mxu0 %v9831
  %10561 = vmatpush1.bf16.msra.mxu0 %v9830
  %10562 = vmatprep.subr.bf16.mxu0 %v9834
  %10563 = vmatpush1.bf16.msra.mxu0 %v9833
  %10564 = vmatprep.subr.bf16.mxu0 %v9837
  %10565 = vmatpush1.bf16.msra.mxu0 %v9836
  %10566 = vmatprep.subr.bf16.mxu0 %v9840
  %10567 = vmatpush1.bf16.msra.mxu0 %v9839
  %10568 = vmatprep.subr.bf16.mxu0 %v9843
  %10569 = vmatpush1.bf16.msra.mxu0 %v9842
  %10570 = vmatprep.subr.bf16.mxu0 %v9846
  %10571 = vmatpush1.bf16.msra.mxu0 %v9845
  %10572 = vmatprep.subr.bf16.mxu0 %v9849
  %10573 = vmatpush1.bf16.msra.mxu0 %v9848
  %10574 = vmatprep.subr.bf16.mxu0 %v9852
  %10575 = vmatpush1.bf16.msra.mxu0 %v9851
  %10576 = vmatprep.mubr.bf16.mxu0 %v7706
  %10577 = vmatmul.mubr.bf16.gmra.mrb[0].mxu0 %v7705
  %v10578 = vpop.f32.mrb[0].mxu0
  %v10579 = vadd.f32 %v10536, %v10578
  %v10580 = vpop.f32.mrb[0].mxu0
  %v10581 = vadd.f32 %v10538, %v10580
  %v10582 = vpop.f32.mrb[0].mxu0
  %v10583 = vadd.f32 %v10540, %v10582
  %v10584 = vpop.f32.mrb[0].mxu0
  %v10585 = vadd.f32 %v10542, %v10584
  %10586 = vdwg.mxu0
  %10587 = vmatprep.subr.bf16.mxu0 %v9855
  %10588 = vmatpush1.bf16.msra.mxu0 %v9854
  %10589 = vmatprep.subr.bf16.mxu0 %v9858
  %10590 = vmatpush1.bf16.msra.mxu0 %v9857
  %10591 = vmatprep.subr.bf16.mxu0 %v9861
  %10592 = vmatpush1.bf16.msra.mxu0 %v9860
  %10593 = vmatprep.subr.bf16.mxu0 %v9864
  %10594 = vmatpush1.bf16.msra.mxu0 %v9863
  %10595 = vmatprep.subr.bf16.mxu0 %v9867
  %10596 = vmatpush1.bf16.msra.mxu0 %v9866
  %10597 = vmatprep.subr.bf16.mxu0 %v9870
  %10598 = vmatpush1.bf16.msra.mxu0 %v9869
  %10599 = vmatprep.subr.bf16.mxu0 %v9873
  %10600 = vmatpush1.bf16.msra.mxu0 %v9872
  %10601 = vmatprep.subr.bf16.mxu0 %v9876
  %10602 = vmatpush1.bf16.msra.mxu0 %v9875
  %10603 = vmatprep.subr.bf16.mxu0 %v9879
  %10604 = vmatpush1.bf16.msra.mxu0 %v9878
  %10605 = vmatprep.subr.bf16.mxu0 %v9882
  %10606 = vmatpush1.bf16.msra.mxu0 %v9881
  %10607 = vmatprep.subr.bf16.mxu0 %v9885
  %10608 = vmatpush1.bf16.msra.mxu0 %v9884
  %10609 = vmatprep.subr.bf16.mxu0 %v9888
  %10610 = vmatpush1.bf16.msra.mxu0 %v9887
  %10611 = vmatprep.subr.bf16.mxu0 %v9891
  %10612 = vmatpush1.bf16.msra.mxu0 %v9890
  %10613 = vmatprep.subr.bf16.mxu0 %v9894
  %10614 = vmatpush1.bf16.msra.mxu0 %v9893
  %10615 = vmatprep.subr.bf16.mxu0 %v9897
  %10616 = vmatpush1.bf16.msra.mxu0 %v9896
  %10617 = vmatprep.subr.bf16.mxu0 %v9900
  %10618 = vmatpush1.bf16.msra.mxu0 %v9899
  %10619 = vmatprep.mubr.bf16.mxu0 %v7708
  %10620 = vmatmul.mubr.bf16.gmra.mrb[0].mxu0 %v7707
  %v10621 = vpop.f32.mrb[0].mxu0
  %v10622 = vadd.f32 %v10579, %v10621
  %v10623 = vpop.f32.mrb[0].mxu0
  %v10624 = vadd.f32 %v10581, %v10623
  %v10625 = vpop.f32.mrb[0].mxu0
  %v10626 = vadd.f32 %v10583, %v10625
  %v10627 = vpop.f32.mrb[0].mxu0
  %v10628 = vadd.f32 %v10585, %v10627
  %10629 = vdwg.mxu0
  %10630 = vmatprep.subr.bf16.mxu0 0
  %10631 = vmatpush1.bf16.msra.mxu0 %v9520
  %10632 = vmatprep.subr.bf16.mxu0 0
  %10633 = vmatpush1.bf16.msra.mxu0 %v9523
  %10634 = vmatprep.subr.bf16.mxu0 0
  %10635 = vmatpush1.bf16.msra.mxu0 %v9526
  %10636 = vmatprep.subr.bf16.mxu0 0
  %10637 = vmatpush1.bf16.msra.mxu0 %v9529
  %10638 = vmatprep.subr.bf16.mxu0 0
  %10639 = vmatpush1.bf16.msra.mxu0 %v9532
  %10640 = vmatprep.subr.bf16.mxu0 0
  %10641 = vmatpush1.bf16.msra.mxu0 %v9535
  %10642 = vmatprep.subr.bf16.mxu0 0
  %10643 = vmatpush1.bf16.msra.mxu0 %v9538
  %10644 = vmatprep.subr.bf16.mxu0 0
  %10645 = vmatpush1.bf16.msra.mxu0 %v9541
  %10646 = vmatprep.subr.bf16.mxu0 0
  %10647 = vmatpush1.bf16.msra.mxu0 %v9544
  %10648 = vmatprep.subr.bf16.mxu0 0
  %10649 = vmatpush1.bf16.msra.mxu0 %v9547
  %10650 = vmatprep.subr.bf16.mxu0 0
  %10651 = vmatpush1.bf16.msra.mxu0 %v9550
  %10652 = vmatprep.subr.bf16.mxu0 0
  %10653 = vmatpush1.bf16.msra.mxu0 %v9553
  %10654 = vmatprep.subr.bf16.mxu0 0
  %10655 = vmatpush1.bf16.msra.mxu0 %v9556
  %10656 = vmatprep.subr.bf16.mxu0 0
  %10657 = vmatpush1.bf16.msra.mxu0 %v9559
  %10658 = vmatprep.subr.bf16.mxu0 0
  %10659 = vmatpush1.bf16.msra.mxu0 %v9562
  %10660 = vmatprep.subr.bf16.mxu0 0
  %10661 = vmatpush1.bf16.msra.mxu0 %v9565
  %10662 = vmatprep.mubr.bf16.mxu0 %v7694
  %10663 = vmatmul.mubr.bf16.gmra.mrb[0].mxu0 %v7693
  %v10664 = vpop.f32.mrb[0].mxu0
  %v10665 = vadd.f32 %v8234, %v10664
  %v10666 = vpop.f32.mrb[0].mxu0
  %v10667 = vpop.f32.mrb[0].mxu0
  %v10668 = vadd.f32 %v8234, %v10667
  %v10669 = vpop.f32.mrb[0].mxu0
  %10670 = vdwg.mxu0
  %10671 = vmatprep.subr.bf16.mxu0 0
  %10672 = vmatpush1.bf16.msra.mxu0 %v9568
  %10673 = vmatprep.subr.bf16.mxu0 0
  %10674 = vmatpush1.bf16.msra.mxu0 %v9571
  %10675 = vmatprep.subr.bf16.mxu0 0
  %10676 = vmatpush1.bf16.msra.mxu0 %v9574
  %10677 = vmatprep.subr.bf16.mxu0 0
  %10678 = vmatpush1.bf16.msra.mxu0 %v9577
  %10679 = vmatprep.subr.bf16.mxu0 0
  %10680 = vmatpush1.bf16.msra.mxu0 %v9580
  %10681 = vmatprep.subr.bf16.mxu0 0
  %10682 = vmatpush1.bf16.msra.mxu0 %v9583
  %10683 = vmatprep.subr.bf16.mxu0 0
  %10684 = vmatpush1.bf16.msra.mxu0 %v9586
  %10685 = vmatprep.subr.bf16.mxu0 0
  %10686 = vmatpush1.bf16.msra.mxu0 %v9589
  %10687 = vmatprep.subr.bf16.mxu0 0
  %10688 = vmatpush1.bf16.msra.mxu0 %v9592
  %10689 = vmatprep.subr.bf16.mxu0 0
  %10690 = vmatpush1.bf16.msra.mxu0 %v9595
  %10691 = vmatprep.subr.bf16.mxu0 0
  %10692 = vmatpush1.bf16.msra.mxu0 %v9598
  %10693 = vmatprep.subr.bf16.mxu0 0
  %10694 = vmatpush1.bf16.msra.mxu0 %v9601
  %10695 = vmatprep.subr.bf16.mxu0 0
  %10696 = vmatpush1.bf16.msra.mxu0 %v9604
  %10697 = vmatprep.subr.bf16.mxu0 0
  %10698 = vmatpush1.bf16.msra.mxu0 %v9607
  %10699 = vmatprep.subr.bf16.mxu0 0
  %10700 = vmatpush1.bf16.msra.mxu0 %v9610
  %10701 = vmatprep.subr.bf16.mxu0 0
  %10702 = vmatpush1.bf16.msra.mxu0 %v9613
  %10703 = vmatprep.mubr.bf16.mxu0 %v7696
  %10704 = vmatmul.mubr.bf16.gmra.mrb[0].mxu0 %v7695
  %v10705 = vpop.f32.mrb[0].mxu0
  %v10706 = vadd.f32 %v10665, %v10705
  %v10707 = vpop.f32.mrb[0].mxu0
  %v10708 = vpop.f32.mrb[0].mxu0
  %v10709 = vadd.f32 %v10668, %v10708
  %v10710 = vpop.f32.mrb[0].mxu0
  %10711 = vdwg.mxu0
  %10712 = vmatprep.subr.bf16.mxu0 0
  %10713 = vmatpush1.bf16.msra.mxu0 %v9616
  %10714 = vmatprep.subr.bf16.mxu0 0
  %10715 = vmatpush1.bf16.msra.mxu0 %v9619
  %10716 = vmatprep.subr.bf16.mxu0 0
  %10717 = vmatpush1.bf16.msra.mxu0 %v9622
  %10718 = vmatprep.subr.bf16.mxu0 0
  %10719 = vmatpush1.bf16.msra.mxu0 %v9625
  %10720 = vmatprep.subr.bf16.mxu0 0
  %10721 = vmatpush1.bf16.msra.mxu0 %v9628
  %10722 = vmatprep.subr.bf16.mxu0 0
  %10723 = vmatpush1.bf16.msra.mxu0 %v9631
  %10724 = vmatprep.subr.bf16.mxu0 0
  %10725 = vmatpush1.bf16.msra.mxu0 %v9634
  %10726 = vmatprep.subr.bf16.mxu0 0
  %10727 = vmatpush1.bf16.msra.mxu0 %v9637
  %10728 = vmatprep.subr.bf16.mxu0 0
  %10729 = vmatpush1.bf16.msra.mxu0 %v9640
  %10730 = vmatprep.subr.bf16.mxu0 0
  %10731 = vmatpush1.bf16.msra.mxu0 %v9643
  %10732 = vmatprep.subr.bf16.mxu0 0
  %10733 = vmatpush1.bf16.msra.mxu0 %v9646
  %10734 = vmatprep.subr.bf16.mxu0 0
  %10735 = vmatpush1.bf16.msra.mxu0 %v9649
  %10736 = vmatprep.subr.bf16.mxu0 0
  %10737 = vmatpush1.bf16.msra.mxu0 %v9652
  %10738 = vmatprep.subr.bf16.mxu0 0
  %10739 = vmatpush1.bf16.msra.mxu0 %v9655
  %10740 = vmatprep.subr.bf16.mxu0 0
  %10741 = vmatpush1.bf16.msra.mxu0 %v9658
  %10742 = vmatprep.subr.bf16.mxu0 0
  %10743 = vmatpush1.bf16.msra.mxu0 %v9661
  %10744 = vmatprep.mubr.bf16.mxu0 %v7698
  %10745 = vmatmul.mubr.bf16.gmra.mrb[0].mxu0 %v7697
  %v10746 = vpop.f32.mrb[0].mxu0
  %v10747 = vadd.f32 %v10706, %v10746
  %v10748 = vpop.f32.mrb[0].mxu0
  %v10749 = vpop.f32.mrb[0].mxu0
  %v10750 = vadd.f32 %v10709, %v10749
  %v10751 = vpop.f32.mrb[0].mxu0
  %10752 = vdwg.mxu0
  %10753 = vmatprep.subr.bf16.mxu0 0
  %10754 = vmatpush1.bf16.msra.mxu0 %v9664
  %10755 = vmatprep.subr.bf16.mxu0 0
  %10756 = vmatpush1.bf16.msra.mxu0 %v9667
  %10757 = vmatprep.subr.bf16.mxu0 0
  %10758 = vmatpush1.bf16.msra.mxu0 %v9670
  %10759 = vmatprep.subr.bf16.mxu0 0
  %10760 = vmatpush1.bf16.msra.mxu0 %v9673
  %10761 = vmatprep.subr.bf16.mxu0 0
  %10762 = vmatpush1.bf16.msra.mxu0 %v9676
  %10763 = vmatprep.subr.bf16.mxu0 0
  %10764 = vmatpush1.bf16.msra.mxu0 %v9679
  %10765 = vmatprep.subr.bf16.mxu0 0
  %10766 = vmatpush1.bf16.msra.mxu0 %v9682
  %10767 = vmatprep.subr.bf16.mxu0 0
  %10768 = vmatpush1.bf16.msra.mxu0 %v9685
  %10769 = vmatprep.subr.bf16.mxu0 0
  %10770 = vmatpush1.bf16.msra.mxu0 %v9688
  %10771 = vmatprep.subr.bf16.mxu0 0
  %10772 = vmatpush1.bf16.msra.mxu0 %v9691
  %10773 = vmatprep.subr.bf16.mxu0 0
  %10774 = vmatpush1.bf16.msra.mxu0 %v9694
  %10775 = vmatprep.subr.bf16.mxu0 0
  %10776 = vmatpush1.bf16.msra.mxu0 %v9697
  %10777 = vmatprep.subr.bf16.mxu0 0
  %10778 = vmatpush1.bf16.msra.mxu0 %v9700
  %10779 = vmatprep.subr.bf16.mxu0 0
  %10780 = vmatpush1.bf16.msra.mxu0 %v9703
  %10781 = vmatprep.subr.bf16.mxu0 0
  %10782 = vmatpush1.bf16.msra.mxu0 %v9706
  %10783 = vmatprep.subr.bf16.mxu0 0
  %10784 = vmatpush1.bf16.msra.mxu0 %v9709
  %10785 = vmatprep.mubr.bf16.mxu0 %v7700
  %10786 = vmatmul.mubr.bf16.gmra.mrb[0].mxu0 %v7699
  %v10787 = vpop.f32.mrb[0].mxu0
  %v10788 = vadd.f32 %v10747, %v10787
  %v10789 = vpop.f32.mrb[0].mxu0
  %v10790 = vpop.f32.mrb[0].mxu0
  %v10791 = vadd.f32 %v10750, %v10790
  %v10792 = vpop.f32.mrb[0].mxu0
  %10793 = vdwg.mxu0
  %10794 = vmatprep.subr.bf16.mxu0 0
  %10795 = vmatpush1.bf16.msra.mxu0 %v9712
  %10796 = vmatprep.subr.bf16.mxu0 0
  %10797 = vmatpush1.bf16.msra.mxu0 %v9715
  %10798 = vmatprep.subr.bf16.mxu0 0
  %10799 = vmatpush1.bf16.msra.mxu0 %v9718
  %10800 = vmatprep.subr.bf16.mxu0 0
  %10801 = vmatpush1.bf16.msra.mxu0 %v9721
  %10802 = vmatprep.subr.bf16.mxu0 0
  %10803 = vmatpush1.bf16.msra.mxu0 %v9724
  %10804 = vmatprep.subr.bf16.mxu0 0
  %10805 = vmatpush1.bf16.msra.mxu0 %v9727
  %10806 = vmatprep.subr.bf16.mxu0 0
  %10807 = vmatpush1.bf16.msra.mxu0 %v9730
  %10808 = vmatprep.subr.bf16.mxu0 0
  %10809 = vmatpush1.bf16.msra.mxu0 %v9733
  %10810 = vmatprep.subr.bf16.mxu0 0
  %10811 = vmatpush1.bf16.msra.mxu0 %v9736
  %10812 = vmatprep.subr.bf16.mxu0 0
  %10813 = vmatpush1.bf16.msra.mxu0 %v9739
  %10814 = vmatprep.subr.bf16.mxu0 0
  %10815 = vmatpush1.bf16.msra.mxu0 %v9742
  %10816 = vmatprep.subr.bf16.mxu0 0
  %10817 = vmatpush1.bf16.msra.mxu0 %v9745
  %10818 = vmatprep.subr.bf16.mxu0 0
  %10819 = vmatpush1.bf16.msra.mxu0 %v9748
  %10820 = vmatprep.subr.bf16.mxu0 0
  %10821 = vmatpush1.bf16.msra.mxu0 %v9751
  %10822 = vmatprep.subr.bf16.mxu0 0
  %10823 = vmatpush1.bf16.msra.mxu0 %v9754
  %10824 = vmatprep.subr.bf16.mxu0 0
  %10825 = vmatpush1.bf16.msra.mxu0 %v9757
  %10826 = vmatprep.mubr.bf16.mxu0 %v7702
  %10827 = vmatmul.mubr.bf16.gmra.mrb[0].mxu0 %v7701
  %v10828 = vpop.f32.mrb[0].mxu0
  %v10829 = vadd.f32 %v10788, %v10828
  %v10830 = vpop.f32.mrb[0].mxu0
  %v10831 = vpop.f32.mrb[0].mxu0
  %v10832 = vadd.f32 %v10791, %v10831
  %v10833 = vpop.f32.mrb[0].mxu0
  %10834 = vdwg.mxu0
  %10835 = vmatprep.subr.bf16.mxu0 0
  %10836 = vmatpush1.bf16.msra.mxu0 %v9760
  %10837 = vmatprep.subr.bf16.mxu0 0
  %10838 = vmatpush1.bf16.msra.mxu0 %v9763
  %10839 = vmatprep.subr.bf16.mxu0 0
  %10840 = vmatpush1.bf16.msra.mxu0 %v9766
  %10841 = vmatprep.subr.bf16.mxu0 0
  %10842 = vmatpush1.bf16.msra.mxu0 %v9769
  %10843 = vmatprep.subr.bf16.mxu0 0
  %10844 = vmatpush1.bf16.msra.mxu0 %v9772
  %10845 = vmatprep.subr.bf16.mxu0 0
  %10846 = vmatpush1.bf16.msra.mxu0 %v9775
  %10847 = vmatprep.subr.bf16.mxu0 0
  %10848 = vmatpush1.bf16.msra.mxu0 %v9778
  %10849 = vmatprep.subr.bf16.mxu0 0
  %10850 = vmatpush1.bf16.msra.mxu0 %v9781
  %10851 = vmatprep.subr.bf16.mxu0 0
  %10852 = vmatpush1.bf16.msra.mxu0 %v9784
  %10853 = vmatprep.subr.bf16.mxu0 0
  %10854 = vmatpush1.bf16.msra.mxu0 %v9787
  %10855 = vmatprep.subr.bf16.mxu0 0
  %10856 = vmatpush1.bf16.msra.mxu0 %v9790
  %10857 = vmatprep.subr.bf16.mxu0 0
  %10858 = vmatpush1.bf16.msra.mxu0 %v9793
  %10859 = vmatprep.subr.bf16.mxu0 0
  %10860 = vmatpush1.bf16.msra.mxu0 %v9796
  %10861 = vmatprep.subr.bf16.mxu0 0
  %10862 = vmatpush1.bf16.msra.mxu0 %v9799
  %10863 = vmatprep.subr.bf16.mxu0 0
  %10864 = vmatpush1.bf16.msra.mxu0 %v9802
  %10865 = vmatprep.subr.bf16.mxu0 0
  %10866 = vmatpush1.bf16.msra.mxu0 %v9805
  %10867 = vmatprep.mubr.bf16.mxu0 %v7704
  %10868 = vmatmul.mubr.bf16.gmra.mrb[0].mxu0 %v7703
  %v10869 = vpop.f32.mrb[0].mxu0
  %v10870 = vadd.f32 %v10829, %v10869
  %v10871 = vpop.f32.mrb[0].mxu0
  %v10872 = vpop.f32.mrb[0].mxu0
  %v10873 = vadd.f32 %v10832, %v10872
  %v10874 = vpop.f32.mrb[0].mxu0
  %10875 = vdwg.mxu0
  %10876 = vmatprep.subr.bf16.mxu0 0
  %10877 = vmatpush1.bf16.msra.mxu0 %v9808
  %10878 = vmatprep.subr.bf16.mxu0 0
  %10879 = vmatpush1.bf16.msra.mxu0 %v9811
  %10880 = vmatprep.subr.bf16.mxu0 0
  %10881 = vmatpush1.bf16.msra.mxu0 %v9814
  %10882 = vmatprep.subr.bf16.mxu0 0
  %10883 = vmatpush1.bf16.msra.mxu0 %v9817
  %10884 = vmatprep.subr.bf16.mxu0 0
  %10885 = vmatpush1.bf16.msra.mxu0 %v9820
  %10886 = vmatprep.subr.bf16.mxu0 0
  %10887 = vmatpush1.bf16.msra.mxu0 %v9823
  %10888 = vmatprep.subr.bf16.mxu0 0
  %10889 = vmatpush1.bf16.msra.mxu0 %v9826
  %10890 = vmatprep.subr.bf16.mxu0 0
  %10891 = vmatpush1.bf16.msra.mxu0 %v9829
  %10892 = vmatprep.subr.bf16.mxu0 0
  %10893 = vmatpush1.bf16.msra.mxu0 %v9832
  %10894 = vmatprep.subr.bf16.mxu0 0
  %10895 = vmatpush1.bf16.msra.mxu0 %v9835
  %10896 = vmatprep.subr.bf16.mxu0 0
  %10897 = vmatpush1.bf16.msra.mxu0 %v9838
  %10898 = vmatprep.subr.bf16.mxu0 0
  %10899 = vmatpush1.bf16.msra.mxu0 %v9841
  %10900 = vmatprep.subr.bf16.mxu0 0
  %10901 = vmatpush1.bf16.msra.mxu0 %v9844
  %10902 = vmatprep.subr.bf16.mxu0 0
  %10903 = vmatpush1.bf16.msra.mxu0 %v9847
  %10904 = vmatprep.subr.bf16.mxu0 0
  %10905 = vmatpush1.bf16.msra.mxu0 %v9850
  %10906 = vmatprep.subr.bf16.mxu0 0
  %10907 = vmatpush1.bf16.msra.mxu0 %v9853
  %10908 = vmatprep.mubr.bf16.mxu0 %v7706
  %10909 = vmatmul.mubr.bf16.gmra.mrb[0].mxu0 %v7705
  %v10910 = vpop.f32.mrb[0].mxu0
  %v10911 = vadd.f32 %v10870, %v10910
  %v10912 = vpop.f32.mrb[0].mxu0
  %v10913 = vpop.f32.mrb[0].mxu0
  %v10914 = vadd.f32 %v10873, %v10913
  %v10915 = vpop.f32.mrb[0].mxu0
  %10916 = vdwg.mxu0
  %10917 = vmatprep.subr.bf16.mxu0 0
  %10918 = vmatpush1.bf16.msra.mxu0 %v9856
  %10919 = vmatprep.subr.bf16.mxu0 0
  %10920 = vmatpush1.bf16.msra.mxu0 %v9859
  %10921 = vmatprep.subr.bf16.mxu0 0
  %10922 = vmatpush1.bf16.msra.mxu0 %v9862
  %10923 = vmatprep.subr.bf16.mxu0 0
  %10924 = vmatpush1.bf16.msra.mxu0 %v9865
  %10925 = vmatprep.subr.bf16.mxu0 0
  %10926 = vmatpush1.bf16.msra.mxu0 %v9868
  %10927 = vmatprep.subr.bf16.mxu0 0
  %10928 = vmatpush1.bf16.msra.mxu0 %v9871
  %10929 = vmatprep.subr.bf16.mxu0 0
  %10930 = vmatpush1.bf16.msra.mxu0 %v9874
  %10931 = vmatprep.subr.bf16.mxu0 0
  %10932 = vmatpush1.bf16.msra.mxu0 %v9877
  %10933 = vmatprep.subr.bf16.mxu0 0
  %10934 = vmatpush1.bf16.msra.mxu0 %v9880
  %10935 = vmatprep.subr.bf16.mxu0 0
  %10936 = vmatpush1.bf16.msra.mxu0 %v9883
  %10937 = vmatprep.subr.bf16.mxu0 0
  %10938 = vmatpush1.bf16.msra.mxu0 %v9886
  %10939 = vmatprep.subr.bf16.mxu0 0
  %10940 = vmatpush1.bf16.msra.mxu0 %v9889
  %10941 = vmatprep.subr.bf16.mxu0 0
  %10942 = vmatpush1.bf16.msra.mxu0 %v9892
  %10943 = vmatprep.subr.bf16.mxu0 0
  %10944 = vmatpush1.bf16.msra.mxu0 %v9895
  %10945 = vmatprep.subr.bf16.mxu0 0
  %10946 = vmatpush1.bf16.msra.mxu0 %v9898
  %10947 = vmatprep.subr.bf16.mxu0 0
  %10948 = vmatpush1.bf16.msra.mxu0 %v9901
  %10949 = vmatprep.mubr.bf16.mxu0 %v7708
  %10950 = vmatmul.mubr.bf16.gmra.mrb[0].mxu0 %v7707
  %v10951 = vpop.f32.mrb[0].mxu0
  %v10952 = vadd.f32 %v10911, %v10951
  %v10953 = vpop.f32.mrb[0].mxu0
  %v10954 = vpop.f32.mrb[0].mxu0
  %v10955 = vadd.f32 %v10914, %v10954
  %v10956 = vpop.f32.mrb[0].mxu0
  %10957 = vdwg.mxu0
  %v10958 = vadd.f32 %v5021, %v10622
  %v10959 = vadd.f32 %v5022, %v10624
  %v10960 = vadd.f32 %v5023, %v10952
  %v10961 = vadd.f32 %v5024, %v10626
  %v10962 = vadd.f32 %v5025, %v10628
  %v10963 = vadd.f32 %v5026, %v10955
  %v10964 = vld [vmem:[%s21] sm:$0x7]
  %v10965 = vld [vmem:[%s22] sm:$0x7]
  %v10966 = vadd.f32 %v10958, %v10959
  %v10967 = vsel %vm759, %v10960, 0.0
  %v10968 = vadd.f32 %v10966, %v10967
  %10969 = vadd.xlane.f32.xlu0 %v10968
  %v10970 = vpop.xlane.xlu0 %10969
  %v10971 = vsel %vm763, %v10961, 0.0
  %v10972 = vsel %vm763, %v10962, 0.0
  %v10973 = vadd.f32 %v10971, %v10972
  %v10974 = vsel %vm4939, %v10963, 0.0
  %v10975 = vadd.f32 %v10973, %v10974
  %10976 = vadd.xlane.f32.xlu0 %v10975
  %v10977 = vpop.xlane.xlu0 %10976
  %v10978 = vmul.f32 %v10970, %v4944
  %v10979 = vmul.f32 %v10977, %v4944
  %v10980 = vsub.f32 %v10958, %v10978
  %v10981 = vsub.f32 %v10959, %v10978
  %v10982 = vsub.f32 %v10960, %v10978
  %v10983 = vsub.f32 %v10961, %v10979
  %v10984 = vsub.f32 %v10962, %v10979
  %v10985 = vsub.f32 %v10963, %v10979
  %v10986 = vmul.f32 %v10980, %v10980
  %v10987 = vmul.f32 %v10981, %v10981
  %v10988 = vmul.f32 %v10982, %v10982
  %v10989 = vmul.f32 %v10983, %v10983
  %v10990 = vmul.f32 %v10984, %v10984
  %v10991 = vmul.f32 %v10985, %v10985
  %v10992 = vadd.f32 %v10986, %v10987
  %v10993 = vsel %vm759, %v10988, 0.0
  %v10994 = vadd.f32 %v10992, %v10993
  %10995 = vadd.xlane.f32.xlu0 %v10994
  %v10996 = vpop.xlane.xlu0 %10995
  %v10997 = vsel %vm763, %v10989, 0.0
  %v10998 = vsel %vm763, %v10990, 0.0
  %v10999 = vadd.f32 %v10997, %v10998
  %v11000 = vsel %vm4939, %v10991, 0.0
  %v11001 = vadd.f32 %v10999, %v11000
  %11002 = vadd.xlane.f32.xlu0 %v11001
  %v11003 = vpop.xlane.xlu0 %11002
  %v11004 = vmul.f32 %v10996, %v4944
  %v11005 = vmul.f32 %v11003, %v4944
  %v11006 = vadd.f32 %v11004, 1e-05
  %v11007 = vadd.f32 %v11005, 1e-05
  %v11008 = vrsqrt.pop %v11006
  %v11009 = vrsqrt.pop %v11007
  %v11010 = vmul.f32 %v10980, %v11008
  %v11011 = vmul.f32 %v10981, %v11008
  %v11012 = vmul.f32 %v10982, %v11008
  %v11013 = vmul.f32 %v10983, %v11009
  %v11014 = vmul.f32 %v10984, %v11009
  %v11015 = vmul.f32 %v10985, %v11009
  %v11017 = vlaneseq
  %v11018 = vshrl.u32 %v11017, 7
  %v11019 = vsub.s32 0, %v11018
  %v11020 = vrot.slane %v10964, %v11019
  %v11021 = vlaneseq
  %v11022 = vshrl.u32 %v11021, 7
  %v11023 = vsub.s32 1, %v11022
  %v11024 = vrot.slane %v10964, %v11023
  %v11025 = vlaneseq
  %v11026 = vshrl.u32 %v11025, 7
  %v11027 = vsub.s32 2, %v11026
  %v11028 = vrot.slane %v10964, %v11027
  %v11032 = vmul.f32 %v11010, %v11020
  %v11033 = vmul.f32 %v11011, %v11024
  %v11034 = vmul.f32 %v11012, %v11028
  %v11035 = vmul.f32 %v11013, %v11020
  %v11036 = vmul.f32 %v11014, %v11024
  %v11037 = vmul.f32 %v11015, %v11028
  %v11039 = vlaneseq
  %v11040 = vshrl.u32 %v11039, 7
  %v11041 = vsub.s32 0, %v11040
  %v11042 = vrot.slane %v10965, %v11041
  %v11043 = vlaneseq
  %v11044 = vshrl.u32 %v11043, 7
  %v11045 = vsub.s32 1, %v11044
  %v11046 = vrot.slane %v10965, %v11045
  %v11047 = vlaneseq
  %v11048 = vshrl.u32 %v11047, 7
  %v11049 = vsub.s32 2, %v11048
  %v11050 = vrot.slane %v10965, %v11049
  %v11054 = vadd.f32 %v11032, %v11042
  %v11055 = vadd.f32 %v11033, %v11046
  %v11056 = vadd.f32 %v11034, %v11050
  %v11057 = vadd.f32 %v11035, %v11042
  %v11058 = vadd.f32 %v11036, %v11046
  %v11059 = vadd.f32 %v11037, %v11050
  %11060 = vst [vmem:[%s23] sm:$0xff] %v11054
  %11061 = vst [vmem:[%s23 + $0x8] sm:$0xff] %v11055
  %11062 = vst.msk [vmem:[%s23 + $0x10] sm:$0xff] %vm759, %v11056
  %11063 = vst [vmem:[%s23 + $0x18] sm:$0x3f] %v11057
  %11064 = vst [vmem:[%s23 + $0x20] sm:$0x3f] %v11058
  %11065 = vst.msk [vmem:[%s23 + $0x28] sm:$0x3f] %vm4939, %v11059
  // Predicated region
  $region94: #{text_forward.1} parent=0 // pred_check
    _
  $region95: #{text_forward.1} parent=0 // pred_check_branch
    %11067 = sbr.rel (0) target = $region97
  $region96: #{text_forward.1} parent=0 // pred_region
    _
  $region97: #{text_forward.1} parent=0 // pred_fallthru
    _
  // Predicated region
  $region98: #{text_forward.1} parent=0 // pred_check
    _
  $region99: #{text_forward.1} parent=0 // pred_check_branch
    %11069 = sbr.rel (0) target = $region101
  $region100: #{text_forward.1} parent=0 // pred_region
    _
  $region101: #{text_forward.1} parent=0 // pred_fallthru
    _

</llo_original>
